<compile_context>
chip_gen: v7x
topology: tpu7x:2x2x1
jax: 0.10.0
libtpu: 0.0.40
codegen_flags: <defaults>
</compile_context>

<pallas_src>
import jax
import jax.numpy as jnp
import numpy as np
from jax.experimental import pallas as pl
from jax.experimental.pallas import tpu as pltpu


# ------------------------------ Pallas kernel -------------------------------
#
# Column bookkeeping (per image, spatial index on lanes):
#   x      : [3, 784]   column r = 28*h + w
#   conv1  : valid at r = 28*oh + ow          (oh,ow <= 23), width 668
#   pool1  : valid at r = 56*i  + 2*j         (i,j   <= 11), width 639
#   conv2  : valid at r = 56*oh2 + 2*ow2      (oh2,ow2 <= 7), width 407
#   pool2  : valid at r = 112*i2 + 4*j2       (i2,j2 <= 3),  width 349
# Garbage columns are never read by later stages (all reads are at the valid
# column formulas above), and they stay finite.

def _classifier_kernel(x_ref, w1_ref, b1_ref, w2_ref, b2_ref,
                       f1w_ref, f1b_ref, f2w_ref, f2b_ref,
                       f3w_ref, f3b_ref, out_ref):
    f32 = jnp.float32
    bf16 = jnp.bfloat16

    xb = x_ref[0].astype(bf16)                                   # [3, 784]

    # ---------------- conv1 + bias + ReLU  -> a1 [8, 668] ----------------
    # w1_ref: [200, 3], rows 40*kh + 8*kw + co  (co padded 6->8 with zeros)
    a1 = jnp.zeros((8, 668), f32)
    for kh in range(5):
        u = jnp.dot(w1_ref[pl.ds(40 * kh, 40), :], xb,
                    preferred_element_type=f32)                  # [40, 784]
        for kw in range(5):
            d = 28 * kh + kw
            a1 = a1 + u[8 * kw:8 * kw + 8, d:d + 668]
    a1 = jnp.maximum(a1 + b1_ref[...], 0.0)                      # [8, 668]

    # ---------------- maxpool 2x2 -> z1 [8, 639] --------------------------
    z1 = jnp.maximum(jnp.maximum(a1[:, 0:639], a1[:, 1:640]),
                     jnp.maximum(a1[:, 28:667], a1[:, 29:668]))
    z1b = z1.astype(bf16)

    # ---------------- conv2 + bias + ReLU -> a2 [16, 407] -----------------
    # w2_ref: [400, 8], rows 80*kh + 16*kw + co2, input channels padded 6->8
    a2 = jnp.zeros((16, 407), f32)
    for kh in range(5):
        u = jnp.dot(w2_ref[pl.ds(80 * kh, 80), :], z1b,
                    preferred_element_type=f32)                  # [80, 639]
        for kw in range(5):
            d = 56 * kh + 2 * kw
            a2 = a2 + u[16 * kw:16 * kw + 16, d:d + 407]
    a2 = jnp.maximum(a2 + b2_ref[...], 0.0)                      # [16, 407]

    # ---------------- maxpool 2x2 -> z2 [16, 349] -------------------------
    z2 = jnp.maximum(jnp.maximum(a2[:, 0:349], a2[:, 2:351]),
                     jnp.maximum(a2[:, 56:405], a2[:, 58:407]))

    # ---------------- fc1 (NCHW flatten folded into weights) --------------
    # f1w_ref: [16, 128, 16] = fc1.weight.reshape(128,16,16).transpose(2,0,1)
    # so f1w_ref[s][o, c] == W1[o, c*16 + s],  s = i2*4 + j2.
    acc = jnp.zeros((128, 1), f32)
    for s in range(16):
        col = 112 * (s // 4) + 4 * (s % 4)
        zc = z2[:, col:col + 1].astype(bf16)                     # [16, 1]
        acc = acc + jnp.dot(f1w_ref[s], zc, preferred_element_type=f32)
    h1 = jnp.maximum(acc + f1b_ref[...], 0.0).astype(bf16)       # [128, 1]

    # ---------------- fc2 / fc3 -------------------------------------------
    h2 = jnp.maximum(
        jnp.dot(f2w_ref[...], h1, preferred_element_type=f32) + f2b_ref[...],
        0.0).astype(bf16)                                        # [64, 1]
    logits = (jnp.dot(f3w_ref[...], h2, preferred_element_type=f32)
              + f3b_ref[...])                                    # [10, 1]

    out_ref[0] = logits


# ------------------------------- wrapper ------------------------------------

def classifier_forward(packed, x):
    """x: [B, 3, 28, 28] float32 (NCHW). Returns [B, 10] float32."""
    B = x.shape[0]
    x3 = x.reshape(B, 3, 28 * 28)          # free view of the NCHW tensor

    out = pl.pallas_call(
        _classifier_kernel,
        out_shape=jax.ShapeDtypeStruct((B, 10, 1), jnp.float32),
        grid=(B,),
        in_specs=[
            pl.BlockSpec((1, 3, 784), lambda b: (b, 0, 0)),      # x
            pl.BlockSpec((200, 3), lambda b: (0, 0)),            # conv1 w
            pl.BlockSpec((8, 1), lambda b: (0, 0)),              # conv1 b
            pl.BlockSpec((400, 8), lambda b: (0, 0)),            # conv2 w
            pl.BlockSpec((16, 1), lambda b: (0, 0)),             # conv2 b
            pl.BlockSpec((16, 128, 16), lambda b: (0, 0, 0)),    # fc1 w
            pl.BlockSpec((128, 1), lambda b: (0, 0)),            # fc1 b
            pl.BlockSpec((64, 128), lambda b: (0, 0)),           # fc2 w
            pl.BlockSpec((64, 1), lambda b: (0, 0)),             # fc2 b
            pl.BlockSpec((10, 64), lambda b: (0, 0)),            # fc3 w
            pl.BlockSpec((10, 1), lambda b: (0, 0)),             # fc3 b
        ],
        out_specs=pl.BlockSpec((1, 10, 1), lambda b: (b, 0, 0)),
        compiler_params=pltpu.CompilerParams(
            dimension_semantics=("parallel",)),
    )(x3, packed["w1"], packed["b1"], packed["w2"], packed["b2"],
      packed["f1w"], packed["f1b"], packed["f2w"], packed["f2b"],
      packed["f3w"], packed["f3b"])

    return out.reshape(B, 10)


# --------------------- one-time parameter packing ---------------------------

def pack_params(p):
    """Re-layout PyTorch-style params once (outside jit): bf16 weights,
    conv taps stacked on rows, fc1 pre-permuted so the NCHW flatten is free."""
    bf16 = jnp.bfloat16
    f32 = jnp.float32

    # conv1: [6,3,5,5] -> [5,5,8,3] -> [200,3]; rows = 40*kh + 8*kw + co
    w1 = jnp.transpose(p["conv1_w"], (2, 3, 0, 1))               # [5,5,6,3]
    w1 = jnp.pad(w1, ((0, 0), (0, 0), (0, 2), (0, 0)))           # pad co 6->8
    w1 = w1.reshape(200, 3).astype(bf16)
    b1 = jnp.pad(p["conv1_b"], (0, 2)).reshape(8, 1).astype(f32)

    # conv2: [16,6,5,5] -> [5,5,16,8] -> [400,8]; rows = 80*kh + 16*kw + co2
    w2 = jnp.transpose(p["conv2_w"], (2, 3, 0, 1))               # [5,5,16,6]
    w2 = jnp.pad(w2, ((0, 0), (0, 0), (0, 0), (0, 2)))           # pad ci 6->8
    w2 = w2.reshape(400, 8).astype(bf16)
    b2 = p["conv2_b"].reshape(16, 1).astype(f32)

    # fc1: [128,256] -> [16(s),128(o),16(c)] so f1w[s][o,c] = W1[o, c*16+s]
    f1w = p["fc1_w"].reshape(128, 16, 16).transpose(2, 0, 1).astype(bf16)
    f1b = p["fc1_b"].reshape(128, 1).astype(f32)
    f2w = p["fc2_w"].astype(bf16)                                # [64,128]
    f2b = p["fc2_b"].reshape(64, 1).astype(f32)
    f3w = p["fc3_w"].astype(bf16)                                # [10,64]
    f3b = p["fc3_b"].reshape(10, 1).astype(f32)

    return {"w1": w1, "b1": b1, "w2": w2, "b2": b2,
            "f1w": f1w, "f1b": f1b, "f2w": f2w, "f2b": f2b,
            "f3w": f3w, "f3b": f3b}


# ---------------------- params + pure-JAX reference -------------------------

def init_params(key):
    ks = jax.random.split(key, 10)

    def uinit(k, shape, fan_in):
        bound = 1.0 / np.sqrt(fan_in)
        return jax.random.uniform(k, shape, jnp.float32, -bound, bound)

    return {
        "conv1_w": uinit(ks[0], (6, 3, 5, 5), 3 * 25),
        "conv1_b": uinit(ks[1], (6,), 3 * 25),
        "conv2_w": uinit(ks[2], (16, 6, 5, 5), 6 * 25),
        "conv2_b": uinit(ks[3], (16,), 6 * 25),
        "fc1_w": uinit(ks[4], (128, 16 * 4 * 4), 16 * 4 * 4),
        "fc1_b": uinit(ks[5], (128,), 16 * 4 * 4),
        "fc2_w": uinit(ks[6], (64, 128), 128),
        "fc2_b": uinit(ks[7], (64,), 128),
        "fc3_w": uinit(ks[8], (10, 64), 64),
        "fc3_b": uinit(ks[9], (10,), 64),
    }


def reference_forward(params, x):
    def conv(x, w, b):
        y = jax.lax.conv_general_dilated(
            x, w, (1, 1), "VALID",
            dimension_numbers=("NCHW", "OIHW", "NCHW"))
        return y + b[None, :, None, None]

    def pool(x):
        return jax.lax.reduce_window(
            x, -jnp.inf, jax.lax.max, (1, 1, 2, 2), (1, 1, 2, 2), "VALID")

    x = pool(jax.nn.relu(conv(x, params["conv1_w"], params["conv1_b"])))
    x = pool(jax.nn.relu(conv(x, params["conv2_w"], params["conv2_b"])))
    x = x.reshape(x.shape[0], -1)
    x = jax.nn.relu(x @ params["fc1_w"].T + params["fc1_b"])
    x = jax.nn.relu(x @ params["fc2_w"].T + params["fc2_b"])
    return x @ params["fc3_w"].T + params["fc3_b"]


if __name__ == "__main__":
    key = jax.random.PRNGKey(0)
    kx, kp = jax.random.split(key)

    # fc1 = 16*4*4 forces 28x28x3 input (LeNet-style); keep batch small.
    x = jax.random.normal(kx, (2, 3, 28, 28), dtype=jnp.float32)
    params = init_params(kp)
    packed = pack_params(params)          # one-time weight re-layout / bf16

    fwd = jax.jit(classifier_forward)
    out = jax.block_until_ready(fwd(packed, x))

    ref = jax.block_until_ready(reference_forward(params, x))
    assert out.shape == (2, 10), out.shape
    assert np.allclose(np.asarray(out), np.asarray(ref), rtol=5e-2, atol=5e-2), (
        "mismatch vs pure-JAX reference")

    print("KERNEL_OK")
</pallas_src>

<mosaic_0001>
module attributes {stable_mosaic.version = 11 : i64} {
  func.func @_classifier_kernel(%arg0: i32, %arg1: memref<1x3x784xf32, #tpu.memory_space<vmem>>, %arg2: memref<200x3xbf16, #tpu.memory_space<vmem>>, %arg3: memref<8x1xf32, #tpu.memory_space<vmem>>, %arg4: memref<400x8xbf16, #tpu.memory_space<vmem>>, %arg5: memref<16x1xf32, #tpu.memory_space<vmem>>, %arg6: memref<16x128x16xbf16, #tpu.memory_space<vmem>>, %arg7: memref<128x1xf32, #tpu.memory_space<vmem>>, %arg8: memref<64x128xbf16, #tpu.memory_space<vmem>>, %arg9: memref<64x1xf32, #tpu.memory_space<vmem>>, %arg10: memref<10x64xbf16, #tpu.memory_space<vmem>>, %arg11: memref<10x1xf32, #tpu.memory_space<vmem>>, %arg12: memref<1x10x1xf32, #tpu.memory_space<vmem>>) attributes {dimension_semantics = [#tpu.dimension_semantics<parallel>], iteration_bounds = array<i64: 2>, scalar_prefetch = 0 : i64, scratch_operands = 0 : i64, tpu.core_type = #tpu.core_type<tc>, window_params = [{transform_indices = @transform_0, window_bounds = array<i64: 1, 3, 784>}, {pipeline_mode = #tpu.pipeline_mode<synchronous>, transform_indices = @transform_1, window_bounds = array<i64: 200, 3>}, {pipeline_mode = #tpu.pipeline_mode<synchronous>, transform_indices = @transform_2, window_bounds = array<i64: 8, 1>}, {pipeline_mode = #tpu.pipeline_mode<synchronous>, transform_indices = @transform_3, window_bounds = array<i64: 400, 8>}, {pipeline_mode = #tpu.pipeline_mode<synchronous>, transform_indices = @transform_4, window_bounds = array<i64: 16, 1>}, {pipeline_mode = #tpu.pipeline_mode<synchronous>, transform_indices = @transform_5, window_bounds = array<i64: 16, 128, 16>}, {pipeline_mode = #tpu.pipeline_mode<synchronous>, transform_indices = @transform_6, window_bounds = array<i64: 128, 1>}, {pipeline_mode = #tpu.pipeline_mode<synchronous>, transform_indices = @transform_7, window_bounds = array<i64: 64, 128>}, {pipeline_mode = #tpu.pipeline_mode<synchronous>, transform_indices = @transform_8, window_bounds = array<i64: 64, 1>}, {pipeline_mode = #tpu.pipeline_mode<synchronous>, transform_indices = @transform_9, window_bounds = array<i64: 10, 64>}, {pipeline_mode = #tpu.pipeline_mode<synchronous>, transform_indices = @transform_10, window_bounds = array<i64: 10, 1>}, {transform_indices = @transform_11, window_bounds = array<i64: 1, 10, 1>}]} {
    %c0 = arith.constant 0 : index
    %c0_0 = arith.constant 0 : index
    %c0_1 = arith.constant 0 : index
    %0 = vector.load %arg1[%c0, %c0_0, %c0_1] : memref<1x3x784xf32, #tpu.memory_space<vmem>>, vector<1x3x784xf32>
    %1 = vector.shape_cast %0 : vector<1x3x784xf32> to vector<3x784xf32>
    %2 = arith.truncf %1 : vector<3x784xf32> to vector<3x784xbf16>
    %cst = arith.constant 0.000000e+00 : f32
    %3 = vector.broadcast %cst : f32 to vector<8x668xf32>
    %c0_2 = arith.constant 0 : index
    %c0_3 = arith.constant 0 : index
    %4 = vector.load %arg2[%c0_2, %c0_3] : memref<200x3xbf16, #tpu.memory_space<vmem>>, vector<40x3xbf16>
    %cst_4 = arith.constant dense<0.000000e+00> : vector<40x784xf32>
    %5 = tpu.matmul %4, %2, %cst_4 {dimension_numbers = #tpu.dot_dimension_numbers<[1], [0], [0], [1], [0, 0, 1, 1], [], []>} : vector<40x3xbf16>, vector<3x784xbf16>, vector<40x784xf32> -> vector<40x784xf32>
    %6 = vector.extract_strided_slice %5 {offsets = [0, 0], sizes = [8, 668], strides = [1, 1]} : vector<40x784xf32> to vector<8x668xf32>
    %7 = arith.addf %3, %6 : vector<8x668xf32>
    %8 = vector.extract_strided_slice %5 {offsets = [8, 1], sizes = [8, 668], strides = [1, 1]} : vector<40x784xf32> to vector<8x668xf32>
    %9 = arith.addf %7, %8 : vector<8x668xf32>
    %10 = vector.extract_strided_slice %5 {offsets = [16, 2], sizes = [8, 668], strides = [1, 1]} : vector<40x784xf32> to vector<8x668xf32>
    %11 = arith.addf %9, %10 : vector<8x668xf32>
    %12 = vector.extract_strided_slice %5 {offsets = [24, 3], sizes = [8, 668], strides = [1, 1]} : vector<40x784xf32> to vector<8x668xf32>
    %13 = arith.addf %11, %12 : vector<8x668xf32>
    %14 = vector.extract_strided_slice %5 {offsets = [32, 4], sizes = [8, 668], strides = [1, 1]} : vector<40x784xf32> to vector<8x668xf32>
    %15 = arith.addf %13, %14 : vector<8x668xf32>
    %c40 = arith.constant 40 : index
    %c0_5 = arith.constant 0 : index
    %16 = vector.load %arg2[%c40, %c0_5] : memref<200x3xbf16, #tpu.memory_space<vmem>>, vector<40x3xbf16>
    %cst_6 = arith.constant dense<0.000000e+00> : vector<40x784xf32>
    %17 = tpu.matmul %16, %2, %cst_6 {dimension_numbers = #tpu.dot_dimension_numbers<[1], [0], [0], [1], [0, 0, 1, 1], [], []>} : vector<40x3xbf16>, vector<3x784xbf16>, vector<40x784xf32> -> vector<40x784xf32>
    %18 = vector.extract_strided_slice %17 {offsets = [0, 28], sizes = [8, 668], strides = [1, 1]} : vector<40x784xf32> to vector<8x668xf32>
    %19 = arith.addf %15, %18 : vector<8x668xf32>
    %20 = vector.extract_strided_slice %17 {offsets = [8, 29], sizes = [8, 668], strides = [1, 1]} : vector<40x784xf32> to vector<8x668xf32>
    %21 = arith.addf %19, %20 : vector<8x668xf32>
    %22 = vector.extract_strided_slice %17 {offsets = [16, 30], sizes = [8, 668], strides = [1, 1]} : vector<40x784xf32> to vector<8x668xf32>
    %23 = arith.addf %21, %22 : vector<8x668xf32>
    %24 = vector.extract_strided_slice %17 {offsets = [24, 31], sizes = [8, 668], strides = [1, 1]} : vector<40x784xf32> to vector<8x668xf32>
    %25 = arith.addf %23, %24 : vector<8x668xf32>
    %26 = vector.extract_strided_slice %17 {offsets = [32, 32], sizes = [8, 668], strides = [1, 1]} : vector<40x784xf32> to vector<8x668xf32>
    %27 = arith.addf %25, %26 : vector<8x668xf32>
    %c80 = arith.constant 80 : index
    %c0_7 = arith.constant 0 : index
    %28 = vector.load %arg2[%c80, %c0_7] : memref<200x3xbf16, #tpu.memory_space<vmem>>, vector<40x3xbf16>
    %cst_8 = arith.constant dense<0.000000e+00> : vector<40x784xf32>
    %29 = tpu.matmul %28, %2, %cst_8 {dimension_numbers = #tpu.dot_dimension_numbers<[1], [0], [0], [1], [0, 0, 1, 1], [], []>} : vector<40x3xbf16>, vector<3x784xbf16>, vector<40x784xf32> -> vector<40x784xf32>
    %30 = vector.extract_strided_slice %29 {offsets = [0, 56], sizes = [8, 668], strides = [1, 1]} : vector<40x784xf32> to vector<8x668xf32>
    %31 = arith.addf %27, %30 : vector<8x668xf32>
    %32 = vector.extract_strided_slice %29 {offsets = [8, 57], sizes = [8, 668], strides = [1, 1]} : vector<40x784xf32> to vector<8x668xf32>
    %33 = arith.addf %31, %32 : vector<8x668xf32>
    %34 = vector.extract_strided_slice %29 {offsets = [16, 58], sizes = [8, 668], strides = [1, 1]} : vector<40x784xf32> to vector<8x668xf32>
    %35 = arith.addf %33, %34 : vector<8x668xf32>
    %36 = vector.extract_strided_slice %29 {offsets = [24, 59], sizes = [8, 668], strides = [1, 1]} : vector<40x784xf32> to vector<8x668xf32>
    %37 = arith.addf %35, %36 : vector<8x668xf32>
    %38 = vector.extract_strided_slice %29 {offsets = [32, 60], sizes = [8, 668], strides = [1, 1]} : vector<40x784xf32> to vector<8x668xf32>
    %39 = arith.addf %37, %38 : vector<8x668xf32>
    %c120 = arith.constant 120 : index
    %c0_9 = arith.constant 0 : index
    %40 = vector.load %arg2[%c120, %c0_9] : memref<200x3xbf16, #tpu.memory_space<vmem>>, vector<40x3xbf16>
    %cst_10 = arith.constant dense<0.000000e+00> : vector<40x784xf32>
    %41 = tpu.matmul %40, %2, %cst_10 {dimension_numbers = #tpu.dot_dimension_numbers<[1], [0], [0], [1], [0, 0, 1, 1], [], []>} : vector<40x3xbf16>, vector<3x784xbf16>, vector<40x784xf32> -> vector<40x784xf32>
    %42 = vector.extract_strided_slice %41 {offsets = [0, 84], sizes = [8, 668], strides = [1, 1]} : vector<40x784xf32> to vector<8x668xf32>
    %43 = arith.addf %39, %42 : vector<8x668xf32>
    %44 = vector.extract_strided_slice %41 {offsets = [8, 85], sizes = [8, 668], strides = [1, 1]} : vector<40x784xf32> to vector<8x668xf32>
    %45 = arith.addf %43, %44 : vector<8x668xf32>
    %46 = vector.extract_strided_slice %41 {offsets = [16, 86], sizes = [8, 668], strides = [1, 1]} : vector<40x784xf32> to vector<8x668xf32>
    %47 = arith.addf %45, %46 : vector<8x668xf32>
    %48 = vector.extract_strided_slice %41 {offsets = [24, 87], sizes = [8, 668], strides = [1, 1]} : vector<40x784xf32> to vector<8x668xf32>
    %49 = arith.addf %47, %48 : vector<8x668xf32>
    %50 = vector.extract_strided_slice %41 {offsets = [32, 88], sizes = [8, 668], strides = [1, 1]} : vector<40x784xf32> to vector<8x668xf32>
    %51 = arith.addf %49, %50 : vector<8x668xf32>
    %c160 = arith.constant 160 : index
    %c0_11 = arith.constant 0 : index
    %52 = vector.load %arg2[%c160, %c0_11] : memref<200x3xbf16, #tpu.memory_space<vmem>>, vector<40x3xbf16>
    %cst_12 = arith.constant dense<0.000000e+00> : vector<40x784xf32>
    %53 = tpu.matmul %52, %2, %cst_12 {dimension_numbers = #tpu.dot_dimension_numbers<[1], [0], [0], [1], [0, 0, 1, 1], [], []>} : vector<40x3xbf16>, vector<3x784xbf16>, vector<40x784xf32> -> vector<40x784xf32>
    %54 = vector.extract_strided_slice %53 {offsets = [0, 112], sizes = [8, 668], strides = [1, 1]} : vector<40x784xf32> to vector<8x668xf32>
    %55 = arith.addf %51, %54 : vector<8x668xf32>
    %56 = vector.extract_strided_slice %53 {offsets = [8, 113], sizes = [8, 668], strides = [1, 1]} : vector<40x784xf32> to vector<8x668xf32>
    %57 = arith.addf %55, %56 : vector<8x668xf32>
    %58 = vector.extract_strided_slice %53 {offsets = [16, 114], sizes = [8, 668], strides = [1, 1]} : vector<40x784xf32> to vector<8x668xf32>
    %59 = arith.addf %57, %58 : vector<8x668xf32>
    %60 = vector.extract_strided_slice %53 {offsets = [24, 115], sizes = [8, 668], strides = [1, 1]} : vector<40x784xf32> to vector<8x668xf32>
    %61 = arith.addf %59, %60 : vector<8x668xf32>
    %62 = vector.extract_strided_slice %53 {offsets = [32, 116], sizes = [8, 668], strides = [1, 1]} : vector<40x784xf32> to vector<8x668xf32>
    %63 = arith.addf %61, %62 : vector<8x668xf32>
    %c0_13 = arith.constant 0 : index
    %c0_14 = arith.constant 0 : index
    %64 = vector.load %arg3[%c0_13, %c0_14] : memref<8x1xf32, #tpu.memory_space<vmem>>, vector<8x1xf32>
    %65 = vector.broadcast %64 : vector<8x1xf32> to vector<8x668xf32>
    %66 = arith.addf %63, %65 : vector<8x668xf32>
    %cst_15 = arith.constant 0.000000e+00 : f32
    %67 = vector.broadcast %cst_15 : f32 to vector<8x668xf32>
    %68 = arith.maximumf %66, %67 : vector<8x668xf32>
    %69 = vector.extract_strided_slice %68 {offsets = [0, 0], sizes = [8, 639], strides = [1, 1]} : vector<8x668xf32> to vector<8x639xf32>
    %70 = vector.extract_strided_slice %68 {offsets = [0, 1], sizes = [8, 639], strides = [1, 1]} : vector<8x668xf32> to vector<8x639xf32>
    %71 = arith.maximumf %69, %70 : vector<8x639xf32>
    %72 = vector.extract_strided_slice %68 {offsets = [0, 28], sizes = [8, 639], strides = [1, 1]} : vector<8x668xf32> to vector<8x639xf32>
    %73 = vector.extract_strided_slice %68 {offsets = [0, 29], sizes = [8, 639], strides = [1, 1]} : vector<8x668xf32> to vector<8x639xf32>
    %74 = arith.maximumf %72, %73 : vector<8x639xf32>
    %75 = arith.maximumf %71, %74 : vector<8x639xf32>
    %76 = arith.truncf %75 : vector<8x639xf32> to vector<8x639xbf16>
    %cst_16 = arith.constant 0.000000e+00 : f32
    %77 = vector.broadcast %cst_16 : f32 to vector<16x407xf32>
    %c0_17 = arith.constant 0 : index
    %c0_18 = arith.constant 0 : index
    %78 = vector.load %arg4[%c0_17, %c0_18] : memref<400x8xbf16, #tpu.memory_space<vmem>>, vector<80x8xbf16>
    %cst_19 = arith.constant dense<0.000000e+00> : vector<80x639xf32>
    %79 = tpu.matmul %78, %76, %cst_19 {dimension_numbers = #tpu.dot_dimension_numbers<[1], [0], [0], [1], [0, 0, 1, 1], [], []>} : vector<80x8xbf16>, vector<8x639xbf16>, vector<80x639xf32> -> vector<80x639xf32>
    %80 = vector.extract_strided_slice %79 {offsets = [0, 0], sizes = [16, 407], strides = [1, 1]} : vector<80x639xf32> to vector<16x407xf32>
    %81 = arith.addf %77, %80 : vector<16x407xf32>
    %82 = vector.extract_strided_slice %79 {offsets = [16, 2], sizes = [16, 407], strides = [1, 1]} : vector<80x639xf32> to vector<16x407xf32>
    %83 = arith.addf %81, %82 : vector<16x407xf32>
    %84 = vector.extract_strided_slice %79 {offsets = [32, 4], sizes = [16, 407], strides = [1, 1]} : vector<80x639xf32> to vector<16x407xf32>
    %85 = arith.addf %83, %84 : vector<16x407xf32>
    %86 = vector.extract_strided_slice %79 {offsets = [48, 6], sizes = [16, 407], strides = [1, 1]} : vector<80x639xf32> to vector<16x407xf32>
    %87 = arith.addf %85, %86 : vector<16x407xf32>
    %88 = vector.extract_strided_slice %79 {offsets = [64, 8], sizes = [16, 407], strides = [1, 1]} : vector<80x639xf32> to vector<16x407xf32>
    %89 = arith.addf %87, %88 : vector<16x407xf32>
    %c80_20 = arith.constant 80 : index
    %c0_21 = arith.constant 0 : index
    %90 = vector.load %arg4[%c80_20, %c0_21] : memref<400x8xbf16, #tpu.memory_space<vmem>>, vector<80x8xbf16>
    %cst_22 = arith.constant dense<0.000000e+00> : vector<80x639xf32>
    %91 = tpu.matmul %90, %76, %cst_22 {dimension_numbers = #tpu.dot_dimension_numbers<[1], [0], [0], [1], [0, 0, 1, 1], [], []>} : vector<80x8xbf16>, vector<8x639xbf16>, vector<80x639xf32> -> vector<80x639xf32>
    %92 = vector.extract_strided_slice %91 {offsets = [0, 56], sizes = [16, 407], strides = [1, 1]} : vector<80x639xf32> to vector<16x407xf32>
    %93 = arith.addf %89, %92 : vector<16x407xf32>
    %94 = vector.extract_strided_slice %91 {offsets = [16, 58], sizes = [16, 407], strides = [1, 1]} : vector<80x639xf32> to vector<16x407xf32>
    %95 = arith.addf %93, %94 : vector<16x407xf32>
    %96 = vector.extract_strided_slice %91 {offsets = [32, 60], sizes = [16, 407], strides = [1, 1]} : vector<80x639xf32> to vector<16x407xf32>
    %97 = arith.addf %95, %96 : vector<16x407xf32>
    %98 = vector.extract_strided_slice %91 {offsets = [48, 62], sizes = [16, 407], strides = [1, 1]} : vector<80x639xf32> to vector<16x407xf32>
    %99 = arith.addf %97, %98 : vector<16x407xf32>
    %100 = vector.extract_strided_slice %91 {offsets = [64, 64], sizes = [16, 407], strides = [1, 1]} : vector<80x639xf32> to vector<16x407xf32>
    %101 = arith.addf %99, %100 : vector<16x407xf32>
    %c160_23 = arith.constant 160 : index
    %c0_24 = arith.constant 0 : index
    %102 = vector.load %arg4[%c160_23, %c0_24] : memref<400x8xbf16, #tpu.memory_space<vmem>>, vector<80x8xbf16>
    %cst_25 = arith.constant dense<0.000000e+00> : vector<80x639xf32>
    %103 = tpu.matmul %102, %76, %cst_25 {dimension_numbers = #tpu.dot_dimension_numbers<[1], [0], [0], [1], [0, 0, 1, 1], [], []>} : vector<80x8xbf16>, vector<8x639xbf16>, vector<80x639xf32> -> vector<80x639xf32>
    %104 = vector.extract_strided_slice %103 {offsets = [0, 112], sizes = [16, 407], strides = [1, 1]} : vector<80x639xf32> to vector<16x407xf32>
    %105 = arith.addf %101, %104 : vector<16x407xf32>
    %106 = vector.extract_strided_slice %103 {offsets = [16, 114], sizes = [16, 407], strides = [1, 1]} : vector<80x639xf32> to vector<16x407xf32>
    %107 = arith.addf %105, %106 : vector<16x407xf32>
    %108 = vector.extract_strided_slice %103 {offsets = [32, 116], sizes = [16, 407], strides = [1, 1]} : vector<80x639xf32> to vector<16x407xf32>
    %109 = arith.addf %107, %108 : vector<16x407xf32>
    %110 = vector.extract_strided_slice %103 {offsets = [48, 118], sizes = [16, 407], strides = [1, 1]} : vector<80x639xf32> to vector<16x407xf32>
    %111 = arith.addf %109, %110 : vector<16x407xf32>
    %112 = vector.extract_strided_slice %103 {offsets = [64, 120], sizes = [16, 407], strides = [1, 1]} : vector<80x639xf32> to vector<16x407xf32>
    %113 = arith.addf %111, %112 : vector<16x407xf32>
    %c240 = arith.constant 240 : index
    %c0_26 = arith.constant 0 : index
    %114 = vector.load %arg4[%c240, %c0_26] : memref<400x8xbf16, #tpu.memory_space<vmem>>, vector<80x8xbf16>
    %cst_27 = arith.constant dense<0.000000e+00> : vector<80x639xf32>
    %115 = tpu.matmul %114, %76, %cst_27 {dimension_numbers = #tpu.dot_dimension_numbers<[1], [0], [0], [1], [0, 0, 1, 1], [], []>} : vector<80x8xbf16>, vector<8x639xbf16>, vector<80x639xf32> -> vector<80x639xf32>
    %116 = vector.extract_strided_slice %115 {offsets = [0, 168], sizes = [16, 407], strides = [1, 1]} : vector<80x639xf32> to vector<16x407xf32>
    %117 = arith.addf %113, %116 : vector<16x407xf32>
    %118 = vector.extract_strided_slice %115 {offsets = [16, 170], sizes = [16, 407], strides = [1, 1]} : vector<80x639xf32> to vector<16x407xf32>
    %119 = arith.addf %117, %118 : vector<16x407xf32>
    %120 = vector.extract_strided_slice %115 {offsets = [32, 172], sizes = [16, 407], strides = [1, 1]} : vector<80x639xf32> to vector<16x407xf32>
    %121 = arith.addf %119, %120 : vector<16x407xf32>
    %122 = vector.extract_strided_slice %115 {offsets = [48, 174], sizes = [16, 407], strides = [1, 1]} : vector<80x639xf32> to vector<16x407xf32>
    %123 = arith.addf %121, %122 : vector<16x407xf32>
    %124 = vector.extract_strided_slice %115 {offsets = [64, 176], sizes = [16, 407], strides = [1, 1]} : vector<80x639xf32> to vector<16x407xf32>
    %125 = arith.addf %123, %124 : vector<16x407xf32>
    %c320 = arith.constant 320 : index
    %c0_28 = arith.constant 0 : index
    %126 = vector.load %arg4[%c320, %c0_28] : memref<400x8xbf16, #tpu.memory_space<vmem>>, vector<80x8xbf16>
    %cst_29 = arith.constant dense<0.000000e+00> : vector<80x639xf32>
    %127 = tpu.matmul %126, %76, %cst_29 {dimension_numbers = #tpu.dot_dimension_numbers<[1], [0], [0], [1], [0, 0, 1, 1], [], []>} : vector<80x8xbf16>, vector<8x639xbf16>, vector<80x639xf32> -> vector<80x639xf32>
    %128 = vector.extract_strided_slice %127 {offsets = [0, 224], sizes = [16, 407], strides = [1, 1]} : vector<80x639xf32> to vector<16x407xf32>
    %129 = arith.addf %125, %128 : vector<16x407xf32>
    %130 = vector.extract_strided_slice %127 {offsets = [16, 226], sizes = [16, 407], strides = [1, 1]} : vector<80x639xf32> to vector<16x407xf32>
    %131 = arith.addf %129, %130 : vector<16x407xf32>
    %132 = vector.extract_strided_slice %127 {offsets = [32, 228], sizes = [16, 407], strides = [1, 1]} : vector<80x639xf32> to vector<16x407xf32>
    %133 = arith.addf %131, %132 : vector<16x407xf32>
    %134 = vector.extract_strided_slice %127 {offsets = [48, 230], sizes = [16, 407], strides = [1, 1]} : vector<80x639xf32> to vector<16x407xf32>
    %135 = arith.addf %133, %134 : vector<16x407xf32>
    %136 = vector.extract_strided_slice %127 {offsets = [64, 232], sizes = [16, 407], strides = [1, 1]} : vector<80x639xf32> to vector<16x407xf32>
    %137 = arith.addf %135, %136 : vector<16x407xf32>
    %c0_30 = arith.constant 0 : index
    %c0_31 = arith.constant 0 : index
    %138 = vector.load %arg5[%c0_30, %c0_31] : memref<16x1xf32, #tpu.memory_space<vmem>>, vector<16x1xf32>
    %139 = vector.broadcast %138 : vector<16x1xf32> to vector<16x407xf32>
    %140 = arith.addf %137, %139 : vector<16x407xf32>
    %cst_32 = arith.constant 0.000000e+00 : f32
    %141 = vector.broadcast %cst_32 : f32 to vector<16x407xf32>
    %142 = arith.maximumf %140, %141 : vector<16x407xf32>
    %143 = vector.extract_strided_slice %142 {offsets = [0, 0], sizes = [16, 349], strides = [1, 1]} : vector<16x407xf32> to vector<16x349xf32>
    %144 = vector.extract_strided_slice %142 {offsets = [0, 2], sizes = [16, 349], strides = [1, 1]} : vector<16x407xf32> to vector<16x349xf32>
    %145 = arith.maximumf %143, %144 : vector<16x349xf32>
    %146 = vector.extract_strided_slice %142 {offsets = [0, 56], sizes = [16, 349], strides = [1, 1]} : vector<16x407xf32> to vector<16x349xf32>
    %147 = vector.extract_strided_slice %142 {offsets = [0, 58], sizes = [16, 349], strides = [1, 1]} : vector<16x407xf32> to vector<16x349xf32>
    %148 = arith.maximumf %146, %147 : vector<16x349xf32>
    %149 = arith.maximumf %145, %148 : vector<16x349xf32>
    %cst_33 = arith.constant 0.000000e+00 : f32
    %150 = vector.broadcast %cst_33 : f32 to vector<128x1xf32>
    %151 = vector.extract_strided_slice %149 {offsets = [0, 0], sizes = [16, 1], strides = [1, 1]} : vector<16x349xf32> to vector<16x1xf32>
    %152 = arith.truncf %151 : vector<16x1xf32> to vector<16x1xbf16>
    %c0_34 = arith.constant 0 : index
    %c0_35 = arith.constant 0 : index
    %c0_36 = arith.constant 0 : index
    %153 = vector.load %arg6[%c0_34, %c0_35, %c0_36] : memref<16x128x16xbf16, #tpu.memory_space<vmem>>, vector<1x128x16xbf16>
    %154 = vector.shape_cast %153 : vector<1x128x16xbf16> to vector<128x16xbf16>
    %cst_37 = arith.constant dense<0.000000e+00> : vector<128x1xf32>
    %155 = tpu.matmul %154, %152, %cst_37 {dimension_numbers = #tpu.dot_dimension_numbers<[1], [0], [0], [1], [0, 0, 1, 1], [], []>} : vector<128x16xbf16>, vector<16x1xbf16>, vector<128x1xf32> -> vector<128x1xf32>
    %156 = arith.addf %150, %155 : vector<128x1xf32>
    %157 = vector.extract_strided_slice %149 {offsets = [0, 4], sizes = [16, 1], strides = [1, 1]} : vector<16x349xf32> to vector<16x1xf32>
    %158 = arith.truncf %157 : vector<16x1xf32> to vector<16x1xbf16>
    %c1 = arith.constant 1 : index
    %c0_38 = arith.constant 0 : index
    %c0_39 = arith.constant 0 : index
    %159 = vector.load %arg6[%c1, %c0_38, %c0_39] : memref<16x128x16xbf16, #tpu.memory_space<vmem>>, vector<1x128x16xbf16>
    %160 = vector.shape_cast %159 : vector<1x128x16xbf16> to vector<128x16xbf16>
    %cst_40 = arith.constant dense<0.000000e+00> : vector<128x1xf32>
    %161 = tpu.matmul %160, %158, %cst_40 {dimension_numbers = #tpu.dot_dimension_numbers<[1], [0], [0], [1], [0, 0, 1, 1], [], []>} : vector<128x16xbf16>, vector<16x1xbf16>, vector<128x1xf32> -> vector<128x1xf32>
    %162 = arith.addf %156, %161 : vector<128x1xf32>
    %163 = vector.extract_strided_slice %149 {offsets = [0, 8], sizes = [16, 1], strides = [1, 1]} : vector<16x349xf32> to vector<16x1xf32>
    %164 = arith.truncf %163 : vector<16x1xf32> to vector<16x1xbf16>
    %c2 = arith.constant 2 : index
    %c0_41 = arith.constant 0 : index
    %c0_42 = arith.constant 0 : index
    %165 = vector.load %arg6[%c2, %c0_41, %c0_42] : memref<16x128x16xbf16, #tpu.memory_space<vmem>>, vector<1x128x16xbf16>
    %166 = vector.shape_cast %165 : vector<1x128x16xbf16> to vector<128x16xbf16>
    %cst_43 = arith.constant dense<0.000000e+00> : vector<128x1xf32>
    %167 = tpu.matmul %166, %164, %cst_43 {dimension_numbers = #tpu.dot_dimension_numbers<[1], [0], [0], [1], [0, 0, 1, 1], [], []>} : vector<128x16xbf16>, vector<16x1xbf16>, vector<128x1xf32> -> vector<128x1xf32>
    %168 = arith.addf %162, %167 : vector<128x1xf32>
    %169 = vector.extract_strided_slice %149 {offsets = [0, 12], sizes = [16, 1], strides = [1, 1]} : vector<16x349xf32> to vector<16x1xf32>
    %170 = arith.truncf %169 : vector<16x1xf32> to vector<16x1xbf16>
    %c3 = arith.constant 3 : index
    %c0_44 = arith.constant 0 : index
    %c0_45 = arith.constant 0 : index
    %171 = vector.load %arg6[%c3, %c0_44, %c0_45] : memref<16x128x16xbf16, #tpu.memory_space<vmem>>, vector<1x128x16xbf16>
    %172 = vector.shape_cast %171 : vector<1x128x16xbf16> to vector<128x16xbf16>
    %cst_46 = arith.constant dense<0.000000e+00> : vector<128x1xf32>
    %173 = tpu.matmul %172, %170, %cst_46 {dimension_numbers = #tpu.dot_dimension_numbers<[1], [0], [0], [1], [0, 0, 1, 1], [], []>} : vector<128x16xbf16>, vector<16x1xbf16>, vector<128x1xf32> -> vector<128x1xf32>
    %174 = arith.addf %168, %173 : vector<128x1xf32>
    %175 = vector.extract_strided_slice %149 {offsets = [0, 112], sizes = [16, 1], strides = [1, 1]} : vector<16x349xf32> to vector<16x1xf32>
    %176 = arith.truncf %175 : vector<16x1xf32> to vector<16x1xbf16>
    %c4 = arith.constant 4 : index
    %c0_47 = arith.constant 0 : index
    %c0_48 = arith.constant 0 : index
    %177 = vector.load %arg6[%c4, %c0_47, %c0_48] : memref<16x128x16xbf16, #tpu.memory_space<vmem>>, vector<1x128x16xbf16>
    %178 = vector.shape_cast %177 : vector<1x128x16xbf16> to vector<128x16xbf16>
    %cst_49 = arith.constant dense<0.000000e+00> : vector<128x1xf32>
    %179 = tpu.matmul %178, %176, %cst_49 {dimension_numbers = #tpu.dot_dimension_numbers<[1], [0], [0], [1], [0, 0, 1, 1], [], []>} : vector<128x16xbf16>, vector<16x1xbf16>, vector<128x1xf32> -> vector<128x1xf32>
    %180 = arith.addf %174, %179 : vector<128x1xf32>
    %181 = vector.extract_strided_slice %149 {offsets = [0, 116], sizes = [16, 1], strides = [1, 1]} : vector<16x349xf32> to vector<16x1xf32>
    %182 = arith.truncf %181 : vector<16x1xf32> to vector<16x1xbf16>
    %c5 = arith.constant 5 : index
    %c0_50 = arith.constant 0 : index
    %c0_51 = arith.constant 0 : index
    %183 = vector.load %arg6[%c5, %c0_50, %c0_51] : memref<16x128x16xbf16, #tpu.memory_space<vmem>>, vector<1x128x16xbf16>
    %184 = vector.shape_cast %183 : vector<1x128x16xbf16> to vector<128x16xbf16>
    %cst_52 = arith.constant dense<0.000000e+00> : vector<128x1xf32>
    %185 = tpu.matmul %184, %182, %cst_52 {dimension_numbers = #tpu.dot_dimension_numbers<[1], [0], [0], [1], [0, 0, 1, 1], [], []>} : vector<128x16xbf16>, vector<16x1xbf16>, vector<128x1xf32> -> vector<128x1xf32>
    %186 = arith.addf %180, %185 : vector<128x1xf32>
    %187 = vector.extract_strided_slice %149 {offsets = [0, 120], sizes = [16, 1], strides = [1, 1]} : vector<16x349xf32> to vector<16x1xf32>
    %188 = arith.truncf %187 : vector<16x1xf32> to vector<16x1xbf16>
    %c6 = arith.constant 6 : index
    %c0_53 = arith.constant 0 : index
    %c0_54 = arith.constant 0 : index
    %189 = vector.load %arg6[%c6, %c0_53, %c0_54] : memref<16x128x16xbf16, #tpu.memory_space<vmem>>, vector<1x128x16xbf16>
    %190 = vector.shape_cast %189 : vector<1x128x16xbf16> to vector<128x16xbf16>
    %cst_55 = arith.constant dense<0.000000e+00> : vector<128x1xf32>
    %191 = tpu.matmul %190, %188, %cst_55 {dimension_numbers = #tpu.dot_dimension_numbers<[1], [0], [0], [1], [0, 0, 1, 1], [], []>} : vector<128x16xbf16>, vector<16x1xbf16>, vector<128x1xf32> -> vector<128x1xf32>
    %192 = arith.addf %186, %191 : vector<128x1xf32>
    %193 = vector.extract_strided_slice %149 {offsets = [0, 124], sizes = [16, 1], strides = [1, 1]} : vector<16x349xf32> to vector<16x1xf32>
    %194 = arith.truncf %193 : vector<16x1xf32> to vector<16x1xbf16>
    %c7 = arith.constant 7 : index
    %c0_56 = arith.constant 0 : index
    %c0_57 = arith.constant 0 : index
    %195 = vector.load %arg6[%c7, %c0_56, %c0_57] : memref<16x128x16xbf16, #tpu.memory_space<vmem>>, vector<1x128x16xbf16>
    %196 = vector.shape_cast %195 : vector<1x128x16xbf16> to vector<128x16xbf16>
    %cst_58 = arith.constant dense<0.000000e+00> : vector<128x1xf32>
    %197 = tpu.matmul %196, %194, %cst_58 {dimension_numbers = #tpu.dot_dimension_numbers<[1], [0], [0], [1], [0, 0, 1, 1], [], []>} : vector<128x16xbf16>, vector<16x1xbf16>, vector<128x1xf32> -> vector<128x1xf32>
    %198 = arith.addf %192, %197 : vector<128x1xf32>
    %199 = vector.extract_strided_slice %149 {offsets = [0, 224], sizes = [16, 1], strides = [1, 1]} : vector<16x349xf32> to vector<16x1xf32>
    %200 = arith.truncf %199 : vector<16x1xf32> to vector<16x1xbf16>
    %c8 = arith.constant 8 : index
    %c0_59 = arith.constant 0 : index
    %c0_60 = arith.constant 0 : index
    %201 = vector.load %arg6[%c8, %c0_59, %c0_60] : memref<16x128x16xbf16, #tpu.memory_space<vmem>>, vector<1x128x16xbf16>
    %202 = vector.shape_cast %201 : vector<1x128x16xbf16> to vector<128x16xbf16>
    %cst_61 = arith.constant dense<0.000000e+00> : vector<128x1xf32>
    %203 = tpu.matmul %202, %200, %cst_61 {dimension_numbers = #tpu.dot_dimension_numbers<[1], [0], [0], [1], [0, 0, 1, 1], [], []>} : vector<128x16xbf16>, vector<16x1xbf16>, vector<128x1xf32> -> vector<128x1xf32>
    %204 = arith.addf %198, %203 : vector<128x1xf32>
    %205 = vector.extract_strided_slice %149 {offsets = [0, 228], sizes = [16, 1], strides = [1, 1]} : vector<16x349xf32> to vector<16x1xf32>
    %206 = arith.truncf %205 : vector<16x1xf32> to vector<16x1xbf16>
    %c9 = arith.constant 9 : index
    %c0_62 = arith.constant 0 : index
    %c0_63 = arith.constant 0 : index
    %207 = vector.load %arg6[%c9, %c0_62, %c0_63] : memref<16x128x16xbf16, #tpu.memory_space<vmem>>, vector<1x128x16xbf16>
    %208 = vector.shape_cast %207 : vector<1x128x16xbf16> to vector<128x16xbf16>
    %cst_64 = arith.constant dense<0.000000e+00> : vector<128x1xf32>
    %209 = tpu.matmul %208, %206, %cst_64 {dimension_numbers = #tpu.dot_dimension_numbers<[1], [0], [0], [1], [0, 0, 1, 1], [], []>} : vector<128x16xbf16>, vector<16x1xbf16>, vector<128x1xf32> -> vector<128x1xf32>
    %210 = arith.addf %204, %209 : vector<128x1xf32>
    %211 = vector.extract_strided_slice %149 {offsets = [0, 232], sizes = [16, 1], strides = [1, 1]} : vector<16x349xf32> to vector<16x1xf32>
    %212 = arith.truncf %211 : vector<16x1xf32> to vector<16x1xbf16>
    %c10 = arith.constant 10 : index
    %c0_65 = arith.constant 0 : index
    %c0_66 = arith.constant 0 : index
    %213 = vector.load %arg6[%c10, %c0_65, %c0_66] : memref<16x128x16xbf16, #tpu.memory_space<vmem>>, vector<1x128x16xbf16>
    %214 = vector.shape_cast %213 : vector<1x128x16xbf16> to vector<128x16xbf16>
    %cst_67 = arith.constant dense<0.000000e+00> : vector<128x1xf32>
    %215 = tpu.matmul %214, %212, %cst_67 {dimension_numbers = #tpu.dot_dimension_numbers<[1], [0], [0], [1], [0, 0, 1, 1], [], []>} : vector<128x16xbf16>, vector<16x1xbf16>, vector<128x1xf32> -> vector<128x1xf32>
    %216 = arith.addf %210, %215 : vector<128x1xf32>
    %217 = vector.extract_strided_slice %149 {offsets = [0, 236], sizes = [16, 1], strides = [1, 1]} : vector<16x349xf32> to vector<16x1xf32>
    %218 = arith.truncf %217 : vector<16x1xf32> to vector<16x1xbf16>
    %c11 = arith.constant 11 : index
    %c0_68 = arith.constant 0 : index
    %c0_69 = arith.constant 0 : index
    %219 = vector.load %arg6[%c11, %c0_68, %c0_69] : memref<16x128x16xbf16, #tpu.memory_space<vmem>>, vector<1x128x16xbf16>
    %220 = vector.shape_cast %219 : vector<1x128x16xbf16> to vector<128x16xbf16>
    %cst_70 = arith.constant dense<0.000000e+00> : vector<128x1xf32>
    %221 = tpu.matmul %220, %218, %cst_70 {dimension_numbers = #tpu.dot_dimension_numbers<[1], [0], [0], [1], [0, 0, 1, 1], [], []>} : vector<128x16xbf16>, vector<16x1xbf16>, vector<128x1xf32> -> vector<128x1xf32>
    %222 = arith.addf %216, %221 : vector<128x1xf32>
    %223 = vector.extract_strided_slice %149 {offsets = [0, 336], sizes = [16, 1], strides = [1, 1]} : vector<16x349xf32> to vector<16x1xf32>
    %224 = arith.truncf %223 : vector<16x1xf32> to vector<16x1xbf16>
    %c12 = arith.constant 12 : index
    %c0_71 = arith.constant 0 : index
    %c0_72 = arith.constant 0 : index
    %225 = vector.load %arg6[%c12, %c0_71, %c0_72] : memref<16x128x16xbf16, #tpu.memory_space<vmem>>, vector<1x128x16xbf16>
    %226 = vector.shape_cast %225 : vector<1x128x16xbf16> to vector<128x16xbf16>
    %cst_73 = arith.constant dense<0.000000e+00> : vector<128x1xf32>
    %227 = tpu.matmul %226, %224, %cst_73 {dimension_numbers = #tpu.dot_dimension_numbers<[1], [0], [0], [1], [0, 0, 1, 1], [], []>} : vector<128x16xbf16>, vector<16x1xbf16>, vector<128x1xf32> -> vector<128x1xf32>
    %228 = arith.addf %222, %227 : vector<128x1xf32>
    %229 = vector.extract_strided_slice %149 {offsets = [0, 340], sizes = [16, 1], strides = [1, 1]} : vector<16x349xf32> to vector<16x1xf32>
    %230 = arith.truncf %229 : vector<16x1xf32> to vector<16x1xbf16>
    %c13 = arith.constant 13 : index
    %c0_74 = arith.constant 0 : index
    %c0_75 = arith.constant 0 : index
    %231 = vector.load %arg6[%c13, %c0_74, %c0_75] : memref<16x128x16xbf16, #tpu.memory_space<vmem>>, vector<1x128x16xbf16>
    %232 = vector.shape_cast %231 : vector<1x128x16xbf16> to vector<128x16xbf16>
    %cst_76 = arith.constant dense<0.000000e+00> : vector<128x1xf32>
    %233 = tpu.matmul %232, %230, %cst_76 {dimension_numbers = #tpu.dot_dimension_numbers<[1], [0], [0], [1], [0, 0, 1, 1], [], []>} : vector<128x16xbf16>, vector<16x1xbf16>, vector<128x1xf32> -> vector<128x1xf32>
    %234 = arith.addf %228, %233 : vector<128x1xf32>
    %235 = vector.extract_strided_slice %149 {offsets = [0, 344], sizes = [16, 1], strides = [1, 1]} : vector<16x349xf32> to vector<16x1xf32>
    %236 = arith.truncf %235 : vector<16x1xf32> to vector<16x1xbf16>
    %c14 = arith.constant 14 : index
    %c0_77 = arith.constant 0 : index
    %c0_78 = arith.constant 0 : index
    %237 = vector.load %arg6[%c14, %c0_77, %c0_78] : memref<16x128x16xbf16, #tpu.memory_space<vmem>>, vector<1x128x16xbf16>
    %238 = vector.shape_cast %237 : vector<1x128x16xbf16> to vector<128x16xbf16>
    %cst_79 = arith.constant dense<0.000000e+00> : vector<128x1xf32>
    %239 = tpu.matmul %238, %236, %cst_79 {dimension_numbers = #tpu.dot_dimension_numbers<[1], [0], [0], [1], [0, 0, 1, 1], [], []>} : vector<128x16xbf16>, vector<16x1xbf16>, vector<128x1xf32> -> vector<128x1xf32>
    %240 = arith.addf %234, %239 : vector<128x1xf32>
    %241 = vector.extract_strided_slice %149 {offsets = [0, 348], sizes = [16, 1], strides = [1, 1]} : vector<16x349xf32> to vector<16x1xf32>
    %242 = arith.truncf %241 : vector<16x1xf32> to vector<16x1xbf16>
    %c15 = arith.constant 15 : index
    %c0_80 = arith.constant 0 : index
    %c0_81 = arith.constant 0 : index
    %243 = vector.load %arg6[%c15, %c0_80, %c0_81] : memref<16x128x16xbf16, #tpu.memory_space<vmem>>, vector<1x128x16xbf16>
    %244 = vector.shape_cast %243 : vector<1x128x16xbf16> to vector<128x16xbf16>
    %cst_82 = arith.constant dense<0.000000e+00> : vector<128x1xf32>
    %245 = tpu.matmul %244, %242, %cst_82 {dimension_numbers = #tpu.dot_dimension_numbers<[1], [0], [0], [1], [0, 0, 1, 1], [], []>} : vector<128x16xbf16>, vector<16x1xbf16>, vector<128x1xf32> -> vector<128x1xf32>
    %246 = arith.addf %240, %245 : vector<128x1xf32>
    %c0_83 = arith.constant 0 : index
    %c0_84 = arith.constant 0 : index
    %247 = vector.load %arg7[%c0_83, %c0_84] : memref<128x1xf32, #tpu.memory_space<vmem>>, vector<128x1xf32>
    %248 = arith.addf %246, %247 : vector<128x1xf32>
    %cst_85 = arith.constant 0.000000e+00 : f32
    %249 = vector.broadcast %cst_85 : f32 to vector<128x1xf32>
    %250 = arith.maximumf %248, %249 : vector<128x1xf32>
    %251 = arith.truncf %250 : vector<128x1xf32> to vector<128x1xbf16>
    %c0_86 = arith.constant 0 : index
    %c0_87 = arith.constant 0 : index
    %252 = vector.load %arg8[%c0_86, %c0_87] : memref<64x128xbf16, #tpu.memory_space<vmem>>, vector<64x128xbf16>
    %cst_88 = arith.constant dense<0.000000e+00> : vector<64x1xf32>
    %253 = tpu.matmul %252, %251, %cst_88 {dimension_numbers = #tpu.dot_dimension_numbers<[1], [0], [0], [1], [0, 0, 1, 1], [], []>} : vector<64x128xbf16>, vector<128x1xbf16>, vector<64x1xf32> -> vector<64x1xf32>
    %c0_89 = arith.constant 0 : index
    %c0_90 = arith.constant 0 : index
    %254 = vector.load %arg9[%c0_89, %c0_90] : memref<64x1xf32, #tpu.memory_space<vmem>>, vector<64x1xf32>
    %255 = arith.addf %253, %254 : vector<64x1xf32>
    %cst_91 = arith.constant 0.000000e+00 : f32
    %256 = vector.broadcast %cst_91 : f32 to vector<64x1xf32>
    %257 = arith.maximumf %255, %256 : vector<64x1xf32>
    %258 = arith.truncf %257 : vector<64x1xf32> to vector<64x1xbf16>
    %c0_92 = arith.constant 0 : index
    %c0_93 = arith.constant 0 : index
    %259 = vector.load %arg10[%c0_92, %c0_93] : memref<10x64xbf16, #tpu.memory_space<vmem>>, vector<10x64xbf16>
    %cst_94 = arith.constant dense<0.000000e+00> : vector<10x1xf32>
    %260 = tpu.matmul %259, %258, %cst_94 {dimension_numbers = #tpu.dot_dimension_numbers<[1], [0], [0], [1], [0, 0, 1, 1], [], []>} : vector<10x64xbf16>, vector<64x1xbf16>, vector<10x1xf32> -> vector<10x1xf32>
    %c0_95 = arith.constant 0 : index
    %c0_96 = arith.constant 0 : index
    %261 = vector.load %arg11[%c0_95, %c0_96] : memref<10x1xf32, #tpu.memory_space<vmem>>, vector<10x1xf32>
    %262 = arith.addf %260, %261 : vector<10x1xf32>
    %c0_97 = arith.constant 0 : index
    %c0_98 = arith.constant 0 : index
    %c0_99 = arith.constant 0 : index
    %263 = vector.load %arg12[%c0_97, %c0_98, %c0_99] : memref<1x10x1xf32, #tpu.memory_space<vmem>>, vector<1x10x1xf32>
    %264 = vector.shape_cast %263 : vector<1x10x1xf32> to vector<10x1xf32>
    %265 = vector.shape_cast %262 : vector<10x1xf32> to vector<1x10x1xf32>
    tpu.vector_store %arg12[%c0_97, %c0_98, %c0_99], %265 {strides = array<i32>} : memref<1x10x1xf32, #tpu.memory_space<vmem>>, vector<1x10x1xf32>,
    return
  }
  func.func @transform_0(%arg0: i32) -> (i32, i32, i32) {
    %c0_i32 = arith.constant 0 : i32
    %c0_i32_0 = arith.constant 0 : i32
    %c0_i32_1 = arith.constant 0 : i32
    return %arg0, %c0_i32, %c0_i32_0 : i32, i32, i32
  }
  func.func @transform_1(%arg0: i32) -> (i32, i32) {
    %c0_i32 = arith.constant 0 : i32
    %c0_i32_0 = arith.constant 0 : i32
    %c0_i32_1 = arith.constant 0 : i32
    return %c0_i32, %c0_i32_0 : i32, i32
  }
  func.func @transform_2(%arg0: i32) -> (i32, i32) {
    %c0_i32 = arith.constant 0 : i32
    %c0_i32_0 = arith.constant 0 : i32
    %c0_i32_1 = arith.constant 0 : i32
    return %c0_i32, %c0_i32_0 : i32, i32
  }
  func.func @transform_3(%arg0: i32) -> (i32, i32) {
    %c0_i32 = arith.constant 0 : i32
    %c0_i32_0 = arith.constant 0 : i32
    %c0_i32_1 = arith.constant 0 : i32
    return %c0_i32, %c0_i32_0 : i32, i32
  }
  func.func @transform_4(%arg0: i32) -> (i32, i32) {
    %c0_i32 = arith.constant 0 : i32
    %c0_i32_0 = arith.constant 0 : i32
    %c0_i32_1 = arith.constant 0 : i32
    return %c0_i32, %c0_i32_0 : i32, i32
  }
  func.func @transform_5(%arg0: i32) -> (i32, i32, i32) {
    %c0_i32 = arith.constant 0 : i32
    %c0_i32_0 = arith.constant 0 : i32
    %c0_i32_1 = arith.constant 0 : i32
    %c0_i32_2 = arith.constant 0 : i32
    return %c0_i32, %c0_i32_0, %c0_i32_1 : i32, i32, i32
  }
  func.func @transform_6(%arg0: i32) -> (i32, i32) {
    %c0_i32 = arith.constant 0 : i32
    %c0_i32_0 = arith.constant 0 : i32
    %c0_i32_1 = arith.constant 0 : i32
    return %c0_i32, %c0_i32_0 : i32, i32
  }
  func.func @transform_7(%arg0: i32) -> (i32, i32) {
    %c0_i32 = arith.constant 0 : i32
    %c0_i32_0 = arith.constant 0 : i32
    %c0_i32_1 = arith.constant 0 : i32
    return %c0_i32, %c0_i32_0 : i32, i32
  }
  func.func @transform_8(%arg0: i32) -> (i32, i32) {
    %c0_i32 = arith.constant 0 : i32
    %c0_i32_0 = arith.constant 0 : i32
    %c0_i32_1 = arith.constant 0 : i32
    return %c0_i32, %c0_i32_0 : i32, i32
  }
  func.func @transform_9(%arg0: i32) -> (i32, i32) {
    %c0_i32 = arith.constant 0 : i32
    %c0_i32_0 = arith.constant 0 : i32
    %c0_i32_1 = arith.constant 0 : i32
    return %c0_i32, %c0_i32_0 : i32, i32
  }
  func.func @transform_10(%arg0: i32) -> (i32, i32) {
    %c0_i32 = arith.constant 0 : i32
    %c0_i32_0 = arith.constant 0 : i32
    %c0_i32_1 = arith.constant 0 : i32
    return %c0_i32, %c0_i32_0 : i32, i32
  }
  func.func @transform_11(%arg0: i32) -> (i32, i32, i32) {
    %c0_i32 = arith.constant 0 : i32
    %c0_i32_0 = arith.constant 0 : i32
    %c0_i32_1 = arith.constant 0 : i32
    return %arg0, %c0_i32, %c0_i32_0 : i32, i32, i32
  }
}

</mosaic_0001>

<llo_original>
// kernel: classifier_forward.1
$region0: #{classifier_forward.1}
  #allocation0 [shape = 'u32[]', space=smem, size = 0x4, offset = 0x4, fixed_abs, tag = 'smem constant byte address 0x4 - core index']
  #allocation1 [shape = 'u32[144,128]{1,0:T(1,128)}', space=vmem, size = 0x12000, scoped, tag = 'internal scratch']
  %s0 = inlined_call_operand.vmem [shape: f32[2,3,784], index: 0, kind: input, shape index: {}]
  %s1 = inlined_call_operand.vmem [shape: bf16[200,3], index: 1, kind: input, shape index: {}]
  %s2 = inlined_call_operand.vmem [shape: f32[8,1], index: 2, kind: input, shape index: {}]
  %s3 = inlined_call_operand.vmem [shape: bf16[400,8], index: 3, kind: input, shape index: {}]
  %s4 = inlined_call_operand.vmem [shape: f32[16,1], index: 4, kind: input, shape index: {}]
  %s5 = inlined_call_operand.vmem [shape: bf16[16,128,16], index: 5, kind: input, shape index: {}]
  %s6 = inlined_call_operand.vmem [shape: f32[128,1], index: 6, kind: input, shape index: {}]
  %s7 = inlined_call_operand.vmem [shape: bf16[64,128], index: 7, kind: input, shape index: {}]
  %s8 = inlined_call_operand.vmem [shape: f32[64,1], index: 8, kind: input, shape index: {}]
  %s9 = inlined_call_operand.vmem [shape: bf16[10,64], index: 9, kind: input, shape index: {}]
  %s10 = inlined_call_operand.vmem [shape: f32[10,1], index: 10, kind: input, shape index: {}]
  %s11 = inlined_call_operand.vmem [shape: f32[2,10,1], index: 11, kind: output, shape index: {}]
  %s12 = sld [smem:[#allocation0]]
  $region77: #{classifier_forward.1} parent=0
    _
  %s14 = ssub.s32 1, %s12
  %s15 = scalar_select 0, %s14, %s12
  loop: start=0, step=1, limit=4
  $region2: #{classifier_forward.1} parent=0 // loop_pre_header
    _
  $region3: #{classifier_forward.1} parent=0 // loop_header
    %s17 = sphi 0, %s21
    %p18 = scmp.ge.s32.totalorder %s17, 4
    %s27 = sphi 0, %s29
    %s30 = sphi 0, %s27
    %s31 = sphi 0, %s30
    %s47 = sphi 0, %s31
    %s51 = sphi 0, %s51
    %s53 = sphi 0, %s51
    %s54 = sphi 0, %s53
    %s68 = sphi 0, %s54
    %s72 = sphi 0, %s72
    %s74 = sphi 0, %s72
    %s75 = sphi 0, %s74
    %s89 = sphi 0, %s75
    %s93 = sphi 0, %s93
    %s95 = sphi 0, %s93
    %s96 = sphi 0, %s95
    %s110 = sphi 0, %s96
    %s114 = sphi 0, %s114
    %s116 = sphi 0, %s114
    %s117 = sphi 0, %s116
    %s131 = sphi 0, %s117
    %s135 = sphi 0, %s135
    %s137 = sphi 0, %s135
    %s138 = sphi 0, %s137
    %s152 = sphi 0, %s138
    %s156 = sphi 0, %s156
    %s158 = sphi 0, %s156
    %s159 = sphi 0, %s158
    %s173 = sphi 0, %s159
    %s177 = sphi 0, %s177
    %s179 = sphi 0, %s177
    %s180 = sphi 0, %s179
    %s194 = sphi 0, %s180
    %s198 = sphi 0, %s198
    %s200 = sphi 0, %s198
    %s201 = sphi 0, %s200
    %s215 = sphi 0, %s201
    %s219 = sphi 0, %s219
    %s221 = sphi 0, %s219
    %s222 = sphi 0, %s221
    %s236 = sphi 0, %s222
    %s240 = sphi 0, %s240
    %s242 = sphi 0, %s240
    %s243 = sphi 0, %s242
    %s257 = sphi 0, %s243
    %s263 = sphi 0, %s265
    %s266 = sphi 0, %s263
    %s267 = sphi 0, %s266
    %s283 = sphi 0, %s267
  $region4: #{classifier_forward.1} parent=0 // loop_header_branch
    %20 = sbr.rel (%p18) target = $region8
  $region5: #{classifier_forward.1} parent=0 // loop_body
    %s22 = ssub.s32 %s17, 1
    %s23 = ssub.s32 %s17, 2
    %s24 = sadd.s32 %s17, 1
    %s25 = ssub.s32 %s17, %s24
    %p26 = scmp.eq.s32.totalorder %s25, 0
    %s28 = sadd.s32 %s27, 1
    %s29 = scalar_select %p26, %s27, %s28
    %p32 = pneg %p26
    %p33 = scmp.eq.s32.totalorder %s17, 1
    %p34 = por %p32, %p33
    %p35 = scmp.ne.s32.totalorder %s27, %s30
    %p36 = scmp.eq.s32.totalorder %s17, 0
    %p37 = por %p35, %p36
    %p38 = scmp.ne.s32.totalorder %s27, %s30
    %p39 = scmp.eq.s32.totalorder %s22, 1
    %p40 = por %p38, %p39
    %p41 = scmp.ne.s32.totalorder %s30, %s31
    %p42 = scmp.eq.s32.totalorder %s22, 0
    %p43 = por %p41, %p42
    %p44 = scmp.ne.s32.totalorder %s30, %s31
    %p45 = scmp.eq.s32.totalorder %s23, 1
    %p46 = por %p44, %p45
    %p48 = scmp.ne.s32.totalorder %s31, %s47
    %p49 = scmp.eq.s32.totalorder %s23, 0
    %p50 = por %p48, %p49
    %s52 = sadd.s32 %s51, 1
    %p55 = scmp.eq.s32.totalorder %s17, 1
    %p56 = scmp.ne.s32.totalorder %s51, %s53
    %p57 = scmp.eq.s32.totalorder %s17, 0
    %p58 = por %p56, %p57
    %p59 = scmp.ne.s32.totalorder %s51, %s53
    %p60 = scmp.eq.s32.totalorder %s22, 1
    %p61 = por %p59, %p60
    %p62 = scmp.ne.s32.totalorder %s53, %s54
    %p63 = scmp.eq.s32.totalorder %s22, 0
    %p64 = por %p62, %p63
    %p65 = scmp.ne.s32.totalorder %s53, %s54
    %p66 = scmp.eq.s32.totalorder %s23, 1
    %p67 = por %p65, %p66
    %p69 = scmp.ne.s32.totalorder %s54, %s68
    %p70 = scmp.eq.s32.totalorder %s23, 0
    %p71 = por %p69, %p70
    %s73 = sadd.s32 %s72, 1
    %p76 = scmp.eq.s32.totalorder %s17, 1
    %p77 = scmp.ne.s32.totalorder %s72, %s74
    %p78 = scmp.eq.s32.totalorder %s17, 0
    %p79 = por %p77, %p78
    %p80 = scmp.ne.s32.totalorder %s72, %s74
    %p81 = scmp.eq.s32.totalorder %s22, 1
    %p82 = por %p80, %p81
    %p83 = scmp.ne.s32.totalorder %s74, %s75
    %p84 = scmp.eq.s32.totalorder %s22, 0
    %p85 = por %p83, %p84
    %p86 = scmp.ne.s32.totalorder %s74, %s75
    %p87 = scmp.eq.s32.totalorder %s23, 1
    %p88 = por %p86, %p87
    %p90 = scmp.ne.s32.totalorder %s75, %s89
    %p91 = scmp.eq.s32.totalorder %s23, 0
    %p92 = por %p90, %p91
    %s94 = sadd.s32 %s93, 1
    %p97 = scmp.eq.s32.totalorder %s17, 1
    %p98 = scmp.ne.s32.totalorder %s93, %s95
    %p99 = scmp.eq.s32.totalorder %s17, 0
    %p100 = por %p98, %p99
    %p101 = scmp.ne.s32.totalorder %s93, %s95
    %p102 = scmp.eq.s32.totalorder %s22, 1
    %p103 = por %p101, %p102
    %p104 = scmp.ne.s32.totalorder %s95, %s96
    %p105 = scmp.eq.s32.totalorder %s22, 0
    %p106 = por %p104, %p105
    %p107 = scmp.ne.s32.totalorder %s95, %s96
    %p108 = scmp.eq.s32.totalorder %s23, 1
    %p109 = por %p107, %p108
    %p111 = scmp.ne.s32.totalorder %s96, %s110
    %p112 = scmp.eq.s32.totalorder %s23, 0
    %p113 = por %p111, %p112
    %s115 = sadd.s32 %s114, 1
    %p118 = scmp.eq.s32.totalorder %s17, 1
    %p119 = scmp.ne.s32.totalorder %s114, %s116
    %p120 = scmp.eq.s32.totalorder %s17, 0
    %p121 = por %p119, %p120
    %p122 = scmp.ne.s32.totalorder %s114, %s116
    %p123 = scmp.eq.s32.totalorder %s22, 1
    %p124 = por %p122, %p123
    %p125 = scmp.ne.s32.totalorder %s116, %s117
    %p126 = scmp.eq.s32.totalorder %s22, 0
    %p127 = por %p125, %p126
    %p128 = scmp.ne.s32.totalorder %s116, %s117
    %p129 = scmp.eq.s32.totalorder %s23, 1
    %p130 = por %p128, %p129
    %p132 = scmp.ne.s32.totalorder %s117, %s131
    %p133 = scmp.eq.s32.totalorder %s23, 0
    %p134 = por %p132, %p133
    %s136 = sadd.s32 %s135, 1
    %p139 = scmp.eq.s32.totalorder %s17, 1
    %p140 = scmp.ne.s32.totalorder %s135, %s137
    %p141 = scmp.eq.s32.totalorder %s17, 0
    %p142 = por %p140, %p141
    %p143 = scmp.ne.s32.totalorder %s135, %s137
    %p144 = scmp.eq.s32.totalorder %s22, 1
    %p145 = por %p143, %p144
    %p146 = scmp.ne.s32.totalorder %s137, %s138
    %p147 = scmp.eq.s32.totalorder %s22, 0
    %p148 = por %p146, %p147
    %p149 = scmp.ne.s32.totalorder %s137, %s138
    %p150 = scmp.eq.s32.totalorder %s23, 1
    %p151 = por %p149, %p150
    %p153 = scmp.ne.s32.totalorder %s138, %s152
    %p154 = scmp.eq.s32.totalorder %s23, 0
    %p155 = por %p153, %p154
    %s157 = sadd.s32 %s156, 1
    %p160 = scmp.eq.s32.totalorder %s17, 1
    %p161 = scmp.ne.s32.totalorder %s156, %s158
    %p162 = scmp.eq.s32.totalorder %s17, 0
    %p163 = por %p161, %p162
    %p164 = scmp.ne.s32.totalorder %s156, %s158
    %p165 = scmp.eq.s32.totalorder %s22, 1
    %p166 = por %p164, %p165
    %p167 = scmp.ne.s32.totalorder %s158, %s159
    %p168 = scmp.eq.s32.totalorder %s22, 0
    %p169 = por %p167, %p168
    %p170 = scmp.ne.s32.totalorder %s158, %s159
    %p171 = scmp.eq.s32.totalorder %s23, 1
    %p172 = por %p170, %p171
    %p174 = scmp.ne.s32.totalorder %s159, %s173
    %p175 = scmp.eq.s32.totalorder %s23, 0
    %p176 = por %p174, %p175
    %s178 = sadd.s32 %s177, 1
    %p181 = scmp.eq.s32.totalorder %s17, 1
    %p182 = scmp.ne.s32.totalorder %s177, %s179
    %p183 = scmp.eq.s32.totalorder %s17, 0
    %p184 = por %p182, %p183
    %p185 = scmp.ne.s32.totalorder %s177, %s179
    %p186 = scmp.eq.s32.totalorder %s22, 1
    %p187 = por %p185, %p186
    %p188 = scmp.ne.s32.totalorder %s179, %s180
    %p189 = scmp.eq.s32.totalorder %s22, 0
    %p190 = por %p188, %p189
    %p191 = scmp.ne.s32.totalorder %s179, %s180
    %p192 = scmp.eq.s32.totalorder %s23, 1
    %p193 = por %p191, %p192
    %p195 = scmp.ne.s32.totalorder %s180, %s194
    %p196 = scmp.eq.s32.totalorder %s23, 0
    %p197 = por %p195, %p196
    %s199 = sadd.s32 %s198, 1
    %p202 = scmp.eq.s32.totalorder %s17, 1
    %p203 = scmp.ne.s32.totalorder %s198, %s200
    %p204 = scmp.eq.s32.totalorder %s17, 0
    %p205 = por %p203, %p204
    %p206 = scmp.ne.s32.totalorder %s198, %s200
    %p207 = scmp.eq.s32.totalorder %s22, 1
    %p208 = por %p206, %p207
    %p209 = scmp.ne.s32.totalorder %s200, %s201
    %p210 = scmp.eq.s32.totalorder %s22, 0
    %p211 = por %p209, %p210
    %p212 = scmp.ne.s32.totalorder %s200, %s201
    %p213 = scmp.eq.s32.totalorder %s23, 1
    %p214 = por %p212, %p213
    %p216 = scmp.ne.s32.totalorder %s201, %s215
    %p217 = scmp.eq.s32.totalorder %s23, 0
    %p218 = por %p216, %p217
    %s220 = sadd.s32 %s219, 1
    %p223 = scmp.eq.s32.totalorder %s17, 1
    %p224 = scmp.ne.s32.totalorder %s219, %s221
    %p225 = scmp.eq.s32.totalorder %s17, 0
    %p226 = por %p224, %p225
    %p227 = scmp.ne.s32.totalorder %s219, %s221
    %p228 = scmp.eq.s32.totalorder %s22, 1
    %p229 = por %p227, %p228
    %p230 = scmp.ne.s32.totalorder %s221, %s222
    %p231 = scmp.eq.s32.totalorder %s22, 0
    %p232 = por %p230, %p231
    %p233 = scmp.ne.s32.totalorder %s221, %s222
    %p234 = scmp.eq.s32.totalorder %s23, 1
    %p235 = por %p233, %p234
    %p237 = scmp.ne.s32.totalorder %s222, %s236
    %p238 = scmp.eq.s32.totalorder %s23, 0
    %p239 = por %p237, %p238
    %s241 = sadd.s32 %s240, 1
    %p244 = scmp.eq.s32.totalorder %s17, 1
    %p245 = scmp.ne.s32.totalorder %s240, %s242
    %p246 = scmp.eq.s32.totalorder %s17, 0
    %p247 = por %p245, %p246
    %p248 = scmp.ne.s32.totalorder %s240, %s242
    %p249 = scmp.eq.s32.totalorder %s22, 1
    %p250 = por %p248, %p249
    %p251 = scmp.ne.s32.totalorder %s242, %s243
    %p252 = scmp.eq.s32.totalorder %s22, 0
    %p253 = por %p251, %p252
    %p254 = scmp.ne.s32.totalorder %s242, %s243
    %p255 = scmp.eq.s32.totalorder %s23, 1
    %p256 = por %p254, %p255
    %p258 = scmp.ne.s32.totalorder %s243, %s257
    %p259 = scmp.eq.s32.totalorder %s23, 0
    %p260 = por %p258, %p259
    %s261 = ssub.s32 %s17, %s24
    %p262 = scmp.eq.s32.totalorder %s261, 0
    %s264 = sadd.s32 %s263, 1
    %s265 = scalar_select %p262, %s263, %s264
    %p268 = pneg %p262
    %p269 = scmp.eq.s32.totalorder %s17, 1
    %p270 = por %p268, %p269
    %p271 = scmp.ne.s32.totalorder %s263, %s266
    %p272 = scmp.eq.s32.totalorder %s17, 0
    %p273 = por %p271, %p272
    %p274 = scmp.ne.s32.totalorder %s263, %s266
    %p275 = scmp.eq.s32.totalorder %s22, 1
    %p276 = por %p274, %p275
    %p277 = scmp.ne.s32.totalorder %s266, %s267
    %p278 = scmp.eq.s32.totalorder %s22, 0
    %p279 = por %p277, %p278
    %p280 = scmp.ne.s32.totalorder %s266, %s267
    %p281 = scmp.eq.s32.totalorder %s23, 1
    %p282 = por %p280, %p281
    %p284 = scmp.ne.s32.totalorder %s267, %s283
    %p285 = scmp.eq.s32.totalorder %s23, 0
    %p286 = por %p284, %p285
    %p287 = scmp.le.s32.totalorder 1, %s17
    %p288 = scmp.lt.s32.totalorder %s17, 3
    %p289 = pnand %p287, %p288
    %p290 = pneg %p289
    // Predicated region
    $region9: #{classifier_forward.1} parent=5 // pred_check
      _
    $region10: #{classifier_forward.1} parent=5 // pred_check_branch
      %292 = sbr.rel (%p289) target = $region12
    $region11: #{classifier_forward.1} parent=5 // pred_region
      %s293 = ssub.s32 %s17, 1
      // Predicated region
      $region13: #{classifier_forward.1} parent=11 // pred_check
        %p294 = pneg %p64
      $region14: #{classifier_forward.1} parent=11 // pred_check_branch
        %296 = sbr.rel (%p294) target = $region16
      $region15: #{classifier_forward.1} parent=11 // pred_region
        _
      $region16: #{classifier_forward.1} parent=11 // pred_fallthru
        _
      // Predicated region
      $region17: #{classifier_forward.1} parent=11 // pred_check
        %p297 = pneg %p85
      $region18: #{classifier_forward.1} parent=11 // pred_check_branch
        %299 = sbr.rel (%p297) target = $region20
      $region19: #{classifier_forward.1} parent=11 // pred_region
        _
      $region20: #{classifier_forward.1} parent=11 // pred_fallthru
        _
      // Predicated region
      $region21: #{classifier_forward.1} parent=11 // pred_check
        %p300 = pneg %p106
      $region22: #{classifier_forward.1} parent=11 // pred_check_branch
        %302 = sbr.rel (%p300) target = $region24
      $region23: #{classifier_forward.1} parent=11 // pred_region
        _
      $region24: #{classifier_forward.1} parent=11 // pred_fallthru
        _
      // Predicated region
      $region25: #{classifier_forward.1} parent=11 // pred_check
        %p303 = pneg %p127
      $region26: #{classifier_forward.1} parent=11 // pred_check_branch
        %305 = sbr.rel (%p303) target = $region28
      $region27: #{classifier_forward.1} parent=11 // pred_region
        _
      $region28: #{classifier_forward.1} parent=11 // pred_fallthru
        _
      // Predicated region
      $region29: #{classifier_forward.1} parent=11 // pred_check
        %p306 = pneg %p148
      $region30: #{classifier_forward.1} parent=11 // pred_check_branch
        %308 = sbr.rel (%p306) target = $region32
      $region31: #{classifier_forward.1} parent=11 // pred_region
        _
      $region32: #{classifier_forward.1} parent=11 // pred_fallthru
        _
      // Predicated region
      $region33: #{classifier_forward.1} parent=11 // pred_check
        %p309 = pneg %p169
      $region34: #{classifier_forward.1} parent=11 // pred_check_branch
        %311 = sbr.rel (%p309) target = $region36
      $region35: #{classifier_forward.1} parent=11 // pred_region
        _
      $region36: #{classifier_forward.1} parent=11 // pred_fallthru
        _
      // Predicated region
      $region37: #{classifier_forward.1} parent=11 // pred_check
        %p312 = pneg %p190
      $region38: #{classifier_forward.1} parent=11 // pred_check_branch
        %314 = sbr.rel (%p312) target = $region40
      $region39: #{classifier_forward.1} parent=11 // pred_region
        _
      $region40: #{classifier_forward.1} parent=11 // pred_fallthru
        _
      // Predicated region
      $region41: #{classifier_forward.1} parent=11 // pred_check
        %p315 = pneg %p211
      $region42: #{classifier_forward.1} parent=11 // pred_check_branch
        %317 = sbr.rel (%p315) target = $region44
      $region43: #{classifier_forward.1} parent=11 // pred_region
        _
      $region44: #{classifier_forward.1} parent=11 // pred_fallthru
        _
      // Predicated region
      $region45: #{classifier_forward.1} parent=11 // pred_check
        %p318 = pneg %p232
      $region46: #{classifier_forward.1} parent=11 // pred_check_branch
        %320 = sbr.rel (%p318) target = $region48
      $region47: #{classifier_forward.1} parent=11 // pred_region
        _
      $region48: #{classifier_forward.1} parent=11 // pred_fallthru
        _
      // Predicated region
      $region49: #{classifier_forward.1} parent=11 // pred_check
        %p321 = pneg %p253
      $region50: #{classifier_forward.1} parent=11 // pred_check_branch
        %323 = sbr.rel (%p321) target = $region52
      $region51: #{classifier_forward.1} parent=11 // pred_region
        _
      $region52: #{classifier_forward.1} parent=11 // pred_fallthru
        _
    $region12: #{classifier_forward.1} parent=5 // pred_fallthru
      _
    %p324 = scmp.lt.s32.totalorder %s17, 2
    // Predicated region
    $region53: #{classifier_forward.1} parent=5 // pred_check
      %p325 = pneg %p324
    $region54: #{classifier_forward.1} parent=5 // pred_check_branch
      %327 = sbr.rel (%p325) target = $region56
    $region55: #{classifier_forward.1} parent=5 // pred_region
      // Predicated region
      $region57: #{classifier_forward.1} parent=55 // pred_check
        %p328 = pneg %p37
      $region58: #{classifier_forward.1} parent=55 // pred_check_branch
        %330 = sbr.rel (%p328) target = $region60
      $region59: #{classifier_forward.1} parent=55 // pred_region
        %p331 = scmp.lt.s32.totalorder %s17, 1
        %s332 = scalar_select %p331, %s17, 1
        %s333 = smul.addr %s332, 7
        %s334 = smul.addr %s333, 4
        %s335 = scalar_lea.vmem %s0, %s334
      $region60: #{classifier_forward.1} parent=55 // pred_fallthru
        _
    $region56: #{classifier_forward.1} parent=5 // pred_fallthru
      _
    %p336 = scmp.le.s32.totalorder 1, %s17
    %p337 = scmp.lt.s32.totalorder %s17, 3
    %p338 = pnand %p336, %p337
    %p339 = pneg %p338
    // Predicated region
    $region61: #{classifier_forward.1} parent=5 // pred_check
      _
    $region62: #{classifier_forward.1} parent=5 // pred_check_branch
      %341 = sbr.rel (%p338) target = $region64
    $region63: #{classifier_forward.1} parent=5 // pred_region
      %s342 = ssub.s32 %s17, 1
      %p343 = scmp.lt.s32.totalorder %s22, 1
      %s344 = scalar_select %p343, %s22, 1
      %s345 = smul.addr %s344, 7
      %s346 = smul.addr %s345, 4
      %s347 = scalar_lea.vmem %s0, %s346
      %p348 = pneg %p43
      %p349 = pneg %p40
      %p350 = pneg %p64
      %p351 = pneg %p61
      %p352 = pneg %p85
      %p353 = pneg %p82
      %p354 = pneg %p106
      %p355 = pneg %p103
      %p356 = pneg %p127
      %p357 = pneg %p124
      %p358 = pneg %p148
      %p359 = pneg %p145
      %p360 = pneg %p169
      %p361 = pneg %p166
      %p362 = pneg %p190
      %p363 = pneg %p187
      %p364 = pneg %p211
      %p365 = pneg %p208
      %p366 = pneg %p232
      %p367 = pneg %p229
      %p368 = pneg %p253
      %p369 = pneg %p250
      %p370 = pneg %p279
      %p371 = pneg %p276
      %p372 = scmp.lt.s32.totalorder %s22, 1
      %s373 = scalar_select %p372, %s22, 1
      %s374 = smul.addr %s373, 2
      %s375 = smul.addr %s374, 8
      %s376 = scalar_lea.vmem %s11, %s375
      %p377 = scmp.lt.s32.totalorder %s22, 1
      %s378 = scalar_select %p377, %s22, 1
      %s379 = smul.addr %s378, 7
      %s380 = smul.addr %s379, 4
      %s381 = scalar_lea.vmem %s0, %s380
      %p382 = scmp.lt.s32.totalorder %s22, 1
      %s383 = scalar_select %p382, %s22, 1
      %s384 = smul.addr %s383, 2
      %s385 = smul.addr %s384, 8
      %s386 = scalar_lea.vmem %s11, %s385
      %v388 = vld [vmem:[%s381] sm:$0x77]
      %v389 = vld [vmem:[%s381 + $0x8] sm:$0x77]
      %v390 = vld [vmem:[%s381 + $0x10] sm:$0x77]
      %v391 = vld [vmem:[%s381 + $0x18] sm:$0x7]
      %v395 = vcombine.high %v388, %v388
      %v396 = vcombine.high %v389, %v389
      %v397 = vcombine.high %v390, %v390
      %v401 = vpack.c.bf16 %v388, %v388
      %v402 = vpack.c.bf16 %v395, %v395
      %v403 = vpack.c.bf16 %v389, %v389
      %v404 = vpack.c.bf16 %v396, %v396
      %v405 = vpack.c.bf16 %v390, %v390
      %v406 = vpack.c.bf16 %v397, %v397
      %v407 = vpack.c.bf16 %v391, %v391
      %v408 = vld [vmem:[%s1] sm:$0xf]
      %v409 = vld [vmem:[%s1 + $0x4] sm:$0xf]
      %v410 = vld [vmem:[%s1 + $0x8] sm:$0xf]
      %v411 = vld [vmem:[%s1 + $0xc] sm:$0xf]
      %v412 = vld [vmem:[%s1 + $0x10] sm:$0xf]
      %v418 = vunpack.c.l.b16 %v408
      %v419 = vunpack.c.l.b16 %v409
      %v420 = vunpack.c.l.b16 %v410
      %v421 = vunpack.c.l.b16 %v411
      %v422 = vunpack.c.l.b16 %v412
      %v423 = vpack.c.b16 %v419, %v418
      %v424 = vpack.c.b16 %v421, %v420
      %v425 = vpack.c.b16 %v422, %v422
      %vm426 = vcmask 23552
      %v428 = vsel %vm426, %v423, 0
      %v431 = vsel %vm426, %v424, 0
      %v434 = vsel %vm426, %v425, 0
      %vm436 = vcmask 1040384
      %vm437 = vcmask 1041408
      %v438 = vsel %vm436, 4294967295, 65535
      %v439 = vsel %vm437, %v438, 0
      %v441 = vand.u32 %v401, %v439
      %v444 = vand.u32 %v402, %v439
      %v447 = vand.u32 %v403, %v439
      %v450 = vand.u32 %v404, %v439
      %v453 = vand.u32 %v405, %v439
      %v456 = vand.u32 %v406, %v439
      %458 = vmatprep.subr.bf16.mxu0 %v444
      %459 = vmatpush1.bf16.msra.mxu0 %v441
      %460 = vmatprep.subr.bf16.mxu0 0
      %461 = vmatpush1.bf16.msra.mxu0 0
      %462 = vmatprep.subr.bf16.mxu0 0
      %463 = vmatpush1.bf16.msra.mxu0 0
      %464 = vmatprep.subr.bf16.mxu0 0
      %465 = vmatpush1.bf16.msra.mxu0 0
      %466 = vmatprep.subr.bf16.mxu0 0
      %467 = vmatpush1.bf16.msra.mxu0 0
      %468 = vmatprep.subr.bf16.mxu0 0
      %469 = vmatpush1.bf16.msra.mxu0 0
      %470 = vmatprep.subr.bf16.mxu0 0
      %471 = vmatpush1.bf16.msra.mxu0 0
      %472 = vmatprep.subr.bf16.mxu0 0
      %473 = vmatpush1.bf16.msra.mxu0 0
      %474 = vmatprep.subr.bf16.mxu0 0
      %475 = vmatpush1.bf16.msra.mxu0 0
      %476 = vmatprep.subr.bf16.mxu0 0
      %477 = vmatpush1.bf16.msra.mxu0 0
      %478 = vmatprep.subr.bf16.mxu0 0
      %479 = vmatpush1.bf16.msra.mxu0 0
      %480 = vmatprep.subr.bf16.mxu0 0
      %481 = vmatpush1.bf16.msra.mxu0 0
      %482 = vmatprep.subr.bf16.mxu0 0
      %483 = vmatpush1.bf16.msra.mxu0 0
      %484 = vmatprep.subr.bf16.mxu0 0
      %485 = vmatpush1.bf16.msra.mxu0 0
      %486 = vmatprep.subr.bf16.mxu0 0
      %487 = vmatpush1.bf16.msra.mxu0 0
      %488 = vmatprep.subr.bf16.mxu0 0
      %489 = vmatpush1.bf16.msra.mxu0 0
      %490 = vmatprep.mubr.bf16.mxu0 0
      %491 = vmatmul.mubr.bf16.gmra.mrb[0].mxu0 %v428
      %v492 = vpop.f32.mrb[0].mxu0
      %v493 = vadd.f32 0.0, %v492
      %v494 = vpop.f32.mrb[0].mxu0
      %v495 = vadd.f32 0.0, %v494
      %v496 = vpop.f32.mrb[0].mxu0
      %v497 = vadd.f32 0.0, %v496
      %v498 = vpop.f32.mrb[0].mxu0
      %v499 = vadd.f32 0.0, %v498
      %500 = vmatprep.mubr.bf16.mxu0 0
      %501 = vmatmul.mubr.bf16.gmra.mrb[0].mxu0 %v431
      %v502 = vpop.f32.mrb[0].mxu0
      %v503 = vadd.f32 0.0, %v502
      %v504 = vpop.f32.mrb[0].mxu0
      %v505 = vadd.f32 0.0, %v504
      %v506 = vpop.f32.mrb[0].mxu0
      %v507 = vadd.f32 0.0, %v506
      %v508 = vpop.f32.mrb[0].mxu0
      %v509 = vadd.f32 0.0, %v508
      %510 = vmatprep.mubr.bf16.mxu0 0
      %511 = vmatmul.mubr.bf16.gmra.mrb[0].mxu0 %v434
      %v512 = vpop.f32.mrb[0].mxu0
      %v513 = vadd.f32 0.0, %v512
      %v514 = vpop.f32.mrb[0].mxu0
      %v515 = vadd.f32 0.0, %v514
      %v516 = vpop.f32.mrb[0].mxu0
      %v517 = vpop.f32.mrb[0].mxu0
      %518 = vdwg.mxu0
      %519 = vmatprep.subr.bf16.mxu0 %v450
      %520 = vmatpush1.bf16.msra.mxu0 %v447
      %521 = vmatprep.subr.bf16.mxu0 0
      %522 = vmatpush1.bf16.msra.mxu0 0
      %523 = vmatprep.subr.bf16.mxu0 0
      %524 = vmatpush1.bf16.msra.mxu0 0
      %525 = vmatprep.subr.bf16.mxu0 0
      %526 = vmatpush1.bf16.msra.mxu0 0
      %527 = vmatprep.subr.bf16.mxu0 0
      %528 = vmatpush1.bf16.msra.mxu0 0
      %529 = vmatprep.subr.bf16.mxu0 0
      %530 = vmatpush1.bf16.msra.mxu0 0
      %531 = vmatprep.subr.bf16.mxu0 0
      %532 = vmatpush1.bf16.msra.mxu0 0
      %533 = vmatprep.subr.bf16.mxu0 0
      %534 = vmatpush1.bf16.msra.mxu0 0
      %535 = vmatprep.subr.bf16.mxu0 0
      %536 = vmatpush1.bf16.msra.mxu0 0
      %537 = vmatprep.subr.bf16.mxu0 0
      %538 = vmatpush1.bf16.msra.mxu0 0
      %539 = vmatprep.subr.bf16.mxu0 0
      %540 = vmatpush1.bf16.msra.mxu0 0
      %541 = vmatprep.subr.bf16.mxu0 0
      %542 = vmatpush1.bf16.msra.mxu0 0
      %543 = vmatprep.subr.bf16.mxu0 0
      %544 = vmatpush1.bf16.msra.mxu0 0
      %545 = vmatprep.subr.bf16.mxu0 0
      %546 = vmatpush1.bf16.msra.mxu0 0
      %547 = vmatprep.subr.bf16.mxu0 0
      %548 = vmatpush1.bf16.msra.mxu0 0
      %549 = vmatprep.subr.bf16.mxu0 0
      %550 = vmatpush1.bf16.msra.mxu0 0
      %551 = vmatprep.mubr.bf16.mxu0 0
      %552 = vmatmul.mubr.bf16.gmra.mrb[0].mxu0 %v428
      %v553 = vpop.f32.mrb[0].mxu0
      %v554 = vadd.f32 0.0, %v553
      %v555 = vpop.f32.mrb[0].mxu0
      %v556 = vadd.f32 0.0, %v555
      %v557 = vpop.f32.mrb[0].mxu0
      %v558 = vadd.f32 0.0, %v557
      %v559 = vpop.f32.mrb[0].mxu0
      %v560 = vadd.f32 0.0, %v559
      %561 = vmatprep.mubr.bf16.mxu0 0
      %562 = vmatmul.mubr.bf16.gmra.mrb[0].mxu0 %v431
      %v563 = vpop.f32.mrb[0].mxu0
      %v564 = vadd.f32 0.0, %v563
      %v565 = vpop.f32.mrb[0].mxu0
      %v566 = vadd.f32 0.0, %v565
      %v567 = vpop.f32.mrb[0].mxu0
      %v568 = vadd.f32 0.0, %v567
      %v569 = vpop.f32.mrb[0].mxu0
      %v570 = vadd.f32 0.0, %v569
      %571 = vmatprep.mubr.bf16.mxu0 0
      %572 = vmatmul.mubr.bf16.gmra.mrb[0].mxu0 %v434
      %v573 = vpop.f32.mrb[0].mxu0
      %v574 = vadd.f32 0.0, %v573
      %v575 = vpop.f32.mrb[0].mxu0
      %v576 = vadd.f32 0.0, %v575
      %v577 = vpop.f32.mrb[0].mxu0
      %v578 = vpop.f32.mrb[0].mxu0
      %579 = vdwg.mxu0
      %580 = vmatprep.subr.bf16.mxu0 %v456
      %581 = vmatpush1.bf16.msra.mxu0 %v453
      %582 = vmatprep.subr.bf16.mxu0 0
      %583 = vmatpush1.bf16.msra.mxu0 0
      %584 = vmatprep.subr.bf16.mxu0 0
      %585 = vmatpush1.bf16.msra.mxu0 0
      %586 = vmatprep.subr.bf16.mxu0 0
      %587 = vmatpush1.bf16.msra.mxu0 0
      %588 = vmatprep.subr.bf16.mxu0 0
      %589 = vmatpush1.bf16.msra.mxu0 0
      %590 = vmatprep.subr.bf16.mxu0 0
      %591 = vmatpush1.bf16.msra.mxu0 0
      %592 = vmatprep.subr.bf16.mxu0 0
      %593 = vmatpush1.bf16.msra.mxu0 0
      %594 = vmatprep.subr.bf16.mxu0 0
      %595 = vmatpush1.bf16.msra.mxu0 0
      %596 = vmatprep.subr.bf16.mxu0 0
      %597 = vmatpush1.bf16.msra.mxu0 0
      %598 = vmatprep.subr.bf16.mxu0 0
      %599 = vmatpush1.bf16.msra.mxu0 0
      %600 = vmatprep.subr.bf16.mxu0 0
      %601 = vmatpush1.bf16.msra.mxu0 0
      %602 = vmatprep.subr.bf16.mxu0 0
      %603 = vmatpush1.bf16.msra.mxu0 0
      %604 = vmatprep.subr.bf16.mxu0 0
      %605 = vmatpush1.bf16.msra.mxu0 0
      %606 = vmatprep.subr.bf16.mxu0 0
      %607 = vmatpush1.bf16.msra.mxu0 0
      %608 = vmatprep.subr.bf16.mxu0 0
      %609 = vmatpush1.bf16.msra.mxu0 0
      %610 = vmatprep.subr.bf16.mxu0 0
      %611 = vmatpush1.bf16.msra.mxu0 0
      %612 = vmatprep.mubr.bf16.mxu0 0
      %613 = vmatmul.mubr.bf16.gmra.mrb[0].mxu0 %v428
      %v614 = vpop.f32.mrb[0].mxu0
      %v615 = vadd.f32 0.0, %v614
      %v616 = vpop.f32.mrb[0].mxu0
      %v617 = vadd.f32 0.0, %v616
      %v618 = vpop.f32.mrb[0].mxu0
      %v619 = vadd.f32 0.0, %v618
      %v620 = vpop.f32.mrb[0].mxu0
      %v621 = vadd.f32 0.0, %v620
      %622 = vmatprep.mubr.bf16.mxu0 0
      %623 = vmatmul.mubr.bf16.gmra.mrb[0].mxu0 %v431
      %v624 = vpop.f32.mrb[0].mxu0
      %v625 = vadd.f32 0.0, %v624
      %v626 = vpop.f32.mrb[0].mxu0
      %v627 = vadd.f32 0.0, %v626
      %v628 = vpop.f32.mrb[0].mxu0
      %v629 = vadd.f32 0.0, %v628
      %v630 = vpop.f32.mrb[0].mxu0
      %v631 = vadd.f32 0.0, %v630
      %632 = vmatprep.mubr.bf16.mxu0 0
      %633 = vmatmul.mubr.bf16.gmra.mrb[0].mxu0 %v434
      %v634 = vpop.f32.mrb[0].mxu0
      %v635 = vadd.f32 0.0, %v634
      %v636 = vpop.f32.mrb[0].mxu0
      %v637 = vadd.f32 0.0, %v636
      %v638 = vpop.f32.mrb[0].mxu0
      %v639 = vpop.f32.mrb[0].mxu0
      %640 = vdwg.mxu0
      %v641 = vadd.f32 %v493, 0.0
      %v642 = vadd.f32 %v495, 0.0
      %v643 = vadd.f32 %v554, 0.0
      %v644 = vadd.f32 %v556, 0.0
      %v645 = vadd.f32 %v615, 0.0
      %v646 = vadd.f32 %v617, 0.0
      %653 = vrot.lane.b32.xlu0 %v497, 127
      %v654 = vpop.permute.xlu0 %653
      %655 = vrot.lane.b32.xlu0 %v499, 127
      %v656 = vpop.permute.xlu0 %655
      %657 = vrot.lane.b32.xlu0 %v558, 127
      %v658 = vpop.permute.xlu0 %657
      %659 = vrot.lane.b32.xlu0 %v560, 127
      %v660 = vpop.permute.xlu0 %659
      %661 = vrot.lane.b32.xlu0 %v619, 127
      %v662 = vpop.permute.xlu0 %661
      %663 = vrot.lane.b32.xlu0 %v621, 127
      %v664 = vpop.permute.xlu0 %663
      %vm665 = vcmask 1039360
      %v666 = vsel %vm665, %v654, %v656
      %v667 = vsel %vm665, %v656, %v658
      %v668 = vsel %vm665, %v658, %v660
      %v669 = vsel %vm665, %v660, %v662
      %v670 = vsel %vm665, %v662, %v664
      %v677 = vadd.f32 %v641, %v666
      %v678 = vadd.f32 %v642, %v667
      %v679 = vadd.f32 %v643, %v668
      %v680 = vadd.f32 %v644, %v669
      %v681 = vadd.f32 %v645, %v670
      %v682 = vadd.f32 %v646, %v664
      %689 = vrot.lane.b32.xlu0 %v503, 126
      %v690 = vpop.permute.xlu0 %689
      %691 = vrot.lane.b32.xlu0 %v505, 126
      %v692 = vpop.permute.xlu0 %691
      %693 = vrot.lane.b32.xlu0 %v564, 126
      %v694 = vpop.permute.xlu0 %693
      %695 = vrot.lane.b32.xlu0 %v566, 126
      %v696 = vpop.permute.xlu0 %695
      %697 = vrot.lane.b32.xlu0 %v625, 126
      %v698 = vpop.permute.xlu0 %697
      %699 = vrot.lane.b32.xlu0 %v627, 126
      %v700 = vpop.permute.xlu0 %699
      %vm701 = vcmask 1031168
      %v702 = vsel %vm701, %v690, %v692
      %v703 = vsel %vm701, %v692, %v694
      %v704 = vsel %vm701, %v694, %v696
      %v705 = vsel %vm701, %v696, %v698
      %v706 = vsel %vm701, %v698, %v700
      %v713 = vadd.f32 %v677, %v702
      %v714 = vadd.f32 %v678, %v703
      %v715 = vadd.f32 %v679, %v704
      %v716 = vadd.f32 %v680, %v705
      %v717 = vadd.f32 %v681, %v706
      %v718 = vadd.f32 %v682, %v700
      %725 = vrot.lane.b32.xlu0 %v507, 125
      %v726 = vpop.permute.xlu0 %725
      %727 = vrot.lane.b32.xlu0 %v509, 125
      %v728 = vpop.permute.xlu0 %727
      %729 = vrot.lane.b32.xlu0 %v568, 125
      %v730 = vpop.permute.xlu0 %729
      %731 = vrot.lane.b32.xlu0 %v570, 125
      %v732 = vpop.permute.xlu0 %731
      %733 = vrot.lane.b32.xlu0 %v629, 125
      %v734 = vpop.permute.xlu0 %733
      %735 = vrot.lane.b32.xlu0 %v631, 125
      %v736 = vpop.permute.xlu0 %735
      %vm737 = vcmask 1022976
      %v738 = vsel %vm737, %v726, %v728
      %v739 = vsel %vm737, %v728, %v730
      %v740 = vsel %vm737, %v730, %v732
      %v741 = vsel %vm737, %v732, %v734
      %v742 = vsel %vm737, %v734, %v736
      %v749 = vadd.f32 %v713, %v738
      %v750 = vadd.f32 %v714, %v739
      %v751 = vadd.f32 %v715, %v740
      %v752 = vadd.f32 %v716, %v741
      %v753 = vadd.f32 %v717, %v742
      %v754 = vadd.f32 %v718, %v736
      %761 = vrot.lane.b32.xlu0 %v513, 124
      %v762 = vpop.permute.xlu0 %761
      %763 = vrot.lane.b32.xlu0 %v515, 124
      %v764 = vpop.permute.xlu0 %763
      %765 = vrot.lane.b32.xlu0 %v574, 124
      %v766 = vpop.permute.xlu0 %765
      %767 = vrot.lane.b32.xlu0 %v576, 124
      %v768 = vpop.permute.xlu0 %767
      %769 = vrot.lane.b32.xlu0 %v635, 124
      %v770 = vpop.permute.xlu0 %769
      %771 = vrot.lane.b32.xlu0 %v637, 124
      %v772 = vpop.permute.xlu0 %771
      %vm773 = vcmask 1014784
      %v774 = vsel %vm773, %v762, %v764
      %v775 = vsel %vm773, %v764, %v766
      %v776 = vsel %vm773, %v766, %v768
      %v777 = vsel %vm773, %v768, %v770
      %v778 = vsel %vm773, %v770, %v772
      %v785 = vadd.f32 %v749, %v774
      %v786 = vadd.f32 %v750, %v775
      %v787 = vadd.f32 %v751, %v776
      %v788 = vadd.f32 %v752, %v777
      %v789 = vadd.f32 %v753, %v778
      %v790 = vadd.f32 %v754, %v772
      %v791 = vld [vmem:[%s1 + $0x14] sm:$0xf]
      %v792 = vld [vmem:[%s1 + $0x18] sm:$0xf]
      %v793 = vld [vmem:[%s1 + $0x1c] sm:$0xf]
      %v794 = vld [vmem:[%s1 + $0x20] sm:$0xf]
      %v795 = vld [vmem:[%s1 + $0x24] sm:$0xf]
      %v801 = vunpack.c.l.b16 %v791
      %v802 = vunpack.c.l.b16 %v792
      %v803 = vunpack.c.l.b16 %v793
      %v804 = vunpack.c.l.b16 %v794
      %v805 = vunpack.c.l.b16 %v795
      %v806 = vpack.c.b16 %v802, %v801
      %v807 = vpack.c.b16 %v804, %v803
      %v808 = vpack.c.b16 %v805, %v805
      %v810 = vsel %vm426, %v806, 0
      %v813 = vsel %vm426, %v807, 0
      %v816 = vsel %vm426, %v808, 0
      %818 = vmatprep.subr.bf16.mxu0 %v444
      %819 = vmatpush1.bf16.msra.mxu0 %v441
      %820 = vmatprep.subr.bf16.mxu0 0
      %821 = vmatpush1.bf16.msra.mxu0 0
      %822 = vmatprep.subr.bf16.mxu0 0
      %823 = vmatpush1.bf16.msra.mxu0 0
      %824 = vmatprep.subr.bf16.mxu0 0
      %825 = vmatpush1.bf16.msra.mxu0 0
      %826 = vmatprep.subr.bf16.mxu0 0
      %827 = vmatpush1.bf16.msra.mxu0 0
      %828 = vmatprep.subr.bf16.mxu0 0
      %829 = vmatpush1.bf16.msra.mxu0 0
      %830 = vmatprep.subr.bf16.mxu0 0
      %831 = vmatpush1.bf16.msra.mxu0 0
      %832 = vmatprep.subr.bf16.mxu0 0
      %833 = vmatpush1.bf16.msra.mxu0 0
      %834 = vmatprep.subr.bf16.mxu0 0
      %835 = vmatpush1.bf16.msra.mxu0 0
      %836 = vmatprep.subr.bf16.mxu0 0
      %837 = vmatpush1.bf16.msra.mxu0 0
      %838 = vmatprep.subr.bf16.mxu0 0
      %839 = vmatpush1.bf16.msra.mxu0 0
      %840 = vmatprep.subr.bf16.mxu0 0
      %841 = vmatpush1.bf16.msra.mxu0 0
      %842 = vmatprep.subr.bf16.mxu0 0
      %843 = vmatpush1.bf16.msra.mxu0 0
      %844 = vmatprep.subr.bf16.mxu0 0
      %845 = vmatpush1.bf16.msra.mxu0 0
      %846 = vmatprep.subr.bf16.mxu0 0
      %847 = vmatpush1.bf16.msra.mxu0 0
      %848 = vmatprep.subr.bf16.mxu0 0
      %849 = vmatpush1.bf16.msra.mxu0 0
      %850 = vmatprep.mubr.bf16.mxu0 0
      %851 = vmatmul.mubr.bf16.gmra.mrb[0].mxu0 %v810
      %v852 = vpop.f32.mrb[0].mxu0
      %v853 = vadd.f32 0.0, %v852
      %v854 = vpop.f32.mrb[0].mxu0
      %v855 = vadd.f32 0.0, %v854
      %v856 = vpop.f32.mrb[0].mxu0
      %v857 = vadd.f32 0.0, %v856
      %v858 = vpop.f32.mrb[0].mxu0
      %v859 = vadd.f32 0.0, %v858
      %860 = vmatprep.mubr.bf16.mxu0 0
      %861 = vmatmul.mubr.bf16.gmra.mrb[0].mxu0 %v813
      %v862 = vpop.f32.mrb[0].mxu0
      %v863 = vadd.f32 0.0, %v862
      %v864 = vpop.f32.mrb[0].mxu0
      %v865 = vadd.f32 0.0, %v864
      %v866 = vpop.f32.mrb[0].mxu0
      %v867 = vadd.f32 0.0, %v866
      %v868 = vpop.f32.mrb[0].mxu0
      %v869 = vadd.f32 0.0, %v868
      %870 = vmatprep.mubr.bf16.mxu0 0
      %871 = vmatmul.mubr.bf16.gmra.mrb[0].mxu0 %v816
      %v872 = vpop.f32.mrb[0].mxu0
      %v873 = vadd.f32 0.0, %v872
      %v874 = vpop.f32.mrb[0].mxu0
      %v875 = vadd.f32 0.0, %v874
      %v876 = vpop.f32.mrb[0].mxu0
      %v877 = vpop.f32.mrb[0].mxu0
      %878 = vdwg.mxu0
      %879 = vmatprep.subr.bf16.mxu0 %v450
      %880 = vmatpush1.bf16.msra.mxu0 %v447
      %881 = vmatprep.subr.bf16.mxu0 0
      %882 = vmatpush1.bf16.msra.mxu0 0
      %883 = vmatprep.subr.bf16.mxu0 0
      %884 = vmatpush1.bf16.msra.mxu0 0
      %885 = vmatprep.subr.bf16.mxu0 0
      %886 = vmatpush1.bf16.msra.mxu0 0
      %887 = vmatprep.subr.bf16.mxu0 0
      %888 = vmatpush1.bf16.msra.mxu0 0
      %889 = vmatprep.subr.bf16.mxu0 0
      %890 = vmatpush1.bf16.msra.mxu0 0
      %891 = vmatprep.subr.bf16.mxu0 0
      %892 = vmatpush1.bf16.msra.mxu0 0
      %893 = vmatprep.subr.bf16.mxu0 0
      %894 = vmatpush1.bf16.msra.mxu0 0
      %895 = vmatprep.subr.bf16.mxu0 0
      %896 = vmatpush1.bf16.msra.mxu0 0
      %897 = vmatprep.subr.bf16.mxu0 0
      %898 = vmatpush1.bf16.msra.mxu0 0
      %899 = vmatprep.subr.bf16.mxu0 0
      %900 = vmatpush1.bf16.msra.mxu0 0
      %901 = vmatprep.subr.bf16.mxu0 0
      %902 = vmatpush1.bf16.msra.mxu0 0
      %903 = vmatprep.subr.bf16.mxu0 0
      %904 = vmatpush1.bf16.msra.mxu0 0
      %905 = vmatprep.subr.bf16.mxu0 0
      %906 = vmatpush1.bf16.msra.mxu0 0
      %907 = vmatprep.subr.bf16.mxu0 0
      %908 = vmatpush1.bf16.msra.mxu0 0
      %909 = vmatprep.subr.bf16.mxu0 0
      %910 = vmatpush1.bf16.msra.mxu0 0
      %911 = vmatprep.mubr.bf16.mxu0 0
      %912 = vmatmul.mubr.bf16.gmra.mrb[0].mxu0 %v810
      %v913 = vpop.f32.mrb[0].mxu0
      %v914 = vadd.f32 0.0, %v913
      %v915 = vpop.f32.mrb[0].mxu0
      %v916 = vadd.f32 0.0, %v915
      %v917 = vpop.f32.mrb[0].mxu0
      %v918 = vadd.f32 0.0, %v917
      %v919 = vpop.f32.mrb[0].mxu0
      %v920 = vadd.f32 0.0, %v919
      %921 = vmatprep.mubr.bf16.mxu0 0
      %922 = vmatmul.mubr.bf16.gmra.mrb[0].mxu0 %v813
      %v923 = vpop.f32.mrb[0].mxu0
      %v924 = vadd.f32 0.0, %v923
      %v925 = vpop.f32.mrb[0].mxu0
      %v926 = vadd.f32 0.0, %v925
      %v927 = vpop.f32.mrb[0].mxu0
      %v928 = vadd.f32 0.0, %v927
      %v929 = vpop.f32.mrb[0].mxu0
      %v930 = vadd.f32 0.0, %v929
      %931 = vmatprep.mubr.bf16.mxu0 0
      %932 = vmatmul.mubr.bf16.gmra.mrb[0].mxu0 %v816
      %v933 = vpop.f32.mrb[0].mxu0
      %v934 = vadd.f32 0.0, %v933
      %v935 = vpop.f32.mrb[0].mxu0
      %v936 = vadd.f32 0.0, %v935
      %v937 = vpop.f32.mrb[0].mxu0
      %v938 = vpop.f32.mrb[0].mxu0
      %939 = vdwg.mxu0
      %940 = vmatprep.subr.bf16.mxu0 %v456
      %941 = vmatpush1.bf16.msra.mxu0 %v453
      %942 = vmatprep.subr.bf16.mxu0 0
      %943 = vmatpush1.bf16.msra.mxu0 0
      %944 = vmatprep.subr.bf16.mxu0 0
      %945 = vmatpush1.bf16.msra.mxu0 0
      %946 = vmatprep.subr.bf16.mxu0 0
      %947 = vmatpush1.bf16.msra.mxu0 0
      %948 = vmatprep.subr.bf16.mxu0 0
      %949 = vmatpush1.bf16.msra.mxu0 0
      %950 = vmatprep.subr.bf16.mxu0 0
      %951 = vmatpush1.bf16.msra.mxu0 0
      %952 = vmatprep.subr.bf16.mxu0 0
      %953 = vmatpush1.bf16.msra.mxu0 0
      %954 = vmatprep.subr.bf16.mxu0 0
      %955 = vmatpush1.bf16.msra.mxu0 0
      %956 = vmatprep.subr.bf16.mxu0 0
      %957 = vmatpush1.bf16.msra.mxu0 0
      %958 = vmatprep.subr.bf16.mxu0 0
      %959 = vmatpush1.bf16.msra.mxu0 0
      %960 = vmatprep.subr.bf16.mxu0 0
      %961 = vmatpush1.bf16.msra.mxu0 0
      %962 = vmatprep.subr.bf16.mxu0 0
      %963 = vmatpush1.bf16.msra.mxu0 0
      %964 = vmatprep.subr.bf16.mxu0 0
      %965 = vmatpush1.bf16.msra.mxu0 0
      %966 = vmatprep.subr.bf16.mxu0 0
      %967 = vmatpush1.bf16.msra.mxu0 0
      %968 = vmatprep.subr.bf16.mxu0 0
      %969 = vmatpush1.bf16.msra.mxu0 0
      %970 = vmatprep.subr.bf16.mxu0 0
      %971 = vmatpush1.bf16.msra.mxu0 0
      %972 = vmatprep.mubr.bf16.mxu0 0
      %973 = vmatmul.mubr.bf16.gmra.mrb[0].mxu0 %v810
      %v974 = vpop.f32.mrb[0].mxu0
      %v975 = vadd.f32 0.0, %v974
      %v976 = vpop.f32.mrb[0].mxu0
      %v977 = vadd.f32 0.0, %v976
      %v978 = vpop.f32.mrb[0].mxu0
      %v979 = vadd.f32 0.0, %v978
      %v980 = vpop.f32.mrb[0].mxu0
      %v981 = vadd.f32 0.0, %v980
      %982 = vmatprep.mubr.bf16.mxu0 0
      %983 = vmatmul.mubr.bf16.gmra.mrb[0].mxu0 %v813
      %v984 = vpop.f32.mrb[0].mxu0
      %v985 = vadd.f32 0.0, %v984
      %v986 = vpop.f32.mrb[0].mxu0
      %v987 = vadd.f32 0.0, %v986
      %v988 = vpop.f32.mrb[0].mxu0
      %v989 = vadd.f32 0.0, %v988
      %v990 = vpop.f32.mrb[0].mxu0
      %v991 = vadd.f32 0.0, %v990
      %992 = vmatprep.mubr.bf16.mxu0 0
      %993 = vmatmul.mubr.bf16.gmra.mrb[0].mxu0 %v816
      %v994 = vpop.f32.mrb[0].mxu0
      %v995 = vadd.f32 0.0, %v994
      %v996 = vpop.f32.mrb[0].mxu0
      %v997 = vadd.f32 0.0, %v996
      %v998 = vpop.f32.mrb[0].mxu0
      %v999 = vpop.f32.mrb[0].mxu0
      %1000 = vdwg.mxu0
      %1007 = vrot.lane.b32.xlu0 %v853, 100
      %v1008 = vpop.permute.xlu0 %1007
      %1009 = vrot.lane.b32.xlu0 %v855, 100
      %v1010 = vpop.permute.xlu0 %1009
      %1011 = vrot.lane.b32.xlu0 %v914, 100
      %v1012 = vpop.permute.xlu0 %1011
      %1013 = vrot.lane.b32.xlu0 %v916, 100
      %v1014 = vpop.permute.xlu0 %1013
      %1015 = vrot.lane.b32.xlu0 %v975, 100
      %v1016 = vpop.permute.xlu0 %1015
      %1017 = vrot.lane.b32.xlu0 %v977, 100
      %v1018 = vpop.permute.xlu0 %1017
      %vm1019 = vcmask 818176
      %v1020 = vsel %vm1019, %v1008, %v1010
      %v1021 = vsel %vm1019, %v1010, %v1012
      %v1022 = vsel %vm1019, %v1012, %v1014
      %v1023 = vsel %vm1019, %v1014, %v1016
      %v1024 = vsel %vm1019, %v1016, %v1018
      %v1031 = vadd.f32 %v785, %v1020
      %v1032 = vadd.f32 %v786, %v1021
      %v1033 = vadd.f32 %v787, %v1022
      %v1034 = vadd.f32 %v788, %v1023
      %v1035 = vadd.f32 %v789, %v1024
      %v1036 = vadd.f32 %v790, %v1018
      %1043 = vrot.lane.b32.xlu0 %v857, 99
      %v1044 = vpop.permute.xlu0 %1043
      %1045 = vrot.lane.b32.xlu0 %v859, 99
      %v1046 = vpop.permute.xlu0 %1045
      %1047 = vrot.lane.b32.xlu0 %v918, 99
      %v1048 = vpop.permute.xlu0 %1047
      %1049 = vrot.lane.b32.xlu0 %v920, 99
      %v1050 = vpop.permute.xlu0 %1049
      %1051 = vrot.lane.b32.xlu0 %v979, 99
      %v1052 = vpop.permute.xlu0 %1051
      %1053 = vrot.lane.b32.xlu0 %v981, 99
      %v1054 = vpop.permute.xlu0 %1053
      %vm1055 = vcmask 809984
      %v1056 = vsel %vm1055, %v1044, %v1046
      %v1057 = vsel %vm1055, %v1046, %v1048
      %v1058 = vsel %vm1055, %v1048, %v1050
      %v1059 = vsel %vm1055, %v1050, %v1052
      %v1060 = vsel %vm1055, %v1052, %v1054
      %v1067 = vadd.f32 %v1031, %v1056
      %v1068 = vadd.f32 %v1032, %v1057
      %v1069 = vadd.f32 %v1033, %v1058
      %v1070 = vadd.f32 %v1034, %v1059
      %v1071 = vadd.f32 %v1035, %v1060
      %v1072 = vadd.f32 %v1036, %v1054
      %1079 = vrot.lane.b32.xlu0 %v863, 98
      %v1080 = vpop.permute.xlu0 %1079
      %1081 = vrot.lane.b32.xlu0 %v865, 98
      %v1082 = vpop.permute.xlu0 %1081
      %1083 = vrot.lane.b32.xlu0 %v924, 98
      %v1084 = vpop.permute.xlu0 %1083
      %1085 = vrot.lane.b32.xlu0 %v926, 98
      %v1086 = vpop.permute.xlu0 %1085
      %1087 = vrot.lane.b32.xlu0 %v985, 98
      %v1088 = vpop.permute.xlu0 %1087
      %1089 = vrot.lane.b32.xlu0 %v987, 98
      %v1090 = vpop.permute.xlu0 %1089
      %vm1091 = vcmask 801792
      %v1092 = vsel %vm1091, %v1080, %v1082
      %v1093 = vsel %vm1091, %v1082, %v1084
      %v1094 = vsel %vm1091, %v1084, %v1086
      %v1095 = vsel %vm1091, %v1086, %v1088
      %v1096 = vsel %vm1091, %v1088, %v1090
      %v1103 = vadd.f32 %v1067, %v1092
      %v1104 = vadd.f32 %v1068, %v1093
      %v1105 = vadd.f32 %v1069, %v1094
      %v1106 = vadd.f32 %v1070, %v1095
      %v1107 = vadd.f32 %v1071, %v1096
      %v1108 = vadd.f32 %v1072, %v1090
      %1115 = vrot.lane.b32.xlu0 %v867, 97
      %v1116 = vpop.permute.xlu0 %1115
      %1117 = vrot.lane.b32.xlu0 %v869, 97
      %v1118 = vpop.permute.xlu0 %1117
      %1119 = vrot.lane.b32.xlu0 %v928, 97
      %v1120 = vpop.permute.xlu0 %1119
      %1121 = vrot.lane.b32.xlu0 %v930, 97
      %v1122 = vpop.permute.xlu0 %1121
      %1123 = vrot.lane.b32.xlu0 %v989, 97
      %v1124 = vpop.permute.xlu0 %1123
      %1125 = vrot.lane.b32.xlu0 %v991, 97
      %v1126 = vpop.permute.xlu0 %1125
      %vm1127 = vcmask 793600
      %v1128 = vsel %vm1127, %v1116, %v1118
      %v1129 = vsel %vm1127, %v1118, %v1120
      %v1130 = vsel %vm1127, %v1120, %v1122
      %v1131 = vsel %vm1127, %v1122, %v1124
      %v1132 = vsel %vm1127, %v1124, %v1126
      %v1139 = vadd.f32 %v1103, %v1128
      %v1140 = vadd.f32 %v1104, %v1129
      %v1141 = vadd.f32 %v1105, %v1130
      %v1142 = vadd.f32 %v1106, %v1131
      %v1143 = vadd.f32 %v1107, %v1132
      %v1144 = vadd.f32 %v1108, %v1126
      %1151 = vrot.lane.b32.xlu0 %v873, 96
      %v1152 = vpop.permute.xlu0 %1151
      %1153 = vrot.lane.b32.xlu0 %v875, 96
      %v1154 = vpop.permute.xlu0 %1153
      %1155 = vrot.lane.b32.xlu0 %v934, 96
      %v1156 = vpop.permute.xlu0 %1155
      %1157 = vrot.lane.b32.xlu0 %v936, 96
      %v1158 = vpop.permute.xlu0 %1157
      %1159 = vrot.lane.b32.xlu0 %v995, 96
      %v1160 = vpop.permute.xlu0 %1159
      %1161 = vrot.lane.b32.xlu0 %v997, 96
      %v1162 = vpop.permute.xlu0 %1161
      %vm1163 = vcmask 785408
      %v1164 = vsel %vm1163, %v1152, %v1154
      %v1165 = vsel %vm1163, %v1154, %v1156
      %v1166 = vsel %vm1163, %v1156, %v1158
      %v1167 = vsel %vm1163, %v1158, %v1160
      %v1168 = vsel %vm1163, %v1160, %v1162
      %v1175 = vadd.f32 %v1139, %v1164
      %v1176 = vadd.f32 %v1140, %v1165
      %v1177 = vadd.f32 %v1141, %v1166
      %v1178 = vadd.f32 %v1142, %v1167
      %v1179 = vadd.f32 %v1143, %v1168
      %v1180 = vadd.f32 %v1144, %v1162
      %v1181 = vld [vmem:[%s1 + $0x28] sm:$0xf]
      %v1182 = vld [vmem:[%s1 + $0x2c] sm:$0xf]
      %v1183 = vld [vmem:[%s1 + $0x30] sm:$0xf]
      %v1184 = vld [vmem:[%s1 + $0x34] sm:$0xf]
      %v1185 = vld [vmem:[%s1 + $0x38] sm:$0xf]
      %v1191 = vunpack.c.l.b16 %v1181
      %v1192 = vunpack.c.l.b16 %v1182
      %v1193 = vunpack.c.l.b16 %v1183
      %v1194 = vunpack.c.l.b16 %v1184
      %v1195 = vunpack.c.l.b16 %v1185
      %v1196 = vpack.c.b16 %v1192, %v1191
      %v1197 = vpack.c.b16 %v1194, %v1193
      %v1198 = vpack.c.b16 %v1195, %v1195
      %v1200 = vsel %vm426, %v1196, 0
      %v1203 = vsel %vm426, %v1197, 0
      %v1206 = vsel %vm426, %v1198, 0
      %1208 = vmatprep.subr.bf16.mxu0 %v444
      %1209 = vmatpush1.bf16.msra.mxu0 %v441
      %1210 = vmatprep.subr.bf16.mxu0 0
      %1211 = vmatpush1.bf16.msra.mxu0 0
      %1212 = vmatprep.subr.bf16.mxu0 0
      %1213 = vmatpush1.bf16.msra.mxu0 0
      %1214 = vmatprep.subr.bf16.mxu0 0
      %1215 = vmatpush1.bf16.msra.mxu0 0
      %1216 = vmatprep.subr.bf16.mxu0 0
      %1217 = vmatpush1.bf16.msra.mxu0 0
      %1218 = vmatprep.subr.bf16.mxu0 0
      %1219 = vmatpush1.bf16.msra.mxu0 0
      %1220 = vmatprep.subr.bf16.mxu0 0
      %1221 = vmatpush1.bf16.msra.mxu0 0
      %1222 = vmatprep.subr.bf16.mxu0 0
      %1223 = vmatpush1.bf16.msra.mxu0 0
      %1224 = vmatprep.subr.bf16.mxu0 0
      %1225 = vmatpush1.bf16.msra.mxu0 0
      %1226 = vmatprep.subr.bf16.mxu0 0
      %1227 = vmatpush1.bf16.msra.mxu0 0
      %1228 = vmatprep.subr.bf16.mxu0 0
      %1229 = vmatpush1.bf16.msra.mxu0 0
      %1230 = vmatprep.subr.bf16.mxu0 0
      %1231 = vmatpush1.bf16.msra.mxu0 0
      %1232 = vmatprep.subr.bf16.mxu0 0
      %1233 = vmatpush1.bf16.msra.mxu0 0
      %1234 = vmatprep.subr.bf16.mxu0 0
      %1235 = vmatpush1.bf16.msra.mxu0 0
      %1236 = vmatprep.subr.bf16.mxu0 0
      %1237 = vmatpush1.bf16.msra.mxu0 0
      %1238 = vmatprep.subr.bf16.mxu0 0
      %1239 = vmatpush1.bf16.msra.mxu0 0
      %1240 = vmatprep.mubr.bf16.mxu0 0
      %1241 = vmatmul.mubr.bf16.gmra.mrb[0].mxu0 %v1200
      %v1242 = vpop.f32.mrb[0].mxu0
      %v1243 = vadd.f32 0.0, %v1242
      %v1244 = vpop.f32.mrb[0].mxu0
      %v1245 = vadd.f32 0.0, %v1244
      %v1246 = vpop.f32.mrb[0].mxu0
      %v1247 = vadd.f32 0.0, %v1246
      %v1248 = vpop.f32.mrb[0].mxu0
      %v1249 = vadd.f32 0.0, %v1248
      %1250 = vmatprep.mubr.bf16.mxu0 0
      %1251 = vmatmul.mubr.bf16.gmra.mrb[0].mxu0 %v1203
      %v1252 = vpop.f32.mrb[0].mxu0
      %v1253 = vadd.f32 0.0, %v1252
      %v1254 = vpop.f32.mrb[0].mxu0
      %v1255 = vadd.f32 0.0, %v1254
      %v1256 = vpop.f32.mrb[0].mxu0
      %v1257 = vadd.f32 0.0, %v1256
      %v1258 = vpop.f32.mrb[0].mxu0
      %v1259 = vadd.f32 0.0, %v1258
      %1260 = vmatprep.mubr.bf16.mxu0 0
      %1261 = vmatmul.mubr.bf16.gmra.mrb[0].mxu0 %v1206
      %v1262 = vpop.f32.mrb[0].mxu0
      %v1263 = vadd.f32 0.0, %v1262
      %v1264 = vpop.f32.mrb[0].mxu0
      %v1265 = vadd.f32 0.0, %v1264
      %v1266 = vpop.f32.mrb[0].mxu0
      %v1267 = vpop.f32.mrb[0].mxu0
      %1268 = vdwg.mxu0
      %1269 = vmatprep.subr.bf16.mxu0 %v450
      %1270 = vmatpush1.bf16.msra.mxu0 %v447
      %1271 = vmatprep.subr.bf16.mxu0 0
      %1272 = vmatpush1.bf16.msra.mxu0 0
      %1273 = vmatprep.subr.bf16.mxu0 0
      %1274 = vmatpush1.bf16.msra.mxu0 0
      %1275 = vmatprep.subr.bf16.mxu0 0
      %1276 = vmatpush1.bf16.msra.mxu0 0
      %1277 = vmatprep.subr.bf16.mxu0 0
      %1278 = vmatpush1.bf16.msra.mxu0 0
      %1279 = vmatprep.subr.bf16.mxu0 0
      %1280 = vmatpush1.bf16.msra.mxu0 0
      %1281 = vmatprep.subr.bf16.mxu0 0
      %1282 = vmatpush1.bf16.msra.mxu0 0
      %1283 = vmatprep.subr.bf16.mxu0 0
      %1284 = vmatpush1.bf16.msra.mxu0 0
      %1285 = vmatprep.subr.bf16.mxu0 0
      %1286 = vmatpush1.bf16.msra.mxu0 0
      %1287 = vmatprep.subr.bf16.mxu0 0
      %1288 = vmatpush1.bf16.msra.mxu0 0
      %1289 = vmatprep.subr.bf16.mxu0 0
      %1290 = vmatpush1.bf16.msra.mxu0 0
      %1291 = vmatprep.subr.bf16.mxu0 0
      %1292 = vmatpush1.bf16.msra.mxu0 0
      %1293 = vmatprep.subr.bf16.mxu0 0
      %1294 = vmatpush1.bf16.msra.mxu0 0
      %1295 = vmatprep.subr.bf16.mxu0 0
      %1296 = vmatpush1.bf16.msra.mxu0 0
      %1297 = vmatprep.subr.bf16.mxu0 0
      %1298 = vmatpush1.bf16.msra.mxu0 0
      %1299 = vmatprep.subr.bf16.mxu0 0
      %1300 = vmatpush1.bf16.msra.mxu0 0
      %1301 = vmatprep.mubr.bf16.mxu0 0
      %1302 = vmatmul.mubr.bf16.gmra.mrb[0].mxu0 %v1200
      %v1303 = vpop.f32.mrb[0].mxu0
      %v1304 = vadd.f32 0.0, %v1303
      %v1305 = vpop.f32.mrb[0].mxu0
      %v1306 = vadd.f32 0.0, %v1305
      %v1307 = vpop.f32.mrb[0].mxu0
      %v1308 = vadd.f32 0.0, %v1307
      %v1309 = vpop.f32.mrb[0].mxu0
      %v1310 = vadd.f32 0.0, %v1309
      %1311 = vmatprep.mubr.bf16.mxu0 0
      %1312 = vmatmul.mubr.bf16.gmra.mrb[0].mxu0 %v1203
      %v1313 = vpop.f32.mrb[0].mxu0
      %v1314 = vadd.f32 0.0, %v1313
      %v1315 = vpop.f32.mrb[0].mxu0
      %v1316 = vadd.f32 0.0, %v1315
      %v1317 = vpop.f32.mrb[0].mxu0
      %v1318 = vadd.f32 0.0, %v1317
      %v1319 = vpop.f32.mrb[0].mxu0
      %v1320 = vadd.f32 0.0, %v1319
      %1321 = vmatprep.mubr.bf16.mxu0 0
      %1322 = vmatmul.mubr.bf16.gmra.mrb[0].mxu0 %v1206
      %v1323 = vpop.f32.mrb[0].mxu0
      %v1324 = vadd.f32 0.0, %v1323
      %v1325 = vpop.f32.mrb[0].mxu0
      %v1326 = vadd.f32 0.0, %v1325
      %v1327 = vpop.f32.mrb[0].mxu0
      %v1328 = vpop.f32.mrb[0].mxu0
      %1329 = vdwg.mxu0
      %1330 = vmatprep.subr.bf16.mxu0 %v456
      %1331 = vmatpush1.bf16.msra.mxu0 %v453
      %1332 = vmatprep.subr.bf16.mxu0 0
      %1333 = vmatpush1.bf16.msra.mxu0 0
      %1334 = vmatprep.subr.bf16.mxu0 0
      %1335 = vmatpush1.bf16.msra.mxu0 0
      %1336 = vmatprep.subr.bf16.mxu0 0
      %1337 = vmatpush1.bf16.msra.mxu0 0
      %1338 = vmatprep.subr.bf16.mxu0 0
      %1339 = vmatpush1.bf16.msra.mxu0 0
      %1340 = vmatprep.subr.bf16.mxu0 0
      %1341 = vmatpush1.bf16.msra.mxu0 0
      %1342 = vmatprep.subr.bf16.mxu0 0
      %1343 = vmatpush1.bf16.msra.mxu0 0
      %1344 = vmatprep.subr.bf16.mxu0 0
      %1345 = vmatpush1.bf16.msra.mxu0 0
      %1346 = vmatprep.subr.bf16.mxu0 0
      %1347 = vmatpush1.bf16.msra.mxu0 0
      %1348 = vmatprep.subr.bf16.mxu0 0
      %1349 = vmatpush1.bf16.msra.mxu0 0
      %1350 = vmatprep.subr.bf16.mxu0 0
      %1351 = vmatpush1.bf16.msra.mxu0 0
      %1352 = vmatprep.subr.bf16.mxu0 0
      %1353 = vmatpush1.bf16.msra.mxu0 0
      %1354 = vmatprep.subr.bf16.mxu0 0
      %1355 = vmatpush1.bf16.msra.mxu0 0
      %1356 = vmatprep.subr.bf16.mxu0 0
      %1357 = vmatpush1.bf16.msra.mxu0 0
      %1358 = vmatprep.subr.bf16.mxu0 0
      %1359 = vmatpush1.bf16.msra.mxu0 0
      %1360 = vmatprep.subr.bf16.mxu0 0
      %1361 = vmatpush1.bf16.msra.mxu0 0
      %1362 = vmatprep.mubr.bf16.mxu0 0
      %1363 = vmatmul.mubr.bf16.gmra.mrb[0].mxu0 %v1200
      %v1364 = vpop.f32.mrb[0].mxu0
      %v1365 = vadd.f32 0.0, %v1364
      %v1366 = vpop.f32.mrb[0].mxu0
      %v1367 = vadd.f32 0.0, %v1366
      %v1368 = vpop.f32.mrb[0].mxu0
      %v1369 = vadd.f32 0.0, %v1368
      %v1370 = vpop.f32.mrb[0].mxu0
      %v1371 = vadd.f32 0.0, %v1370
      %1372 = vmatprep.mubr.bf16.mxu0 0
      %1373 = vmatmul.mubr.bf16.gmra.mrb[0].mxu0 %v1203
      %v1374 = vpop.f32.mrb[0].mxu0
      %v1375 = vadd.f32 0.0, %v1374
      %v1376 = vpop.f32.mrb[0].mxu0
      %v1377 = vadd.f32 0.0, %v1376
      %v1378 = vpop.f32.mrb[0].mxu0
      %v1379 = vadd.f32 0.0, %v1378
      %v1380 = vpop.f32.mrb[0].mxu0
      %v1381 = vadd.f32 0.0, %v1380
      %1382 = vmatprep.mubr.bf16.mxu0 0
      %1383 = vmatmul.mubr.bf16.gmra.mrb[0].mxu0 %v1206
      %v1384 = vpop.f32.mrb[0].mxu0
      %v1385 = vadd.f32 0.0, %v1384
      %v1386 = vpop.f32.mrb[0].mxu0
      %v1387 = vadd.f32 0.0, %v1386
      %v1388 = vpop.f32.mrb[0].mxu0
      %v1389 = vpop.f32.mrb[0].mxu0
      %1390 = vdwg.mxu0
      %1397 = vrot.lane.b32.xlu0 %v1243, 72
      %v1398 = vpop.permute.xlu0 %1397
      %1399 = vrot.lane.b32.xlu0 %v1245, 72
      %v1400 = vpop.permute.xlu0 %1399
      %1401 = vrot.lane.b32.xlu0 %v1304, 72
      %v1402 = vpop.permute.xlu0 %1401
      %1403 = vrot.lane.b32.xlu0 %v1306, 72
      %v1404 = vpop.permute.xlu0 %1403
      %1405 = vrot.lane.b32.xlu0 %v1365, 72
      %v1406 = vpop.permute.xlu0 %1405
      %1407 = vrot.lane.b32.xlu0 %v1367, 72
      %v1408 = vpop.permute.xlu0 %1407
      %vm1409 = vcmask 588800
      %v1410 = vsel %vm1409, %v1398, %v1400
      %v1411 = vsel %vm1409, %v1400, %v1402
      %v1412 = vsel %vm1409, %v1402, %v1404
      %v1413 = vsel %vm1409, %v1404, %v1406
      %v1414 = vsel %vm1409, %v1406, %v1408
      %v1421 = vadd.f32 %v1175, %v1410
      %v1422 = vadd.f32 %v1176, %v1411
      %v1423 = vadd.f32 %v1177, %v1412
      %v1424 = vadd.f32 %v1178, %v1413
      %v1425 = vadd.f32 %v1179, %v1414
      %v1426 = vadd.f32 %v1180, %v1408
      %1433 = vrot.lane.b32.xlu0 %v1247, 71
      %v1434 = vpop.permute.xlu0 %1433
      %1435 = vrot.lane.b32.xlu0 %v1249, 71
      %v1436 = vpop.permute.xlu0 %1435
      %1437 = vrot.lane.b32.xlu0 %v1308, 71
      %v1438 = vpop.permute.xlu0 %1437
      %1439 = vrot.lane.b32.xlu0 %v1310, 71
      %v1440 = vpop.permute.xlu0 %1439
      %1441 = vrot.lane.b32.xlu0 %v1369, 71
      %v1442 = vpop.permute.xlu0 %1441
      %1443 = vrot.lane.b32.xlu0 %v1371, 71
      %v1444 = vpop.permute.xlu0 %1443
      %vm1445 = vcmask 580608
      %v1446 = vsel %vm1445, %v1434, %v1436
      %v1447 = vsel %vm1445, %v1436, %v1438
      %v1448 = vsel %vm1445, %v1438, %v1440
      %v1449 = vsel %vm1445, %v1440, %v1442
      %v1450 = vsel %vm1445, %v1442, %v1444
      %v1457 = vadd.f32 %v1421, %v1446
      %v1458 = vadd.f32 %v1422, %v1447
      %v1459 = vadd.f32 %v1423, %v1448
      %v1460 = vadd.f32 %v1424, %v1449
      %v1461 = vadd.f32 %v1425, %v1450
      %v1462 = vadd.f32 %v1426, %v1444
      %1469 = vrot.lane.b32.xlu0 %v1253, 70
      %v1470 = vpop.permute.xlu0 %1469
      %1471 = vrot.lane.b32.xlu0 %v1255, 70
      %v1472 = vpop.permute.xlu0 %1471
      %1473 = vrot.lane.b32.xlu0 %v1314, 70
      %v1474 = vpop.permute.xlu0 %1473
      %1475 = vrot.lane.b32.xlu0 %v1316, 70
      %v1476 = vpop.permute.xlu0 %1475
      %1477 = vrot.lane.b32.xlu0 %v1375, 70
      %v1478 = vpop.permute.xlu0 %1477
      %1479 = vrot.lane.b32.xlu0 %v1377, 70
      %v1480 = vpop.permute.xlu0 %1479
      %vm1481 = vcmask 572416
      %v1482 = vsel %vm1481, %v1470, %v1472
      %v1483 = vsel %vm1481, %v1472, %v1474
      %v1484 = vsel %vm1481, %v1474, %v1476
      %v1485 = vsel %vm1481, %v1476, %v1478
      %v1486 = vsel %vm1481, %v1478, %v1480
      %v1493 = vadd.f32 %v1457, %v1482
      %v1494 = vadd.f32 %v1458, %v1483
      %v1495 = vadd.f32 %v1459, %v1484
      %v1496 = vadd.f32 %v1460, %v1485
      %v1497 = vadd.f32 %v1461, %v1486
      %v1498 = vadd.f32 %v1462, %v1480
      %1505 = vrot.lane.b32.xlu0 %v1257, 69
      %v1506 = vpop.permute.xlu0 %1505
      %1507 = vrot.lane.b32.xlu0 %v1259, 69
      %v1508 = vpop.permute.xlu0 %1507
      %1509 = vrot.lane.b32.xlu0 %v1318, 69
      %v1510 = vpop.permute.xlu0 %1509
      %1511 = vrot.lane.b32.xlu0 %v1320, 69
      %v1512 = vpop.permute.xlu0 %1511
      %1513 = vrot.lane.b32.xlu0 %v1379, 69
      %v1514 = vpop.permute.xlu0 %1513
      %1515 = vrot.lane.b32.xlu0 %v1381, 69
      %v1516 = vpop.permute.xlu0 %1515
      %vm1517 = vcmask 564224
      %v1518 = vsel %vm1517, %v1506, %v1508
      %v1519 = vsel %vm1517, %v1508, %v1510
      %v1520 = vsel %vm1517, %v1510, %v1512
      %v1521 = vsel %vm1517, %v1512, %v1514
      %v1522 = vsel %vm1517, %v1514, %v1516
      %v1529 = vadd.f32 %v1493, %v1518
      %v1530 = vadd.f32 %v1494, %v1519
      %v1531 = vadd.f32 %v1495, %v1520
      %v1532 = vadd.f32 %v1496, %v1521
      %v1533 = vadd.f32 %v1497, %v1522
      %v1534 = vadd.f32 %v1498, %v1516
      %1541 = vrot.lane.b32.xlu0 %v1263, 68
      %v1542 = vpop.permute.xlu0 %1541
      %1543 = vrot.lane.b32.xlu0 %v1265, 68
      %v1544 = vpop.permute.xlu0 %1543
      %1545 = vrot.lane.b32.xlu0 %v1324, 68
      %v1546 = vpop.permute.xlu0 %1545
      %1547 = vrot.lane.b32.xlu0 %v1326, 68
      %v1548 = vpop.permute.xlu0 %1547
      %1549 = vrot.lane.b32.xlu0 %v1385, 68
      %v1550 = vpop.permute.xlu0 %1549
      %1551 = vrot.lane.b32.xlu0 %v1387, 68
      %v1552 = vpop.permute.xlu0 %1551
      %vm1553 = vcmask 556032
      %v1554 = vsel %vm1553, %v1542, %v1544
      %v1555 = vsel %vm1553, %v1544, %v1546
      %v1556 = vsel %vm1553, %v1546, %v1548
      %v1557 = vsel %vm1553, %v1548, %v1550
      %v1558 = vsel %vm1553, %v1550, %v1552
      %v1565 = vadd.f32 %v1529, %v1554
      %v1566 = vadd.f32 %v1530, %v1555
      %v1567 = vadd.f32 %v1531, %v1556
      %v1568 = vadd.f32 %v1532, %v1557
      %v1569 = vadd.f32 %v1533, %v1558
      %v1570 = vadd.f32 %v1534, %v1552
      %v1571 = vld [vmem:[%s1 + $0x3c] sm:$0xf]
      %v1572 = vld [vmem:[%s1 + $0x40] sm:$0xf]
      %v1573 = vld [vmem:[%s1 + $0x44] sm:$0xf]
      %v1574 = vld [vmem:[%s1 + $0x48] sm:$0xf]
      %v1575 = vld [vmem:[%s1 + $0x4c] sm:$0xf]
      %v1581 = vunpack.c.l.b16 %v1571
      %v1582 = vunpack.c.l.b16 %v1572
      %v1583 = vunpack.c.l.b16 %v1573
      %v1584 = vunpack.c.l.b16 %v1574
      %v1585 = vunpack.c.l.b16 %v1575
      %v1586 = vpack.c.b16 %v1582, %v1581
      %v1587 = vpack.c.b16 %v1584, %v1583
      %v1588 = vpack.c.b16 %v1585, %v1585
      %v1590 = vsel %vm426, %v1586, 0
      %v1593 = vsel %vm426, %v1587, 0
      %v1596 = vsel %vm426, %v1588, 0
      %1598 = vmatprep.subr.bf16.mxu0 %v444
      %1599 = vmatpush1.bf16.msra.mxu0 %v441
      %1600 = vmatprep.subr.bf16.mxu0 0
      %1601 = vmatpush1.bf16.msra.mxu0 0
      %1602 = vmatprep.subr.bf16.mxu0 0
      %1603 = vmatpush1.bf16.msra.mxu0 0
      %1604 = vmatprep.subr.bf16.mxu0 0
      %1605 = vmatpush1.bf16.msra.mxu0 0
      %1606 = vmatprep.subr.bf16.mxu0 0
      %1607 = vmatpush1.bf16.msra.mxu0 0
      %1608 = vmatprep.subr.bf16.mxu0 0
      %1609 = vmatpush1.bf16.msra.mxu0 0
      %1610 = vmatprep.subr.bf16.mxu0 0
      %1611 = vmatpush1.bf16.msra.mxu0 0
      %1612 = vmatprep.subr.bf16.mxu0 0
      %1613 = vmatpush1.bf16.msra.mxu0 0
      %1614 = vmatprep.subr.bf16.mxu0 0
      %1615 = vmatpush1.bf16.msra.mxu0 0
      %1616 = vmatprep.subr.bf16.mxu0 0
      %1617 = vmatpush1.bf16.msra.mxu0 0
      %1618 = vmatprep.subr.bf16.mxu0 0
      %1619 = vmatpush1.bf16.msra.mxu0 0
      %1620 = vmatprep.subr.bf16.mxu0 0
      %1621 = vmatpush1.bf16.msra.mxu0 0
      %1622 = vmatprep.subr.bf16.mxu0 0
      %1623 = vmatpush1.bf16.msra.mxu0 0
      %1624 = vmatprep.subr.bf16.mxu0 0
      %1625 = vmatpush1.bf16.msra.mxu0 0
      %1626 = vmatprep.subr.bf16.mxu0 0
      %1627 = vmatpush1.bf16.msra.mxu0 0
      %1628 = vmatprep.subr.bf16.mxu0 0
      %1629 = vmatpush1.bf16.msra.mxu0 0
      %1630 = vmatprep.mubr.bf16.mxu0 0
      %1631 = vmatmul.mubr.bf16.gmra.mrb[0].mxu0 %v1590
      %v1632 = vpop.f32.mrb[0].mxu0
      %v1633 = vadd.f32 0.0, %v1632
      %v1634 = vpop.f32.mrb[0].mxu0
      %v1635 = vadd.f32 0.0, %v1634
      %v1636 = vpop.f32.mrb[0].mxu0
      %v1637 = vadd.f32 0.0, %v1636
      %v1638 = vpop.f32.mrb[0].mxu0
      %v1639 = vadd.f32 0.0, %v1638
      %1640 = vmatprep.mubr.bf16.mxu0 0
      %1641 = vmatmul.mubr.bf16.gmra.mrb[0].mxu0 %v1593
      %v1642 = vpop.f32.mrb[0].mxu0
      %v1643 = vadd.f32 0.0, %v1642
      %v1644 = vpop.f32.mrb[0].mxu0
      %v1645 = vadd.f32 0.0, %v1644
      %v1646 = vpop.f32.mrb[0].mxu0
      %v1647 = vadd.f32 0.0, %v1646
      %v1648 = vpop.f32.mrb[0].mxu0
      %v1649 = vadd.f32 0.0, %v1648
      %1650 = vmatprep.mubr.bf16.mxu0 0
      %1651 = vmatmul.mubr.bf16.gmra.mrb[0].mxu0 %v1596
      %v1652 = vpop.f32.mrb[0].mxu0
      %v1653 = vadd.f32 0.0, %v1652
      %v1654 = vpop.f32.mrb[0].mxu0
      %v1655 = vadd.f32 0.0, %v1654
      %v1656 = vpop.f32.mrb[0].mxu0
      %v1657 = vpop.f32.mrb[0].mxu0
      %1658 = vdwg.mxu0
      %1659 = vmatprep.subr.bf16.mxu0 %v450
      %1660 = vmatpush1.bf16.msra.mxu0 %v447
      %1661 = vmatprep.subr.bf16.mxu0 0
      %1662 = vmatpush1.bf16.msra.mxu0 0
      %1663 = vmatprep.subr.bf16.mxu0 0
      %1664 = vmatpush1.bf16.msra.mxu0 0
      %1665 = vmatprep.subr.bf16.mxu0 0
      %1666 = vmatpush1.bf16.msra.mxu0 0
      %1667 = vmatprep.subr.bf16.mxu0 0
      %1668 = vmatpush1.bf16.msra.mxu0 0
      %1669 = vmatprep.subr.bf16.mxu0 0
      %1670 = vmatpush1.bf16.msra.mxu0 0
      %1671 = vmatprep.subr.bf16.mxu0 0
      %1672 = vmatpush1.bf16.msra.mxu0 0
      %1673 = vmatprep.subr.bf16.mxu0 0
      %1674 = vmatpush1.bf16.msra.mxu0 0
      %1675 = vmatprep.subr.bf16.mxu0 0
      %1676 = vmatpush1.bf16.msra.mxu0 0
      %1677 = vmatprep.subr.bf16.mxu0 0
      %1678 = vmatpush1.bf16.msra.mxu0 0
      %1679 = vmatprep.subr.bf16.mxu0 0
      %1680 = vmatpush1.bf16.msra.mxu0 0
      %1681 = vmatprep.subr.bf16.mxu0 0
      %1682 = vmatpush1.bf16.msra.mxu0 0
      %1683 = vmatprep.subr.bf16.mxu0 0
      %1684 = vmatpush1.bf16.msra.mxu0 0
      %1685 = vmatprep.subr.bf16.mxu0 0
      %1686 = vmatpush1.bf16.msra.mxu0 0
      %1687 = vmatprep.subr.bf16.mxu0 0
      %1688 = vmatpush1.bf16.msra.mxu0 0
      %1689 = vmatprep.subr.bf16.mxu0 0
      %1690 = vmatpush1.bf16.msra.mxu0 0
      %1691 = vmatprep.mubr.bf16.mxu0 0
      %1692 = vmatmul.mubr.bf16.gmra.mrb[0].mxu0 %v1590
      %v1693 = vpop.f32.mrb[0].mxu0
      %v1694 = vadd.f32 0.0, %v1693
      %v1695 = vpop.f32.mrb[0].mxu0
      %v1696 = vadd.f32 0.0, %v1695
      %v1697 = vpop.f32.mrb[0].mxu0
      %v1698 = vadd.f32 0.0, %v1697
      %v1699 = vpop.f32.mrb[0].mxu0
      %v1700 = vadd.f32 0.0, %v1699
      %1701 = vmatprep.mubr.bf16.mxu0 0
      %1702 = vmatmul.mubr.bf16.gmra.mrb[0].mxu0 %v1593
      %v1703 = vpop.f32.mrb[0].mxu0
      %v1704 = vadd.f32 0.0, %v1703
      %v1705 = vpop.f32.mrb[0].mxu0
      %v1706 = vadd.f32 0.0, %v1705
      %v1707 = vpop.f32.mrb[0].mxu0
      %v1708 = vadd.f32 0.0, %v1707
      %v1709 = vpop.f32.mrb[0].mxu0
      %v1710 = vadd.f32 0.0, %v1709
      %1711 = vmatprep.mubr.bf16.mxu0 0
      %1712 = vmatmul.mubr.bf16.gmra.mrb[0].mxu0 %v1596
      %v1713 = vpop.f32.mrb[0].mxu0
      %v1714 = vadd.f32 0.0, %v1713
      %v1715 = vpop.f32.mrb[0].mxu0
      %v1716 = vadd.f32 0.0, %v1715
      %v1717 = vpop.f32.mrb[0].mxu0
      %v1718 = vpop.f32.mrb[0].mxu0
      %1719 = vdwg.mxu0
      %1720 = vmatprep.subr.bf16.mxu0 %v456
      %1721 = vmatpush1.bf16.msra.mxu0 %v453
      %1722 = vmatprep.subr.bf16.mxu0 0
      %1723 = vmatpush1.bf16.msra.mxu0 0
      %1724 = vmatprep.subr.bf16.mxu0 0
      %1725 = vmatpush1.bf16.msra.mxu0 0
      %1726 = vmatprep.subr.bf16.mxu0 0
      %1727 = vmatpush1.bf16.msra.mxu0 0
      %1728 = vmatprep.subr.bf16.mxu0 0
      %1729 = vmatpush1.bf16.msra.mxu0 0
      %1730 = vmatprep.subr.bf16.mxu0 0
      %1731 = vmatpush1.bf16.msra.mxu0 0
      %1732 = vmatprep.subr.bf16.mxu0 0
      %1733 = vmatpush1.bf16.msra.mxu0 0
      %1734 = vmatprep.subr.bf16.mxu0 0
      %1735 = vmatpush1.bf16.msra.mxu0 0
      %1736 = vmatprep.subr.bf16.mxu0 0
      %1737 = vmatpush1.bf16.msra.mxu0 0
      %1738 = vmatprep.subr.bf16.mxu0 0
      %1739 = vmatpush1.bf16.msra.mxu0 0
      %1740 = vmatprep.subr.bf16.mxu0 0
      %1741 = vmatpush1.bf16.msra.mxu0 0
      %1742 = vmatprep.subr.bf16.mxu0 0
      %1743 = vmatpush1.bf16.msra.mxu0 0
      %1744 = vmatprep.subr.bf16.mxu0 0
      %1745 = vmatpush1.bf16.msra.mxu0 0
      %1746 = vmatprep.subr.bf16.mxu0 0
      %1747 = vmatpush1.bf16.msra.mxu0 0
      %1748 = vmatprep.subr.bf16.mxu0 0
      %1749 = vmatpush1.bf16.msra.mxu0 0
      %1750 = vmatprep.subr.bf16.mxu0 0
      %1751 = vmatpush1.bf16.msra.mxu0 0
      %1752 = vmatprep.mubr.bf16.mxu0 0
      %1753 = vmatmul.mubr.bf16.gmra.mrb[0].mxu0 %v1590
      %v1754 = vpop.f32.mrb[0].mxu0
      %v1755 = vadd.f32 0.0, %v1754
      %v1756 = vpop.f32.mrb[0].mxu0
      %v1757 = vadd.f32 0.0, %v1756
      %v1758 = vpop.f32.mrb[0].mxu0
      %v1759 = vadd.f32 0.0, %v1758
      %v1760 = vpop.f32.mrb[0].mxu0
      %v1761 = vadd.f32 0.0, %v1760
      %1762 = vmatprep.mubr.bf16.mxu0 0
      %1763 = vmatmul.mubr.bf16.gmra.mrb[0].mxu0 %v1593
      %v1764 = vpop.f32.mrb[0].mxu0
      %v1765 = vadd.f32 0.0, %v1764
      %v1766 = vpop.f32.mrb[0].mxu0
      %v1767 = vadd.f32 0.0, %v1766
      %v1768 = vpop.f32.mrb[0].mxu0
      %v1769 = vadd.f32 0.0, %v1768
      %v1770 = vpop.f32.mrb[0].mxu0
      %v1771 = vadd.f32 0.0, %v1770
      %1772 = vmatprep.mubr.bf16.mxu0 0
      %1773 = vmatmul.mubr.bf16.gmra.mrb[0].mxu0 %v1596
      %v1774 = vpop.f32.mrb[0].mxu0
      %v1775 = vadd.f32 0.0, %v1774
      %v1776 = vpop.f32.mrb[0].mxu0
      %v1777 = vadd.f32 0.0, %v1776
      %v1778 = vpop.f32.mrb[0].mxu0
      %v1779 = vpop.f32.mrb[0].mxu0
      %1780 = vdwg.mxu0
      %1787 = vrot.lane.b32.xlu0 %v1633, 44
      %v1788 = vpop.permute.xlu0 %1787
      %1789 = vrot.lane.b32.xlu0 %v1635, 44
      %v1790 = vpop.permute.xlu0 %1789
      %1791 = vrot.lane.b32.xlu0 %v1694, 44
      %v1792 = vpop.permute.xlu0 %1791
      %1793 = vrot.lane.b32.xlu0 %v1696, 44
      %v1794 = vpop.permute.xlu0 %1793
      %1795 = vrot.lane.b32.xlu0 %v1755, 44
      %v1796 = vpop.permute.xlu0 %1795
      %1797 = vrot.lane.b32.xlu0 %v1757, 44
      %v1798 = vpop.permute.xlu0 %1797
      %vm1799 = vcmask 359424
      %v1800 = vsel %vm1799, %v1788, %v1790
      %v1801 = vsel %vm1799, %v1790, %v1792
      %v1802 = vsel %vm1799, %v1792, %v1794
      %v1803 = vsel %vm1799, %v1794, %v1796
      %v1804 = vsel %vm1799, %v1796, %v1798
      %v1811 = vadd.f32 %v1565, %v1800
      %v1812 = vadd.f32 %v1566, %v1801
      %v1813 = vadd.f32 %v1567, %v1802
      %v1814 = vadd.f32 %v1568, %v1803
      %v1815 = vadd.f32 %v1569, %v1804
      %v1816 = vadd.f32 %v1570, %v1798
      %1823 = vrot.lane.b32.xlu0 %v1637, 43
      %v1824 = vpop.permute.xlu0 %1823
      %1825 = vrot.lane.b32.xlu0 %v1639, 43
      %v1826 = vpop.permute.xlu0 %1825
      %1827 = vrot.lane.b32.xlu0 %v1698, 43
      %v1828 = vpop.permute.xlu0 %1827
      %1829 = vrot.lane.b32.xlu0 %v1700, 43
      %v1830 = vpop.permute.xlu0 %1829
      %1831 = vrot.lane.b32.xlu0 %v1759, 43
      %v1832 = vpop.permute.xlu0 %1831
      %1833 = vrot.lane.b32.xlu0 %v1761, 43
      %v1834 = vpop.permute.xlu0 %1833
      %vm1835 = vcmask 351232
      %v1836 = vsel %vm1835, %v1824, %v1826
      %v1837 = vsel %vm1835, %v1826, %v1828
      %v1838 = vsel %vm1835, %v1828, %v1830
      %v1839 = vsel %vm1835, %v1830, %v1832
      %v1840 = vsel %vm1835, %v1832, %v1834
      %v1847 = vadd.f32 %v1811, %v1836
      %v1848 = vadd.f32 %v1812, %v1837
      %v1849 = vadd.f32 %v1813, %v1838
      %v1850 = vadd.f32 %v1814, %v1839
      %v1851 = vadd.f32 %v1815, %v1840
      %v1852 = vadd.f32 %v1816, %v1834
      %1859 = vrot.lane.b32.xlu0 %v1643, 42
      %v1860 = vpop.permute.xlu0 %1859
      %1861 = vrot.lane.b32.xlu0 %v1645, 42
      %v1862 = vpop.permute.xlu0 %1861
      %1863 = vrot.lane.b32.xlu0 %v1704, 42
      %v1864 = vpop.permute.xlu0 %1863
      %1865 = vrot.lane.b32.xlu0 %v1706, 42
      %v1866 = vpop.permute.xlu0 %1865
      %1867 = vrot.lane.b32.xlu0 %v1765, 42
      %v1868 = vpop.permute.xlu0 %1867
      %1869 = vrot.lane.b32.xlu0 %v1767, 42
      %v1870 = vpop.permute.xlu0 %1869
      %vm1871 = vcmask 343040
      %v1872 = vsel %vm1871, %v1860, %v1862
      %v1873 = vsel %vm1871, %v1862, %v1864
      %v1874 = vsel %vm1871, %v1864, %v1866
      %v1875 = vsel %vm1871, %v1866, %v1868
      %v1876 = vsel %vm1871, %v1868, %v1870
      %v1883 = vadd.f32 %v1847, %v1872
      %v1884 = vadd.f32 %v1848, %v1873
      %v1885 = vadd.f32 %v1849, %v1874
      %v1886 = vadd.f32 %v1850, %v1875
      %v1887 = vadd.f32 %v1851, %v1876
      %v1888 = vadd.f32 %v1852, %v1870
      %1895 = vrot.lane.b32.xlu0 %v1647, 41
      %v1896 = vpop.permute.xlu0 %1895
      %1897 = vrot.lane.b32.xlu0 %v1649, 41
      %v1898 = vpop.permute.xlu0 %1897
      %1899 = vrot.lane.b32.xlu0 %v1708, 41
      %v1900 = vpop.permute.xlu0 %1899
      %1901 = vrot.lane.b32.xlu0 %v1710, 41
      %v1902 = vpop.permute.xlu0 %1901
      %1903 = vrot.lane.b32.xlu0 %v1769, 41
      %v1904 = vpop.permute.xlu0 %1903
      %1905 = vrot.lane.b32.xlu0 %v1771, 41
      %v1906 = vpop.permute.xlu0 %1905
      %vm1907 = vcmask 334848
      %v1908 = vsel %vm1907, %v1896, %v1898
      %v1909 = vsel %vm1907, %v1898, %v1900
      %v1910 = vsel %vm1907, %v1900, %v1902
      %v1911 = vsel %vm1907, %v1902, %v1904
      %v1912 = vsel %vm1907, %v1904, %v1906
      %v1919 = vadd.f32 %v1883, %v1908
      %v1920 = vadd.f32 %v1884, %v1909
      %v1921 = vadd.f32 %v1885, %v1910
      %v1922 = vadd.f32 %v1886, %v1911
      %v1923 = vadd.f32 %v1887, %v1912
      %v1924 = vadd.f32 %v1888, %v1906
      %1931 = vrot.lane.b32.xlu0 %v1653, 40
      %v1932 = vpop.permute.xlu0 %1931
      %1933 = vrot.lane.b32.xlu0 %v1655, 40
      %v1934 = vpop.permute.xlu0 %1933
      %1935 = vrot.lane.b32.xlu0 %v1714, 40
      %v1936 = vpop.permute.xlu0 %1935
      %1937 = vrot.lane.b32.xlu0 %v1716, 40
      %v1938 = vpop.permute.xlu0 %1937
      %1939 = vrot.lane.b32.xlu0 %v1775, 40
      %v1940 = vpop.permute.xlu0 %1939
      %1941 = vrot.lane.b32.xlu0 %v1777, 40
      %v1942 = vpop.permute.xlu0 %1941
      %vm1943 = vcmask 326656
      %v1944 = vsel %vm1943, %v1932, %v1934
      %v1945 = vsel %vm1943, %v1934, %v1936
      %v1946 = vsel %vm1943, %v1936, %v1938
      %v1947 = vsel %vm1943, %v1938, %v1940
      %v1948 = vsel %vm1943, %v1940, %v1942
      %v1955 = vadd.f32 %v1919, %v1944
      %v1956 = vadd.f32 %v1920, %v1945
      %v1957 = vadd.f32 %v1921, %v1946
      %v1958 = vadd.f32 %v1922, %v1947
      %v1959 = vadd.f32 %v1923, %v1948
      %v1960 = vadd.f32 %v1924, %v1942
      %v1961 = vld [vmem:[%s1 + $0x50] sm:$0xf]
      %v1962 = vld [vmem:[%s1 + $0x54] sm:$0xf]
      %v1963 = vld [vmem:[%s1 + $0x58] sm:$0xf]
      %v1964 = vld [vmem:[%s1 + $0x5c] sm:$0xf]
      %v1965 = vld [vmem:[%s1 + $0x60] sm:$0xf]
      %v1971 = vunpack.c.l.b16 %v1961
      %v1972 = vunpack.c.l.b16 %v1962
      %v1973 = vunpack.c.l.b16 %v1963
      %v1974 = vunpack.c.l.b16 %v1964
      %v1975 = vunpack.c.l.b16 %v1965
      %v1976 = vpack.c.b16 %v1972, %v1971
      %v1977 = vpack.c.b16 %v1974, %v1973
      %v1978 = vpack.c.b16 %v1975, %v1975
      %v1980 = vsel %vm426, %v1976, 0
      %v1983 = vsel %vm426, %v1977, 0
      %v1986 = vsel %vm426, %v1978, 0
      %v1989 = vand.u32 %v407, %v439
      %1991 = vmatprep.subr.bf16.mxu0 %v444
      %1992 = vmatpush1.bf16.msra.mxu0 %v441
      %1993 = vmatprep.subr.bf16.mxu0 0
      %1994 = vmatpush1.bf16.msra.mxu0 0
      %1995 = vmatprep.subr.bf16.mxu0 0
      %1996 = vmatpush1.bf16.msra.mxu0 0
      %1997 = vmatprep.subr.bf16.mxu0 0
      %1998 = vmatpush1.bf16.msra.mxu0 0
      %1999 = vmatprep.subr.bf16.mxu0 0
      %2000 = vmatpush1.bf16.msra.mxu0 0
      %2001 = vmatprep.subr.bf16.mxu0 0
      %2002 = vmatpush1.bf16.msra.mxu0 0
      %2003 = vmatprep.subr.bf16.mxu0 0
      %2004 = vmatpush1.bf16.msra.mxu0 0
      %2005 = vmatprep.subr.bf16.mxu0 0
      %2006 = vmatpush1.bf16.msra.mxu0 0
      %2007 = vmatprep.subr.bf16.mxu0 0
      %2008 = vmatpush1.bf16.msra.mxu0 0
      %2009 = vmatprep.subr.bf16.mxu0 0
      %2010 = vmatpush1.bf16.msra.mxu0 0
      %2011 = vmatprep.subr.bf16.mxu0 0
      %2012 = vmatpush1.bf16.msra.mxu0 0
      %2013 = vmatprep.subr.bf16.mxu0 0
      %2014 = vmatpush1.bf16.msra.mxu0 0
      %2015 = vmatprep.subr.bf16.mxu0 0
      %2016 = vmatpush1.bf16.msra.mxu0 0
      %2017 = vmatprep.subr.bf16.mxu0 0
      %2018 = vmatpush1.bf16.msra.mxu0 0
      %2019 = vmatprep.subr.bf16.mxu0 0
      %2020 = vmatpush1.bf16.msra.mxu0 0
      %2021 = vmatprep.subr.bf16.mxu0 0
      %2022 = vmatpush1.bf16.msra.mxu0 0
      %2023 = vmatprep.mubr.bf16.mxu0 0
      %2024 = vmatmul.mubr.bf16.gmra.mrb[0].mxu0 %v1980
      %v2025 = vpop.f32.mrb[0].mxu0
      %v2026 = vadd.f32 0.0, %v2025
      %v2027 = vpop.f32.mrb[0].mxu0
      %v2028 = vadd.f32 0.0, %v2027
      %v2029 = vpop.f32.mrb[0].mxu0
      %v2030 = vadd.f32 0.0, %v2029
      %v2031 = vpop.f32.mrb[0].mxu0
      %v2032 = vadd.f32 0.0, %v2031
      %2033 = vmatprep.mubr.bf16.mxu0 0
      %2034 = vmatmul.mubr.bf16.gmra.mrb[0].mxu0 %v1983
      %v2035 = vpop.f32.mrb[0].mxu0
      %v2036 = vadd.f32 0.0, %v2035
      %v2037 = vpop.f32.mrb[0].mxu0
      %v2038 = vadd.f32 0.0, %v2037
      %v2039 = vpop.f32.mrb[0].mxu0
      %v2040 = vadd.f32 0.0, %v2039
      %v2041 = vpop.f32.mrb[0].mxu0
      %v2042 = vadd.f32 0.0, %v2041
      %2043 = vmatprep.mubr.bf16.mxu0 0
      %2044 = vmatmul.mubr.bf16.gmra.mrb[0].mxu0 %v1986
      %v2045 = vpop.f32.mrb[0].mxu0
      %v2046 = vadd.f32 0.0, %v2045
      %v2047 = vpop.f32.mrb[0].mxu0
      %v2048 = vadd.f32 0.0, %v2047
      %v2049 = vpop.f32.mrb[0].mxu0
      %v2050 = vpop.f32.mrb[0].mxu0
      %2051 = vdwg.mxu0
      %2052 = vmatprep.subr.bf16.mxu0 %v450
      %2053 = vmatpush1.bf16.msra.mxu0 %v447
      %2054 = vmatprep.subr.bf16.mxu0 0
      %2055 = vmatpush1.bf16.msra.mxu0 0
      %2056 = vmatprep.subr.bf16.mxu0 0
      %2057 = vmatpush1.bf16.msra.mxu0 0
      %2058 = vmatprep.subr.bf16.mxu0 0
      %2059 = vmatpush1.bf16.msra.mxu0 0
      %2060 = vmatprep.subr.bf16.mxu0 0
      %2061 = vmatpush1.bf16.msra.mxu0 0
      %2062 = vmatprep.subr.bf16.mxu0 0
      %2063 = vmatpush1.bf16.msra.mxu0 0
      %2064 = vmatprep.subr.bf16.mxu0 0
      %2065 = vmatpush1.bf16.msra.mxu0 0
      %2066 = vmatprep.subr.bf16.mxu0 0
      %2067 = vmatpush1.bf16.msra.mxu0 0
      %2068 = vmatprep.subr.bf16.mxu0 0
      %2069 = vmatpush1.bf16.msra.mxu0 0
      %2070 = vmatprep.subr.bf16.mxu0 0
      %2071 = vmatpush1.bf16.msra.mxu0 0
      %2072 = vmatprep.subr.bf16.mxu0 0
      %2073 = vmatpush1.bf16.msra.mxu0 0
      %2074 = vmatprep.subr.bf16.mxu0 0
      %2075 = vmatpush1.bf16.msra.mxu0 0
      %2076 = vmatprep.subr.bf16.mxu0 0
      %2077 = vmatpush1.bf16.msra.mxu0 0
      %2078 = vmatprep.subr.bf16.mxu0 0
      %2079 = vmatpush1.bf16.msra.mxu0 0
      %2080 = vmatprep.subr.bf16.mxu0 0
      %2081 = vmatpush1.bf16.msra.mxu0 0
      %2082 = vmatprep.subr.bf16.mxu0 0
      %2083 = vmatpush1.bf16.msra.mxu0 0
      %2084 = vmatprep.mubr.bf16.mxu0 0
      %2085 = vmatmul.mubr.bf16.gmra.mrb[0].mxu0 %v1980
      %v2086 = vpop.f32.mrb[0].mxu0
      %v2087 = vadd.f32 0.0, %v2086
      %v2088 = vpop.f32.mrb[0].mxu0
      %v2089 = vadd.f32 0.0, %v2088
      %v2090 = vpop.f32.mrb[0].mxu0
      %v2091 = vadd.f32 0.0, %v2090
      %v2092 = vpop.f32.mrb[0].mxu0
      %v2093 = vadd.f32 0.0, %v2092
      %2094 = vmatprep.mubr.bf16.mxu0 0
      %2095 = vmatmul.mubr.bf16.gmra.mrb[0].mxu0 %v1983
      %v2096 = vpop.f32.mrb[0].mxu0
      %v2097 = vadd.f32 0.0, %v2096
      %v2098 = vpop.f32.mrb[0].mxu0
      %v2099 = vadd.f32 0.0, %v2098
      %v2100 = vpop.f32.mrb[0].mxu0
      %v2101 = vadd.f32 0.0, %v2100
      %v2102 = vpop.f32.mrb[0].mxu0
      %v2103 = vadd.f32 0.0, %v2102
      %2104 = vmatprep.mubr.bf16.mxu0 0
      %2105 = vmatmul.mubr.bf16.gmra.mrb[0].mxu0 %v1986
      %v2106 = vpop.f32.mrb[0].mxu0
      %v2107 = vadd.f32 0.0, %v2106
      %v2108 = vpop.f32.mrb[0].mxu0
      %v2109 = vadd.f32 0.0, %v2108
      %v2110 = vpop.f32.mrb[0].mxu0
      %v2111 = vpop.f32.mrb[0].mxu0
      %2112 = vdwg.mxu0
      %2113 = vmatprep.subr.bf16.mxu0 %v456
      %2114 = vmatpush1.bf16.msra.mxu0 %v453
      %2115 = vmatprep.subr.bf16.mxu0 0
      %2116 = vmatpush1.bf16.msra.mxu0 0
      %2117 = vmatprep.subr.bf16.mxu0 0
      %2118 = vmatpush1.bf16.msra.mxu0 0
      %2119 = vmatprep.subr.bf16.mxu0 0
      %2120 = vmatpush1.bf16.msra.mxu0 0
      %2121 = vmatprep.subr.bf16.mxu0 0
      %2122 = vmatpush1.bf16.msra.mxu0 0
      %2123 = vmatprep.subr.bf16.mxu0 0
      %2124 = vmatpush1.bf16.msra.mxu0 0
      %2125 = vmatprep.subr.bf16.mxu0 0
      %2126 = vmatpush1.bf16.msra.mxu0 0
      %2127 = vmatprep.subr.bf16.mxu0 0
      %2128 = vmatpush1.bf16.msra.mxu0 0
      %2129 = vmatprep.subr.bf16.mxu0 0
      %2130 = vmatpush1.bf16.msra.mxu0 0
      %2131 = vmatprep.subr.bf16.mxu0 0
      %2132 = vmatpush1.bf16.msra.mxu0 0
      %2133 = vmatprep.subr.bf16.mxu0 0
      %2134 = vmatpush1.bf16.msra.mxu0 0
      %2135 = vmatprep.subr.bf16.mxu0 0
      %2136 = vmatpush1.bf16.msra.mxu0 0
      %2137 = vmatprep.subr.bf16.mxu0 0
      %2138 = vmatpush1.bf16.msra.mxu0 0
      %2139 = vmatprep.subr.bf16.mxu0 0
      %2140 = vmatpush1.bf16.msra.mxu0 0
      %2141 = vmatprep.subr.bf16.mxu0 0
      %2142 = vmatpush1.bf16.msra.mxu0 0
      %2143 = vmatprep.subr.bf16.mxu0 0
      %2144 = vmatpush1.bf16.msra.mxu0 0
      %2145 = vmatprep.mubr.bf16.mxu0 0
      %2146 = vmatmul.mubr.bf16.gmra.mrb[0].mxu0 %v1980
      %v2147 = vpop.f32.mrb[0].mxu0
      %v2148 = vadd.f32 0.0, %v2147
      %v2149 = vpop.f32.mrb[0].mxu0
      %v2150 = vadd.f32 0.0, %v2149
      %v2151 = vpop.f32.mrb[0].mxu0
      %v2152 = vadd.f32 0.0, %v2151
      %v2153 = vpop.f32.mrb[0].mxu0
      %v2154 = vadd.f32 0.0, %v2153
      %2155 = vmatprep.mubr.bf16.mxu0 0
      %2156 = vmatmul.mubr.bf16.gmra.mrb[0].mxu0 %v1983
      %v2157 = vpop.f32.mrb[0].mxu0
      %v2158 = vadd.f32 0.0, %v2157
      %v2159 = vpop.f32.mrb[0].mxu0
      %v2160 = vadd.f32 0.0, %v2159
      %v2161 = vpop.f32.mrb[0].mxu0
      %v2162 = vadd.f32 0.0, %v2161
      %v2163 = vpop.f32.mrb[0].mxu0
      %v2164 = vadd.f32 0.0, %v2163
      %2165 = vmatprep.mubr.bf16.mxu0 0
      %2166 = vmatmul.mubr.bf16.gmra.mrb[0].mxu0 %v1986
      %v2167 = vpop.f32.mrb[0].mxu0
      %v2168 = vadd.f32 0.0, %v2167
      %v2169 = vpop.f32.mrb[0].mxu0
      %v2170 = vadd.f32 0.0, %v2169
      %v2171 = vpop.f32.mrb[0].mxu0
      %v2172 = vpop.f32.mrb[0].mxu0
      %2173 = vdwg.mxu0
      %2174 = vmatprep.subr.bf16.mxu0 0
      %2175 = vmatpush1.bf16.msra.mxu0 %v1989
      %2176 = vmatprep.subr.bf16.mxu0 0
      %2177 = vmatpush1.bf16.msra.mxu0 0
      %2178 = vmatprep.subr.bf16.mxu0 0
      %2179 = vmatpush1.bf16.msra.mxu0 0
      %2180 = vmatprep.subr.bf16.mxu0 0
      %2181 = vmatpush1.bf16.msra.mxu0 0
      %2182 = vmatprep.subr.bf16.mxu0 0
      %2183 = vmatpush1.bf16.msra.mxu0 0
      %2184 = vmatprep.subr.bf16.mxu0 0
      %2185 = vmatpush1.bf16.msra.mxu0 0
      %2186 = vmatprep.subr.bf16.mxu0 0
      %2187 = vmatpush1.bf16.msra.mxu0 0
      %2188 = vmatprep.subr.bf16.mxu0 0
      %2189 = vmatpush1.bf16.msra.mxu0 0
      %2190 = vmatprep.subr.bf16.mxu0 0
      %2191 = vmatpush1.bf16.msra.mxu0 0
      %2192 = vmatprep.subr.bf16.mxu0 0
      %2193 = vmatpush1.bf16.msra.mxu0 0
      %2194 = vmatprep.subr.bf16.mxu0 0
      %2195 = vmatpush1.bf16.msra.mxu0 0
      %2196 = vmatprep.subr.bf16.mxu0 0
      %2197 = vmatpush1.bf16.msra.mxu0 0
      %2198 = vmatprep.subr.bf16.mxu0 0
      %2199 = vmatpush1.bf16.msra.mxu0 0
      %2200 = vmatprep.subr.bf16.mxu0 0
      %2201 = vmatpush1.bf16.msra.mxu0 0
      %2202 = vmatprep.subr.bf16.mxu0 0
      %2203 = vmatpush1.bf16.msra.mxu0 0
      %2204 = vmatprep.subr.bf16.mxu0 0
      %2205 = vmatpush1.bf16.msra.mxu0 0
      %2206 = vmatprep.mubr.bf16.mxu0 0
      %2207 = vmatmul.mubr.bf16.gmra.mrb[0].mxu0 %v1980
      %v2208 = vpop.f32.mrb[0].mxu0
      %v2209 = vadd.f32 0.0, %v2208
      %v2210 = vpop.f32.mrb[0].mxu0
      %v2211 = vpop.f32.mrb[0].mxu0
      %v2212 = vadd.f32 0.0, %v2211
      %v2213 = vpop.f32.mrb[0].mxu0
      %2214 = vmatprep.mubr.bf16.mxu0 0
      %2215 = vmatmul.mubr.bf16.gmra.mrb[0].mxu0 %v1983
      %v2216 = vpop.f32.mrb[0].mxu0
      %v2217 = vadd.f32 0.0, %v2216
      %v2218 = vpop.f32.mrb[0].mxu0
      %v2219 = vpop.f32.mrb[0].mxu0
      %v2220 = vadd.f32 0.0, %v2219
      %v2221 = vpop.f32.mrb[0].mxu0
      %2222 = vmatprep.mubr.bf16.mxu0 0
      %2223 = vmatmul.mubr.bf16.gmra.mrb[0].mxu0 %v1986
      %v2224 = vpop.f32.mrb[0].mxu0
      %v2225 = vadd.f32 0.0, %v2224
      %v2226 = vpop.f32.mrb[0].mxu0
      %v2227 = vpop.f32.mrb[0].mxu0
      %v2228 = vpop.f32.mrb[0].mxu0
      %2229 = vdwg.mxu0
      %2237 = vrot.lane.b32.xlu0 %v2026, 16
      %v2238 = vpop.permute.xlu0 %2237
      %2239 = vrot.lane.b32.xlu0 %v2028, 16
      %v2240 = vpop.permute.xlu0 %2239
      %2241 = vrot.lane.b32.xlu0 %v2087, 16
      %v2242 = vpop.permute.xlu0 %2241
      %2243 = vrot.lane.b32.xlu0 %v2089, 16
      %v2244 = vpop.permute.xlu0 %2243
      %2245 = vrot.lane.b32.xlu0 %v2148, 16
      %v2246 = vpop.permute.xlu0 %2245
      %2247 = vrot.lane.b32.xlu0 %v2150, 16
      %v2248 = vpop.permute.xlu0 %2247
      %2249 = vrot.lane.b32.xlu0 %v2209, 16
      %v2250 = vpop.permute.xlu0 %2249
      %vm2251 = vcmask 130048
      %v2252 = vsel %vm2251, %v2238, %v2240
      %v2253 = vsel %vm2251, %v2240, %v2242
      %v2254 = vsel %vm2251, %v2242, %v2244
      %v2255 = vsel %vm2251, %v2244, %v2246
      %v2256 = vsel %vm2251, %v2246, %v2248
      %v2257 = vsel %vm2251, %v2248, %v2250
      %v2264 = vadd.f32 %v1955, %v2252
      %v2265 = vadd.f32 %v1956, %v2253
      %v2266 = vadd.f32 %v1957, %v2254
      %v2267 = vadd.f32 %v1958, %v2255
      %v2268 = vadd.f32 %v1959, %v2256
      %v2269 = vadd.f32 %v1960, %v2257
      %2277 = vrot.lane.b32.xlu0 %v2030, 15
      %v2278 = vpop.permute.xlu0 %2277
      %2279 = vrot.lane.b32.xlu0 %v2032, 15
      %v2280 = vpop.permute.xlu0 %2279
      %2281 = vrot.lane.b32.xlu0 %v2091, 15
      %v2282 = vpop.permute.xlu0 %2281
      %2283 = vrot.lane.b32.xlu0 %v2093, 15
      %v2284 = vpop.permute.xlu0 %2283
      %2285 = vrot.lane.b32.xlu0 %v2152, 15
      %v2286 = vpop.permute.xlu0 %2285
      %2287 = vrot.lane.b32.xlu0 %v2154, 15
      %v2288 = vpop.permute.xlu0 %2287
      %2289 = vrot.lane.b32.xlu0 %v2212, 15
      %v2290 = vpop.permute.xlu0 %2289
      %vm2291 = vcmask 121856
      %v2292 = vsel %vm2291, %v2278, %v2280
      %v2293 = vsel %vm2291, %v2280, %v2282
      %v2294 = vsel %vm2291, %v2282, %v2284
      %v2295 = vsel %vm2291, %v2284, %v2286
      %v2296 = vsel %vm2291, %v2286, %v2288
      %v2297 = vsel %vm2291, %v2288, %v2290
      %v2304 = vadd.f32 %v2264, %v2292
      %v2305 = vadd.f32 %v2265, %v2293
      %v2306 = vadd.f32 %v2266, %v2294
      %v2307 = vadd.f32 %v2267, %v2295
      %v2308 = vadd.f32 %v2268, %v2296
      %v2309 = vadd.f32 %v2269, %v2297
      %2317 = vrot.lane.b32.xlu0 %v2036, 14
      %v2318 = vpop.permute.xlu0 %2317
      %2319 = vrot.lane.b32.xlu0 %v2038, 14
      %v2320 = vpop.permute.xlu0 %2319
      %2321 = vrot.lane.b32.xlu0 %v2097, 14
      %v2322 = vpop.permute.xlu0 %2321
      %2323 = vrot.lane.b32.xlu0 %v2099, 14
      %v2324 = vpop.permute.xlu0 %2323
      %2325 = vrot.lane.b32.xlu0 %v2158, 14
      %v2326 = vpop.permute.xlu0 %2325
      %2327 = vrot.lane.b32.xlu0 %v2160, 14
      %v2328 = vpop.permute.xlu0 %2327
      %2329 = vrot.lane.b32.xlu0 %v2217, 14
      %v2330 = vpop.permute.xlu0 %2329
      %vm2331 = vcmask 113664
      %v2332 = vsel %vm2331, %v2318, %v2320
      %v2333 = vsel %vm2331, %v2320, %v2322
      %v2334 = vsel %vm2331, %v2322, %v2324
      %v2335 = vsel %vm2331, %v2324, %v2326
      %v2336 = vsel %vm2331, %v2326, %v2328
      %v2337 = vsel %vm2331, %v2328, %v2330
      %v2344 = vadd.f32 %v2304, %v2332
      %v2345 = vadd.f32 %v2305, %v2333
      %v2346 = vadd.f32 %v2306, %v2334
      %v2347 = vadd.f32 %v2307, %v2335
      %v2348 = vadd.f32 %v2308, %v2336
      %v2349 = vadd.f32 %v2309, %v2337
      %2357 = vrot.lane.b32.xlu0 %v2040, 13
      %v2358 = vpop.permute.xlu0 %2357
      %2359 = vrot.lane.b32.xlu0 %v2042, 13
      %v2360 = vpop.permute.xlu0 %2359
      %2361 = vrot.lane.b32.xlu0 %v2101, 13
      %v2362 = vpop.permute.xlu0 %2361
      %2363 = vrot.lane.b32.xlu0 %v2103, 13
      %v2364 = vpop.permute.xlu0 %2363
      %2365 = vrot.lane.b32.xlu0 %v2162, 13
      %v2366 = vpop.permute.xlu0 %2365
      %2367 = vrot.lane.b32.xlu0 %v2164, 13
      %v2368 = vpop.permute.xlu0 %2367
      %2369 = vrot.lane.b32.xlu0 %v2220, 13
      %v2370 = vpop.permute.xlu0 %2369
      %vm2371 = vcmask 105472
      %v2372 = vsel %vm2371, %v2358, %v2360
      %v2373 = vsel %vm2371, %v2360, %v2362
      %v2374 = vsel %vm2371, %v2362, %v2364
      %v2375 = vsel %vm2371, %v2364, %v2366
      %v2376 = vsel %vm2371, %v2366, %v2368
      %v2377 = vsel %vm2371, %v2368, %v2370
      %v2384 = vadd.f32 %v2344, %v2372
      %v2385 = vadd.f32 %v2345, %v2373
      %v2386 = vadd.f32 %v2346, %v2374
      %v2387 = vadd.f32 %v2347, %v2375
      %v2388 = vadd.f32 %v2348, %v2376
      %v2389 = vadd.f32 %v2349, %v2377
      %2397 = vrot.lane.b32.xlu0 %v2046, 12
      %v2398 = vpop.permute.xlu0 %2397
      %2399 = vrot.lane.b32.xlu0 %v2048, 12
      %v2400 = vpop.permute.xlu0 %2399
      %2401 = vrot.lane.b32.xlu0 %v2107, 12
      %v2402 = vpop.permute.xlu0 %2401
      %2403 = vrot.lane.b32.xlu0 %v2109, 12
      %v2404 = vpop.permute.xlu0 %2403
      %2405 = vrot.lane.b32.xlu0 %v2168, 12
      %v2406 = vpop.permute.xlu0 %2405
      %2407 = vrot.lane.b32.xlu0 %v2170, 12
      %v2408 = vpop.permute.xlu0 %2407
      %2409 = vrot.lane.b32.xlu0 %v2225, 12
      %v2410 = vpop.permute.xlu0 %2409
      %vm2411 = vcmask 97280
      %v2412 = vsel %vm2411, %v2398, %v2400
      %v2413 = vsel %vm2411, %v2400, %v2402
      %v2414 = vsel %vm2411, %v2402, %v2404
      %v2415 = vsel %vm2411, %v2404, %v2406
      %v2416 = vsel %vm2411, %v2406, %v2408
      %v2417 = vsel %vm2411, %v2408, %v2410
      %v2424 = vadd.f32 %v2384, %v2412
      %v2425 = vadd.f32 %v2385, %v2413
      %v2426 = vadd.f32 %v2386, %v2414
      %v2427 = vadd.f32 %v2387, %v2415
      %v2428 = vadd.f32 %v2388, %v2416
      %v2429 = vadd.f32 %v2389, %v2417
      %v2430 = vld [vmem:[%s2] sm:$0xff]
      %2432 = vset.pattern.permute.xlu0 0
      %2433 = vperm.xlu0 %2432, %v2430
      %v2434 = vpop.permute.xlu0 %2433
      %v2436 = vadd.f32 %v2424, %v2434
      %v2437 = vadd.f32 %v2425, %v2434
      %v2438 = vadd.f32 %v2426, %v2434
      %v2439 = vadd.f32 %v2427, %v2434
      %v2440 = vadd.f32 %v2428, %v2434
      %v2441 = vadd.f32 %v2429, %v2434
      %v2442 = vmax.f32 %v2436, 0.0
      %v2443 = vmax.f32 %v2437, 0.0
      %v2444 = vmax.f32 %v2438, 0.0
      %v2445 = vmax.f32 %v2439, 0.0
      %v2446 = vmax.f32 %v2440, 0.0
      %v2447 = vmax.f32 %v2441, 0.0
      %2453 = vrot.lane.b32.xlu0 %v2442, 127
      %v2454 = vpop.permute.xlu0 %2453
      %2455 = vrot.lane.b32.xlu0 %v2443, 127
      %v2456 = vpop.permute.xlu0 %2455
      %2457 = vrot.lane.b32.xlu0 %v2444, 127
      %v2458 = vpop.permute.xlu0 %2457
      %2459 = vrot.lane.b32.xlu0 %v2445, 127
      %v2460 = vpop.permute.xlu0 %2459
      %2461 = vrot.lane.b32.xlu0 %v2446, 127
      %v2462 = vpop.permute.xlu0 %2461
      %v2463 = vsel %vm665, %v2454, %v2456
      %v2464 = vsel %vm665, %v2456, %v2458
      %v2465 = vsel %vm665, %v2458, %v2460
      %v2466 = vsel %vm665, %v2460, %v2462
      %v2472 = vmax.f32 %v2442, %v2463
      %v2473 = vmax.f32 %v2443, %v2464
      %v2474 = vmax.f32 %v2444, %v2465
      %v2475 = vmax.f32 %v2445, %v2466
      %v2476 = vmax.f32 %v2446, %v2462
      %2478 = vrot.lane.b32.xlu0 %v2447, 127
      %v2479 = vpop.permute.xlu0 %2478
      %v2480 = vsel %vm665, %v2462, %v2479
      %v2483 = vmax.f32 %v2446, %v2480
      %v2484 = vmax.f32 %v2447, %v2479
      %2491 = vrot.lane.b32.xlu0 %v2472, 100
      %v2492 = vpop.permute.xlu0 %2491
      %2493 = vrot.lane.b32.xlu0 %v2473, 100
      %v2494 = vpop.permute.xlu0 %2493
      %2495 = vrot.lane.b32.xlu0 %v2474, 100
      %v2496 = vpop.permute.xlu0 %2495
      %2497 = vrot.lane.b32.xlu0 %v2475, 100
      %v2498 = vpop.permute.xlu0 %2497
      %2499 = vrot.lane.b32.xlu0 %v2483, 100
      %v2500 = vpop.permute.xlu0 %2499
      %2501 = vrot.lane.b32.xlu0 %v2484, 100
      %v2502 = vpop.permute.xlu0 %2501
      %v2503 = vsel %vm1019, %v2492, %v2494
      %v2504 = vsel %vm1019, %v2494, %v2496
      %v2505 = vsel %vm1019, %v2496, %v2498
      %v2506 = vsel %vm1019, %v2498, %v2500
      %v2507 = vsel %vm1019, %v2500, %v2502
      %v2513 = vmax.f32 %v2472, %v2503
      %v2514 = vmax.f32 %v2473, %v2504
      %v2515 = vmax.f32 %v2474, %v2505
      %v2516 = vmax.f32 %v2475, %v2506
      %v2517 = vmax.f32 %v2476, %v2507
      %v2518 = vpack.c.bf16 %v2513, %v2513
      %v2519 = vpack.c.bf16 %v2514, %v2514
      %v2520 = vpack.c.bf16 %v2515, %v2515
      %v2521 = vpack.c.bf16 %v2516, %v2516
      %v2522 = vpack.c.bf16 %v2517, %v2517
      %v2523 = vld [vmem:[%s3] sm:$0xf]
      %v2524 = vld [vmem:[%s3 + $0x4] sm:$0xf]
      %v2525 = vld [vmem:[%s3 + $0x8] sm:$0xf]
      %v2526 = vld [vmem:[%s3 + $0xc] sm:$0xf]
      %v2527 = vld [vmem:[%s3 + $0x10] sm:$0xf]
      %v2528 = vld [vmem:[%s3 + $0x14] sm:$0xf]
      %v2529 = vld [vmem:[%s3 + $0x18] sm:$0xf]
      %v2530 = vld [vmem:[%s3 + $0x1c] sm:$0xf]
      %v2531 = vld [vmem:[%s3 + $0x20] sm:$0xf]
      %v2532 = vld [vmem:[%s3 + $0x24] sm:$0xf]
      %v2543 = vunpack.c.l.b16 %v2523
      %v2544 = vunpack.c.l.b16 %v2524
      %v2545 = vunpack.c.l.b16 %v2525
      %v2546 = vunpack.c.l.b16 %v2526
      %v2547 = vunpack.c.l.b16 %v2527
      %v2548 = vunpack.c.l.b16 %v2528
      %v2549 = vunpack.c.l.b16 %v2529
      %v2550 = vunpack.c.l.b16 %v2530
      %v2551 = vunpack.c.l.b16 %v2531
      %v2552 = vunpack.c.l.b16 %v2532
      %v2553 = vpack.c.b16 %v2544, %v2543
      %v2554 = vpack.c.b16 %v2546, %v2545
      %v2555 = vpack.c.b16 %v2548, %v2547
      %v2556 = vpack.c.b16 %v2550, %v2549
      %v2557 = vpack.c.b16 %v2552, %v2551
      %vm2558 = vcmask 64512
      %v2560 = vsel %vm2558, %v2553, 0
      %v2563 = vsel %vm2558, %v2554, 0
      %v2566 = vsel %vm2558, %v2555, 0
      %v2569 = vsel %vm2558, %v2556, 0
      %v2572 = vsel %vm2558, %v2557, 0
      %vm2574 = vcmask 1043456
      %v2576 = vsel %vm2574, %v2518, 0
      %v2579 = vsel %vm2574, %v2519, 0
      %v2582 = vsel %vm2574, %v2520, 0
      %v2585 = vsel %vm2574, %v2521, 0
      %2587 = vmatprep.subr.bf16.mxu0 %v2579
      %2588 = vmatpush1.bf16.msra.mxu0 %v2576
      %2589 = vmatprep.subr.bf16.mxu0 0
      %2590 = vmatpush1.bf16.msra.mxu0 0
      %2591 = vmatprep.subr.bf16.mxu0 0
      %2592 = vmatpush1.bf16.msra.mxu0 0
      %2593 = vmatprep.subr.bf16.mxu0 0
      %2594 = vmatpush1.bf16.msra.mxu0 0
      %2595 = vmatprep.subr.bf16.mxu0 0
      %2596 = vmatpush1.bf16.msra.mxu0 0
      %2597 = vmatprep.subr.bf16.mxu0 0
      %2598 = vmatpush1.bf16.msra.mxu0 0
      %2599 = vmatprep.subr.bf16.mxu0 0
      %2600 = vmatpush1.bf16.msra.mxu0 0
      %2601 = vmatprep.subr.bf16.mxu0 0
      %2602 = vmatpush1.bf16.msra.mxu0 0
      %2603 = vmatprep.subr.bf16.mxu0 0
      %2604 = vmatpush1.bf16.msra.mxu0 0
      %2605 = vmatprep.subr.bf16.mxu0 0
      %2606 = vmatpush1.bf16.msra.mxu0 0
      %2607 = vmatprep.subr.bf16.mxu0 0
      %2608 = vmatpush1.bf16.msra.mxu0 0
      %2609 = vmatprep.subr.bf16.mxu0 0
      %2610 = vmatpush1.bf16.msra.mxu0 0
      %2611 = vmatprep.subr.bf16.mxu0 0
      %2612 = vmatpush1.bf16.msra.mxu0 0
      %2613 = vmatprep.subr.bf16.mxu0 0
      %2614 = vmatpush1.bf16.msra.mxu0 0
      %2615 = vmatprep.subr.bf16.mxu0 0
      %2616 = vmatpush1.bf16.msra.mxu0 0
      %2617 = vmatprep.subr.bf16.mxu0 0
      %2618 = vmatpush1.bf16.msra.mxu0 0
      %2619 = vmatprep.mubr.bf16.mxu0 0
      %2620 = vmatmul.mubr.bf16.gmra.mrb[0].mxu0 %v2560
      %v2621 = vpop.f32.mrb[0].mxu0
      %v2622 = vadd.f32 0.0, %v2621
      %v2623 = vpop.f32.mrb[0].mxu0
      %v2624 = vadd.f32 0.0, %v2623
      %v2625 = vpop.f32.mrb[0].mxu0
      %v2626 = vadd.f32 0.0, %v2625
      %v2627 = vpop.f32.mrb[0].mxu0
      %v2628 = vadd.f32 0.0, %v2627
      %2629 = vmatprep.mubr.bf16.mxu0 0
      %2630 = vmatmul.mubr.bf16.gmra.mrb[0].mxu0 %v2563
      %v2631 = vpop.f32.mrb[0].mxu0
      %v2632 = vadd.f32 0.0, %v2631
      %v2633 = vpop.f32.mrb[0].mxu0
      %v2634 = vadd.f32 0.0, %v2633
      %v2635 = vpop.f32.mrb[0].mxu0
      %v2636 = vadd.f32 0.0, %v2635
      %v2637 = vpop.f32.mrb[0].mxu0
      %v2638 = vadd.f32 0.0, %v2637
      %2639 = vmatprep.mubr.bf16.mxu0 0
      %2640 = vmatmul.mubr.bf16.gmra.mrb[0].mxu0 %v2566
      %v2641 = vpop.f32.mrb[0].mxu0
      %v2642 = vadd.f32 0.0, %v2641
      %v2643 = vpop.f32.mrb[0].mxu0
      %v2644 = vadd.f32 0.0, %v2643
      %v2645 = vpop.f32.mrb[0].mxu0
      %v2646 = vadd.f32 0.0, %v2645
      %v2647 = vpop.f32.mrb[0].mxu0
      %v2648 = vadd.f32 0.0, %v2647
      %2649 = vmatprep.mubr.bf16.mxu0 0
      %2650 = vmatmul.mubr.bf16.gmra.mrb[0].mxu0 %v2569
      %v2651 = vpop.f32.mrb[0].mxu0
      %v2652 = vadd.f32 0.0, %v2651
      %v2653 = vpop.f32.mrb[0].mxu0
      %v2654 = vadd.f32 0.0, %v2653
      %v2655 = vpop.f32.mrb[0].mxu0
      %v2656 = vadd.f32 0.0, %v2655
      %v2657 = vpop.f32.mrb[0].mxu0
      %v2658 = vadd.f32 0.0, %v2657
      %2659 = vmatprep.mubr.bf16.mxu0 0
      %2660 = vmatmul.mubr.bf16.gmra.mrb[0].mxu0 %v2572
      %v2661 = vpop.f32.mrb[0].mxu0
      %v2662 = vadd.f32 0.0, %v2661
      %v2663 = vpop.f32.mrb[0].mxu0
      %v2664 = vadd.f32 0.0, %v2663
      %v2665 = vpop.f32.mrb[0].mxu0
      %v2666 = vadd.f32 0.0, %v2665
      %v2667 = vpop.f32.mrb[0].mxu0
      %v2668 = vadd.f32 0.0, %v2667
      %2669 = vdwg.mxu0
      %2670 = vmatprep.subr.bf16.mxu0 %v2585
      %2671 = vmatpush1.bf16.msra.mxu0 %v2582
      %2672 = vmatprep.subr.bf16.mxu0 0
      %2673 = vmatpush1.bf16.msra.mxu0 0
      %2674 = vmatprep.subr.bf16.mxu0 0
      %2675 = vmatpush1.bf16.msra.mxu0 0
      %2676 = vmatprep.subr.bf16.mxu0 0
      %2677 = vmatpush1.bf16.msra.mxu0 0
      %2678 = vmatprep.subr.bf16.mxu0 0
      %2679 = vmatpush1.bf16.msra.mxu0 0
      %2680 = vmatprep.subr.bf16.mxu0 0
      %2681 = vmatpush1.bf16.msra.mxu0 0
      %2682 = vmatprep.subr.bf16.mxu0 0
      %2683 = vmatpush1.bf16.msra.mxu0 0
      %2684 = vmatprep.subr.bf16.mxu0 0
      %2685 = vmatpush1.bf16.msra.mxu0 0
      %2686 = vmatprep.subr.bf16.mxu0 0
      %2687 = vmatpush1.bf16.msra.mxu0 0
      %2688 = vmatprep.subr.bf16.mxu0 0
      %2689 = vmatpush1.bf16.msra.mxu0 0
      %2690 = vmatprep.subr.bf16.mxu0 0
      %2691 = vmatpush1.bf16.msra.mxu0 0
      %2692 = vmatprep.subr.bf16.mxu0 0
      %2693 = vmatpush1.bf16.msra.mxu0 0
      %2694 = vmatprep.subr.bf16.mxu0 0
      %2695 = vmatpush1.bf16.msra.mxu0 0
      %2696 = vmatprep.subr.bf16.mxu0 0
      %2697 = vmatpush1.bf16.msra.mxu0 0
      %2698 = vmatprep.subr.bf16.mxu0 0
      %2699 = vmatpush1.bf16.msra.mxu0 0
      %2700 = vmatprep.subr.bf16.mxu0 0
      %2701 = vmatpush1.bf16.msra.mxu0 0
      %2702 = vmatprep.mubr.bf16.mxu0 0
      %2703 = vmatmul.mubr.bf16.gmra.mrb[0].mxu0 %v2560
      %v2704 = vpop.f32.mrb[0].mxu0
      %v2705 = vadd.f32 0.0, %v2704
      %v2706 = vpop.f32.mrb[0].mxu0
      %v2707 = vadd.f32 0.0, %v2706
      %v2708 = vpop.f32.mrb[0].mxu0
      %v2709 = vadd.f32 0.0, %v2708
      %v2710 = vpop.f32.mrb[0].mxu0
      %v2711 = vadd.f32 0.0, %v2710
      %2712 = vmatprep.mubr.bf16.mxu0 0
      %2713 = vmatmul.mubr.bf16.gmra.mrb[0].mxu0 %v2563
      %v2714 = vpop.f32.mrb[0].mxu0
      %v2715 = vadd.f32 0.0, %v2714
      %v2716 = vpop.f32.mrb[0].mxu0
      %v2717 = vadd.f32 0.0, %v2716
      %v2718 = vpop.f32.mrb[0].mxu0
      %v2719 = vadd.f32 0.0, %v2718
      %v2720 = vpop.f32.mrb[0].mxu0
      %v2721 = vadd.f32 0.0, %v2720
      %2722 = vmatprep.mubr.bf16.mxu0 0
      %2723 = vmatmul.mubr.bf16.gmra.mrb[0].mxu0 %v2566
      %v2724 = vpop.f32.mrb[0].mxu0
      %v2725 = vadd.f32 0.0, %v2724
      %v2726 = vpop.f32.mrb[0].mxu0
      %v2727 = vadd.f32 0.0, %v2726
      %v2728 = vpop.f32.mrb[0].mxu0
      %v2729 = vadd.f32 0.0, %v2728
      %v2730 = vpop.f32.mrb[0].mxu0
      %v2731 = vadd.f32 0.0, %v2730
      %2732 = vmatprep.mubr.bf16.mxu0 0
      %2733 = vmatmul.mubr.bf16.gmra.mrb[0].mxu0 %v2569
      %v2734 = vpop.f32.mrb[0].mxu0
      %v2735 = vadd.f32 0.0, %v2734
      %v2736 = vpop.f32.mrb[0].mxu0
      %v2737 = vadd.f32 0.0, %v2736
      %v2738 = vpop.f32.mrb[0].mxu0
      %v2739 = vadd.f32 0.0, %v2738
      %v2740 = vpop.f32.mrb[0].mxu0
      %v2741 = vadd.f32 0.0, %v2740
      %2742 = vmatprep.mubr.bf16.mxu0 0
      %2743 = vmatmul.mubr.bf16.gmra.mrb[0].mxu0 %v2572
      %v2744 = vpop.f32.mrb[0].mxu0
      %v2745 = vadd.f32 0.0, %v2744
      %v2746 = vpop.f32.mrb[0].mxu0
      %v2747 = vadd.f32 0.0, %v2746
      %v2748 = vpop.f32.mrb[0].mxu0
      %v2749 = vadd.f32 0.0, %v2748
      %v2750 = vpop.f32.mrb[0].mxu0
      %v2751 = vadd.f32 0.0, %v2750
      %2752 = vdwg.mxu0
      %v2753 = vadd.f32 %v2622, 0.0
      %v2754 = vadd.f32 %v2624, 0.0
      %v2755 = vadd.f32 %v2705, 0.0
      %v2756 = vadd.f32 %v2707, 0.0
      %v2757 = vadd.f32 %v2626, 0.0
      %v2758 = vadd.f32 %v2628, 0.0
      %v2759 = vadd.f32 %v2709, 0.0
      %v2760 = vadd.f32 %v2711, 0.0
      %2769 = vrot.lane.b32.xlu0 %v2632, 126
      %v2770 = vpop.permute.xlu0 %2769
      %2771 = vrot.lane.b32.xlu0 %v2634, 126
      %v2772 = vpop.permute.xlu0 %2771
      %2773 = vrot.lane.b32.xlu0 %v2715, 126
      %v2774 = vpop.permute.xlu0 %2773
      %2775 = vrot.lane.b32.xlu0 %v2717, 126
      %v2776 = vpop.permute.xlu0 %2775
      %2777 = vrot.lane.b32.xlu0 %v2636, 126
      %v2778 = vpop.permute.xlu0 %2777
      %2779 = vrot.lane.b32.xlu0 %v2638, 126
      %v2780 = vpop.permute.xlu0 %2779
      %2781 = vrot.lane.b32.xlu0 %v2719, 126
      %v2782 = vpop.permute.xlu0 %2781
      %2783 = vrot.lane.b32.xlu0 %v2721, 126
      %v2784 = vpop.permute.xlu0 %2783
      %v2785 = vsel %vm701, %v2770, %v2772
      %v2786 = vsel %vm701, %v2772, %v2774
      %v2787 = vsel %vm701, %v2774, %v2776
      %v2788 = vsel %vm701, %v2778, %v2780
      %v2789 = vsel %vm701, %v2780, %v2782
      %v2790 = vsel %vm701, %v2782, %v2784
      %v2799 = vadd.f32 %v2753, %v2785
      %v2800 = vadd.f32 %v2754, %v2786
      %v2801 = vadd.f32 %v2755, %v2787
      %v2802 = vadd.f32 %v2756, %v2776
      %v2803 = vadd.f32 %v2757, %v2788
      %v2804 = vadd.f32 %v2758, %v2789
      %v2805 = vadd.f32 %v2759, %v2790
      %v2806 = vadd.f32 %v2760, %v2784
      %2815 = vrot.lane.b32.xlu0 %v2642, 124
      %v2816 = vpop.permute.xlu0 %2815
      %2817 = vrot.lane.b32.xlu0 %v2644, 124
      %v2818 = vpop.permute.xlu0 %2817
      %2819 = vrot.lane.b32.xlu0 %v2725, 124
      %v2820 = vpop.permute.xlu0 %2819
      %2821 = vrot.lane.b32.xlu0 %v2727, 124
      %v2822 = vpop.permute.xlu0 %2821
      %2823 = vrot.lane.b32.xlu0 %v2646, 124
      %v2824 = vpop.permute.xlu0 %2823
      %2825 = vrot.lane.b32.xlu0 %v2648, 124
      %v2826 = vpop.permute.xlu0 %2825
      %2827 = vrot.lane.b32.xlu0 %v2729, 124
      %v2828 = vpop.permute.xlu0 %2827
      %2829 = vrot.lane.b32.xlu0 %v2731, 124
      %v2830 = vpop.permute.xlu0 %2829
      %v2831 = vsel %vm773, %v2816, %v2818
      %v2832 = vsel %vm773, %v2818, %v2820
      %v2833 = vsel %vm773, %v2820, %v2822
      %v2834 = vsel %vm773, %v2824, %v2826
      %v2835 = vsel %vm773, %v2826, %v2828
      %v2836 = vsel %vm773, %v2828, %v2830
      %v2845 = vadd.f32 %v2799, %v2831
      %v2846 = vadd.f32 %v2800, %v2832
      %v2847 = vadd.f32 %v2801, %v2833
      %v2848 = vadd.f32 %v2802, %v2822
      %v2849 = vadd.f32 %v2803, %v2834
      %v2850 = vadd.f32 %v2804, %v2835
      %v2851 = vadd.f32 %v2805, %v2836
      %v2852 = vadd.f32 %v2806, %v2830
      %2861 = vrot.lane.b32.xlu0 %v2652, 122
      %v2862 = vpop.permute.xlu0 %2861
      %2863 = vrot.lane.b32.xlu0 %v2654, 122
      %v2864 = vpop.permute.xlu0 %2863
      %2865 = vrot.lane.b32.xlu0 %v2735, 122
      %v2866 = vpop.permute.xlu0 %2865
      %2867 = vrot.lane.b32.xlu0 %v2737, 122
      %v2868 = vpop.permute.xlu0 %2867
      %2869 = vrot.lane.b32.xlu0 %v2656, 122
      %v2870 = vpop.permute.xlu0 %2869
      %2871 = vrot.lane.b32.xlu0 %v2658, 122
      %v2872 = vpop.permute.xlu0 %2871
      %2873 = vrot.lane.b32.xlu0 %v2739, 122
      %v2874 = vpop.permute.xlu0 %2873
      %2875 = vrot.lane.b32.xlu0 %v2741, 122
      %v2876 = vpop.permute.xlu0 %2875
      %vm2877 = vcmask 998400
      %v2878 = vsel %vm2877, %v2862, %v2864
      %v2879 = vsel %vm2877, %v2864, %v2866
      %v2880 = vsel %vm2877, %v2866, %v2868
      %v2881 = vsel %vm2877, %v2870, %v2872
      %v2882 = vsel %vm2877, %v2872, %v2874
      %v2883 = vsel %vm2877, %v2874, %v2876
      %v2892 = vadd.f32 %v2845, %v2878
      %v2893 = vadd.f32 %v2846, %v2879
      %v2894 = vadd.f32 %v2847, %v2880
      %v2895 = vadd.f32 %v2848, %v2868
      %v2896 = vadd.f32 %v2849, %v2881
      %v2897 = vadd.f32 %v2850, %v2882
      %v2898 = vadd.f32 %v2851, %v2883
      %v2899 = vadd.f32 %v2852, %v2876
      %2908 = vrot.lane.b32.xlu0 %v2662, 120
      %v2909 = vpop.permute.xlu0 %2908
      %2910 = vrot.lane.b32.xlu0 %v2664, 120
      %v2911 = vpop.permute.xlu0 %2910
      %2912 = vrot.lane.b32.xlu0 %v2745, 120
      %v2913 = vpop.permute.xlu0 %2912
      %2914 = vrot.lane.b32.xlu0 %v2747, 120
      %v2915 = vpop.permute.xlu0 %2914
      %2916 = vrot.lane.b32.xlu0 %v2666, 120
      %v2917 = vpop.permute.xlu0 %2916
      %2918 = vrot.lane.b32.xlu0 %v2668, 120
      %v2919 = vpop.permute.xlu0 %2918
      %2920 = vrot.lane.b32.xlu0 %v2749, 120
      %v2921 = vpop.permute.xlu0 %2920
      %2922 = vrot.lane.b32.xlu0 %v2751, 120
      %v2923 = vpop.permute.xlu0 %2922
      %vm2924 = vcmask 982016
      %v2925 = vsel %vm2924, %v2909, %v2911
      %v2926 = vsel %vm2924, %v2911, %v2913
      %v2927 = vsel %vm2924, %v2913, %v2915
      %v2928 = vsel %vm2924, %v2917, %v2919
      %v2929 = vsel %vm2924, %v2919, %v2921
      %v2930 = vsel %vm2924, %v2921, %v2923
      %v2939 = vadd.f32 %v2892, %v2925
      %v2940 = vadd.f32 %v2893, %v2926
      %v2941 = vadd.f32 %v2894, %v2927
      %v2942 = vadd.f32 %v2895, %v2915
      %v2943 = vadd.f32 %v2896, %v2928
      %v2944 = vadd.f32 %v2897, %v2929
      %v2945 = vadd.f32 %v2898, %v2930
      %v2946 = vadd.f32 %v2899, %v2923
      %v2947 = vld [vmem:[%s3 + $0x28] sm:$0xf]
      %v2948 = vld [vmem:[%s3 + $0x2c] sm:$0xf]
      %v2949 = vld [vmem:[%s3 + $0x30] sm:$0xf]
      %v2950 = vld [vmem:[%s3 + $0x34] sm:$0xf]
      %v2951 = vld [vmem:[%s3 + $0x38] sm:$0xf]
      %v2952 = vld [vmem:[%s3 + $0x3c] sm:$0xf]
      %v2953 = vld [vmem:[%s3 + $0x40] sm:$0xf]
      %v2954 = vld [vmem:[%s3 + $0x44] sm:$0xf]
      %v2955 = vld [vmem:[%s3 + $0x48] sm:$0xf]
      %v2956 = vld [vmem:[%s3 + $0x4c] sm:$0xf]
      %v2967 = vunpack.c.l.b16 %v2947
      %v2968 = vunpack.c.l.b16 %v2948
      %v2969 = vunpack.c.l.b16 %v2949
      %v2970 = vunpack.c.l.b16 %v2950
      %v2971 = vunpack.c.l.b16 %v2951
      %v2972 = vunpack.c.l.b16 %v2952
      %v2973 = vunpack.c.l.b16 %v2953
      %v2974 = vunpack.c.l.b16 %v2954
      %v2975 = vunpack.c.l.b16 %v2955
      %v2976 = vunpack.c.l.b16 %v2956
      %v2977 = vpack.c.b16 %v2968, %v2967
      %v2978 = vpack.c.b16 %v2970, %v2969
      %v2979 = vpack.c.b16 %v2972, %v2971
      %v2980 = vpack.c.b16 %v2974, %v2973
      %v2981 = vpack.c.b16 %v2976, %v2975
      %v2983 = vsel %vm2558, %v2977, 0
      %v2986 = vsel %vm2558, %v2978, 0
      %v2989 = vsel %vm2558, %v2979, 0
      %v2992 = vsel %vm2558, %v2980, 0
      %v2995 = vsel %vm2558, %v2981, 0
      %2997 = vmatprep.subr.bf16.mxu0 %v2579
      %2998 = vmatpush1.bf16.msra.mxu0 %v2576
      %2999 = vmatprep.subr.bf16.mxu0 0
      %3000 = vmatpush1.bf16.msra.mxu0 0
      %3001 = vmatprep.subr.bf16.mxu0 0
      %3002 = vmatpush1.bf16.msra.mxu0 0
      %3003 = vmatprep.subr.bf16.mxu0 0
      %3004 = vmatpush1.bf16.msra.mxu0 0
      %3005 = vmatprep.subr.bf16.mxu0 0
      %3006 = vmatpush1.bf16.msra.mxu0 0
      %3007 = vmatprep.subr.bf16.mxu0 0
      %3008 = vmatpush1.bf16.msra.mxu0 0
      %3009 = vmatprep.subr.bf16.mxu0 0
      %3010 = vmatpush1.bf16.msra.mxu0 0
      %3011 = vmatprep.subr.bf16.mxu0 0
      %3012 = vmatpush1.bf16.msra.mxu0 0
      %3013 = vmatprep.subr.bf16.mxu0 0
      %3014 = vmatpush1.bf16.msra.mxu0 0
      %3015 = vmatprep.subr.bf16.mxu0 0
      %3016 = vmatpush1.bf16.msra.mxu0 0
      %3017 = vmatprep.subr.bf16.mxu0 0
      %3018 = vmatpush1.bf16.msra.mxu0 0
      %3019 = vmatprep.subr.bf16.mxu0 0
      %3020 = vmatpush1.bf16.msra.mxu0 0
      %3021 = vmatprep.subr.bf16.mxu0 0
      %3022 = vmatpush1.bf16.msra.mxu0 0
      %3023 = vmatprep.subr.bf16.mxu0 0
      %3024 = vmatpush1.bf16.msra.mxu0 0
      %3025 = vmatprep.subr.bf16.mxu0 0
      %3026 = vmatpush1.bf16.msra.mxu0 0
      %3027 = vmatprep.subr.bf16.mxu0 0
      %3028 = vmatpush1.bf16.msra.mxu0 0
      %3029 = vmatprep.mubr.bf16.mxu0 0
      %3030 = vmatmul.mubr.bf16.gmra.mrb[0].mxu0 %v2983
      %v3031 = vpop.f32.mrb[0].mxu0
      %v3032 = vadd.f32 0.0, %v3031
      %v3033 = vpop.f32.mrb[0].mxu0
      %v3034 = vadd.f32 0.0, %v3033
      %v3035 = vpop.f32.mrb[0].mxu0
      %v3036 = vadd.f32 0.0, %v3035
      %v3037 = vpop.f32.mrb[0].mxu0
      %v3038 = vadd.f32 0.0, %v3037
      %3039 = vmatprep.mubr.bf16.mxu0 0
      %3040 = vmatmul.mubr.bf16.gmra.mrb[0].mxu0 %v2986
      %v3041 = vpop.f32.mrb[0].mxu0
      %v3042 = vadd.f32 0.0, %v3041
      %v3043 = vpop.f32.mrb[0].mxu0
      %v3044 = vadd.f32 0.0, %v3043
      %v3045 = vpop.f32.mrb[0].mxu0
      %v3046 = vadd.f32 0.0, %v3045
      %v3047 = vpop.f32.mrb[0].mxu0
      %v3048 = vadd.f32 0.0, %v3047
      %3049 = vmatprep.mubr.bf16.mxu0 0
      %3050 = vmatmul.mubr.bf16.gmra.mrb[0].mxu0 %v2989
      %v3051 = vpop.f32.mrb[0].mxu0
      %v3052 = vadd.f32 0.0, %v3051
      %v3053 = vpop.f32.mrb[0].mxu0
      %v3054 = vadd.f32 0.0, %v3053
      %v3055 = vpop.f32.mrb[0].mxu0
      %v3056 = vadd.f32 0.0, %v3055
      %v3057 = vpop.f32.mrb[0].mxu0
      %v3058 = vadd.f32 0.0, %v3057
      %3059 = vmatprep.mubr.bf16.mxu0 0
      %3060 = vmatmul.mubr.bf16.gmra.mrb[0].mxu0 %v2992
      %v3061 = vpop.f32.mrb[0].mxu0
      %v3062 = vadd.f32 0.0, %v3061
      %v3063 = vpop.f32.mrb[0].mxu0
      %v3064 = vadd.f32 0.0, %v3063
      %v3065 = vpop.f32.mrb[0].mxu0
      %v3066 = vadd.f32 0.0, %v3065
      %v3067 = vpop.f32.mrb[0].mxu0
      %v3068 = vadd.f32 0.0, %v3067
      %3069 = vmatprep.mubr.bf16.mxu0 0
      %3070 = vmatmul.mubr.bf16.gmra.mrb[0].mxu0 %v2995
      %v3071 = vpop.f32.mrb[0].mxu0
      %v3072 = vadd.f32 0.0, %v3071
      %v3073 = vpop.f32.mrb[0].mxu0
      %v3074 = vadd.f32 0.0, %v3073
      %v3075 = vpop.f32.mrb[0].mxu0
      %v3076 = vadd.f32 0.0, %v3075
      %v3077 = vpop.f32.mrb[0].mxu0
      %v3078 = vadd.f32 0.0, %v3077
      %3079 = vdwg.mxu0
      %3080 = vmatprep.subr.bf16.mxu0 %v2585
      %3081 = vmatpush1.bf16.msra.mxu0 %v2582
      %3082 = vmatprep.subr.bf16.mxu0 0
      %3083 = vmatpush1.bf16.msra.mxu0 0
      %3084 = vmatprep.subr.bf16.mxu0 0
      %3085 = vmatpush1.bf16.msra.mxu0 0
      %3086 = vmatprep.subr.bf16.mxu0 0
      %3087 = vmatpush1.bf16.msra.mxu0 0
      %3088 = vmatprep.subr.bf16.mxu0 0
      %3089 = vmatpush1.bf16.msra.mxu0 0
      %3090 = vmatprep.subr.bf16.mxu0 0
      %3091 = vmatpush1.bf16.msra.mxu0 0
      %3092 = vmatprep.subr.bf16.mxu0 0
      %3093 = vmatpush1.bf16.msra.mxu0 0
      %3094 = vmatprep.subr.bf16.mxu0 0
      %3095 = vmatpush1.bf16.msra.mxu0 0
      %3096 = vmatprep.subr.bf16.mxu0 0
      %3097 = vmatpush1.bf16.msra.mxu0 0
      %3098 = vmatprep.subr.bf16.mxu0 0
      %3099 = vmatpush1.bf16.msra.mxu0 0
      %3100 = vmatprep.subr.bf16.mxu0 0
      %3101 = vmatpush1.bf16.msra.mxu0 0
      %3102 = vmatprep.subr.bf16.mxu0 0
      %3103 = vmatpush1.bf16.msra.mxu0 0
      %3104 = vmatprep.subr.bf16.mxu0 0
      %3105 = vmatpush1.bf16.msra.mxu0 0
      %3106 = vmatprep.subr.bf16.mxu0 0
      %3107 = vmatpush1.bf16.msra.mxu0 0
      %3108 = vmatprep.subr.bf16.mxu0 0
      %3109 = vmatpush1.bf16.msra.mxu0 0
      %3110 = vmatprep.subr.bf16.mxu0 0
      %3111 = vmatpush1.bf16.msra.mxu0 0
      %3112 = vmatprep.mubr.bf16.mxu0 0
      %3113 = vmatmul.mubr.bf16.gmra.mrb[0].mxu0 %v2983
      %v3114 = vpop.f32.mrb[0].mxu0
      %v3115 = vadd.f32 0.0, %v3114
      %v3116 = vpop.f32.mrb[0].mxu0
      %v3117 = vadd.f32 0.0, %v3116
      %v3118 = vpop.f32.mrb[0].mxu0
      %v3119 = vadd.f32 0.0, %v3118
      %v3120 = vpop.f32.mrb[0].mxu0
      %v3121 = vadd.f32 0.0, %v3120
      %3122 = vmatprep.mubr.bf16.mxu0 0
      %3123 = vmatmul.mubr.bf16.gmra.mrb[0].mxu0 %v2986
      %v3124 = vpop.f32.mrb[0].mxu0
      %v3125 = vadd.f32 0.0, %v3124
      %v3126 = vpop.f32.mrb[0].mxu0
      %v3127 = vadd.f32 0.0, %v3126
      %v3128 = vpop.f32.mrb[0].mxu0
      %v3129 = vadd.f32 0.0, %v3128
      %v3130 = vpop.f32.mrb[0].mxu0
      %v3131 = vadd.f32 0.0, %v3130
      %3132 = vmatprep.mubr.bf16.mxu0 0
      %3133 = vmatmul.mubr.bf16.gmra.mrb[0].mxu0 %v2989
      %v3134 = vpop.f32.mrb[0].mxu0
      %v3135 = vadd.f32 0.0, %v3134
      %v3136 = vpop.f32.mrb[0].mxu0
      %v3137 = vadd.f32 0.0, %v3136
      %v3138 = vpop.f32.mrb[0].mxu0
      %v3139 = vadd.f32 0.0, %v3138
      %v3140 = vpop.f32.mrb[0].mxu0
      %v3141 = vadd.f32 0.0, %v3140
      %3142 = vmatprep.mubr.bf16.mxu0 0
      %3143 = vmatmul.mubr.bf16.gmra.mrb[0].mxu0 %v2992
      %v3144 = vpop.f32.mrb[0].mxu0
      %v3145 = vadd.f32 0.0, %v3144
      %v3146 = vpop.f32.mrb[0].mxu0
      %v3147 = vadd.f32 0.0, %v3146
      %v3148 = vpop.f32.mrb[0].mxu0
      %v3149 = vadd.f32 0.0, %v3148
      %v3150 = vpop.f32.mrb[0].mxu0
      %v3151 = vadd.f32 0.0, %v3150
      %3152 = vmatprep.mubr.bf16.mxu0 0
      %3153 = vmatmul.mubr.bf16.gmra.mrb[0].mxu0 %v2995
      %v3154 = vpop.f32.mrb[0].mxu0
      %v3155 = vadd.f32 0.0, %v3154
      %v3156 = vpop.f32.mrb[0].mxu0
      %v3157 = vadd.f32 0.0, %v3156
      %v3158 = vpop.f32.mrb[0].mxu0
      %v3159 = vadd.f32 0.0, %v3158
      %v3160 = vpop.f32.mrb[0].mxu0
      %v3161 = vadd.f32 0.0, %v3160
      %3162 = vdwg.mxu0
      %3171 = vrot.lane.b32.xlu0 %v3032, 72
      %v3172 = vpop.permute.xlu0 %3171
      %3173 = vrot.lane.b32.xlu0 %v3034, 72
      %v3174 = vpop.permute.xlu0 %3173
      %3175 = vrot.lane.b32.xlu0 %v3115, 72
      %v3176 = vpop.permute.xlu0 %3175
      %3177 = vrot.lane.b32.xlu0 %v3117, 72
      %v3178 = vpop.permute.xlu0 %3177
      %3179 = vrot.lane.b32.xlu0 %v3036, 72
      %v3180 = vpop.permute.xlu0 %3179
      %3181 = vrot.lane.b32.xlu0 %v3038, 72
      %v3182 = vpop.permute.xlu0 %3181
      %3183 = vrot.lane.b32.xlu0 %v3119, 72
      %v3184 = vpop.permute.xlu0 %3183
      %3185 = vrot.lane.b32.xlu0 %v3121, 72
      %v3186 = vpop.permute.xlu0 %3185
      %v3187 = vsel %vm1409, %v3172, %v3174
      %v3188 = vsel %vm1409, %v3174, %v3176
      %v3189 = vsel %vm1409, %v3176, %v3178
      %v3190 = vsel %vm1409, %v3180, %v3182
      %v3191 = vsel %vm1409, %v3182, %v3184
      %v3192 = vsel %vm1409, %v3184, %v3186
      %v3201 = vadd.f32 %v2939, %v3187
      %v3202 = vadd.f32 %v2940, %v3188
      %v3203 = vadd.f32 %v2941, %v3189
      %v3204 = vadd.f32 %v2942, %v3178
      %v3205 = vadd.f32 %v2943, %v3190
      %v3206 = vadd.f32 %v2944, %v3191
      %v3207 = vadd.f32 %v2945, %v3192
      %v3208 = vadd.f32 %v2946, %v3186
      %3217 = vrot.lane.b32.xlu0 %v3042, 70
      %v3218 = vpop.permute.xlu0 %3217
      %3219 = vrot.lane.b32.xlu0 %v3044, 70
      %v3220 = vpop.permute.xlu0 %3219
      %3221 = vrot.lane.b32.xlu0 %v3125, 70
      %v3222 = vpop.permute.xlu0 %3221
      %3223 = vrot.lane.b32.xlu0 %v3127, 70
      %v3224 = vpop.permute.xlu0 %3223
      %3225 = vrot.lane.b32.xlu0 %v3046, 70
      %v3226 = vpop.permute.xlu0 %3225
      %3227 = vrot.lane.b32.xlu0 %v3048, 70
      %v3228 = vpop.permute.xlu0 %3227
      %3229 = vrot.lane.b32.xlu0 %v3129, 70
      %v3230 = vpop.permute.xlu0 %3229
      %3231 = vrot.lane.b32.xlu0 %v3131, 70
      %v3232 = vpop.permute.xlu0 %3231
      %v3233 = vsel %vm1481, %v3218, %v3220
      %v3234 = vsel %vm1481, %v3220, %v3222
      %v3235 = vsel %vm1481, %v3222, %v3224
      %v3236 = vsel %vm1481, %v3226, %v3228
      %v3237 = vsel %vm1481, %v3228, %v3230
      %v3238 = vsel %vm1481, %v3230, %v3232
      %v3247 = vadd.f32 %v3201, %v3233
      %v3248 = vadd.f32 %v3202, %v3234
      %v3249 = vadd.f32 %v3203, %v3235
      %v3250 = vadd.f32 %v3204, %v3224
      %v3251 = vadd.f32 %v3205, %v3236
      %v3252 = vadd.f32 %v3206, %v3237
      %v3253 = vadd.f32 %v3207, %v3238
      %v3254 = vadd.f32 %v3208, %v3232
      %3263 = vrot.lane.b32.xlu0 %v3052, 68
      %v3264 = vpop.permute.xlu0 %3263
      %3265 = vrot.lane.b32.xlu0 %v3054, 68
      %v3266 = vpop.permute.xlu0 %3265
      %3267 = vrot.lane.b32.xlu0 %v3135, 68
      %v3268 = vpop.permute.xlu0 %3267
      %3269 = vrot.lane.b32.xlu0 %v3137, 68
      %v3270 = vpop.permute.xlu0 %3269
      %3271 = vrot.lane.b32.xlu0 %v3056, 68
      %v3272 = vpop.permute.xlu0 %3271
      %3273 = vrot.lane.b32.xlu0 %v3058, 68
      %v3274 = vpop.permute.xlu0 %3273
      %3275 = vrot.lane.b32.xlu0 %v3139, 68
      %v3276 = vpop.permute.xlu0 %3275
      %3277 = vrot.lane.b32.xlu0 %v3141, 68
      %v3278 = vpop.permute.xlu0 %3277
      %v3279 = vsel %vm1553, %v3264, %v3266
      %v3280 = vsel %vm1553, %v3266, %v3268
      %v3281 = vsel %vm1553, %v3268, %v3270
      %v3282 = vsel %vm1553, %v3272, %v3274
      %v3283 = vsel %vm1553, %v3274, %v3276
      %v3284 = vsel %vm1553, %v3276, %v3278
      %v3293 = vadd.f32 %v3247, %v3279
      %v3294 = vadd.f32 %v3248, %v3280
      %v3295 = vadd.f32 %v3249, %v3281
      %v3296 = vadd.f32 %v3250, %v3270
      %v3297 = vadd.f32 %v3251, %v3282
      %v3298 = vadd.f32 %v3252, %v3283
      %v3299 = vadd.f32 %v3253, %v3284
      %v3300 = vadd.f32 %v3254, %v3278
      %3309 = vrot.lane.b32.xlu0 %v3062, 66
      %v3310 = vpop.permute.xlu0 %3309
      %3311 = vrot.lane.b32.xlu0 %v3064, 66
      %v3312 = vpop.permute.xlu0 %3311
      %3313 = vrot.lane.b32.xlu0 %v3145, 66
      %v3314 = vpop.permute.xlu0 %3313
      %3315 = vrot.lane.b32.xlu0 %v3147, 66
      %v3316 = vpop.permute.xlu0 %3315
      %3317 = vrot.lane.b32.xlu0 %v3066, 66
      %v3318 = vpop.permute.xlu0 %3317
      %3319 = vrot.lane.b32.xlu0 %v3068, 66
      %v3320 = vpop.permute.xlu0 %3319
      %3321 = vrot.lane.b32.xlu0 %v3149, 66
      %v3322 = vpop.permute.xlu0 %3321
      %3323 = vrot.lane.b32.xlu0 %v3151, 66
      %v3324 = vpop.permute.xlu0 %3323
      %vm3325 = vcmask 539648
      %v3326 = vsel %vm3325, %v3310, %v3312
      %v3327 = vsel %vm3325, %v3312, %v3314
      %v3328 = vsel %vm3325, %v3314, %v3316
      %v3329 = vsel %vm3325, %v3318, %v3320
      %v3330 = vsel %vm3325, %v3320, %v3322
      %v3331 = vsel %vm3325, %v3322, %v3324
      %v3340 = vadd.f32 %v3293, %v3326
      %v3341 = vadd.f32 %v3294, %v3327
      %v3342 = vadd.f32 %v3295, %v3328
      %v3343 = vadd.f32 %v3296, %v3316
      %v3344 = vadd.f32 %v3297, %v3329
      %v3345 = vadd.f32 %v3298, %v3330
      %v3346 = vadd.f32 %v3299, %v3331
      %v3347 = vadd.f32 %v3300, %v3324
      %3356 = vrot.lane.b32.xlu0 %v3072, 64
      %v3357 = vpop.permute.xlu0 %3356
      %3358 = vrot.lane.b32.xlu0 %v3074, 64
      %v3359 = vpop.permute.xlu0 %3358
      %3360 = vrot.lane.b32.xlu0 %v3155, 64
      %v3361 = vpop.permute.xlu0 %3360
      %3362 = vrot.lane.b32.xlu0 %v3157, 64
      %v3363 = vpop.permute.xlu0 %3362
      %3364 = vrot.lane.b32.xlu0 %v3076, 64
      %v3365 = vpop.permute.xlu0 %3364
      %3366 = vrot.lane.b32.xlu0 %v3078, 64
      %v3367 = vpop.permute.xlu0 %3366
      %3368 = vrot.lane.b32.xlu0 %v3159, 64
      %v3369 = vpop.permute.xlu0 %3368
      %3370 = vrot.lane.b32.xlu0 %v3161, 64
      %v3371 = vpop.permute.xlu0 %3370
      %vm3372 = vcmask 523264
      %v3373 = vsel %vm3372, %v3357, %v3359
      %v3374 = vsel %vm3372, %v3359, %v3361
      %v3375 = vsel %vm3372, %v3361, %v3363
      %v3376 = vsel %vm3372, %v3365, %v3367
      %v3377 = vsel %vm3372, %v3367, %v3369
      %v3378 = vsel %vm3372, %v3369, %v3371
      %v3387 = vadd.f32 %v3340, %v3373
      %v3388 = vadd.f32 %v3341, %v3374
      %v3389 = vadd.f32 %v3342, %v3375
      %v3390 = vadd.f32 %v3343, %v3363
      %v3391 = vadd.f32 %v3344, %v3376
      %v3392 = vadd.f32 %v3345, %v3377
      %v3393 = vadd.f32 %v3346, %v3378
      %v3394 = vadd.f32 %v3347, %v3371
      %v3395 = vld [vmem:[%s3 + $0x50] sm:$0xf]
      %v3396 = vld [vmem:[%s3 + $0x54] sm:$0xf]
      %v3397 = vld [vmem:[%s3 + $0x58] sm:$0xf]
      %v3398 = vld [vmem:[%s3 + $0x5c] sm:$0xf]
      %v3399 = vld [vmem:[%s3 + $0x60] sm:$0xf]
      %v3400 = vld [vmem:[%s3 + $0x64] sm:$0xf]
      %v3401 = vld [vmem:[%s3 + $0x68] sm:$0xf]
      %v3402 = vld [vmem:[%s3 + $0x6c] sm:$0xf]
      %v3403 = vld [vmem:[%s3 + $0x70] sm:$0xf]
      %v3404 = vld [vmem:[%s3 + $0x74] sm:$0xf]
      %v3415 = vunpack.c.l.b16 %v3395
      %v3416 = vunpack.c.l.b16 %v3396
      %v3417 = vunpack.c.l.b16 %v3397
      %v3418 = vunpack.c.l.b16 %v3398
      %v3419 = vunpack.c.l.b16 %v3399
      %v3420 = vunpack.c.l.b16 %v3400
      %v3421 = vunpack.c.l.b16 %v3401
      %v3422 = vunpack.c.l.b16 %v3402
      %v3423 = vunpack.c.l.b16 %v3403
      %v3424 = vunpack.c.l.b16 %v3404
      %v3425 = vpack.c.b16 %v3416, %v3415
      %v3426 = vpack.c.b16 %v3418, %v3417
      %v3427 = vpack.c.b16 %v3420, %v3419
      %v3428 = vpack.c.b16 %v3422, %v3421
      %v3429 = vpack.c.b16 %v3424, %v3423
      %v3431 = vsel %vm2558, %v3425, 0
      %v3434 = vsel %vm2558, %v3426, 0
      %v3437 = vsel %vm2558, %v3427, 0
      %v3440 = vsel %vm2558, %v3428, 0
      %v3443 = vsel %vm2558, %v3429, 0
      %v3446 = vsel %vm2574, %v2522, 0
      %3448 = vmatprep.subr.bf16.mxu0 %v2579
      %3449 = vmatpush1.bf16.msra.mxu0 %v2576
      %3450 = vmatprep.subr.bf16.mxu0 0
      %3451 = vmatpush1.bf16.msra.mxu0 0
      %3452 = vmatprep.subr.bf16.mxu0 0
      %3453 = vmatpush1.bf16.msra.mxu0 0
      %3454 = vmatprep.subr.bf16.mxu0 0
      %3455 = vmatpush1.bf16.msra.mxu0 0
      %3456 = vmatprep.subr.bf16.mxu0 0
      %3457 = vmatpush1.bf16.msra.mxu0 0
      %3458 = vmatprep.subr.bf16.mxu0 0
      %3459 = vmatpush1.bf16.msra.mxu0 0
      %3460 = vmatprep.subr.bf16.mxu0 0
      %3461 = vmatpush1.bf16.msra.mxu0 0
      %3462 = vmatprep.subr.bf16.mxu0 0
      %3463 = vmatpush1.bf16.msra.mxu0 0
      %3464 = vmatprep.subr.bf16.mxu0 0
      %3465 = vmatpush1.bf16.msra.mxu0 0
      %3466 = vmatprep.subr.bf16.mxu0 0
      %3467 = vmatpush1.bf16.msra.mxu0 0
      %3468 = vmatprep.subr.bf16.mxu0 0
      %3469 = vmatpush1.bf16.msra.mxu0 0
      %3470 = vmatprep.subr.bf16.mxu0 0
      %3471 = vmatpush1.bf16.msra.mxu0 0
      %3472 = vmatprep.subr.bf16.mxu0 0
      %3473 = vmatpush1.bf16.msra.mxu0 0
      %3474 = vmatprep.subr.bf16.mxu0 0
      %3475 = vmatpush1.bf16.msra.mxu0 0
      %3476 = vmatprep.subr.bf16.mxu0 0
      %3477 = vmatpush1.bf16.msra.mxu0 0
      %3478 = vmatprep.subr.bf16.mxu0 0
      %3479 = vmatpush1.bf16.msra.mxu0 0
      %3480 = vmatprep.mubr.bf16.mxu0 0
      %3481 = vmatmul.mubr.bf16.gmra.mrb[0].mxu0 %v3431
      %v3482 = vpop.f32.mrb[0].mxu0
      %v3483 = vadd.f32 0.0, %v3482
      %v3484 = vpop.f32.mrb[0].mxu0
      %v3485 = vadd.f32 0.0, %v3484
      %v3486 = vpop.f32.mrb[0].mxu0
      %v3487 = vadd.f32 0.0, %v3486
      %v3488 = vpop.f32.mrb[0].mxu0
      %v3489 = vadd.f32 0.0, %v3488
      %3490 = vmatprep.mubr.bf16.mxu0 0
      %3491 = vmatmul.mubr.bf16.gmra.mrb[0].mxu0 %v3434
      %v3492 = vpop.f32.mrb[0].mxu0
      %v3493 = vadd.f32 0.0, %v3492
      %v3494 = vpop.f32.mrb[0].mxu0
      %v3495 = vadd.f32 0.0, %v3494
      %v3496 = vpop.f32.mrb[0].mxu0
      %v3497 = vadd.f32 0.0, %v3496
      %v3498 = vpop.f32.mrb[0].mxu0
      %v3499 = vadd.f32 0.0, %v3498
      %3500 = vmatprep.mubr.bf16.mxu0 0
      %3501 = vmatmul.mubr.bf16.gmra.mrb[0].mxu0 %v3437
      %v3502 = vpop.f32.mrb[0].mxu0
      %v3503 = vadd.f32 0.0, %v3502
      %v3504 = vpop.f32.mrb[0].mxu0
      %v3505 = vadd.f32 0.0, %v3504
      %v3506 = vpop.f32.mrb[0].mxu0
      %v3507 = vadd.f32 0.0, %v3506
      %v3508 = vpop.f32.mrb[0].mxu0
      %v3509 = vadd.f32 0.0, %v3508
      %3510 = vmatprep.mubr.bf16.mxu0 0
      %3511 = vmatmul.mubr.bf16.gmra.mrb[0].mxu0 %v3440
      %v3512 = vpop.f32.mrb[0].mxu0
      %v3513 = vadd.f32 0.0, %v3512
      %v3514 = vpop.f32.mrb[0].mxu0
      %v3515 = vadd.f32 0.0, %v3514
      %v3516 = vpop.f32.mrb[0].mxu0
      %v3517 = vadd.f32 0.0, %v3516
      %v3518 = vpop.f32.mrb[0].mxu0
      %v3519 = vadd.f32 0.0, %v3518
      %3520 = vmatprep.mubr.bf16.mxu0 0
      %3521 = vmatmul.mubr.bf16.gmra.mrb[0].mxu0 %v3443
      %v3522 = vpop.f32.mrb[0].mxu0
      %v3523 = vadd.f32 0.0, %v3522
      %v3524 = vpop.f32.mrb[0].mxu0
      %v3525 = vadd.f32 0.0, %v3524
      %v3526 = vpop.f32.mrb[0].mxu0
      %v3527 = vadd.f32 0.0, %v3526
      %v3528 = vpop.f32.mrb[0].mxu0
      %v3529 = vadd.f32 0.0, %v3528
      %3530 = vdwg.mxu0
      %3531 = vmatprep.subr.bf16.mxu0 %v2585
      %3532 = vmatpush1.bf16.msra.mxu0 %v2582
      %3533 = vmatprep.subr.bf16.mxu0 0
      %3534 = vmatpush1.bf16.msra.mxu0 0
      %3535 = vmatprep.subr.bf16.mxu0 0
      %3536 = vmatpush1.bf16.msra.mxu0 0
      %3537 = vmatprep.subr.bf16.mxu0 0
      %3538 = vmatpush1.bf16.msra.mxu0 0
      %3539 = vmatprep.subr.bf16.mxu0 0
      %3540 = vmatpush1.bf16.msra.mxu0 0
      %3541 = vmatprep.subr.bf16.mxu0 0
      %3542 = vmatpush1.bf16.msra.mxu0 0
      %3543 = vmatprep.subr.bf16.mxu0 0
      %3544 = vmatpush1.bf16.msra.mxu0 0
      %3545 = vmatprep.subr.bf16.mxu0 0
      %3546 = vmatpush1.bf16.msra.mxu0 0
      %3547 = vmatprep.subr.bf16.mxu0 0
      %3548 = vmatpush1.bf16.msra.mxu0 0
      %3549 = vmatprep.subr.bf16.mxu0 0
      %3550 = vmatpush1.bf16.msra.mxu0 0
      %3551 = vmatprep.subr.bf16.mxu0 0
      %3552 = vmatpush1.bf16.msra.mxu0 0
      %3553 = vmatprep.subr.bf16.mxu0 0
      %3554 = vmatpush1.bf16.msra.mxu0 0
      %3555 = vmatprep.subr.bf16.mxu0 0
      %3556 = vmatpush1.bf16.msra.mxu0 0
      %3557 = vmatprep.subr.bf16.mxu0 0
      %3558 = vmatpush1.bf16.msra.mxu0 0
      %3559 = vmatprep.subr.bf16.mxu0 0
      %3560 = vmatpush1.bf16.msra.mxu0 0
      %3561 = vmatprep.subr.bf16.mxu0 0
      %3562 = vmatpush1.bf16.msra.mxu0 0
      %3563 = vmatprep.mubr.bf16.mxu0 0
      %3564 = vmatmul.mubr.bf16.gmra.mrb[0].mxu0 %v3431
      %v3565 = vpop.f32.mrb[0].mxu0
      %v3566 = vadd.f32 0.0, %v3565
      %v3567 = vpop.f32.mrb[0].mxu0
      %v3568 = vadd.f32 0.0, %v3567
      %v3569 = vpop.f32.mrb[0].mxu0
      %v3570 = vadd.f32 0.0, %v3569
      %v3571 = vpop.f32.mrb[0].mxu0
      %v3572 = vadd.f32 0.0, %v3571
      %3573 = vmatprep.mubr.bf16.mxu0 0
      %3574 = vmatmul.mubr.bf16.gmra.mrb[0].mxu0 %v3434
      %v3575 = vpop.f32.mrb[0].mxu0
      %v3576 = vadd.f32 0.0, %v3575
      %v3577 = vpop.f32.mrb[0].mxu0
      %v3578 = vadd.f32 0.0, %v3577
      %v3579 = vpop.f32.mrb[0].mxu0
      %v3580 = vadd.f32 0.0, %v3579
      %v3581 = vpop.f32.mrb[0].mxu0
      %v3582 = vadd.f32 0.0, %v3581
      %3583 = vmatprep.mubr.bf16.mxu0 0
      %3584 = vmatmul.mubr.bf16.gmra.mrb[0].mxu0 %v3437
      %v3585 = vpop.f32.mrb[0].mxu0
      %v3586 = vadd.f32 0.0, %v3585
      %v3587 = vpop.f32.mrb[0].mxu0
      %v3588 = vadd.f32 0.0, %v3587
      %v3589 = vpop.f32.mrb[0].mxu0
      %v3590 = vadd.f32 0.0, %v3589
      %v3591 = vpop.f32.mrb[0].mxu0
      %v3592 = vadd.f32 0.0, %v3591
      %3593 = vmatprep.mubr.bf16.mxu0 0
      %3594 = vmatmul.mubr.bf16.gmra.mrb[0].mxu0 %v3440
      %v3595 = vpop.f32.mrb[0].mxu0
      %v3596 = vadd.f32 0.0, %v3595
      %v3597 = vpop.f32.mrb[0].mxu0
      %v3598 = vadd.f32 0.0, %v3597
      %v3599 = vpop.f32.mrb[0].mxu0
      %v3600 = vadd.f32 0.0, %v3599
      %v3601 = vpop.f32.mrb[0].mxu0
      %v3602 = vadd.f32 0.0, %v3601
      %3603 = vmatprep.mubr.bf16.mxu0 0
      %3604 = vmatmul.mubr.bf16.gmra.mrb[0].mxu0 %v3443
      %v3605 = vpop.f32.mrb[0].mxu0
      %v3606 = vadd.f32 0.0, %v3605
      %v3607 = vpop.f32.mrb[0].mxu0
      %v3608 = vadd.f32 0.0, %v3607
      %v3609 = vpop.f32.mrb[0].mxu0
      %v3610 = vadd.f32 0.0, %v3609
      %v3611 = vpop.f32.mrb[0].mxu0
      %v3612 = vadd.f32 0.0, %v3611
      %3613 = vdwg.mxu0
      %3614 = vmatprep.subr.bf16.mxu0 0
      %3615 = vmatpush1.bf16.msra.mxu0 %v3446
      %3616 = vmatprep.subr.bf16.mxu0 0
      %3617 = vmatpush1.bf16.msra.mxu0 0
      %3618 = vmatprep.subr.bf16.mxu0 0
      %3619 = vmatpush1.bf16.msra.mxu0 0
      %3620 = vmatprep.subr.bf16.mxu0 0
      %3621 = vmatpush1.bf16.msra.mxu0 0
      %3622 = vmatprep.subr.bf16.mxu0 0
      %3623 = vmatpush1.bf16.msra.mxu0 0
      %3624 = vmatprep.subr.bf16.mxu0 0
      %3625 = vmatpush1.bf16.msra.mxu0 0
      %3626 = vmatprep.subr.bf16.mxu0 0
      %3627 = vmatpush1.bf16.msra.mxu0 0
      %3628 = vmatprep.subr.bf16.mxu0 0
      %3629 = vmatpush1.bf16.msra.mxu0 0
      %3630 = vmatprep.subr.bf16.mxu0 0
      %3631 = vmatpush1.bf16.msra.mxu0 0
      %3632 = vmatprep.subr.bf16.mxu0 0
      %3633 = vmatpush1.bf16.msra.mxu0 0
      %3634 = vmatprep.subr.bf16.mxu0 0
      %3635 = vmatpush1.bf16.msra.mxu0 0
      %3636 = vmatprep.subr.bf16.mxu0 0
      %3637 = vmatpush1.bf16.msra.mxu0 0
      %3638 = vmatprep.subr.bf16.mxu0 0
      %3639 = vmatpush1.bf16.msra.mxu0 0
      %3640 = vmatprep.subr.bf16.mxu0 0
      %3641 = vmatpush1.bf16.msra.mxu0 0
      %3642 = vmatprep.subr.bf16.mxu0 0
      %3643 = vmatpush1.bf16.msra.mxu0 0
      %3644 = vmatprep.subr.bf16.mxu0 0
      %3645 = vmatpush1.bf16.msra.mxu0 0
      %3646 = vmatprep.mubr.bf16.mxu0 0
      %3647 = vmatmul.mubr.bf16.gmra.mrb[0].mxu0 %v3431
      %v3648 = vpop.f32.mrb[0].mxu0
      %v3649 = vadd.f32 0.0, %v3648
      %v3650 = vpop.f32.mrb[0].mxu0
      %v3651 = vpop.f32.mrb[0].mxu0
      %v3652 = vadd.f32 0.0, %v3651
      %v3653 = vpop.f32.mrb[0].mxu0
      %3654 = vmatprep.mubr.bf16.mxu0 0
      %3655 = vmatmul.mubr.bf16.gmra.mrb[0].mxu0 %v3434
      %v3656 = vpop.f32.mrb[0].mxu0
      %v3657 = vadd.f32 0.0, %v3656
      %v3658 = vpop.f32.mrb[0].mxu0
      %v3659 = vpop.f32.mrb[0].mxu0
      %v3660 = vadd.f32 0.0, %v3659
      %v3661 = vpop.f32.mrb[0].mxu0
      %3662 = vmatprep.mubr.bf16.mxu0 0
      %3663 = vmatmul.mubr.bf16.gmra.mrb[0].mxu0 %v3437
      %v3664 = vpop.f32.mrb[0].mxu0
      %v3665 = vadd.f32 0.0, %v3664
      %v3666 = vpop.f32.mrb[0].mxu0
      %v3667 = vpop.f32.mrb[0].mxu0
      %v3668 = vadd.f32 0.0, %v3667
      %v3669 = vpop.f32.mrb[0].mxu0
      %3670 = vmatprep.mubr.bf16.mxu0 0
      %3671 = vmatmul.mubr.bf16.gmra.mrb[0].mxu0 %v3440
      %v3672 = vpop.f32.mrb[0].mxu0
      %v3673 = vadd.f32 0.0, %v3672
      %v3674 = vpop.f32.mrb[0].mxu0
      %v3675 = vpop.f32.mrb[0].mxu0
      %v3676 = vadd.f32 0.0, %v3675
      %v3677 = vpop.f32.mrb[0].mxu0
      %3678 = vmatprep.mubr.bf16.mxu0 0
      %3679 = vmatmul.mubr.bf16.gmra.mrb[0].mxu0 %v3443
      %v3680 = vpop.f32.mrb[0].mxu0
      %v3681 = vadd.f32 0.0, %v3680
      %v3682 = vpop.f32.mrb[0].mxu0
      %v3683 = vpop.f32.mrb[0].mxu0
      %v3684 = vadd.f32 0.0, %v3683
      %v3685 = vpop.f32.mrb[0].mxu0
      %3686 = vdwg.mxu0
      %3697 = vrot.lane.b32.xlu0 %v3483, 16
      %v3698 = vpop.permute.xlu0 %3697
      %3699 = vrot.lane.b32.xlu0 %v3485, 16
      %v3700 = vpop.permute.xlu0 %3699
      %3701 = vrot.lane.b32.xlu0 %v3566, 16
      %v3702 = vpop.permute.xlu0 %3701
      %3703 = vrot.lane.b32.xlu0 %v3568, 16
      %v3704 = vpop.permute.xlu0 %3703
      %3705 = vrot.lane.b32.xlu0 %v3649, 16
      %v3706 = vpop.permute.xlu0 %3705
      %3707 = vrot.lane.b32.xlu0 %v3487, 16
      %v3708 = vpop.permute.xlu0 %3707
      %3709 = vrot.lane.b32.xlu0 %v3489, 16
      %v3710 = vpop.permute.xlu0 %3709
      %3711 = vrot.lane.b32.xlu0 %v3570, 16
      %v3712 = vpop.permute.xlu0 %3711
      %3713 = vrot.lane.b32.xlu0 %v3572, 16
      %v3714 = vpop.permute.xlu0 %3713
      %3715 = vrot.lane.b32.xlu0 %v3652, 16
      %v3716 = vpop.permute.xlu0 %3715
      %v3717 = vsel %vm2251, %v3698, %v3700
      %v3718 = vsel %vm2251, %v3700, %v3702
      %v3719 = vsel %vm2251, %v3702, %v3704
      %v3720 = vsel %vm2251, %v3704, %v3706
      %v3721 = vsel %vm2251, %v3708, %v3710
      %v3722 = vsel %vm2251, %v3710, %v3712
      %v3723 = vsel %vm2251, %v3712, %v3714
      %v3724 = vsel %vm2251, %v3714, %v3716
      %v3733 = vadd.f32 %v3387, %v3717
      %v3734 = vadd.f32 %v3388, %v3718
      %v3735 = vadd.f32 %v3389, %v3719
      %v3736 = vadd.f32 %v3390, %v3720
      %v3737 = vadd.f32 %v3391, %v3721
      %v3738 = vadd.f32 %v3392, %v3722
      %v3739 = vadd.f32 %v3393, %v3723
      %v3740 = vadd.f32 %v3394, %v3724
      %3751 = vrot.lane.b32.xlu0 %v3493, 14
      %v3752 = vpop.permute.xlu0 %3751
      %3753 = vrot.lane.b32.xlu0 %v3495, 14
      %v3754 = vpop.permute.xlu0 %3753
      %3755 = vrot.lane.b32.xlu0 %v3576, 14
      %v3756 = vpop.permute.xlu0 %3755
      %3757 = vrot.lane.b32.xlu0 %v3578, 14
      %v3758 = vpop.permute.xlu0 %3757
      %3759 = vrot.lane.b32.xlu0 %v3657, 14
      %v3760 = vpop.permute.xlu0 %3759
      %3761 = vrot.lane.b32.xlu0 %v3497, 14
      %v3762 = vpop.permute.xlu0 %3761
      %3763 = vrot.lane.b32.xlu0 %v3499, 14
      %v3764 = vpop.permute.xlu0 %3763
      %3765 = vrot.lane.b32.xlu0 %v3580, 14
      %v3766 = vpop.permute.xlu0 %3765
      %3767 = vrot.lane.b32.xlu0 %v3582, 14
      %v3768 = vpop.permute.xlu0 %3767
      %3769 = vrot.lane.b32.xlu0 %v3660, 14
      %v3770 = vpop.permute.xlu0 %3769
      %v3771 = vsel %vm2331, %v3752, %v3754
      %v3772 = vsel %vm2331, %v3754, %v3756
      %v3773 = vsel %vm2331, %v3756, %v3758
      %v3774 = vsel %vm2331, %v3758, %v3760
      %v3775 = vsel %vm2331, %v3762, %v3764
      %v3776 = vsel %vm2331, %v3764, %v3766
      %v3777 = vsel %vm2331, %v3766, %v3768
      %v3778 = vsel %vm2331, %v3768, %v3770
      %v3787 = vadd.f32 %v3733, %v3771
      %v3788 = vadd.f32 %v3734, %v3772
      %v3789 = vadd.f32 %v3735, %v3773
      %v3790 = vadd.f32 %v3736, %v3774
      %v3791 = vadd.f32 %v3737, %v3775
      %v3792 = vadd.f32 %v3738, %v3776
      %v3793 = vadd.f32 %v3739, %v3777
      %v3794 = vadd.f32 %v3740, %v3778
      %3805 = vrot.lane.b32.xlu0 %v3503, 12
      %v3806 = vpop.permute.xlu0 %3805
      %3807 = vrot.lane.b32.xlu0 %v3505, 12
      %v3808 = vpop.permute.xlu0 %3807
      %3809 = vrot.lane.b32.xlu0 %v3586, 12
      %v3810 = vpop.permute.xlu0 %3809
      %3811 = vrot.lane.b32.xlu0 %v3588, 12
      %v3812 = vpop.permute.xlu0 %3811
      %3813 = vrot.lane.b32.xlu0 %v3665, 12
      %v3814 = vpop.permute.xlu0 %3813
      %3815 = vrot.lane.b32.xlu0 %v3507, 12
      %v3816 = vpop.permute.xlu0 %3815
      %3817 = vrot.lane.b32.xlu0 %v3509, 12
      %v3818 = vpop.permute.xlu0 %3817
      %3819 = vrot.lane.b32.xlu0 %v3590, 12
      %v3820 = vpop.permute.xlu0 %3819
      %3821 = vrot.lane.b32.xlu0 %v3592, 12
      %v3822 = vpop.permute.xlu0 %3821
      %3823 = vrot.lane.b32.xlu0 %v3668, 12
      %v3824 = vpop.permute.xlu0 %3823
      %v3825 = vsel %vm2411, %v3806, %v3808
      %v3826 = vsel %vm2411, %v3808, %v3810
      %v3827 = vsel %vm2411, %v3810, %v3812
      %v3828 = vsel %vm2411, %v3812, %v3814
      %v3829 = vsel %vm2411, %v3816, %v3818
      %v3830 = vsel %vm2411, %v3818, %v3820
      %v3831 = vsel %vm2411, %v3820, %v3822
      %v3832 = vsel %vm2411, %v3822, %v3824
      %v3841 = vadd.f32 %v3787, %v3825
      %v3842 = vadd.f32 %v3788, %v3826
      %v3843 = vadd.f32 %v3789, %v3827
      %v3844 = vadd.f32 %v3790, %v3828
      %v3845 = vadd.f32 %v3791, %v3829
      %v3846 = vadd.f32 %v3792, %v3830
      %v3847 = vadd.f32 %v3793, %v3831
      %v3848 = vadd.f32 %v3794, %v3832
      %3859 = vrot.lane.b32.xlu0 %v3513, 10
      %v3860 = vpop.permute.xlu0 %3859
      %3861 = vrot.lane.b32.xlu0 %v3515, 10
      %v3862 = vpop.permute.xlu0 %3861
      %3863 = vrot.lane.b32.xlu0 %v3596, 10
      %v3864 = vpop.permute.xlu0 %3863
      %3865 = vrot.lane.b32.xlu0 %v3598, 10
      %v3866 = vpop.permute.xlu0 %3865
      %3867 = vrot.lane.b32.xlu0 %v3673, 10
      %v3868 = vpop.permute.xlu0 %3867
      %3869 = vrot.lane.b32.xlu0 %v3517, 10
      %v3870 = vpop.permute.xlu0 %3869
      %3871 = vrot.lane.b32.xlu0 %v3519, 10
      %v3872 = vpop.permute.xlu0 %3871
      %3873 = vrot.lane.b32.xlu0 %v3600, 10
      %v3874 = vpop.permute.xlu0 %3873
      %3875 = vrot.lane.b32.xlu0 %v3602, 10
      %v3876 = vpop.permute.xlu0 %3875
      %3877 = vrot.lane.b32.xlu0 %v3676, 10
      %v3878 = vpop.permute.xlu0 %3877
      %vm3879 = vcmask 80896
      %v3880 = vsel %vm3879, %v3860, %v3862
      %v3881 = vsel %vm3879, %v3862, %v3864
      %v3882 = vsel %vm3879, %v3864, %v3866
      %v3883 = vsel %vm3879, %v3866, %v3868
      %v3884 = vsel %vm3879, %v3870, %v3872
      %v3885 = vsel %vm3879, %v3872, %v3874
      %v3886 = vsel %vm3879, %v3874, %v3876
      %v3887 = vsel %vm3879, %v3876, %v3878
      %v3896 = vadd.f32 %v3841, %v3880
      %v3897 = vadd.f32 %v3842, %v3881
      %v3898 = vadd.f32 %v3843, %v3882
      %v3899 = vadd.f32 %v3844, %v3883
      %v3900 = vadd.f32 %v3845, %v3884
      %v3901 = vadd.f32 %v3846, %v3885
      %v3902 = vadd.f32 %v3847, %v3886
      %v3903 = vadd.f32 %v3848, %v3887
      %3914 = vrot.lane.b32.xlu0 %v3523, 8
      %v3915 = vpop.permute.xlu0 %3914
      %3916 = vrot.lane.b32.xlu0 %v3525, 8
      %v3917 = vpop.permute.xlu0 %3916
      %3918 = vrot.lane.b32.xlu0 %v3606, 8
      %v3919 = vpop.permute.xlu0 %3918
      %3920 = vrot.lane.b32.xlu0 %v3608, 8
      %v3921 = vpop.permute.xlu0 %3920
      %3922 = vrot.lane.b32.xlu0 %v3681, 8
      %v3923 = vpop.permute.xlu0 %3922
      %3924 = vrot.lane.b32.xlu0 %v3527, 8
      %v3925 = vpop.permute.xlu0 %3924
      %3926 = vrot.lane.b32.xlu0 %v3529, 8
      %v3927 = vpop.permute.xlu0 %3926
      %3928 = vrot.lane.b32.xlu0 %v3610, 8
      %v3929 = vpop.permute.xlu0 %3928
      %3930 = vrot.lane.b32.xlu0 %v3612, 8
      %v3931 = vpop.permute.xlu0 %3930
      %3932 = vrot.lane.b32.xlu0 %v3684, 8
      %v3933 = vpop.permute.xlu0 %3932
      %v3934 = vsel %vm2558, %v3915, %v3917
      %v3935 = vsel %vm2558, %v3917, %v3919
      %v3936 = vsel %vm2558, %v3919, %v3921
      %v3937 = vsel %vm2558, %v3921, %v3923
      %v3938 = vsel %vm2558, %v3925, %v3927
      %v3939 = vsel %vm2558, %v3927, %v3929
      %v3940 = vsel %vm2558, %v3929, %v3931
      %v3941 = vsel %vm2558, %v3931, %v3933
      %v3950 = vadd.f32 %v3896, %v3934
      %v3951 = vadd.f32 %v3897, %v3935
      %v3952 = vadd.f32 %v3898, %v3936
      %v3953 = vadd.f32 %v3899, %v3937
      %v3954 = vadd.f32 %v3900, %v3938
      %v3955 = vadd.f32 %v3901, %v3939
      %v3956 = vadd.f32 %v3902, %v3940
      %v3957 = vadd.f32 %v3903, %v3941
      %v3958 = vld [vmem:[%s3 + $0x78] sm:$0xf]
      %v3959 = vld [vmem:[%s3 + $0x7c] sm:$0xf]
      %v3960 = vld [vmem:[%s3 + $0x80] sm:$0xf]
      %v3961 = vld [vmem:[%s3 + $0x84] sm:$0xf]
      %v3962 = vld [vmem:[%s3 + $0x88] sm:$0xf]
      %v3963 = vld [vmem:[%s3 + $0x8c] sm:$0xf]
      %v3964 = vld [vmem:[%s3 + $0x90] sm:$0xf]
      %v3965 = vld [vmem:[%s3 + $0x94] sm:$0xf]
      %v3966 = vld [vmem:[%s3 + $0x98] sm:$0xf]
      %v3967 = vld [vmem:[%s3 + $0x9c] sm:$0xf]
      %v3978 = vunpack.c.l.b16 %v3958
      %v3979 = vunpack.c.l.b16 %v3959
      %v3980 = vunpack.c.l.b16 %v3960
      %v3981 = vunpack.c.l.b16 %v3961
      %v3982 = vunpack.c.l.b16 %v3962
      %v3983 = vunpack.c.l.b16 %v3963
      %v3984 = vunpack.c.l.b16 %v3964
      %v3985 = vunpack.c.l.b16 %v3965
      %v3986 = vunpack.c.l.b16 %v3966
      %v3987 = vunpack.c.l.b16 %v3967
      %v3988 = vpack.c.b16 %v3979, %v3978
      %v3989 = vpack.c.b16 %v3981, %v3980
      %v3990 = vpack.c.b16 %v3983, %v3982
      %v3991 = vpack.c.b16 %v3985, %v3984
      %v3992 = vpack.c.b16 %v3987, %v3986
      %v3994 = vsel %vm2558, %v3988, 0
      %v3997 = vsel %vm2558, %v3989, 0
      %v4000 = vsel %vm2558, %v3990, 0
      %v4003 = vsel %vm2558, %v3991, 0
      %v4006 = vsel %vm2558, %v3992, 0
      %4008 = vmatprep.subr.bf16.mxu0 %v2579
      %4009 = vmatpush1.bf16.msra.mxu0 %v2576
      %4010 = vmatprep.subr.bf16.mxu0 0
      %4011 = vmatpush1.bf16.msra.mxu0 0
      %4012 = vmatprep.subr.bf16.mxu0 0
      %4013 = vmatpush1.bf16.msra.mxu0 0
      %4014 = vmatprep.subr.bf16.mxu0 0
      %4015 = vmatpush1.bf16.msra.mxu0 0
      %4016 = vmatprep.subr.bf16.mxu0 0
      %4017 = vmatpush1.bf16.msra.mxu0 0
      %4018 = vmatprep.subr.bf16.mxu0 0
      %4019 = vmatpush1.bf16.msra.mxu0 0
      %4020 = vmatprep.subr.bf16.mxu0 0
      %4021 = vmatpush1.bf16.msra.mxu0 0
      %4022 = vmatprep.subr.bf16.mxu0 0
      %4023 = vmatpush1.bf16.msra.mxu0 0
      %4024 = vmatprep.subr.bf16.mxu0 0
      %4025 = vmatpush1.bf16.msra.mxu0 0
      %4026 = vmatprep.subr.bf16.mxu0 0
      %4027 = vmatpush1.bf16.msra.mxu0 0
      %4028 = vmatprep.subr.bf16.mxu0 0
      %4029 = vmatpush1.bf16.msra.mxu0 0
      %4030 = vmatprep.subr.bf16.mxu0 0
      %4031 = vmatpush1.bf16.msra.mxu0 0
      %4032 = vmatprep.subr.bf16.mxu0 0
      %4033 = vmatpush1.bf16.msra.mxu0 0
      %4034 = vmatprep.subr.bf16.mxu0 0
      %4035 = vmatpush1.bf16.msra.mxu0 0
      %4036 = vmatprep.subr.bf16.mxu0 0
      %4037 = vmatpush1.bf16.msra.mxu0 0
      %4038 = vmatprep.subr.bf16.mxu0 0
      %4039 = vmatpush1.bf16.msra.mxu0 0
      %4040 = vmatprep.mubr.bf16.mxu0 0
      %4041 = vmatmul.mubr.bf16.gmra.mrb[0].mxu0 %v3994
      %v4042 = vpop.f32.mrb[0].mxu0
      %v4043 = vpop.f32.mrb[0].mxu0
      %v4044 = vadd.f32 0.0, %v4043
      %v4045 = vpop.f32.mrb[0].mxu0
      %v4046 = vpop.f32.mrb[0].mxu0
      %v4047 = vadd.f32 0.0, %v4046
      %4048 = vmatprep.mubr.bf16.mxu0 0
      %4049 = vmatmul.mubr.bf16.gmra.mrb[0].mxu0 %v3997
      %v4050 = vpop.f32.mrb[0].mxu0
      %v4051 = vpop.f32.mrb[0].mxu0
      %v4052 = vadd.f32 0.0, %v4051
      %v4053 = vpop.f32.mrb[0].mxu0
      %v4054 = vpop.f32.mrb[0].mxu0
      %v4055 = vadd.f32 0.0, %v4054
      %4056 = vmatprep.mubr.bf16.mxu0 0
      %4057 = vmatmul.mubr.bf16.gmra.mrb[0].mxu0 %v4000
      %v4058 = vpop.f32.mrb[0].mxu0
      %v4059 = vpop.f32.mrb[0].mxu0
      %v4060 = vadd.f32 0.0, %v4059
      %v4061 = vpop.f32.mrb[0].mxu0
      %v4062 = vpop.f32.mrb[0].mxu0
      %v4063 = vadd.f32 0.0, %v4062
      %4064 = vmatprep.mubr.bf16.mxu0 0
      %4065 = vmatmul.mubr.bf16.gmra.mrb[0].mxu0 %v4003
      %v4066 = vpop.f32.mrb[0].mxu0
      %v4067 = vpop.f32.mrb[0].mxu0
      %v4068 = vadd.f32 0.0, %v4067
      %v4069 = vpop.f32.mrb[0].mxu0
      %v4070 = vpop.f32.mrb[0].mxu0
      %v4071 = vadd.f32 0.0, %v4070
      %4072 = vmatprep.mubr.bf16.mxu0 0
      %4073 = vmatmul.mubr.bf16.gmra.mrb[0].mxu0 %v4006
      %v4074 = vpop.f32.mrb[0].mxu0
      %v4075 = vpop.f32.mrb[0].mxu0
      %v4076 = vadd.f32 0.0, %v4075
      %v4077 = vpop.f32.mrb[0].mxu0
      %v4078 = vpop.f32.mrb[0].mxu0
      %v4079 = vadd.f32 0.0, %v4078
      %4080 = vdwg.mxu0
      %4081 = vmatprep.subr.bf16.mxu0 %v2585
      %4082 = vmatpush1.bf16.msra.mxu0 %v2582
      %4083 = vmatprep.subr.bf16.mxu0 0
      %4084 = vmatpush1.bf16.msra.mxu0 0
      %4085 = vmatprep.subr.bf16.mxu0 0
      %4086 = vmatpush1.bf16.msra.mxu0 0
      %4087 = vmatprep.subr.bf16.mxu0 0
      %4088 = vmatpush1.bf16.msra.mxu0 0
      %4089 = vmatprep.subr.bf16.mxu0 0
      %4090 = vmatpush1.bf16.msra.mxu0 0
      %4091 = vmatprep.subr.bf16.mxu0 0
      %4092 = vmatpush1.bf16.msra.mxu0 0
      %4093 = vmatprep.subr.bf16.mxu0 0
      %4094 = vmatpush1.bf16.msra.mxu0 0
      %4095 = vmatprep.subr.bf16.mxu0 0
      %4096 = vmatpush1.bf16.msra.mxu0 0
      %4097 = vmatprep.subr.bf16.mxu0 0
      %4098 = vmatpush1.bf16.msra.mxu0 0
      %4099 = vmatprep.subr.bf16.mxu0 0
      %4100 = vmatpush1.bf16.msra.mxu0 0
      %4101 = vmatprep.subr.bf16.mxu0 0
      %4102 = vmatpush1.bf16.msra.mxu0 0
      %4103 = vmatprep.subr.bf16.mxu0 0
      %4104 = vmatpush1.bf16.msra.mxu0 0
      %4105 = vmatprep.subr.bf16.mxu0 0
      %4106 = vmatpush1.bf16.msra.mxu0 0
      %4107 = vmatprep.subr.bf16.mxu0 0
      %4108 = vmatpush1.bf16.msra.mxu0 0
      %4109 = vmatprep.subr.bf16.mxu0 0
      %4110 = vmatpush1.bf16.msra.mxu0 0
      %4111 = vmatprep.subr.bf16.mxu0 0
      %4112 = vmatpush1.bf16.msra.mxu0 0
      %4113 = vmatprep.mubr.bf16.mxu0 0
      %4114 = vmatmul.mubr.bf16.gmra.mrb[0].mxu0 %v3994
      %v4115 = vpop.f32.mrb[0].mxu0
      %v4116 = vadd.f32 0.0, %v4115
      %v4117 = vpop.f32.mrb[0].mxu0
      %v4118 = vadd.f32 0.0, %v4117
      %v4119 = vpop.f32.mrb[0].mxu0
      %v4120 = vadd.f32 0.0, %v4119
      %v4121 = vpop.f32.mrb[0].mxu0
      %v4122 = vadd.f32 0.0, %v4121
      %4123 = vmatprep.mubr.bf16.mxu0 0
      %4124 = vmatmul.mubr.bf16.gmra.mrb[0].mxu0 %v3997
      %v4125 = vpop.f32.mrb[0].mxu0
      %v4126 = vadd.f32 0.0, %v4125
      %v4127 = vpop.f32.mrb[0].mxu0
      %v4128 = vadd.f32 0.0, %v4127
      %v4129 = vpop.f32.mrb[0].mxu0
      %v4130 = vadd.f32 0.0, %v4129
      %v4131 = vpop.f32.mrb[0].mxu0
      %v4132 = vadd.f32 0.0, %v4131
      %4133 = vmatprep.mubr.bf16.mxu0 0
      %4134 = vmatmul.mubr.bf16.gmra.mrb[0].mxu0 %v4000
      %v4135 = vpop.f32.mrb[0].mxu0
      %v4136 = vadd.f32 0.0, %v4135
      %v4137 = vpop.f32.mrb[0].mxu0
      %v4138 = vadd.f32 0.0, %v4137
      %v4139 = vpop.f32.mrb[0].mxu0
      %v4140 = vadd.f32 0.0, %v4139
      %v4141 = vpop.f32.mrb[0].mxu0
      %v4142 = vadd.f32 0.0, %v4141
      %4143 = vmatprep.mubr.bf16.mxu0 0
      %4144 = vmatmul.mubr.bf16.gmra.mrb[0].mxu0 %v4003
      %v4145 = vpop.f32.mrb[0].mxu0
      %v4146 = vadd.f32 0.0, %v4145
      %v4147 = vpop.f32.mrb[0].mxu0
      %v4148 = vadd.f32 0.0, %v4147
      %v4149 = vpop.f32.mrb[0].mxu0
      %v4150 = vadd.f32 0.0, %v4149
      %v4151 = vpop.f32.mrb[0].mxu0
      %v4152 = vadd.f32 0.0, %v4151
      %4153 = vmatprep.mubr.bf16.mxu0 0
      %4154 = vmatmul.mubr.bf16.gmra.mrb[0].mxu0 %v4006
      %v4155 = vpop.f32.mrb[0].mxu0
      %v4156 = vadd.f32 0.0, %v4155
      %v4157 = vpop.f32.mrb[0].mxu0
      %v4158 = vadd.f32 0.0, %v4157
      %v4159 = vpop.f32.mrb[0].mxu0
      %v4160 = vadd.f32 0.0, %v4159
      %v4161 = vpop.f32.mrb[0].mxu0
      %v4162 = vadd.f32 0.0, %v4161
      %4163 = vdwg.mxu0
      %4164 = vmatprep.subr.bf16.mxu0 0
      %4165 = vmatpush1.bf16.msra.mxu0 %v3446
      %4166 = vmatprep.subr.bf16.mxu0 0
      %4167 = vmatpush1.bf16.msra.mxu0 0
      %4168 = vmatprep.subr.bf16.mxu0 0
      %4169 = vmatpush1.bf16.msra.mxu0 0
      %4170 = vmatprep.subr.bf16.mxu0 0
      %4171 = vmatpush1.bf16.msra.mxu0 0
      %4172 = vmatprep.subr.bf16.mxu0 0
      %4173 = vmatpush1.bf16.msra.mxu0 0
      %4174 = vmatprep.subr.bf16.mxu0 0
      %4175 = vmatpush1.bf16.msra.mxu0 0
      %4176 = vmatprep.subr.bf16.mxu0 0
      %4177 = vmatpush1.bf16.msra.mxu0 0
      %4178 = vmatprep.subr.bf16.mxu0 0
      %4179 = vmatpush1.bf16.msra.mxu0 0
      %4180 = vmatprep.subr.bf16.mxu0 0
      %4181 = vmatpush1.bf16.msra.mxu0 0
      %4182 = vmatprep.subr.bf16.mxu0 0
      %4183 = vmatpush1.bf16.msra.mxu0 0
      %4184 = vmatprep.subr.bf16.mxu0 0
      %4185 = vmatpush1.bf16.msra.mxu0 0
      %4186 = vmatprep.subr.bf16.mxu0 0
      %4187 = vmatpush1.bf16.msra.mxu0 0
      %4188 = vmatprep.subr.bf16.mxu0 0
      %4189 = vmatpush1.bf16.msra.mxu0 0
      %4190 = vmatprep.subr.bf16.mxu0 0
      %4191 = vmatpush1.bf16.msra.mxu0 0
      %4192 = vmatprep.subr.bf16.mxu0 0
      %4193 = vmatpush1.bf16.msra.mxu0 0
      %4194 = vmatprep.subr.bf16.mxu0 0
      %4195 = vmatpush1.bf16.msra.mxu0 0
      %4196 = vmatprep.mubr.bf16.mxu0 0
      %4197 = vmatmul.mubr.bf16.gmra.mrb[0].mxu0 %v3994
      %v4198 = vpop.f32.mrb[0].mxu0
      %v4199 = vadd.f32 0.0, %v4198
      %v4200 = vpop.f32.mrb[0].mxu0
      %v4201 = vpop.f32.mrb[0].mxu0
      %v4202 = vadd.f32 0.0, %v4201
      %v4203 = vpop.f32.mrb[0].mxu0
      %4204 = vmatprep.mubr.bf16.mxu0 0
      %4205 = vmatmul.mubr.bf16.gmra.mrb[0].mxu0 %v3997
      %v4206 = vpop.f32.mrb[0].mxu0
      %v4207 = vadd.f32 0.0, %v4206
      %v4208 = vpop.f32.mrb[0].mxu0
      %v4209 = vpop.f32.mrb[0].mxu0
      %v4210 = vadd.f32 0.0, %v4209
      %v4211 = vpop.f32.mrb[0].mxu0
      %4212 = vmatprep.mubr.bf16.mxu0 0
      %4213 = vmatmul.mubr.bf16.gmra.mrb[0].mxu0 %v4000
      %v4214 = vpop.f32.mrb[0].mxu0
      %v4215 = vadd.f32 0.0, %v4214
      %v4216 = vpop.f32.mrb[0].mxu0
      %v4217 = vpop.f32.mrb[0].mxu0
      %v4218 = vadd.f32 0.0, %v4217
      %v4219 = vpop.f32.mrb[0].mxu0
      %4220 = vmatprep.mubr.bf16.mxu0 0
      %4221 = vmatmul.mubr.bf16.gmra.mrb[0].mxu0 %v4003
      %v4222 = vpop.f32.mrb[0].mxu0
      %v4223 = vadd.f32 0.0, %v4222
      %v4224 = vpop.f32.mrb[0].mxu0
      %v4225 = vpop.f32.mrb[0].mxu0
      %v4226 = vadd.f32 0.0, %v4225
      %v4227 = vpop.f32.mrb[0].mxu0
      %4228 = vmatprep.mubr.bf16.mxu0 0
      %4229 = vmatmul.mubr.bf16.gmra.mrb[0].mxu0 %v4006
      %v4230 = vpop.f32.mrb[0].mxu0
      %v4231 = vadd.f32 0.0, %v4230
      %v4232 = vpop.f32.mrb[0].mxu0
      %v4233 = vpop.f32.mrb[0].mxu0
      %v4234 = vadd.f32 0.0, %v4233
      %v4235 = vpop.f32.mrb[0].mxu0
      %4236 = vdwg.mxu0
      %4245 = vrot.lane.b32.xlu0 %v4044, 88
      %v4246 = vpop.permute.xlu0 %4245
      %4247 = vrot.lane.b32.xlu0 %v4116, 88
      %v4248 = vpop.permute.xlu0 %4247
      %4249 = vrot.lane.b32.xlu0 %v4118, 88
      %v4250 = vpop.permute.xlu0 %4249
      %4251 = vrot.lane.b32.xlu0 %v4199, 88
      %v4252 = vpop.permute.xlu0 %4251
      %4253 = vrot.lane.b32.xlu0 %v4047, 88
      %v4254 = vpop.permute.xlu0 %4253
      %4255 = vrot.lane.b32.xlu0 %v4120, 88
      %v4256 = vpop.permute.xlu0 %4255
      %4257 = vrot.lane.b32.xlu0 %v4122, 88
      %v4258 = vpop.permute.xlu0 %4257
      %4259 = vrot.lane.b32.xlu0 %v4202, 88
      %v4260 = vpop.permute.xlu0 %4259
      %vm4261 = vcmask 719872
      %v4262 = vsel %vm4261, %v4246, %v4248
      %v4263 = vsel %vm4261, %v4248, %v4250
      %v4264 = vsel %vm4261, %v4250, %v4252
      %v4265 = vsel %vm4261, %v4254, %v4256
      %v4266 = vsel %vm4261, %v4256, %v4258
      %v4267 = vsel %vm4261, %v4258, %v4260
      %v4276 = vadd.f32 %v3950, %v4262
      %v4277 = vadd.f32 %v3951, %v4263
      %v4278 = vadd.f32 %v3952, %v4264
      %v4279 = vadd.f32 %v3953, %v4252
      %v4280 = vadd.f32 %v3954, %v4265
      %v4281 = vadd.f32 %v3955, %v4266
      %v4282 = vadd.f32 %v3956, %v4267
      %v4283 = vadd.f32 %v3957, %v4260
      %4292 = vrot.lane.b32.xlu0 %v4052, 86
      %v4293 = vpop.permute.xlu0 %4292
      %4294 = vrot.lane.b32.xlu0 %v4126, 86
      %v4295 = vpop.permute.xlu0 %4294
      %4296 = vrot.lane.b32.xlu0 %v4128, 86
      %v4297 = vpop.permute.xlu0 %4296
      %4298 = vrot.lane.b32.xlu0 %v4207, 86
      %v4299 = vpop.permute.xlu0 %4298
      %4300 = vrot.lane.b32.xlu0 %v4055, 86
      %v4301 = vpop.permute.xlu0 %4300
      %4302 = vrot.lane.b32.xlu0 %v4130, 86
      %v4303 = vpop.permute.xlu0 %4302
      %4304 = vrot.lane.b32.xlu0 %v4132, 86
      %v4305 = vpop.permute.xlu0 %4304
      %4306 = vrot.lane.b32.xlu0 %v4210, 86
      %v4307 = vpop.permute.xlu0 %4306
      %vm4308 = vcmask 703488
      %v4309 = vsel %vm4308, %v4293, %v4295
      %v4310 = vsel %vm4308, %v4295, %v4297
      %v4311 = vsel %vm4308, %v4297, %v4299
      %v4312 = vsel %vm4308, %v4301, %v4303
      %v4313 = vsel %vm4308, %v4303, %v4305
      %v4314 = vsel %vm4308, %v4305, %v4307
      %v4323 = vadd.f32 %v4276, %v4309
      %v4324 = vadd.f32 %v4277, %v4310
      %v4325 = vadd.f32 %v4278, %v4311
      %v4326 = vadd.f32 %v4279, %v4299
      %v4327 = vadd.f32 %v4280, %v4312
      %v4328 = vadd.f32 %v4281, %v4313
      %v4329 = vadd.f32 %v4282, %v4314
      %v4330 = vadd.f32 %v4283, %v4307
      %4339 = vrot.lane.b32.xlu0 %v4060, 84
      %v4340 = vpop.permute.xlu0 %4339
      %4341 = vrot.lane.b32.xlu0 %v4136, 84
      %v4342 = vpop.permute.xlu0 %4341
      %4343 = vrot.lane.b32.xlu0 %v4138, 84
      %v4344 = vpop.permute.xlu0 %4343
      %4345 = vrot.lane.b32.xlu0 %v4215, 84
      %v4346 = vpop.permute.xlu0 %4345
      %4347 = vrot.lane.b32.xlu0 %v4063, 84
      %v4348 = vpop.permute.xlu0 %4347
      %4349 = vrot.lane.b32.xlu0 %v4140, 84
      %v4350 = vpop.permute.xlu0 %4349
      %4351 = vrot.lane.b32.xlu0 %v4142, 84
      %v4352 = vpop.permute.xlu0 %4351
      %4353 = vrot.lane.b32.xlu0 %v4218, 84
      %v4354 = vpop.permute.xlu0 %4353
      %vm4355 = vcmask 687104
      %v4356 = vsel %vm4355, %v4340, %v4342
      %v4357 = vsel %vm4355, %v4342, %v4344
      %v4358 = vsel %vm4355, %v4344, %v4346
      %v4359 = vsel %vm4355, %v4348, %v4350
      %v4360 = vsel %vm4355, %v4350, %v4352
      %v4361 = vsel %vm4355, %v4352, %v4354
      %v4370 = vadd.f32 %v4323, %v4356
      %v4371 = vadd.f32 %v4324, %v4357
      %v4372 = vadd.f32 %v4325, %v4358
      %v4373 = vadd.f32 %v4326, %v4346
      %v4374 = vadd.f32 %v4327, %v4359
      %v4375 = vadd.f32 %v4328, %v4360
      %v4376 = vadd.f32 %v4329, %v4361
      %v4377 = vadd.f32 %v4330, %v4354
      %4386 = vrot.lane.b32.xlu0 %v4068, 82
      %v4387 = vpop.permute.xlu0 %4386
      %4388 = vrot.lane.b32.xlu0 %v4146, 82
      %v4389 = vpop.permute.xlu0 %4388
      %4390 = vrot.lane.b32.xlu0 %v4148, 82
      %v4391 = vpop.permute.xlu0 %4390
      %4392 = vrot.lane.b32.xlu0 %v4223, 82
      %v4393 = vpop.permute.xlu0 %4392
      %4394 = vrot.lane.b32.xlu0 %v4071, 82
      %v4395 = vpop.permute.xlu0 %4394
      %4396 = vrot.lane.b32.xlu0 %v4150, 82
      %v4397 = vpop.permute.xlu0 %4396
      %4398 = vrot.lane.b32.xlu0 %v4152, 82
      %v4399 = vpop.permute.xlu0 %4398
      %4400 = vrot.lane.b32.xlu0 %v4226, 82
      %v4401 = vpop.permute.xlu0 %4400
      %vm4402 = vcmask 670720
      %v4403 = vsel %vm4402, %v4387, %v4389
      %v4404 = vsel %vm4402, %v4389, %v4391
      %v4405 = vsel %vm4402, %v4391, %v4393
      %v4406 = vsel %vm4402, %v4395, %v4397
      %v4407 = vsel %vm4402, %v4397, %v4399
      %v4408 = vsel %vm4402, %v4399, %v4401
      %v4417 = vadd.f32 %v4370, %v4403
      %v4418 = vadd.f32 %v4371, %v4404
      %v4419 = vadd.f32 %v4372, %v4405
      %v4420 = vadd.f32 %v4373, %v4393
      %v4421 = vadd.f32 %v4374, %v4406
      %v4422 = vadd.f32 %v4375, %v4407
      %v4423 = vadd.f32 %v4376, %v4408
      %v4424 = vadd.f32 %v4377, %v4401
      %4433 = vrot.lane.b32.xlu0 %v4076, 80
      %v4434 = vpop.permute.xlu0 %4433
      %4435 = vrot.lane.b32.xlu0 %v4156, 80
      %v4436 = vpop.permute.xlu0 %4435
      %4437 = vrot.lane.b32.xlu0 %v4158, 80
      %v4438 = vpop.permute.xlu0 %4437
      %4439 = vrot.lane.b32.xlu0 %v4231, 80
      %v4440 = vpop.permute.xlu0 %4439
      %4441 = vrot.lane.b32.xlu0 %v4079, 80
      %v4442 = vpop.permute.xlu0 %4441
      %4443 = vrot.lane.b32.xlu0 %v4160, 80
      %v4444 = vpop.permute.xlu0 %4443
      %4445 = vrot.lane.b32.xlu0 %v4162, 80
      %v4446 = vpop.permute.xlu0 %4445
      %4447 = vrot.lane.b32.xlu0 %v4234, 80
      %v4448 = vpop.permute.xlu0 %4447
      %vm4449 = vcmask 654336
      %v4450 = vsel %vm4449, %v4434, %v4436
      %v4451 = vsel %vm4449, %v4436, %v4438
      %v4452 = vsel %vm4449, %v4438, %v4440
      %v4453 = vsel %vm4449, %v4442, %v4444
      %v4454 = vsel %vm4449, %v4444, %v4446
      %v4455 = vsel %vm4449, %v4446, %v4448
      %v4464 = vadd.f32 %v4417, %v4450
      %v4465 = vadd.f32 %v4418, %v4451
      %v4466 = vadd.f32 %v4419, %v4452
      %v4467 = vadd.f32 %v4420, %v4440
      %v4468 = vadd.f32 %v4421, %v4453
      %v4469 = vadd.f32 %v4422, %v4454
      %v4470 = vadd.f32 %v4423, %v4455
      %v4471 = vadd.f32 %v4424, %v4448
      %v4472 = vld [vmem:[%s3 + $0xa0] sm:$0xf]
      %v4473 = vld [vmem:[%s3 + $0xa4] sm:$0xf]
      %v4474 = vld [vmem:[%s3 + $0xa8] sm:$0xf]
      %v4475 = vld [vmem:[%s3 + $0xac] sm:$0xf]
      %v4476 = vld [vmem:[%s3 + $0xb0] sm:$0xf]
      %v4477 = vld [vmem:[%s3 + $0xb4] sm:$0xf]
      %v4478 = vld [vmem:[%s3 + $0xb8] sm:$0xf]
      %v4479 = vld [vmem:[%s3 + $0xbc] sm:$0xf]
      %v4480 = vld [vmem:[%s3 + $0xc0] sm:$0xf]
      %v4481 = vld [vmem:[%s3 + $0xc4] sm:$0xf]
      %v4492 = vunpack.c.l.b16 %v4472
      %v4493 = vunpack.c.l.b16 %v4473
      %v4494 = vunpack.c.l.b16 %v4474
      %v4495 = vunpack.c.l.b16 %v4475
      %v4496 = vunpack.c.l.b16 %v4476
      %v4497 = vunpack.c.l.b16 %v4477
      %v4498 = vunpack.c.l.b16 %v4478
      %v4499 = vunpack.c.l.b16 %v4479
      %v4500 = vunpack.c.l.b16 %v4480
      %v4501 = vunpack.c.l.b16 %v4481
      %v4502 = vpack.c.b16 %v4493, %v4492
      %v4503 = vpack.c.b16 %v4495, %v4494
      %v4504 = vpack.c.b16 %v4497, %v4496
      %v4505 = vpack.c.b16 %v4499, %v4498
      %v4506 = vpack.c.b16 %v4501, %v4500
      %v4508 = vsel %vm2558, %v4502, 0
      %v4511 = vsel %vm2558, %v4503, 0
      %v4514 = vsel %vm2558, %v4504, 0
      %v4517 = vsel %vm2558, %v4505, 0
      %v4520 = vsel %vm2558, %v4506, 0
      %4522 = vmatprep.subr.bf16.mxu0 %v2579
      %4523 = vmatpush1.bf16.msra.mxu0 %v2576
      %4524 = vmatprep.subr.bf16.mxu0 0
      %4525 = vmatpush1.bf16.msra.mxu0 0
      %4526 = vmatprep.subr.bf16.mxu0 0
      %4527 = vmatpush1.bf16.msra.mxu0 0
      %4528 = vmatprep.subr.bf16.mxu0 0
      %4529 = vmatpush1.bf16.msra.mxu0 0
      %4530 = vmatprep.subr.bf16.mxu0 0
      %4531 = vmatpush1.bf16.msra.mxu0 0
      %4532 = vmatprep.subr.bf16.mxu0 0
      %4533 = vmatpush1.bf16.msra.mxu0 0
      %4534 = vmatprep.subr.bf16.mxu0 0
      %4535 = vmatpush1.bf16.msra.mxu0 0
      %4536 = vmatprep.subr.bf16.mxu0 0
      %4537 = vmatpush1.bf16.msra.mxu0 0
      %4538 = vmatprep.subr.bf16.mxu0 0
      %4539 = vmatpush1.bf16.msra.mxu0 0
      %4540 = vmatprep.subr.bf16.mxu0 0
      %4541 = vmatpush1.bf16.msra.mxu0 0
      %4542 = vmatprep.subr.bf16.mxu0 0
      %4543 = vmatpush1.bf16.msra.mxu0 0
      %4544 = vmatprep.subr.bf16.mxu0 0
      %4545 = vmatpush1.bf16.msra.mxu0 0
      %4546 = vmatprep.subr.bf16.mxu0 0
      %4547 = vmatpush1.bf16.msra.mxu0 0
      %4548 = vmatprep.subr.bf16.mxu0 0
      %4549 = vmatpush1.bf16.msra.mxu0 0
      %4550 = vmatprep.subr.bf16.mxu0 0
      %4551 = vmatpush1.bf16.msra.mxu0 0
      %4552 = vmatprep.subr.bf16.mxu0 0
      %4553 = vmatpush1.bf16.msra.mxu0 0
      %4554 = vmatprep.mubr.bf16.mxu0 0
      %4555 = vmatmul.mubr.bf16.gmra.mrb[0].mxu0 %v4508
      %v4556 = vpop.f32.mrb[0].mxu0
      %v4557 = vpop.f32.mrb[0].mxu0
      %v4558 = vadd.f32 0.0, %v4557
      %v4559 = vpop.f32.mrb[0].mxu0
      %v4560 = vpop.f32.mrb[0].mxu0
      %v4561 = vadd.f32 0.0, %v4560
      %4562 = vmatprep.mubr.bf16.mxu0 0
      %4563 = vmatmul.mubr.bf16.gmra.mrb[0].mxu0 %v4511
      %v4564 = vpop.f32.mrb[0].mxu0
      %v4565 = vpop.f32.mrb[0].mxu0
      %v4566 = vadd.f32 0.0, %v4565
      %v4567 = vpop.f32.mrb[0].mxu0
      %v4568 = vpop.f32.mrb[0].mxu0
      %v4569 = vadd.f32 0.0, %v4568
      %4570 = vmatprep.mubr.bf16.mxu0 0
      %4571 = vmatmul.mubr.bf16.gmra.mrb[0].mxu0 %v4514
      %v4572 = vpop.f32.mrb[0].mxu0
      %v4573 = vpop.f32.mrb[0].mxu0
      %v4574 = vadd.f32 0.0, %v4573
      %v4575 = vpop.f32.mrb[0].mxu0
      %v4576 = vpop.f32.mrb[0].mxu0
      %v4577 = vadd.f32 0.0, %v4576
      %4578 = vmatprep.mubr.bf16.mxu0 0
      %4579 = vmatmul.mubr.bf16.gmra.mrb[0].mxu0 %v4517
      %v4580 = vpop.f32.mrb[0].mxu0
      %v4581 = vpop.f32.mrb[0].mxu0
      %v4582 = vadd.f32 0.0, %v4581
      %v4583 = vpop.f32.mrb[0].mxu0
      %v4584 = vpop.f32.mrb[0].mxu0
      %v4585 = vadd.f32 0.0, %v4584
      %4586 = vmatprep.mubr.bf16.mxu0 0
      %4587 = vmatmul.mubr.bf16.gmra.mrb[0].mxu0 %v4520
      %v4588 = vpop.f32.mrb[0].mxu0
      %v4589 = vpop.f32.mrb[0].mxu0
      %v4590 = vadd.f32 0.0, %v4589
      %v4591 = vpop.f32.mrb[0].mxu0
      %v4592 = vpop.f32.mrb[0].mxu0
      %v4593 = vadd.f32 0.0, %v4592
      %4594 = vdwg.mxu0
      %4595 = vmatprep.subr.bf16.mxu0 %v2585
      %4596 = vmatpush1.bf16.msra.mxu0 %v2582
      %4597 = vmatprep.subr.bf16.mxu0 0
      %4598 = vmatpush1.bf16.msra.mxu0 0
      %4599 = vmatprep.subr.bf16.mxu0 0
      %4600 = vmatpush1.bf16.msra.mxu0 0
      %4601 = vmatprep.subr.bf16.mxu0 0
      %4602 = vmatpush1.bf16.msra.mxu0 0
      %4603 = vmatprep.subr.bf16.mxu0 0
      %4604 = vmatpush1.bf16.msra.mxu0 0
      %4605 = vmatprep.subr.bf16.mxu0 0
      %4606 = vmatpush1.bf16.msra.mxu0 0
      %4607 = vmatprep.subr.bf16.mxu0 0
      %4608 = vmatpush1.bf16.msra.mxu0 0
      %4609 = vmatprep.subr.bf16.mxu0 0
      %4610 = vmatpush1.bf16.msra.mxu0 0
      %4611 = vmatprep.subr.bf16.mxu0 0
      %4612 = vmatpush1.bf16.msra.mxu0 0
      %4613 = vmatprep.subr.bf16.mxu0 0
      %4614 = vmatpush1.bf16.msra.mxu0 0
      %4615 = vmatprep.subr.bf16.mxu0 0
      %4616 = vmatpush1.bf16.msra.mxu0 0
      %4617 = vmatprep.subr.bf16.mxu0 0
      %4618 = vmatpush1.bf16.msra.mxu0 0
      %4619 = vmatprep.subr.bf16.mxu0 0
      %4620 = vmatpush1.bf16.msra.mxu0 0
      %4621 = vmatprep.subr.bf16.mxu0 0
      %4622 = vmatpush1.bf16.msra.mxu0 0
      %4623 = vmatprep.subr.bf16.mxu0 0
      %4624 = vmatpush1.bf16.msra.mxu0 0
      %4625 = vmatprep.subr.bf16.mxu0 0
      %4626 = vmatpush1.bf16.msra.mxu0 0
      %4627 = vmatprep.mubr.bf16.mxu0 0
      %4628 = vmatmul.mubr.bf16.gmra.mrb[0].mxu0 %v4508
      %v4629 = vpop.f32.mrb[0].mxu0
      %v4630 = vadd.f32 0.0, %v4629
      %v4631 = vpop.f32.mrb[0].mxu0
      %v4632 = vadd.f32 0.0, %v4631
      %v4633 = vpop.f32.mrb[0].mxu0
      %v4634 = vadd.f32 0.0, %v4633
      %v4635 = vpop.f32.mrb[0].mxu0
      %v4636 = vadd.f32 0.0, %v4635
      %4637 = vmatprep.mubr.bf16.mxu0 0
      %4638 = vmatmul.mubr.bf16.gmra.mrb[0].mxu0 %v4511
      %v4639 = vpop.f32.mrb[0].mxu0
      %v4640 = vadd.f32 0.0, %v4639
      %v4641 = vpop.f32.mrb[0].mxu0
      %v4642 = vadd.f32 0.0, %v4641
      %v4643 = vpop.f32.mrb[0].mxu0
      %v4644 = vadd.f32 0.0, %v4643
      %v4645 = vpop.f32.mrb[0].mxu0
      %v4646 = vadd.f32 0.0, %v4645
      %4647 = vmatprep.mubr.bf16.mxu0 0
      %4648 = vmatmul.mubr.bf16.gmra.mrb[0].mxu0 %v4514
      %v4649 = vpop.f32.mrb[0].mxu0
      %v4650 = vadd.f32 0.0, %v4649
      %v4651 = vpop.f32.mrb[0].mxu0
      %v4652 = vadd.f32 0.0, %v4651
      %v4653 = vpop.f32.mrb[0].mxu0
      %v4654 = vadd.f32 0.0, %v4653
      %v4655 = vpop.f32.mrb[0].mxu0
      %v4656 = vadd.f32 0.0, %v4655
      %4657 = vmatprep.mubr.bf16.mxu0 0
      %4658 = vmatmul.mubr.bf16.gmra.mrb[0].mxu0 %v4517
      %v4659 = vpop.f32.mrb[0].mxu0
      %v4660 = vadd.f32 0.0, %v4659
      %v4661 = vpop.f32.mrb[0].mxu0
      %v4662 = vadd.f32 0.0, %v4661
      %v4663 = vpop.f32.mrb[0].mxu0
      %v4664 = vadd.f32 0.0, %v4663
      %v4665 = vpop.f32.mrb[0].mxu0
      %v4666 = vadd.f32 0.0, %v4665
      %4667 = vmatprep.mubr.bf16.mxu0 0
      %4668 = vmatmul.mubr.bf16.gmra.mrb[0].mxu0 %v4520
      %v4669 = vpop.f32.mrb[0].mxu0
      %v4670 = vadd.f32 0.0, %v4669
      %v4671 = vpop.f32.mrb[0].mxu0
      %v4672 = vadd.f32 0.0, %v4671
      %v4673 = vpop.f32.mrb[0].mxu0
      %v4674 = vadd.f32 0.0, %v4673
      %v4675 = vpop.f32.mrb[0].mxu0
      %v4676 = vadd.f32 0.0, %v4675
      %4677 = vdwg.mxu0
      %4678 = vmatprep.subr.bf16.mxu0 0
      %4679 = vmatpush1.bf16.msra.mxu0 %v3446
      %4680 = vmatprep.subr.bf16.mxu0 0
      %4681 = vmatpush1.bf16.msra.mxu0 0
      %4682 = vmatprep.subr.bf16.mxu0 0
      %4683 = vmatpush1.bf16.msra.mxu0 0
      %4684 = vmatprep.subr.bf16.mxu0 0
      %4685 = vmatpush1.bf16.msra.mxu0 0
      %4686 = vmatprep.subr.bf16.mxu0 0
      %4687 = vmatpush1.bf16.msra.mxu0 0
      %4688 = vmatprep.subr.bf16.mxu0 0
      %4689 = vmatpush1.bf16.msra.mxu0 0
      %4690 = vmatprep.subr.bf16.mxu0 0
      %4691 = vmatpush1.bf16.msra.mxu0 0
      %4692 = vmatprep.subr.bf16.mxu0 0
      %4693 = vmatpush1.bf16.msra.mxu0 0
      %4694 = vmatprep.subr.bf16.mxu0 0
      %4695 = vmatpush1.bf16.msra.mxu0 0
      %4696 = vmatprep.subr.bf16.mxu0 0
      %4697 = vmatpush1.bf16.msra.mxu0 0
      %4698 = vmatprep.subr.bf16.mxu0 0
      %4699 = vmatpush1.bf16.msra.mxu0 0
      %4700 = vmatprep.subr.bf16.mxu0 0
      %4701 = vmatpush1.bf16.msra.mxu0 0
      %4702 = vmatprep.subr.bf16.mxu0 0
      %4703 = vmatpush1.bf16.msra.mxu0 0
      %4704 = vmatprep.subr.bf16.mxu0 0
      %4705 = vmatpush1.bf16.msra.mxu0 0
      %4706 = vmatprep.subr.bf16.mxu0 0
      %4707 = vmatpush1.bf16.msra.mxu0 0
      %4708 = vmatprep.subr.bf16.mxu0 0
      %4709 = vmatpush1.bf16.msra.mxu0 0
      %4710 = vmatprep.mubr.bf16.mxu0 0
      %4711 = vmatmul.mubr.bf16.gmra.mrb[0].mxu0 %v4508
      %v4712 = vpop.f32.mrb[0].mxu0
      %v4713 = vadd.f32 0.0, %v4712
      %v4714 = vpop.f32.mrb[0].mxu0
      %v4715 = vpop.f32.mrb[0].mxu0
      %v4716 = vadd.f32 0.0, %v4715
      %v4717 = vpop.f32.mrb[0].mxu0
      %4718 = vmatprep.mubr.bf16.mxu0 0
      %4719 = vmatmul.mubr.bf16.gmra.mrb[0].mxu0 %v4511
      %v4720 = vpop.f32.mrb[0].mxu0
      %v4721 = vadd.f32 0.0, %v4720
      %v4722 = vpop.f32.mrb[0].mxu0
      %v4723 = vpop.f32.mrb[0].mxu0
      %v4724 = vadd.f32 0.0, %v4723
      %v4725 = vpop.f32.mrb[0].mxu0
      %4726 = vmatprep.mubr.bf16.mxu0 0
      %4727 = vmatmul.mubr.bf16.gmra.mrb[0].mxu0 %v4514
      %v4728 = vpop.f32.mrb[0].mxu0
      %v4729 = vadd.f32 0.0, %v4728
      %v4730 = vpop.f32.mrb[0].mxu0
      %v4731 = vpop.f32.mrb[0].mxu0
      %v4732 = vadd.f32 0.0, %v4731
      %v4733 = vpop.f32.mrb[0].mxu0
      %4734 = vmatprep.mubr.bf16.mxu0 0
      %4735 = vmatmul.mubr.bf16.gmra.mrb[0].mxu0 %v4517
      %v4736 = vpop.f32.mrb[0].mxu0
      %v4737 = vadd.f32 0.0, %v4736
      %v4738 = vpop.f32.mrb[0].mxu0
      %v4739 = vpop.f32.mrb[0].mxu0
      %v4740 = vadd.f32 0.0, %v4739
      %v4741 = vpop.f32.mrb[0].mxu0
      %4742 = vmatprep.mubr.bf16.mxu0 0
      %4743 = vmatmul.mubr.bf16.gmra.mrb[0].mxu0 %v4520
      %v4744 = vpop.f32.mrb[0].mxu0
      %v4745 = vadd.f32 0.0, %v4744
      %v4746 = vpop.f32.mrb[0].mxu0
      %v4747 = vpop.f32.mrb[0].mxu0
      %v4748 = vadd.f32 0.0, %v4747
      %v4749 = vpop.f32.mrb[0].mxu0
      %4750 = vdwg.mxu0
      %4759 = vrot.lane.b32.xlu0 %v4558, 32
      %v4760 = vpop.permute.xlu0 %4759
      %4761 = vrot.lane.b32.xlu0 %v4630, 32
      %v4762 = vpop.permute.xlu0 %4761
      %4763 = vrot.lane.b32.xlu0 %v4632, 32
      %v4764 = vpop.permute.xlu0 %4763
      %4765 = vrot.lane.b32.xlu0 %v4713, 32
      %v4766 = vpop.permute.xlu0 %4765
      %4767 = vrot.lane.b32.xlu0 %v4561, 32
      %v4768 = vpop.permute.xlu0 %4767
      %4769 = vrot.lane.b32.xlu0 %v4634, 32
      %v4770 = vpop.permute.xlu0 %4769
      %4771 = vrot.lane.b32.xlu0 %v4636, 32
      %v4772 = vpop.permute.xlu0 %4771
      %4773 = vrot.lane.b32.xlu0 %v4716, 32
      %v4774 = vpop.permute.xlu0 %4773
      %vm4775 = vcmask 261120
      %v4776 = vsel %vm4775, %v4760, %v4762
      %v4777 = vsel %vm4775, %v4762, %v4764
      %v4778 = vsel %vm4775, %v4764, %v4766
      %v4779 = vsel %vm4775, %v4768, %v4770
      %v4780 = vsel %vm4775, %v4770, %v4772
      %v4781 = vsel %vm4775, %v4772, %v4774
      %v4790 = vadd.f32 %v4464, %v4776
      %v4791 = vadd.f32 %v4465, %v4777
      %v4792 = vadd.f32 %v4466, %v4778
      %v4793 = vadd.f32 %v4467, %v4766
      %v4794 = vadd.f32 %v4468, %v4779
      %v4795 = vadd.f32 %v4469, %v4780
      %v4796 = vadd.f32 %v4470, %v4781
      %v4797 = vadd.f32 %v4471, %v4774
      %4806 = vrot.lane.b32.xlu0 %v4566, 30
      %v4807 = vpop.permute.xlu0 %4806
      %4808 = vrot.lane.b32.xlu0 %v4640, 30
      %v4809 = vpop.permute.xlu0 %4808
      %4810 = vrot.lane.b32.xlu0 %v4642, 30
      %v4811 = vpop.permute.xlu0 %4810
      %4812 = vrot.lane.b32.xlu0 %v4721, 30
      %v4813 = vpop.permute.xlu0 %4812
      %4814 = vrot.lane.b32.xlu0 %v4569, 30
      %v4815 = vpop.permute.xlu0 %4814
      %4816 = vrot.lane.b32.xlu0 %v4644, 30
      %v4817 = vpop.permute.xlu0 %4816
      %4818 = vrot.lane.b32.xlu0 %v4646, 30
      %v4819 = vpop.permute.xlu0 %4818
      %4820 = vrot.lane.b32.xlu0 %v4724, 30
      %v4821 = vpop.permute.xlu0 %4820
      %vm4822 = vcmask 244736
      %v4823 = vsel %vm4822, %v4807, %v4809
      %v4824 = vsel %vm4822, %v4809, %v4811
      %v4825 = vsel %vm4822, %v4811, %v4813
      %v4826 = vsel %vm4822, %v4815, %v4817
      %v4827 = vsel %vm4822, %v4817, %v4819
      %v4828 = vsel %vm4822, %v4819, %v4821
      %v4837 = vadd.f32 %v4790, %v4823
      %v4838 = vadd.f32 %v4791, %v4824
      %v4839 = vadd.f32 %v4792, %v4825
      %v4840 = vadd.f32 %v4793, %v4813
      %v4841 = vadd.f32 %v4794, %v4826
      %v4842 = vadd.f32 %v4795, %v4827
      %v4843 = vadd.f32 %v4796, %v4828
      %v4844 = vadd.f32 %v4797, %v4821
      %4853 = vrot.lane.b32.xlu0 %v4574, 28
      %v4854 = vpop.permute.xlu0 %4853
      %4855 = vrot.lane.b32.xlu0 %v4650, 28
      %v4856 = vpop.permute.xlu0 %4855
      %4857 = vrot.lane.b32.xlu0 %v4652, 28
      %v4858 = vpop.permute.xlu0 %4857
      %4859 = vrot.lane.b32.xlu0 %v4729, 28
      %v4860 = vpop.permute.xlu0 %4859
      %4861 = vrot.lane.b32.xlu0 %v4577, 28
      %v4862 = vpop.permute.xlu0 %4861
      %4863 = vrot.lane.b32.xlu0 %v4654, 28
      %v4864 = vpop.permute.xlu0 %4863
      %4865 = vrot.lane.b32.xlu0 %v4656, 28
      %v4866 = vpop.permute.xlu0 %4865
      %4867 = vrot.lane.b32.xlu0 %v4732, 28
      %v4868 = vpop.permute.xlu0 %4867
      %vm4869 = vcmask 228352
      %v4870 = vsel %vm4869, %v4854, %v4856
      %v4871 = vsel %vm4869, %v4856, %v4858
      %v4872 = vsel %vm4869, %v4858, %v4860
      %v4873 = vsel %vm4869, %v4862, %v4864
      %v4874 = vsel %vm4869, %v4864, %v4866
      %v4875 = vsel %vm4869, %v4866, %v4868
      %v4884 = vadd.f32 %v4837, %v4870
      %v4885 = vadd.f32 %v4838, %v4871
      %v4886 = vadd.f32 %v4839, %v4872
      %v4887 = vadd.f32 %v4840, %v4860
      %v4888 = vadd.f32 %v4841, %v4873
      %v4889 = vadd.f32 %v4842, %v4874
      %v4890 = vadd.f32 %v4843, %v4875
      %v4891 = vadd.f32 %v4844, %v4868
      %4900 = vrot.lane.b32.xlu0 %v4582, 26
      %v4901 = vpop.permute.xlu0 %4900
      %4902 = vrot.lane.b32.xlu0 %v4660, 26
      %v4903 = vpop.permute.xlu0 %4902
      %4904 = vrot.lane.b32.xlu0 %v4662, 26
      %v4905 = vpop.permute.xlu0 %4904
      %4906 = vrot.lane.b32.xlu0 %v4737, 26
      %v4907 = vpop.permute.xlu0 %4906
      %4908 = vrot.lane.b32.xlu0 %v4585, 26
      %v4909 = vpop.permute.xlu0 %4908
      %4910 = vrot.lane.b32.xlu0 %v4664, 26
      %v4911 = vpop.permute.xlu0 %4910
      %4912 = vrot.lane.b32.xlu0 %v4666, 26
      %v4913 = vpop.permute.xlu0 %4912
      %4914 = vrot.lane.b32.xlu0 %v4740, 26
      %v4915 = vpop.permute.xlu0 %4914
      %vm4916 = vcmask 211968
      %v4917 = vsel %vm4916, %v4901, %v4903
      %v4918 = vsel %vm4916, %v4903, %v4905
      %v4919 = vsel %vm4916, %v4905, %v4907
      %v4920 = vsel %vm4916, %v4909, %v4911
      %v4921 = vsel %vm4916, %v4911, %v4913
      %v4922 = vsel %vm4916, %v4913, %v4915
      %v4931 = vadd.f32 %v4884, %v4917
      %v4932 = vadd.f32 %v4885, %v4918
      %v4933 = vadd.f32 %v4886, %v4919
      %v4934 = vadd.f32 %v4887, %v4907
      %v4935 = vadd.f32 %v4888, %v4920
      %v4936 = vadd.f32 %v4889, %v4921
      %v4937 = vadd.f32 %v4890, %v4922
      %v4938 = vadd.f32 %v4891, %v4915
      %4947 = vrot.lane.b32.xlu0 %v4590, 24
      %v4948 = vpop.permute.xlu0 %4947
      %4949 = vrot.lane.b32.xlu0 %v4670, 24
      %v4950 = vpop.permute.xlu0 %4949
      %4951 = vrot.lane.b32.xlu0 %v4672, 24
      %v4952 = vpop.permute.xlu0 %4951
      %4953 = vrot.lane.b32.xlu0 %v4745, 24
      %v4954 = vpop.permute.xlu0 %4953
      %4955 = vrot.lane.b32.xlu0 %v4593, 24
      %v4956 = vpop.permute.xlu0 %4955
      %4957 = vrot.lane.b32.xlu0 %v4674, 24
      %v4958 = vpop.permute.xlu0 %4957
      %4959 = vrot.lane.b32.xlu0 %v4676, 24
      %v4960 = vpop.permute.xlu0 %4959
      %4961 = vrot.lane.b32.xlu0 %v4748, 24
      %v4962 = vpop.permute.xlu0 %4961
      %vm4963 = vcmask 195584
      %v4964 = vsel %vm4963, %v4948, %v4950
      %v4965 = vsel %vm4963, %v4950, %v4952
      %v4966 = vsel %vm4963, %v4952, %v4954
      %v4967 = vsel %vm4963, %v4956, %v4958
      %v4968 = vsel %vm4963, %v4958, %v4960
      %v4969 = vsel %vm4963, %v4960, %v4962
      %v4978 = vadd.f32 %v4931, %v4964
      %v4979 = vadd.f32 %v4932, %v4965
      %v4980 = vadd.f32 %v4933, %v4966
      %v4981 = vadd.f32 %v4934, %v4954
      %v4982 = vadd.f32 %v4935, %v4967
      %v4983 = vadd.f32 %v4936, %v4968
      %v4984 = vadd.f32 %v4937, %v4969
      %v4985 = vadd.f32 %v4938, %v4962
      %v4986 = vld [vmem:[%s4] sm:$0xff]
      %v4987 = vld [vmem:[%s4 + $0x8] sm:$0xff]
      %4989 = vset.pattern.permute.xlu0 0
      %4990 = vperm.xlu0 %4989, %v4986
      %v4991 = vpop.permute.xlu0 %4990
      %4994 = vset.pattern.permute.xlu0 0
      %4995 = vperm.xlu0 %4994, %v4987
      %v4996 = vpop.permute.xlu0 %4995
      %v4998 = vadd.f32 %v4978, %v4991
      %v4999 = vadd.f32 %v4979, %v4991
      %v5000 = vadd.f32 %v4980, %v4991
      %v5001 = vadd.f32 %v4981, %v4991
      %v5002 = vadd.f32 %v4982, %v4996
      %v5003 = vadd.f32 %v4983, %v4996
      %v5004 = vadd.f32 %v4984, %v4996
      %v5005 = vadd.f32 %v4985, %v4996
      %v5006 = vmax.f32 %v4998, 0.0
      %v5007 = vmax.f32 %v4999, 0.0
      %v5008 = vmax.f32 %v5000, 0.0
      %v5009 = vmax.f32 %v5001, 0.0
      %v5010 = vmax.f32 %v5002, 0.0
      %v5011 = vmax.f32 %v5003, 0.0
      %v5012 = vmax.f32 %v5004, 0.0
      %v5013 = vmax.f32 %v5005, 0.0
      %5020 = vrot.lane.b32.xlu0 %v5006, 126
      %v5021 = vpop.permute.xlu0 %5020
      %5022 = vrot.lane.b32.xlu0 %v5007, 126
      %v5023 = vpop.permute.xlu0 %5022
      %5024 = vrot.lane.b32.xlu0 %v5008, 126
      %v5025 = vpop.permute.xlu0 %5024
      %5026 = vrot.lane.b32.xlu0 %v5010, 126
      %v5027 = vpop.permute.xlu0 %5026
      %5028 = vrot.lane.b32.xlu0 %v5011, 126
      %v5029 = vpop.permute.xlu0 %5028
      %5030 = vrot.lane.b32.xlu0 %v5012, 126
      %v5031 = vpop.permute.xlu0 %5030
      %v5032 = vsel %vm701, %v5021, %v5023
      %v5033 = vsel %vm701, %v5023, %v5025
      %v5034 = vsel %vm701, %v5027, %v5029
      %v5035 = vsel %vm701, %v5029, %v5031
      %v5042 = vmax.f32 %v5006, %v5032
      %v5043 = vmax.f32 %v5007, %v5033
      %v5044 = vmax.f32 %v5008, %v5025
      %v5045 = vmax.f32 %v5010, %v5034
      %v5046 = vmax.f32 %v5011, %v5035
      %v5047 = vmax.f32 %v5012, %v5031
      %5050 = vrot.lane.b32.xlu0 %v5009, 126
      %v5051 = vpop.permute.xlu0 %5050
      %5052 = vrot.lane.b32.xlu0 %v5013, 126
      %v5053 = vpop.permute.xlu0 %5052
      %v5054 = vsel %vm701, %v5025, %v5051
      %v5055 = vsel %vm701, %v5031, %v5053
      %v5060 = vmax.f32 %v5008, %v5054
      %v5061 = vmax.f32 %v5009, %v5051
      %v5062 = vmax.f32 %v5012, %v5055
      %v5063 = vmax.f32 %v5013, %v5053
      %5072 = vrot.lane.b32.xlu0 %v5042, 72
      %v5073 = vpop.permute.xlu0 %5072
      %5074 = vrot.lane.b32.xlu0 %v5043, 72
      %v5075 = vpop.permute.xlu0 %5074
      %5076 = vrot.lane.b32.xlu0 %v5060, 72
      %v5077 = vpop.permute.xlu0 %5076
      %5078 = vrot.lane.b32.xlu0 %v5061, 72
      %v5079 = vpop.permute.xlu0 %5078
      %5080 = vrot.lane.b32.xlu0 %v5045, 72
      %v5081 = vpop.permute.xlu0 %5080
      %5082 = vrot.lane.b32.xlu0 %v5046, 72
      %v5083 = vpop.permute.xlu0 %5082
      %5084 = vrot.lane.b32.xlu0 %v5062, 72
      %v5085 = vpop.permute.xlu0 %5084
      %5086 = vrot.lane.b32.xlu0 %v5063, 72
      %v5087 = vpop.permute.xlu0 %5086
      %v5088 = vsel %vm1409, %v5073, %v5075
      %v5089 = vsel %vm1409, %v5075, %v5077
      %v5090 = vsel %vm1409, %v5077, %v5079
      %v5091 = vsel %vm1409, %v5081, %v5083
      %v5092 = vsel %vm1409, %v5083, %v5085
      %v5093 = vsel %vm1409, %v5085, %v5087
      %v5100 = vmax.f32 %v5042, %v5088
      %v5101 = vmax.f32 %v5043, %v5089
      %v5102 = vmax.f32 %v5044, %v5090
      %v5103 = vmax.f32 %v5045, %v5091
      %v5104 = vmax.f32 %v5046, %v5092
      %v5105 = vmax.f32 %v5047, %v5093
      %v5106 = vpack.c.bf16 %v5103, %v5100
      %v5107 = vld [vmem:[%s5] sm:$0xf]
      %v5108 = vld [vmem:[%s5 + $0x4] sm:$0xf]
      %v5109 = vld [vmem:[%s5 + $0x8] sm:$0xf]
      %v5110 = vld [vmem:[%s5 + $0xc] sm:$0xf]
      %v5111 = vld [vmem:[%s5 + $0x10] sm:$0xf]
      %v5112 = vld [vmem:[%s5 + $0x14] sm:$0xf]
      %v5113 = vld [vmem:[%s5 + $0x18] sm:$0xf]
      %v5114 = vld [vmem:[%s5 + $0x1c] sm:$0xf]
      %v5115 = vld [vmem:[%s5 + $0x20] sm:$0xf]
      %v5116 = vld [vmem:[%s5 + $0x24] sm:$0xf]
      %v5117 = vld [vmem:[%s5 + $0x28] sm:$0xf]
      %v5118 = vld [vmem:[%s5 + $0x2c] sm:$0xf]
      %v5119 = vld [vmem:[%s5 + $0x30] sm:$0xf]
      %v5120 = vld [vmem:[%s5 + $0x34] sm:$0xf]
      %v5121 = vld [vmem:[%s5 + $0x38] sm:$0xf]
      %v5122 = vld [vmem:[%s5 + $0x3c] sm:$0xf]
      %s5123 = scalar_lea.vmem %s5, 64
      %v5124 = vld [vmem:[%s5123] sm:$0xf]
      %v5125 = vld [vmem:[%s5123 + $0x4] sm:$0xf]
      %v5126 = vld [vmem:[%s5123 + $0x8] sm:$0xf]
      %v5127 = vld [vmem:[%s5123 + $0xc] sm:$0xf]
      %v5128 = vld [vmem:[%s5123 + $0x10] sm:$0xf]
      %v5129 = vld [vmem:[%s5123 + $0x14] sm:$0xf]
      %v5130 = vld [vmem:[%s5123 + $0x18] sm:$0xf]
      %v5131 = vld [vmem:[%s5123 + $0x1c] sm:$0xf]
      %v5132 = vld [vmem:[%s5123 + $0x20] sm:$0xf]
      %v5133 = vld [vmem:[%s5123 + $0x24] sm:$0xf]
      %v5134 = vld [vmem:[%s5123 + $0x28] sm:$0xf]
      %v5135 = vld [vmem:[%s5123 + $0x2c] sm:$0xf]
      %v5136 = vld [vmem:[%s5123 + $0x30] sm:$0xf]
      %v5137 = vld [vmem:[%s5123 + $0x34] sm:$0xf]
      %v5138 = vld [vmem:[%s5123 + $0x38] sm:$0xf]
      %v5139 = vld [vmem:[%s5123 + $0x3c] sm:$0xf]
      %v5156 = vunpack.c.l.b16 %v5124
      %v5157 = vunpack.c.l.b16 %v5125
      %v5158 = vunpack.c.l.b16 %v5126
      %v5159 = vunpack.c.l.b16 %v5127
      %v5160 = vunpack.c.l.b16 %v5128
      %v5161 = vunpack.c.l.b16 %v5129
      %v5162 = vunpack.c.l.b16 %v5130
      %v5163 = vunpack.c.l.b16 %v5131
      %v5164 = vunpack.c.l.b16 %v5132
      %v5165 = vunpack.c.l.b16 %v5133
      %v5166 = vunpack.c.l.b16 %v5134
      %v5167 = vunpack.c.l.b16 %v5135
      %v5168 = vunpack.c.l.b16 %v5136
      %v5169 = vunpack.c.l.b16 %v5137
      %v5170 = vunpack.c.l.b16 %v5138
      %v5171 = vunpack.c.l.b16 %v5139
      %v5172 = vpack.c.b16 %v5157, %v5156
      %v5173 = vpack.c.b16 %v5159, %v5158
      %v5174 = vpack.c.b16 %v5161, %v5160
      %v5175 = vpack.c.b16 %v5163, %v5162
      %v5176 = vpack.c.b16 %v5165, %v5164
      %v5177 = vpack.c.b16 %v5167, %v5166
      %v5178 = vpack.c.b16 %v5169, %v5168
      %v5179 = vpack.c.b16 %v5171, %v5170
      %5181 = vrot.lane.b32.xlu0 %v5106, 124
      %v5182 = vpop.permute.xlu0 %5181
      %v5185 = vsel %vm2251, %v5172, 0
      %v5188 = vsel %vm2251, %v5173, 0
      %v5191 = vsel %vm2251, %v5174, 0
      %v5194 = vsel %vm2251, %v5175, 0
      %v5197 = vsel %vm2251, %v5176, 0
      %v5200 = vsel %vm2251, %v5177, 0
      %v5203 = vsel %vm2251, %v5178, 0
      %v5206 = vsel %vm2251, %v5179, 0
      %5208 = vmatprep.subr.bf16.mxu0 0
      %5209 = vmatpush1.bf16.msra.mxu0 %v5182
      %5210 = vmatprep.subr.bf16.mxu0 0
      %5211 = vmatpush1.bf16.msra.mxu0 0
      %5212 = vmatprep.subr.bf16.mxu0 0
      %5213 = vmatpush1.bf16.msra.mxu0 0
      %5214 = vmatprep.subr.bf16.mxu0 0
      %5215 = vmatpush1.bf16.msra.mxu0 0
      %5216 = vmatprep.subr.bf16.mxu0 0
      %5217 = vmatpush1.bf16.msra.mxu0 0
      %5218 = vmatprep.subr.bf16.mxu0 0
      %5219 = vmatpush1.bf16.msra.mxu0 0
      %5220 = vmatprep.subr.bf16.mxu0 0
      %5221 = vmatpush1.bf16.msra.mxu0 0
      %5222 = vmatprep.subr.bf16.mxu0 0
      %5223 = vmatpush1.bf16.msra.mxu0 0
      %5224 = vmatprep.subr.bf16.mxu0 0
      %5225 = vmatpush1.bf16.msra.mxu0 0
      %5226 = vmatprep.subr.bf16.mxu0 0
      %5227 = vmatpush1.bf16.msra.mxu0 0
      %5228 = vmatprep.subr.bf16.mxu0 0
      %5229 = vmatpush1.bf16.msra.mxu0 0
      %5230 = vmatprep.subr.bf16.mxu0 0
      %5231 = vmatpush1.bf16.msra.mxu0 0
      %5232 = vmatprep.subr.bf16.mxu0 0
      %5233 = vmatpush1.bf16.msra.mxu0 0
      %5234 = vmatprep.subr.bf16.mxu0 0
      %5235 = vmatpush1.bf16.msra.mxu0 0
      %5236 = vmatprep.subr.bf16.mxu0 0
      %5237 = vmatpush1.bf16.msra.mxu0 0
      %5238 = vmatprep.subr.bf16.mxu0 0
      %5239 = vmatpush1.bf16.msra.mxu0 0
      %5240 = vmatprep.mubr.bf16.mxu0 0
      %5241 = vmatmul.mubr.bf16.gmra.mrb[0].mxu0 %v5185
      %v5242 = vpop.f32.mrb[0].mxu0
      %v5243 = vadd.f32 0.0, %v5242
      %v5244 = vpop.f32.mrb[0].mxu0
      %v5245 = vpop.f32.mrb[0].mxu0
      %v5246 = vadd.f32 0.0, %v5245
      %v5247 = vpop.f32.mrb[0].mxu0
      %5248 = vmatprep.mubr.bf16.mxu0 0
      %5249 = vmatmul.mubr.bf16.gmra.mrb[0].mxu0 %v5188
      %v5250 = vpop.f32.mrb[0].mxu0
      %v5251 = vadd.f32 0.0, %v5250
      %v5252 = vpop.f32.mrb[0].mxu0
      %v5253 = vpop.f32.mrb[0].mxu0
      %v5254 = vadd.f32 0.0, %v5253
      %v5255 = vpop.f32.mrb[0].mxu0
      %5256 = vmatprep.mubr.bf16.mxu0 0
      %5257 = vmatmul.mubr.bf16.gmra.mrb[0].mxu0 %v5191
      %v5258 = vpop.f32.mrb[0].mxu0
      %v5259 = vadd.f32 0.0, %v5258
      %v5260 = vpop.f32.mrb[0].mxu0
      %v5261 = vpop.f32.mrb[0].mxu0
      %v5262 = vadd.f32 0.0, %v5261
      %v5263 = vpop.f32.mrb[0].mxu0
      %5264 = vmatprep.mubr.bf16.mxu0 0
      %5265 = vmatmul.mubr.bf16.gmra.mrb[0].mxu0 %v5194
      %v5266 = vpop.f32.mrb[0].mxu0
      %v5267 = vadd.f32 0.0, %v5266
      %v5268 = vpop.f32.mrb[0].mxu0
      %v5269 = vpop.f32.mrb[0].mxu0
      %v5270 = vadd.f32 0.0, %v5269
      %v5271 = vpop.f32.mrb[0].mxu0
      %5272 = vmatprep.mubr.bf16.mxu0 0
      %5273 = vmatmul.mubr.bf16.gmra.mrb[0].mxu0 %v5197
      %v5274 = vpop.f32.mrb[0].mxu0
      %v5275 = vadd.f32 0.0, %v5274
      %v5276 = vpop.f32.mrb[0].mxu0
      %v5277 = vpop.f32.mrb[0].mxu0
      %v5278 = vadd.f32 0.0, %v5277
      %v5279 = vpop.f32.mrb[0].mxu0
      %5280 = vmatprep.mubr.bf16.mxu0 0
      %5281 = vmatmul.mubr.bf16.gmra.mrb[0].mxu0 %v5200
      %v5282 = vpop.f32.mrb[0].mxu0
      %v5283 = vadd.f32 0.0, %v5282
      %v5284 = vpop.f32.mrb[0].mxu0
      %v5285 = vpop.f32.mrb[0].mxu0
      %v5286 = vadd.f32 0.0, %v5285
      %v5287 = vpop.f32.mrb[0].mxu0
      %5288 = vmatprep.mubr.bf16.mxu0 0
      %5289 = vmatmul.mubr.bf16.gmra.mrb[0].mxu0 %v5203
      %v5290 = vpop.f32.mrb[0].mxu0
      %v5291 = vadd.f32 0.0, %v5290
      %v5292 = vpop.f32.mrb[0].mxu0
      %v5293 = vpop.f32.mrb[0].mxu0
      %v5294 = vadd.f32 0.0, %v5293
      %v5295 = vpop.f32.mrb[0].mxu0
      %5296 = vmatprep.mubr.bf16.mxu0 0
      %5297 = vmatmul.mubr.bf16.gmra.mrb[0].mxu0 %v5206
      %v5298 = vpop.f32.mrb[0].mxu0
      %v5299 = vadd.f32 0.0, %v5298
      %v5300 = vpop.f32.mrb[0].mxu0
      %v5301 = vpop.f32.mrb[0].mxu0
      %v5302 = vadd.f32 0.0, %v5301
      %v5303 = vpop.f32.mrb[0].mxu0
      %5304 = vdwg.mxu0
      %v5321 = vunpack.c.l.b16 %v5107
      %v5322 = vunpack.c.l.b16 %v5108
      %v5323 = vunpack.c.l.b16 %v5109
      %v5324 = vunpack.c.l.b16 %v5110
      %v5325 = vunpack.c.l.b16 %v5111
      %v5326 = vunpack.c.l.b16 %v5112
      %v5327 = vunpack.c.l.b16 %v5113
      %v5328 = vunpack.c.l.b16 %v5114
      %v5329 = vunpack.c.l.b16 %v5115
      %v5330 = vunpack.c.l.b16 %v5116
      %v5331 = vunpack.c.l.b16 %v5117
      %v5332 = vunpack.c.l.b16 %v5118
      %v5333 = vunpack.c.l.b16 %v5119
      %v5334 = vunpack.c.l.b16 %v5120
      %v5335 = vunpack.c.l.b16 %v5121
      %v5336 = vunpack.c.l.b16 %v5122
      %v5337 = vpack.c.b16 %v5322, %v5321
      %v5338 = vpack.c.b16 %v5324, %v5323
      %v5339 = vpack.c.b16 %v5326, %v5325
      %v5340 = vpack.c.b16 %v5328, %v5327
      %v5341 = vpack.c.b16 %v5330, %v5329
      %v5342 = vpack.c.b16 %v5332, %v5331
      %v5343 = vpack.c.b16 %v5334, %v5333
      %v5344 = vpack.c.b16 %v5336, %v5335
      %v5346 = vsel %vm2251, %v5337, 0
      %v5349 = vsel %vm2251, %v5338, 0
      %v5352 = vsel %vm2251, %v5339, 0
      %v5355 = vsel %vm2251, %v5340, 0
      %v5358 = vsel %vm2251, %v5341, 0
      %v5361 = vsel %vm2251, %v5342, 0
      %v5364 = vsel %vm2251, %v5343, 0
      %v5367 = vsel %vm2251, %v5344, 0
      %5369 = vmatprep.subr.bf16.mxu0 0
      %5370 = vmatpush1.bf16.msra.mxu0 %v5106
      %5371 = vmatprep.subr.bf16.mxu0 0
      %5372 = vmatpush1.bf16.msra.mxu0 0
      %5373 = vmatprep.subr.bf16.mxu0 0
      %5374 = vmatpush1.bf16.msra.mxu0 0
      %5375 = vmatprep.subr.bf16.mxu0 0
      %5376 = vmatpush1.bf16.msra.mxu0 0
      %5377 = vmatprep.subr.bf16.mxu0 0
      %5378 = vmatpush1.bf16.msra.mxu0 0
      %5379 = vmatprep.subr.bf16.mxu0 0
      %5380 = vmatpush1.bf16.msra.mxu0 0
      %5381 = vmatprep.subr.bf16.mxu0 0
      %5382 = vmatpush1.bf16.msra.mxu0 0
      %5383 = vmatprep.subr.bf16.mxu0 0
      %5384 = vmatpush1.bf16.msra.mxu0 0
      %5385 = vmatprep.subr.bf16.mxu0 0
      %5386 = vmatpush1.bf16.msra.mxu0 0
      %5387 = vmatprep.subr.bf16.mxu0 0
      %5388 = vmatpush1.bf16.msra.mxu0 0
      %5389 = vmatprep.subr.bf16.mxu0 0
      %5390 = vmatpush1.bf16.msra.mxu0 0
      %5391 = vmatprep.subr.bf16.mxu0 0
      %5392 = vmatpush1.bf16.msra.mxu0 0
      %5393 = vmatprep.subr.bf16.mxu0 0
      %5394 = vmatpush1.bf16.msra.mxu0 0
      %5395 = vmatprep.subr.bf16.mxu0 0
      %5396 = vmatpush1.bf16.msra.mxu0 0
      %5397 = vmatprep.subr.bf16.mxu0 0
      %5398 = vmatpush1.bf16.msra.mxu0 0
      %5399 = vmatprep.subr.bf16.mxu0 0
      %5400 = vmatpush1.bf16.msra.mxu0 0
      %5401 = vmatprep.mubr.bf16.mxu0 0
      %5402 = vmatmul.mubr.bf16.gmra.mrb[0].mxu0 %v5346
      %v5403 = vpop.f32.mrb[0].mxu0
      %v5404 = vadd.f32 %v5243, %v5403
      %v5405 = vpop.f32.mrb[0].mxu0
      %v5406 = vpop.f32.mrb[0].mxu0
      %v5407 = vadd.f32 %v5246, %v5406
      %v5408 = vpop.f32.mrb[0].mxu0
      %5409 = vmatprep.mubr.bf16.mxu0 0
      %5410 = vmatmul.mubr.bf16.gmra.mrb[0].mxu0 %v5349
      %v5411 = vpop.f32.mrb[0].mxu0
      %v5412 = vadd.f32 %v5251, %v5411
      %v5413 = vpop.f32.mrb[0].mxu0
      %v5414 = vpop.f32.mrb[0].mxu0
      %v5415 = vadd.f32 %v5254, %v5414
      %v5416 = vpop.f32.mrb[0].mxu0
      %5417 = vmatprep.mubr.bf16.mxu0 0
      %5418 = vmatmul.mubr.bf16.gmra.mrb[0].mxu0 %v5352
      %v5419 = vpop.f32.mrb[0].mxu0
      %v5420 = vadd.f32 %v5259, %v5419
      %v5421 = vpop.f32.mrb[0].mxu0
      %v5422 = vpop.f32.mrb[0].mxu0
      %v5423 = vadd.f32 %v5262, %v5422
      %v5424 = vpop.f32.mrb[0].mxu0
      %5425 = vmatprep.mubr.bf16.mxu0 0
      %5426 = vmatmul.mubr.bf16.gmra.mrb[0].mxu0 %v5355
      %v5427 = vpop.f32.mrb[0].mxu0
      %v5428 = vadd.f32 %v5267, %v5427
      %v5429 = vpop.f32.mrb[0].mxu0
      %v5430 = vpop.f32.mrb[0].mxu0
      %v5431 = vadd.f32 %v5270, %v5430
      %v5432 = vpop.f32.mrb[0].mxu0
      %5433 = vmatprep.mubr.bf16.mxu0 0
      %5434 = vmatmul.mubr.bf16.gmra.mrb[0].mxu0 %v5358
      %v5435 = vpop.f32.mrb[0].mxu0
      %v5436 = vadd.f32 %v5275, %v5435
      %v5437 = vpop.f32.mrb[0].mxu0
      %v5438 = vpop.f32.mrb[0].mxu0
      %v5439 = vadd.f32 %v5278, %v5438
      %v5440 = vpop.f32.mrb[0].mxu0
      %5441 = vmatprep.mubr.bf16.mxu0 0
      %5442 = vmatmul.mubr.bf16.gmra.mrb[0].mxu0 %v5361
      %v5443 = vpop.f32.mrb[0].mxu0
      %v5444 = vadd.f32 %v5283, %v5443
      %v5445 = vpop.f32.mrb[0].mxu0
      %v5446 = vpop.f32.mrb[0].mxu0
      %v5447 = vadd.f32 %v5286, %v5446
      %v5448 = vpop.f32.mrb[0].mxu0
      %5449 = vmatprep.mubr.bf16.mxu0 0
      %5450 = vmatmul.mubr.bf16.gmra.mrb[0].mxu0 %v5364
      %v5451 = vpop.f32.mrb[0].mxu0
      %v5452 = vadd.f32 %v5291, %v5451
      %v5453 = vpop.f32.mrb[0].mxu0
      %v5454 = vpop.f32.mrb[0].mxu0
      %v5455 = vadd.f32 %v5294, %v5454
      %v5456 = vpop.f32.mrb[0].mxu0
      %5457 = vmatprep.mubr.bf16.mxu0 0
      %5458 = vmatmul.mubr.bf16.gmra.mrb[0].mxu0 %v5367
      %v5459 = vpop.f32.mrb[0].mxu0
      %v5460 = vadd.f32 %v5299, %v5459
      %v5461 = vpop.f32.mrb[0].mxu0
      %v5462 = vpop.f32.mrb[0].mxu0
      %v5463 = vadd.f32 %v5302, %v5462
      %v5464 = vpop.f32.mrb[0].mxu0
      %5465 = vdwg.mxu0
      %s5466 = scalar_lea.vmem %s5, 128
      %v5467 = vld [vmem:[%s5466] sm:$0xf]
      %v5468 = vld [vmem:[%s5466 + $0x4] sm:$0xf]
      %v5469 = vld [vmem:[%s5466 + $0x8] sm:$0xf]
      %v5470 = vld [vmem:[%s5466 + $0xc] sm:$0xf]
      %v5471 = vld [vmem:[%s5466 + $0x10] sm:$0xf]
      %v5472 = vld [vmem:[%s5466 + $0x14] sm:$0xf]
      %v5473 = vld [vmem:[%s5466 + $0x18] sm:$0xf]
      %v5474 = vld [vmem:[%s5466 + $0x1c] sm:$0xf]
      %v5475 = vld [vmem:[%s5466 + $0x20] sm:$0xf]
      %v5476 = vld [vmem:[%s5466 + $0x24] sm:$0xf]
      %v5477 = vld [vmem:[%s5466 + $0x28] sm:$0xf]
      %v5478 = vld [vmem:[%s5466 + $0x2c] sm:$0xf]
      %v5479 = vld [vmem:[%s5466 + $0x30] sm:$0xf]
      %v5480 = vld [vmem:[%s5466 + $0x34] sm:$0xf]
      %v5481 = vld [vmem:[%s5466 + $0x38] sm:$0xf]
      %v5482 = vld [vmem:[%s5466 + $0x3c] sm:$0xf]
      %v5499 = vunpack.c.l.b16 %v5467
      %v5500 = vunpack.c.l.b16 %v5468
      %v5501 = vunpack.c.l.b16 %v5469
      %v5502 = vunpack.c.l.b16 %v5470
      %v5503 = vunpack.c.l.b16 %v5471
      %v5504 = vunpack.c.l.b16 %v5472
      %v5505 = vunpack.c.l.b16 %v5473
      %v5506 = vunpack.c.l.b16 %v5474
      %v5507 = vunpack.c.l.b16 %v5475
      %v5508 = vunpack.c.l.b16 %v5476
      %v5509 = vunpack.c.l.b16 %v5477
      %v5510 = vunpack.c.l.b16 %v5478
      %v5511 = vunpack.c.l.b16 %v5479
      %v5512 = vunpack.c.l.b16 %v5480
      %v5513 = vunpack.c.l.b16 %v5481
      %v5514 = vunpack.c.l.b16 %v5482
      %v5515 = vpack.c.b16 %v5500, %v5499
      %v5516 = vpack.c.b16 %v5502, %v5501
      %v5517 = vpack.c.b16 %v5504, %v5503
      %v5518 = vpack.c.b16 %v5506, %v5505
      %v5519 = vpack.c.b16 %v5508, %v5507
      %v5520 = vpack.c.b16 %v5510, %v5509
      %v5521 = vpack.c.b16 %v5512, %v5511
      %v5522 = vpack.c.b16 %v5514, %v5513
      %5523 = vrot.lane.b32.xlu0 %v5106, 120
      %v5524 = vpop.permute.xlu0 %5523
      %v5527 = vsel %vm2251, %v5515, 0
      %v5530 = vsel %vm2251, %v5516, 0
      %v5533 = vsel %vm2251, %v5517, 0
      %v5536 = vsel %vm2251, %v5518, 0
      %v5539 = vsel %vm2251, %v5519, 0
      %v5542 = vsel %vm2251, %v5520, 0
      %v5545 = vsel %vm2251, %v5521, 0
      %v5548 = vsel %vm2251, %v5522, 0
      %5550 = vmatprep.subr.bf16.mxu0 0
      %5551 = vmatpush1.bf16.msra.mxu0 %v5524
      %5552 = vmatprep.subr.bf16.mxu0 0
      %5553 = vmatpush1.bf16.msra.mxu0 0
      %5554 = vmatprep.subr.bf16.mxu0 0
      %5555 = vmatpush1.bf16.msra.mxu0 0
      %5556 = vmatprep.subr.bf16.mxu0 0
      %5557 = vmatpush1.bf16.msra.mxu0 0
      %5558 = vmatprep.subr.bf16.mxu0 0
      %5559 = vmatpush1.bf16.msra.mxu0 0
      %5560 = vmatprep.subr.bf16.mxu0 0
      %5561 = vmatpush1.bf16.msra.mxu0 0
      %5562 = vmatprep.subr.bf16.mxu0 0
      %5563 = vmatpush1.bf16.msra.mxu0 0
      %5564 = vmatprep.subr.bf16.mxu0 0
      %5565 = vmatpush1.bf16.msra.mxu0 0
      %5566 = vmatprep.subr.bf16.mxu0 0
      %5567 = vmatpush1.bf16.msra.mxu0 0
      %5568 = vmatprep.subr.bf16.mxu0 0
      %5569 = vmatpush1.bf16.msra.mxu0 0
      %5570 = vmatprep.subr.bf16.mxu0 0
      %5571 = vmatpush1.bf16.msra.mxu0 0
      %5572 = vmatprep.subr.bf16.mxu0 0
      %5573 = vmatpush1.bf16.msra.mxu0 0
      %5574 = vmatprep.subr.bf16.mxu0 0
      %5575 = vmatpush1.bf16.msra.mxu0 0
      %5576 = vmatprep.subr.bf16.mxu0 0
      %5577 = vmatpush1.bf16.msra.mxu0 0
      %5578 = vmatprep.subr.bf16.mxu0 0
      %5579 = vmatpush1.bf16.msra.mxu0 0
      %5580 = vmatprep.subr.bf16.mxu0 0
      %5581 = vmatpush1.bf16.msra.mxu0 0
      %5582 = vmatprep.mubr.bf16.mxu0 0
      %5583 = vmatmul.mubr.bf16.gmra.mrb[0].mxu0 %v5527
      %v5584 = vpop.f32.mrb[0].mxu0
      %v5585 = vadd.f32 0.0, %v5584
      %v5586 = vpop.f32.mrb[0].mxu0
      %v5587 = vpop.f32.mrb[0].mxu0
      %v5588 = vadd.f32 0.0, %v5587
      %v5589 = vpop.f32.mrb[0].mxu0
      %5590 = vmatprep.mubr.bf16.mxu0 0
      %5591 = vmatmul.mubr.bf16.gmra.mrb[0].mxu0 %v5530
      %v5592 = vpop.f32.mrb[0].mxu0
      %v5593 = vadd.f32 0.0, %v5592
      %v5594 = vpop.f32.mrb[0].mxu0
      %v5595 = vpop.f32.mrb[0].mxu0
      %v5596 = vadd.f32 0.0, %v5595
      %v5597 = vpop.f32.mrb[0].mxu0
      %5598 = vmatprep.mubr.bf16.mxu0 0
      %5599 = vmatmul.mubr.bf16.gmra.mrb[0].mxu0 %v5533
      %v5600 = vpop.f32.mrb[0].mxu0
      %v5601 = vadd.f32 0.0, %v5600
      %v5602 = vpop.f32.mrb[0].mxu0
      %v5603 = vpop.f32.mrb[0].mxu0
      %v5604 = vadd.f32 0.0, %v5603
      %v5605 = vpop.f32.mrb[0].mxu0
      %5606 = vmatprep.mubr.bf16.mxu0 0
      %5607 = vmatmul.mubr.bf16.gmra.mrb[0].mxu0 %v5536
      %v5608 = vpop.f32.mrb[0].mxu0
      %v5609 = vadd.f32 0.0, %v5608
      %v5610 = vpop.f32.mrb[0].mxu0
      %v5611 = vpop.f32.mrb[0].mxu0
      %v5612 = vadd.f32 0.0, %v5611
      %v5613 = vpop.f32.mrb[0].mxu0
      %5614 = vmatprep.mubr.bf16.mxu0 0
      %5615 = vmatmul.mubr.bf16.gmra.mrb[0].mxu0 %v5539
      %v5616 = vpop.f32.mrb[0].mxu0
      %v5617 = vadd.f32 0.0, %v5616
      %v5618 = vpop.f32.mrb[0].mxu0
      %v5619 = vpop.f32.mrb[0].mxu0
      %v5620 = vadd.f32 0.0, %v5619
      %v5621 = vpop.f32.mrb[0].mxu0
      %5622 = vmatprep.mubr.bf16.mxu0 0
      %5623 = vmatmul.mubr.bf16.gmra.mrb[0].mxu0 %v5542
      %v5624 = vpop.f32.mrb[0].mxu0
      %v5625 = vadd.f32 0.0, %v5624
      %v5626 = vpop.f32.mrb[0].mxu0
      %v5627 = vpop.f32.mrb[0].mxu0
      %v5628 = vadd.f32 0.0, %v5627
      %v5629 = vpop.f32.mrb[0].mxu0
      %5630 = vmatprep.mubr.bf16.mxu0 0
      %5631 = vmatmul.mubr.bf16.gmra.mrb[0].mxu0 %v5545
      %v5632 = vpop.f32.mrb[0].mxu0
      %v5633 = vadd.f32 0.0, %v5632
      %v5634 = vpop.f32.mrb[0].mxu0
      %v5635 = vpop.f32.mrb[0].mxu0
      %v5636 = vadd.f32 0.0, %v5635
      %v5637 = vpop.f32.mrb[0].mxu0
      %5638 = vmatprep.mubr.bf16.mxu0 0
      %5639 = vmatmul.mubr.bf16.gmra.mrb[0].mxu0 %v5548
      %v5640 = vpop.f32.mrb[0].mxu0
      %v5641 = vadd.f32 0.0, %v5640
      %v5642 = vpop.f32.mrb[0].mxu0
      %v5643 = vpop.f32.mrb[0].mxu0
      %v5644 = vadd.f32 0.0, %v5643
      %v5645 = vpop.f32.mrb[0].mxu0
      %5646 = vdwg.mxu0
      %v5647 = vadd.f32 %v5404, %v5585
      %v5648 = vadd.f32 %v5407, %v5588
      %v5649 = vadd.f32 %v5412, %v5593
      %v5650 = vadd.f32 %v5415, %v5596
      %v5651 = vadd.f32 %v5420, %v5601
      %v5652 = vadd.f32 %v5423, %v5604
      %v5653 = vadd.f32 %v5428, %v5609
      %v5654 = vadd.f32 %v5431, %v5612
      %v5655 = vadd.f32 %v5436, %v5617
      %v5656 = vadd.f32 %v5439, %v5620
      %v5657 = vadd.f32 %v5444, %v5625
      %v5658 = vadd.f32 %v5447, %v5628
      %v5659 = vadd.f32 %v5452, %v5633
      %v5660 = vadd.f32 %v5455, %v5636
      %v5661 = vadd.f32 %v5460, %v5641
      %v5662 = vadd.f32 %v5463, %v5644
      %s5663 = scalar_lea.vmem %s5, 192
      %v5664 = vld [vmem:[%s5663] sm:$0xf]
      %v5665 = vld [vmem:[%s5663 + $0x4] sm:$0xf]
      %v5666 = vld [vmem:[%s5663 + $0x8] sm:$0xf]
      %v5667 = vld [vmem:[%s5663 + $0xc] sm:$0xf]
      %v5668 = vld [vmem:[%s5663 + $0x10] sm:$0xf]
      %v5669 = vld [vmem:[%s5663 + $0x14] sm:$0xf]
      %v5670 = vld [vmem:[%s5663 + $0x18] sm:$0xf]
      %v5671 = vld [vmem:[%s5663 + $0x1c] sm:$0xf]
      %v5672 = vld [vmem:[%s5663 + $0x20] sm:$0xf]
      %v5673 = vld [vmem:[%s5663 + $0x24] sm:$0xf]
      %v5674 = vld [vmem:[%s5663 + $0x28] sm:$0xf]
      %v5675 = vld [vmem:[%s5663 + $0x2c] sm:$0xf]
      %v5676 = vld [vmem:[%s5663 + $0x30] sm:$0xf]
      %v5677 = vld [vmem:[%s5663 + $0x34] sm:$0xf]
      %v5678 = vld [vmem:[%s5663 + $0x38] sm:$0xf]
      %v5679 = vld [vmem:[%s5663 + $0x3c] sm:$0xf]
      %v5696 = vunpack.c.l.b16 %v5664
      %v5697 = vunpack.c.l.b16 %v5665
      %v5698 = vunpack.c.l.b16 %v5666
      %v5699 = vunpack.c.l.b16 %v5667
      %v5700 = vunpack.c.l.b16 %v5668
      %v5701 = vunpack.c.l.b16 %v5669
      %v5702 = vunpack.c.l.b16 %v5670
      %v5703 = vunpack.c.l.b16 %v5671
      %v5704 = vunpack.c.l.b16 %v5672
      %v5705 = vunpack.c.l.b16 %v5673
      %v5706 = vunpack.c.l.b16 %v5674
      %v5707 = vunpack.c.l.b16 %v5675
      %v5708 = vunpack.c.l.b16 %v5676
      %v5709 = vunpack.c.l.b16 %v5677
      %v5710 = vunpack.c.l.b16 %v5678
      %v5711 = vunpack.c.l.b16 %v5679
      %v5712 = vpack.c.b16 %v5697, %v5696
      %v5713 = vpack.c.b16 %v5699, %v5698
      %v5714 = vpack.c.b16 %v5701, %v5700
      %v5715 = vpack.c.b16 %v5703, %v5702
      %v5716 = vpack.c.b16 %v5705, %v5704
      %v5717 = vpack.c.b16 %v5707, %v5706
      %v5718 = vpack.c.b16 %v5709, %v5708
      %v5719 = vpack.c.b16 %v5711, %v5710
      %5720 = vrot.lane.b32.xlu0 %v5106, 116
      %v5721 = vpop.permute.xlu0 %5720
      %v5724 = vsel %vm2251, %v5712, 0
      %v5727 = vsel %vm2251, %v5713, 0
      %v5730 = vsel %vm2251, %v5714, 0
      %v5733 = vsel %vm2251, %v5715, 0
      %v5736 = vsel %vm2251, %v5716, 0
      %v5739 = vsel %vm2251, %v5717, 0
      %v5742 = vsel %vm2251, %v5718, 0
      %v5745 = vsel %vm2251, %v5719, 0
      %5747 = vmatprep.subr.bf16.mxu0 0
      %5748 = vmatpush1.bf16.msra.mxu0 %v5721
      %5749 = vmatprep.subr.bf16.mxu0 0
      %5750 = vmatpush1.bf16.msra.mxu0 0
      %5751 = vmatprep.subr.bf16.mxu0 0
      %5752 = vmatpush1.bf16.msra.mxu0 0
      %5753 = vmatprep.subr.bf16.mxu0 0
      %5754 = vmatpush1.bf16.msra.mxu0 0
      %5755 = vmatprep.subr.bf16.mxu0 0
      %5756 = vmatpush1.bf16.msra.mxu0 0
      %5757 = vmatprep.subr.bf16.mxu0 0
      %5758 = vmatpush1.bf16.msra.mxu0 0
      %5759 = vmatprep.subr.bf16.mxu0 0
      %5760 = vmatpush1.bf16.msra.mxu0 0
      %5761 = vmatprep.subr.bf16.mxu0 0
      %5762 = vmatpush1.bf16.msra.mxu0 0
      %5763 = vmatprep.subr.bf16.mxu0 0
      %5764 = vmatpush1.bf16.msra.mxu0 0
      %5765 = vmatprep.subr.bf16.mxu0 0
      %5766 = vmatpush1.bf16.msra.mxu0 0
      %5767 = vmatprep.subr.bf16.mxu0 0
      %5768 = vmatpush1.bf16.msra.mxu0 0
      %5769 = vmatprep.subr.bf16.mxu0 0
      %5770 = vmatpush1.bf16.msra.mxu0 0
      %5771 = vmatprep.subr.bf16.mxu0 0
      %5772 = vmatpush1.bf16.msra.mxu0 0
      %5773 = vmatprep.subr.bf16.mxu0 0
      %5774 = vmatpush1.bf16.msra.mxu0 0
      %5775 = vmatprep.subr.bf16.mxu0 0
      %5776 = vmatpush1.bf16.msra.mxu0 0
      %5777 = vmatprep.subr.bf16.mxu0 0
      %5778 = vmatpush1.bf16.msra.mxu0 0
      %5779 = vmatprep.mubr.bf16.mxu0 0
      %5780 = vmatmul.mubr.bf16.gmra.mrb[0].mxu0 %v5724
      %v5781 = vpop.f32.mrb[0].mxu0
      %v5782 = vadd.f32 0.0, %v5781
      %v5783 = vpop.f32.mrb[0].mxu0
      %v5784 = vpop.f32.mrb[0].mxu0
      %v5785 = vadd.f32 0.0, %v5784
      %v5786 = vpop.f32.mrb[0].mxu0
      %5787 = vmatprep.mubr.bf16.mxu0 0
      %5788 = vmatmul.mubr.bf16.gmra.mrb[0].mxu0 %v5727
      %v5789 = vpop.f32.mrb[0].mxu0
      %v5790 = vadd.f32 0.0, %v5789
      %v5791 = vpop.f32.mrb[0].mxu0
      %v5792 = vpop.f32.mrb[0].mxu0
      %v5793 = vadd.f32 0.0, %v5792
      %v5794 = vpop.f32.mrb[0].mxu0
      %5795 = vmatprep.mubr.bf16.mxu0 0
      %5796 = vmatmul.mubr.bf16.gmra.mrb[0].mxu0 %v5730
      %v5797 = vpop.f32.mrb[0].mxu0
      %v5798 = vadd.f32 0.0, %v5797
      %v5799 = vpop.f32.mrb[0].mxu0
      %v5800 = vpop.f32.mrb[0].mxu0
      %v5801 = vadd.f32 0.0, %v5800
      %v5802 = vpop.f32.mrb[0].mxu0
      %5803 = vmatprep.mubr.bf16.mxu0 0
      %5804 = vmatmul.mubr.bf16.gmra.mrb[0].mxu0 %v5733
      %v5805 = vpop.f32.mrb[0].mxu0
      %v5806 = vadd.f32 0.0, %v5805
      %v5807 = vpop.f32.mrb[0].mxu0
      %v5808 = vpop.f32.mrb[0].mxu0
      %v5809 = vadd.f32 0.0, %v5808
      %v5810 = vpop.f32.mrb[0].mxu0
      %5811 = vmatprep.mubr.bf16.mxu0 0
      %5812 = vmatmul.mubr.bf16.gmra.mrb[0].mxu0 %v5736
      %v5813 = vpop.f32.mrb[0].mxu0
      %v5814 = vadd.f32 0.0, %v5813
      %v5815 = vpop.f32.mrb[0].mxu0
      %v5816 = vpop.f32.mrb[0].mxu0
      %v5817 = vadd.f32 0.0, %v5816
      %v5818 = vpop.f32.mrb[0].mxu0
      %5819 = vmatprep.mubr.bf16.mxu0 0
      %5820 = vmatmul.mubr.bf16.gmra.mrb[0].mxu0 %v5739
      %v5821 = vpop.f32.mrb[0].mxu0
      %v5822 = vadd.f32 0.0, %v5821
      %v5823 = vpop.f32.mrb[0].mxu0
      %v5824 = vpop.f32.mrb[0].mxu0
      %v5825 = vadd.f32 0.0, %v5824
      %v5826 = vpop.f32.mrb[0].mxu0
      %5827 = vmatprep.mubr.bf16.mxu0 0
      %5828 = vmatmul.mubr.bf16.gmra.mrb[0].mxu0 %v5742
      %v5829 = vpop.f32.mrb[0].mxu0
      %v5830 = vadd.f32 0.0, %v5829
      %v5831 = vpop.f32.mrb[0].mxu0
      %v5832 = vpop.f32.mrb[0].mxu0
      %v5833 = vadd.f32 0.0, %v5832
      %v5834 = vpop.f32.mrb[0].mxu0
      %5835 = vmatprep.mubr.bf16.mxu0 0
      %5836 = vmatmul.mubr.bf16.gmra.mrb[0].mxu0 %v5745
      %v5837 = vpop.f32.mrb[0].mxu0
      %v5838 = vadd.f32 0.0, %v5837
      %v5839 = vpop.f32.mrb[0].mxu0
      %v5840 = vpop.f32.mrb[0].mxu0
      %v5841 = vadd.f32 0.0, %v5840
      %v5842 = vpop.f32.mrb[0].mxu0
      %5843 = vdwg.mxu0
      %v5844 = vadd.f32 %v5647, %v5782
      %v5845 = vadd.f32 %v5648, %v5785
      %v5846 = vadd.f32 %v5649, %v5790
      %v5847 = vadd.f32 %v5650, %v5793
      %v5848 = vadd.f32 %v5651, %v5798
      %v5849 = vadd.f32 %v5652, %v5801
      %v5850 = vadd.f32 %v5653, %v5806
      %v5851 = vadd.f32 %v5654, %v5809
      %v5852 = vadd.f32 %v5655, %v5814
      %v5853 = vadd.f32 %v5656, %v5817
      %v5854 = vadd.f32 %v5657, %v5822
      %v5855 = vadd.f32 %v5658, %v5825
      %v5856 = vadd.f32 %v5659, %v5830
      %v5857 = vadd.f32 %v5660, %v5833
      %v5858 = vadd.f32 %v5661, %v5838
      %v5859 = vadd.f32 %v5662, %v5841
      %s5860 = scalar_lea.vmem %s5, 256
      %v5861 = vld [vmem:[%s5860] sm:$0xf]
      %v5862 = vld [vmem:[%s5860 + $0x4] sm:$0xf]
      %v5863 = vld [vmem:[%s5860 + $0x8] sm:$0xf]
      %v5864 = vld [vmem:[%s5860 + $0xc] sm:$0xf]
      %v5865 = vld [vmem:[%s5860 + $0x10] sm:$0xf]
      %v5866 = vld [vmem:[%s5860 + $0x14] sm:$0xf]
      %v5867 = vld [vmem:[%s5860 + $0x18] sm:$0xf]
      %v5868 = vld [vmem:[%s5860 + $0x1c] sm:$0xf]
      %v5869 = vld [vmem:[%s5860 + $0x20] sm:$0xf]
      %v5870 = vld [vmem:[%s5860 + $0x24] sm:$0xf]
      %v5871 = vld [vmem:[%s5860 + $0x28] sm:$0xf]
      %v5872 = vld [vmem:[%s5860 + $0x2c] sm:$0xf]
      %v5873 = vld [vmem:[%s5860 + $0x30] sm:$0xf]
      %v5874 = vld [vmem:[%s5860 + $0x34] sm:$0xf]
      %v5875 = vld [vmem:[%s5860 + $0x38] sm:$0xf]
      %v5876 = vld [vmem:[%s5860 + $0x3c] sm:$0xf]
      %v5893 = vunpack.c.l.b16 %v5861
      %v5894 = vunpack.c.l.b16 %v5862
      %v5895 = vunpack.c.l.b16 %v5863
      %v5896 = vunpack.c.l.b16 %v5864
      %v5897 = vunpack.c.l.b16 %v5865
      %v5898 = vunpack.c.l.b16 %v5866
      %v5899 = vunpack.c.l.b16 %v5867
      %v5900 = vunpack.c.l.b16 %v5868
      %v5901 = vunpack.c.l.b16 %v5869
      %v5902 = vunpack.c.l.b16 %v5870
      %v5903 = vunpack.c.l.b16 %v5871
      %v5904 = vunpack.c.l.b16 %v5872
      %v5905 = vunpack.c.l.b16 %v5873
      %v5906 = vunpack.c.l.b16 %v5874
      %v5907 = vunpack.c.l.b16 %v5875
      %v5908 = vunpack.c.l.b16 %v5876
      %v5909 = vpack.c.b16 %v5894, %v5893
      %v5910 = vpack.c.b16 %v5896, %v5895
      %v5911 = vpack.c.b16 %v5898, %v5897
      %v5912 = vpack.c.b16 %v5900, %v5899
      %v5913 = vpack.c.b16 %v5902, %v5901
      %v5914 = vpack.c.b16 %v5904, %v5903
      %v5915 = vpack.c.b16 %v5906, %v5905
      %v5916 = vpack.c.b16 %v5908, %v5907
      %5917 = vrot.lane.b32.xlu0 %v5106, 16
      %v5918 = vpop.permute.xlu0 %5917
      %v5921 = vsel %vm2251, %v5909, 0
      %v5924 = vsel %vm2251, %v5910, 0
      %v5927 = vsel %vm2251, %v5911, 0
      %v5930 = vsel %vm2251, %v5912, 0
      %v5933 = vsel %vm2251, %v5913, 0
      %v5936 = vsel %vm2251, %v5914, 0
      %v5939 = vsel %vm2251, %v5915, 0
      %v5942 = vsel %vm2251, %v5916, 0
      %5944 = vmatprep.subr.bf16.mxu0 0
      %5945 = vmatpush1.bf16.msra.mxu0 %v5918
      %5946 = vmatprep.subr.bf16.mxu0 0
      %5947 = vmatpush1.bf16.msra.mxu0 0
      %5948 = vmatprep.subr.bf16.mxu0 0
      %5949 = vmatpush1.bf16.msra.mxu0 0
      %5950 = vmatprep.subr.bf16.mxu0 0
      %5951 = vmatpush1.bf16.msra.mxu0 0
      %5952 = vmatprep.subr.bf16.mxu0 0
      %5953 = vmatpush1.bf16.msra.mxu0 0
      %5954 = vmatprep.subr.bf16.mxu0 0
      %5955 = vmatpush1.bf16.msra.mxu0 0
      %5956 = vmatprep.subr.bf16.mxu0 0
      %5957 = vmatpush1.bf16.msra.mxu0 0
      %5958 = vmatprep.subr.bf16.mxu0 0
      %5959 = vmatpush1.bf16.msra.mxu0 0
      %5960 = vmatprep.subr.bf16.mxu0 0
      %5961 = vmatpush1.bf16.msra.mxu0 0
      %5962 = vmatprep.subr.bf16.mxu0 0
      %5963 = vmatpush1.bf16.msra.mxu0 0
      %5964 = vmatprep.subr.bf16.mxu0 0
      %5965 = vmatpush1.bf16.msra.mxu0 0
      %5966 = vmatprep.subr.bf16.mxu0 0
      %5967 = vmatpush1.bf16.msra.mxu0 0
      %5968 = vmatprep.subr.bf16.mxu0 0
      %5969 = vmatpush1.bf16.msra.mxu0 0
      %5970 = vmatprep.subr.bf16.mxu0 0
      %5971 = vmatpush1.bf16.msra.mxu0 0
      %5972 = vmatprep.subr.bf16.mxu0 0
      %5973 = vmatpush1.bf16.msra.mxu0 0
      %5974 = vmatprep.subr.bf16.mxu0 0
      %5975 = vmatpush1.bf16.msra.mxu0 0
      %5976 = vmatprep.mubr.bf16.mxu0 0
      %5977 = vmatmul.mubr.bf16.gmra.mrb[0].mxu0 %v5921
      %v5978 = vpop.f32.mrb[0].mxu0
      %v5979 = vadd.f32 0.0, %v5978
      %v5980 = vpop.f32.mrb[0].mxu0
      %v5981 = vpop.f32.mrb[0].mxu0
      %v5982 = vadd.f32 0.0, %v5981
      %v5983 = vpop.f32.mrb[0].mxu0
      %5984 = vmatprep.mubr.bf16.mxu0 0
      %5985 = vmatmul.mubr.bf16.gmra.mrb[0].mxu0 %v5924
      %v5986 = vpop.f32.mrb[0].mxu0
      %v5987 = vadd.f32 0.0, %v5986
      %v5988 = vpop.f32.mrb[0].mxu0
      %v5989 = vpop.f32.mrb[0].mxu0
      %v5990 = vadd.f32 0.0, %v5989
      %v5991 = vpop.f32.mrb[0].mxu0
      %5992 = vmatprep.mubr.bf16.mxu0 0
      %5993 = vmatmul.mubr.bf16.gmra.mrb[0].mxu0 %v5927
      %v5994 = vpop.f32.mrb[0].mxu0
      %v5995 = vadd.f32 0.0, %v5994
      %v5996 = vpop.f32.mrb[0].mxu0
      %v5997 = vpop.f32.mrb[0].mxu0
      %v5998 = vadd.f32 0.0, %v5997
      %v5999 = vpop.f32.mrb[0].mxu0
      %6000 = vmatprep.mubr.bf16.mxu0 0
      %6001 = vmatmul.mubr.bf16.gmra.mrb[0].mxu0 %v5930
      %v6002 = vpop.f32.mrb[0].mxu0
      %v6003 = vadd.f32 0.0, %v6002
      %v6004 = vpop.f32.mrb[0].mxu0
      %v6005 = vpop.f32.mrb[0].mxu0
      %v6006 = vadd.f32 0.0, %v6005
      %v6007 = vpop.f32.mrb[0].mxu0
      %6008 = vmatprep.mubr.bf16.mxu0 0
      %6009 = vmatmul.mubr.bf16.gmra.mrb[0].mxu0 %v5933
      %v6010 = vpop.f32.mrb[0].mxu0
      %v6011 = vadd.f32 0.0, %v6010
      %v6012 = vpop.f32.mrb[0].mxu0
      %v6013 = vpop.f32.mrb[0].mxu0
      %v6014 = vadd.f32 0.0, %v6013
      %v6015 = vpop.f32.mrb[0].mxu0
      %6016 = vmatprep.mubr.bf16.mxu0 0
      %6017 = vmatmul.mubr.bf16.gmra.mrb[0].mxu0 %v5936
      %v6018 = vpop.f32.mrb[0].mxu0
      %v6019 = vadd.f32 0.0, %v6018
      %v6020 = vpop.f32.mrb[0].mxu0
      %v6021 = vpop.f32.mrb[0].mxu0
      %v6022 = vadd.f32 0.0, %v6021
      %v6023 = vpop.f32.mrb[0].mxu0
      %6024 = vmatprep.mubr.bf16.mxu0 0
      %6025 = vmatmul.mubr.bf16.gmra.mrb[0].mxu0 %v5939
      %v6026 = vpop.f32.mrb[0].mxu0
      %v6027 = vadd.f32 0.0, %v6026
      %v6028 = vpop.f32.mrb[0].mxu0
      %v6029 = vpop.f32.mrb[0].mxu0
      %v6030 = vadd.f32 0.0, %v6029
      %v6031 = vpop.f32.mrb[0].mxu0
      %6032 = vmatprep.mubr.bf16.mxu0 0
      %6033 = vmatmul.mubr.bf16.gmra.mrb[0].mxu0 %v5942
      %v6034 = vpop.f32.mrb[0].mxu0
      %v6035 = vadd.f32 0.0, %v6034
      %v6036 = vpop.f32.mrb[0].mxu0
      %v6037 = vpop.f32.mrb[0].mxu0
      %v6038 = vadd.f32 0.0, %v6037
      %v6039 = vpop.f32.mrb[0].mxu0
      %6040 = vdwg.mxu0
      %v6041 = vadd.f32 %v5844, %v5979
      %v6042 = vadd.f32 %v5845, %v5982
      %v6043 = vadd.f32 %v5846, %v5987
      %v6044 = vadd.f32 %v5847, %v5990
      %v6045 = vadd.f32 %v5848, %v5995
      %v6046 = vadd.f32 %v5849, %v5998
      %v6047 = vadd.f32 %v5850, %v6003
      %v6048 = vadd.f32 %v5851, %v6006
      %v6049 = vadd.f32 %v5852, %v6011
      %v6050 = vadd.f32 %v5853, %v6014
      %v6051 = vadd.f32 %v5854, %v6019
      %v6052 = vadd.f32 %v5855, %v6022
      %v6053 = vadd.f32 %v5856, %v6027
      %v6054 = vadd.f32 %v5857, %v6030
      %v6055 = vadd.f32 %v5858, %v6035
      %v6056 = vadd.f32 %v5859, %v6038
      %s6057 = scalar_lea.vmem %s5, 320
      %v6058 = vld [vmem:[%s6057] sm:$0xf]
      %v6059 = vld [vmem:[%s6057 + $0x4] sm:$0xf]
      %v6060 = vld [vmem:[%s6057 + $0x8] sm:$0xf]
      %v6061 = vld [vmem:[%s6057 + $0xc] sm:$0xf]
      %v6062 = vld [vmem:[%s6057 + $0x10] sm:$0xf]
      %v6063 = vld [vmem:[%s6057 + $0x14] sm:$0xf]
      %v6064 = vld [vmem:[%s6057 + $0x18] sm:$0xf]
      %v6065 = vld [vmem:[%s6057 + $0x1c] sm:$0xf]
      %v6066 = vld [vmem:[%s6057 + $0x20] sm:$0xf]
      %v6067 = vld [vmem:[%s6057 + $0x24] sm:$0xf]
      %v6068 = vld [vmem:[%s6057 + $0x28] sm:$0xf]
      %v6069 = vld [vmem:[%s6057 + $0x2c] sm:$0xf]
      %v6070 = vld [vmem:[%s6057 + $0x30] sm:$0xf]
      %v6071 = vld [vmem:[%s6057 + $0x34] sm:$0xf]
      %v6072 = vld [vmem:[%s6057 + $0x38] sm:$0xf]
      %v6073 = vld [vmem:[%s6057 + $0x3c] sm:$0xf]
      %v6090 = vunpack.c.l.b16 %v6058
      %v6091 = vunpack.c.l.b16 %v6059
      %v6092 = vunpack.c.l.b16 %v6060
      %v6093 = vunpack.c.l.b16 %v6061
      %v6094 = vunpack.c.l.b16 %v6062
      %v6095 = vunpack.c.l.b16 %v6063
      %v6096 = vunpack.c.l.b16 %v6064
      %v6097 = vunpack.c.l.b16 %v6065
      %v6098 = vunpack.c.l.b16 %v6066
      %v6099 = vunpack.c.l.b16 %v6067
      %v6100 = vunpack.c.l.b16 %v6068
      %v6101 = vunpack.c.l.b16 %v6069
      %v6102 = vunpack.c.l.b16 %v6070
      %v6103 = vunpack.c.l.b16 %v6071
      %v6104 = vunpack.c.l.b16 %v6072
      %v6105 = vunpack.c.l.b16 %v6073
      %v6106 = vpack.c.b16 %v6091, %v6090
      %v6107 = vpack.c.b16 %v6093, %v6092
      %v6108 = vpack.c.b16 %v6095, %v6094
      %v6109 = vpack.c.b16 %v6097, %v6096
      %v6110 = vpack.c.b16 %v6099, %v6098
      %v6111 = vpack.c.b16 %v6101, %v6100
      %v6112 = vpack.c.b16 %v6103, %v6102
      %v6113 = vpack.c.b16 %v6105, %v6104
      %6114 = vrot.lane.b32.xlu0 %v5106, 12
      %v6115 = vpop.permute.xlu0 %6114
      %v6118 = vsel %vm2251, %v6106, 0
      %v6121 = vsel %vm2251, %v6107, 0
      %v6124 = vsel %vm2251, %v6108, 0
      %v6127 = vsel %vm2251, %v6109, 0
      %v6130 = vsel %vm2251, %v6110, 0
      %v6133 = vsel %vm2251, %v6111, 0
      %v6136 = vsel %vm2251, %v6112, 0
      %v6139 = vsel %vm2251, %v6113, 0
      %6141 = vmatprep.subr.bf16.mxu0 0
      %6142 = vmatpush1.bf16.msra.mxu0 %v6115
      %6143 = vmatprep.subr.bf16.mxu0 0
      %6144 = vmatpush1.bf16.msra.mxu0 0
      %6145 = vmatprep.subr.bf16.mxu0 0
      %6146 = vmatpush1.bf16.msra.mxu0 0
      %6147 = vmatprep.subr.bf16.mxu0 0
      %6148 = vmatpush1.bf16.msra.mxu0 0
      %6149 = vmatprep.subr.bf16.mxu0 0
      %6150 = vmatpush1.bf16.msra.mxu0 0
      %6151 = vmatprep.subr.bf16.mxu0 0
      %6152 = vmatpush1.bf16.msra.mxu0 0
      %6153 = vmatprep.subr.bf16.mxu0 0
      %6154 = vmatpush1.bf16.msra.mxu0 0
      %6155 = vmatprep.subr.bf16.mxu0 0
      %6156 = vmatpush1.bf16.msra.mxu0 0
      %6157 = vmatprep.subr.bf16.mxu0 0
      %6158 = vmatpush1.bf16.msra.mxu0 0
      %6159 = vmatprep.subr.bf16.mxu0 0
      %6160 = vmatpush1.bf16.msra.mxu0 0
      %6161 = vmatprep.subr.bf16.mxu0 0
      %6162 = vmatpush1.bf16.msra.mxu0 0
      %6163 = vmatprep.subr.bf16.mxu0 0
      %6164 = vmatpush1.bf16.msra.mxu0 0
      %6165 = vmatprep.subr.bf16.mxu0 0
      %6166 = vmatpush1.bf16.msra.mxu0 0
      %6167 = vmatprep.subr.bf16.mxu0 0
      %6168 = vmatpush1.bf16.msra.mxu0 0
      %6169 = vmatprep.subr.bf16.mxu0 0
      %6170 = vmatpush1.bf16.msra.mxu0 0
      %6171 = vmatprep.subr.bf16.mxu0 0
      %6172 = vmatpush1.bf16.msra.mxu0 0
      %6173 = vmatprep.mubr.bf16.mxu0 0
      %6174 = vmatmul.mubr.bf16.gmra.mrb[0].mxu0 %v6118
      %v6175 = vpop.f32.mrb[0].mxu0
      %v6176 = vadd.f32 0.0, %v6175
      %v6177 = vpop.f32.mrb[0].mxu0
      %v6178 = vpop.f32.mrb[0].mxu0
      %v6179 = vadd.f32 0.0, %v6178
      %v6180 = vpop.f32.mrb[0].mxu0
      %6181 = vmatprep.mubr.bf16.mxu0 0
      %6182 = vmatmul.mubr.bf16.gmra.mrb[0].mxu0 %v6121
      %v6183 = vpop.f32.mrb[0].mxu0
      %v6184 = vadd.f32 0.0, %v6183
      %v6185 = vpop.f32.mrb[0].mxu0
      %v6186 = vpop.f32.mrb[0].mxu0
      %v6187 = vadd.f32 0.0, %v6186
      %v6188 = vpop.f32.mrb[0].mxu0
      %6189 = vmatprep.mubr.bf16.mxu0 0
      %6190 = vmatmul.mubr.bf16.gmra.mrb[0].mxu0 %v6124
      %v6191 = vpop.f32.mrb[0].mxu0
      %v6192 = vadd.f32 0.0, %v6191
      %v6193 = vpop.f32.mrb[0].mxu0
      %v6194 = vpop.f32.mrb[0].mxu0
      %v6195 = vadd.f32 0.0, %v6194
      %v6196 = vpop.f32.mrb[0].mxu0
      %6197 = vmatprep.mubr.bf16.mxu0 0
      %6198 = vmatmul.mubr.bf16.gmra.mrb[0].mxu0 %v6127
      %v6199 = vpop.f32.mrb[0].mxu0
      %v6200 = vadd.f32 0.0, %v6199
      %v6201 = vpop.f32.mrb[0].mxu0
      %v6202 = vpop.f32.mrb[0].mxu0
      %v6203 = vadd.f32 0.0, %v6202
      %v6204 = vpop.f32.mrb[0].mxu0
      %6205 = vmatprep.mubr.bf16.mxu0 0
      %6206 = vmatmul.mubr.bf16.gmra.mrb[0].mxu0 %v6130
      %v6207 = vpop.f32.mrb[0].mxu0
      %v6208 = vadd.f32 0.0, %v6207
      %v6209 = vpop.f32.mrb[0].mxu0
      %v6210 = vpop.f32.mrb[0].mxu0
      %v6211 = vadd.f32 0.0, %v6210
      %v6212 = vpop.f32.mrb[0].mxu0
      %6213 = vmatprep.mubr.bf16.mxu0 0
      %6214 = vmatmul.mubr.bf16.gmra.mrb[0].mxu0 %v6133
      %v6215 = vpop.f32.mrb[0].mxu0
      %v6216 = vadd.f32 0.0, %v6215
      %v6217 = vpop.f32.mrb[0].mxu0
      %v6218 = vpop.f32.mrb[0].mxu0
      %v6219 = vadd.f32 0.0, %v6218
      %v6220 = vpop.f32.mrb[0].mxu0
      %6221 = vmatprep.mubr.bf16.mxu0 0
      %6222 = vmatmul.mubr.bf16.gmra.mrb[0].mxu0 %v6136
      %v6223 = vpop.f32.mrb[0].mxu0
      %v6224 = vadd.f32 0.0, %v6223
      %v6225 = vpop.f32.mrb[0].mxu0
      %v6226 = vpop.f32.mrb[0].mxu0
      %v6227 = vadd.f32 0.0, %v6226
      %v6228 = vpop.f32.mrb[0].mxu0
      %6229 = vmatprep.mubr.bf16.mxu0 0
      %6230 = vmatmul.mubr.bf16.gmra.mrb[0].mxu0 %v6139
      %v6231 = vpop.f32.mrb[0].mxu0
      %v6232 = vadd.f32 0.0, %v6231
      %v6233 = vpop.f32.mrb[0].mxu0
      %v6234 = vpop.f32.mrb[0].mxu0
      %v6235 = vadd.f32 0.0, %v6234
      %v6236 = vpop.f32.mrb[0].mxu0
      %6237 = vdwg.mxu0
      %v6238 = vadd.f32 %v6041, %v6176
      %v6239 = vadd.f32 %v6042, %v6179
      %v6240 = vadd.f32 %v6043, %v6184
      %v6241 = vadd.f32 %v6044, %v6187
      %v6242 = vadd.f32 %v6045, %v6192
      %v6243 = vadd.f32 %v6046, %v6195
      %v6244 = vadd.f32 %v6047, %v6200
      %v6245 = vadd.f32 %v6048, %v6203
      %v6246 = vadd.f32 %v6049, %v6208
      %v6247 = vadd.f32 %v6050, %v6211
      %v6248 = vadd.f32 %v6051, %v6216
      %v6249 = vadd.f32 %v6052, %v6219
      %v6250 = vadd.f32 %v6053, %v6224
      %v6251 = vadd.f32 %v6054, %v6227
      %v6252 = vadd.f32 %v6055, %v6232
      %v6253 = vadd.f32 %v6056, %v6235
      %s6254 = scalar_lea.vmem %s5, 384
      %v6255 = vld [vmem:[%s6254] sm:$0xf]
      %v6256 = vld [vmem:[%s6254 + $0x4] sm:$0xf]
      %v6257 = vld [vmem:[%s6254 + $0x8] sm:$0xf]
      %v6258 = vld [vmem:[%s6254 + $0xc] sm:$0xf]
      %v6259 = vld [vmem:[%s6254 + $0x10] sm:$0xf]
      %v6260 = vld [vmem:[%s6254 + $0x14] sm:$0xf]
      %v6261 = vld [vmem:[%s6254 + $0x18] sm:$0xf]
      %v6262 = vld [vmem:[%s6254 + $0x1c] sm:$0xf]
      %v6263 = vld [vmem:[%s6254 + $0x20] sm:$0xf]
      %v6264 = vld [vmem:[%s6254 + $0x24] sm:$0xf]
      %v6265 = vld [vmem:[%s6254 + $0x28] sm:$0xf]
      %v6266 = vld [vmem:[%s6254 + $0x2c] sm:$0xf]
      %v6267 = vld [vmem:[%s6254 + $0x30] sm:$0xf]
      %v6268 = vld [vmem:[%s6254 + $0x34] sm:$0xf]
      %v6269 = vld [vmem:[%s6254 + $0x38] sm:$0xf]
      %v6270 = vld [vmem:[%s6254 + $0x3c] sm:$0xf]
      %v6287 = vunpack.c.l.b16 %v6255
      %v6288 = vunpack.c.l.b16 %v6256
      %v6289 = vunpack.c.l.b16 %v6257
      %v6290 = vunpack.c.l.b16 %v6258
      %v6291 = vunpack.c.l.b16 %v6259
      %v6292 = vunpack.c.l.b16 %v6260
      %v6293 = vunpack.c.l.b16 %v6261
      %v6294 = vunpack.c.l.b16 %v6262
      %v6295 = vunpack.c.l.b16 %v6263
      %v6296 = vunpack.c.l.b16 %v6264
      %v6297 = vunpack.c.l.b16 %v6265
      %v6298 = vunpack.c.l.b16 %v6266
      %v6299 = vunpack.c.l.b16 %v6267
      %v6300 = vunpack.c.l.b16 %v6268
      %v6301 = vunpack.c.l.b16 %v6269
      %v6302 = vunpack.c.l.b16 %v6270
      %v6303 = vpack.c.b16 %v6288, %v6287
      %v6304 = vpack.c.b16 %v6290, %v6289
      %v6305 = vpack.c.b16 %v6292, %v6291
      %v6306 = vpack.c.b16 %v6294, %v6293
      %v6307 = vpack.c.b16 %v6296, %v6295
      %v6308 = vpack.c.b16 %v6298, %v6297
      %v6309 = vpack.c.b16 %v6300, %v6299
      %v6310 = vpack.c.b16 %v6302, %v6301
      %6311 = vrot.lane.b32.xlu0 %v5106, 8
      %v6312 = vpop.permute.xlu0 %6311
      %v6315 = vsel %vm2251, %v6303, 0
      %v6318 = vsel %vm2251, %v6304, 0
      %v6321 = vsel %vm2251, %v6305, 0
      %v6324 = vsel %vm2251, %v6306, 0
      %v6327 = vsel %vm2251, %v6307, 0
      %v6330 = vsel %vm2251, %v6308, 0
      %v6333 = vsel %vm2251, %v6309, 0
      %v6336 = vsel %vm2251, %v6310, 0
      %6338 = vmatprep.subr.bf16.mxu0 0
      %6339 = vmatpush1.bf16.msra.mxu0 %v6312
      %6340 = vmatprep.subr.bf16.mxu0 0
      %6341 = vmatpush1.bf16.msra.mxu0 0
      %6342 = vmatprep.subr.bf16.mxu0 0
      %6343 = vmatpush1.bf16.msra.mxu0 0
      %6344 = vmatprep.subr.bf16.mxu0 0
      %6345 = vmatpush1.bf16.msra.mxu0 0
      %6346 = vmatprep.subr.bf16.mxu0 0
      %6347 = vmatpush1.bf16.msra.mxu0 0
      %6348 = vmatprep.subr.bf16.mxu0 0
      %6349 = vmatpush1.bf16.msra.mxu0 0
      %6350 = vmatprep.subr.bf16.mxu0 0
      %6351 = vmatpush1.bf16.msra.mxu0 0
      %6352 = vmatprep.subr.bf16.mxu0 0
      %6353 = vmatpush1.bf16.msra.mxu0 0
      %6354 = vmatprep.subr.bf16.mxu0 0
      %6355 = vmatpush1.bf16.msra.mxu0 0
      %6356 = vmatprep.subr.bf16.mxu0 0
      %6357 = vmatpush1.bf16.msra.mxu0 0
      %6358 = vmatprep.subr.bf16.mxu0 0
      %6359 = vmatpush1.bf16.msra.mxu0 0
      %6360 = vmatprep.subr.bf16.mxu0 0
      %6361 = vmatpush1.bf16.msra.mxu0 0
      %6362 = vmatprep.subr.bf16.mxu0 0
      %6363 = vmatpush1.bf16.msra.mxu0 0
      %6364 = vmatprep.subr.bf16.mxu0 0
      %6365 = vmatpush1.bf16.msra.mxu0 0
      %6366 = vmatprep.subr.bf16.mxu0 0
      %6367 = vmatpush1.bf16.msra.mxu0 0
      %6368 = vmatprep.subr.bf16.mxu0 0
      %6369 = vmatpush1.bf16.msra.mxu0 0
      %6370 = vmatprep.mubr.bf16.mxu0 0
      %6371 = vmatmul.mubr.bf16.gmra.mrb[0].mxu0 %v6315
      %v6372 = vpop.f32.mrb[0].mxu0
      %v6373 = vadd.f32 0.0, %v6372
      %v6374 = vpop.f32.mrb[0].mxu0
      %v6375 = vpop.f32.mrb[0].mxu0
      %v6376 = vadd.f32 0.0, %v6375
      %v6377 = vpop.f32.mrb[0].mxu0
      %6378 = vmatprep.mubr.bf16.mxu0 0
      %6379 = vmatmul.mubr.bf16.gmra.mrb[0].mxu0 %v6318
      %v6380 = vpop.f32.mrb[0].mxu0
      %v6381 = vadd.f32 0.0, %v6380
      %v6382 = vpop.f32.mrb[0].mxu0
      %v6383 = vpop.f32.mrb[0].mxu0
      %v6384 = vadd.f32 0.0, %v6383
      %v6385 = vpop.f32.mrb[0].mxu0
      %6386 = vmatprep.mubr.bf16.mxu0 0
      %6387 = vmatmul.mubr.bf16.gmra.mrb[0].mxu0 %v6321
      %v6388 = vpop.f32.mrb[0].mxu0
      %v6389 = vadd.f32 0.0, %v6388
      %v6390 = vpop.f32.mrb[0].mxu0
      %v6391 = vpop.f32.mrb[0].mxu0
      %v6392 = vadd.f32 0.0, %v6391
      %v6393 = vpop.f32.mrb[0].mxu0
      %6394 = vmatprep.mubr.bf16.mxu0 0
      %6395 = vmatmul.mubr.bf16.gmra.mrb[0].mxu0 %v6324
      %v6396 = vpop.f32.mrb[0].mxu0
      %v6397 = vadd.f32 0.0, %v6396
      %v6398 = vpop.f32.mrb[0].mxu0
      %v6399 = vpop.f32.mrb[0].mxu0
      %v6400 = vadd.f32 0.0, %v6399
      %v6401 = vpop.f32.mrb[0].mxu0
      %6402 = vmatprep.mubr.bf16.mxu0 0
      %6403 = vmatmul.mubr.bf16.gmra.mrb[0].mxu0 %v6327
      %v6404 = vpop.f32.mrb[0].mxu0
      %v6405 = vadd.f32 0.0, %v6404
      %v6406 = vpop.f32.mrb[0].mxu0
      %v6407 = vpop.f32.mrb[0].mxu0
      %v6408 = vadd.f32 0.0, %v6407
      %v6409 = vpop.f32.mrb[0].mxu0
      %6410 = vmatprep.mubr.bf16.mxu0 0
      %6411 = vmatmul.mubr.bf16.gmra.mrb[0].mxu0 %v6330
      %v6412 = vpop.f32.mrb[0].mxu0
      %v6413 = vadd.f32 0.0, %v6412
      %v6414 = vpop.f32.mrb[0].mxu0
      %v6415 = vpop.f32.mrb[0].mxu0
      %v6416 = vadd.f32 0.0, %v6415
      %v6417 = vpop.f32.mrb[0].mxu0
      %6418 = vmatprep.mubr.bf16.mxu0 0
      %6419 = vmatmul.mubr.bf16.gmra.mrb[0].mxu0 %v6333
      %v6420 = vpop.f32.mrb[0].mxu0
      %v6421 = vadd.f32 0.0, %v6420
      %v6422 = vpop.f32.mrb[0].mxu0
      %v6423 = vpop.f32.mrb[0].mxu0
      %v6424 = vadd.f32 0.0, %v6423
      %v6425 = vpop.f32.mrb[0].mxu0
      %6426 = vmatprep.mubr.bf16.mxu0 0
      %6427 = vmatmul.mubr.bf16.gmra.mrb[0].mxu0 %v6336
      %v6428 = vpop.f32.mrb[0].mxu0
      %v6429 = vadd.f32 0.0, %v6428
      %v6430 = vpop.f32.mrb[0].mxu0
      %v6431 = vpop.f32.mrb[0].mxu0
      %v6432 = vadd.f32 0.0, %v6431
      %v6433 = vpop.f32.mrb[0].mxu0
      %6434 = vdwg.mxu0
      %v6435 = vadd.f32 %v6238, %v6373
      %v6436 = vadd.f32 %v6239, %v6376
      %v6437 = vadd.f32 %v6240, %v6381
      %v6438 = vadd.f32 %v6241, %v6384
      %v6439 = vadd.f32 %v6242, %v6389
      %v6440 = vadd.f32 %v6243, %v6392
      %v6441 = vadd.f32 %v6244, %v6397
      %v6442 = vadd.f32 %v6245, %v6400
      %v6443 = vadd.f32 %v6246, %v6405
      %v6444 = vadd.f32 %v6247, %v6408
      %v6445 = vadd.f32 %v6248, %v6413
      %v6446 = vadd.f32 %v6249, %v6416
      %v6447 = vadd.f32 %v6250, %v6421
      %v6448 = vadd.f32 %v6251, %v6424
      %v6449 = vadd.f32 %v6252, %v6429
      %v6450 = vadd.f32 %v6253, %v6432
      %s6451 = scalar_lea.vmem %s5, 448
      %v6452 = vld [vmem:[%s6451] sm:$0xf]
      %v6453 = vld [vmem:[%s6451 + $0x4] sm:$0xf]
      %v6454 = vld [vmem:[%s6451 + $0x8] sm:$0xf]
      %v6455 = vld [vmem:[%s6451 + $0xc] sm:$0xf]
      %v6456 = vld [vmem:[%s6451 + $0x10] sm:$0xf]
      %v6457 = vld [vmem:[%s6451 + $0x14] sm:$0xf]
      %v6458 = vld [vmem:[%s6451 + $0x18] sm:$0xf]
      %v6459 = vld [vmem:[%s6451 + $0x1c] sm:$0xf]
      %v6460 = vld [vmem:[%s6451 + $0x20] sm:$0xf]
      %v6461 = vld [vmem:[%s6451 + $0x24] sm:$0xf]
      %v6462 = vld [vmem:[%s6451 + $0x28] sm:$0xf]
      %v6463 = vld [vmem:[%s6451 + $0x2c] sm:$0xf]
      %v6464 = vld [vmem:[%s6451 + $0x30] sm:$0xf]
      %v6465 = vld [vmem:[%s6451 + $0x34] sm:$0xf]
      %v6466 = vld [vmem:[%s6451 + $0x38] sm:$0xf]
      %v6467 = vld [vmem:[%s6451 + $0x3c] sm:$0xf]
      %v6484 = vunpack.c.l.b16 %v6452
      %v6485 = vunpack.c.l.b16 %v6453
      %v6486 = vunpack.c.l.b16 %v6454
      %v6487 = vunpack.c.l.b16 %v6455
      %v6488 = vunpack.c.l.b16 %v6456
      %v6489 = vunpack.c.l.b16 %v6457
      %v6490 = vunpack.c.l.b16 %v6458
      %v6491 = vunpack.c.l.b16 %v6459
      %v6492 = vunpack.c.l.b16 %v6460
      %v6493 = vunpack.c.l.b16 %v6461
      %v6494 = vunpack.c.l.b16 %v6462
      %v6495 = vunpack.c.l.b16 %v6463
      %v6496 = vunpack.c.l.b16 %v6464
      %v6497 = vunpack.c.l.b16 %v6465
      %v6498 = vunpack.c.l.b16 %v6466
      %v6499 = vunpack.c.l.b16 %v6467
      %v6500 = vpack.c.b16 %v6485, %v6484
      %v6501 = vpack.c.b16 %v6487, %v6486
      %v6502 = vpack.c.b16 %v6489, %v6488
      %v6503 = vpack.c.b16 %v6491, %v6490
      %v6504 = vpack.c.b16 %v6493, %v6492
      %v6505 = vpack.c.b16 %v6495, %v6494
      %v6506 = vpack.c.b16 %v6497, %v6496
      %v6507 = vpack.c.b16 %v6499, %v6498
      %6508 = vrot.lane.b32.xlu0 %v5106, 4
      %v6509 = vpop.permute.xlu0 %6508
      %v6512 = vsel %vm2251, %v6500, 0
      %v6515 = vsel %vm2251, %v6501, 0
      %v6518 = vsel %vm2251, %v6502, 0
      %v6521 = vsel %vm2251, %v6503, 0
      %v6524 = vsel %vm2251, %v6504, 0
      %v6527 = vsel %vm2251, %v6505, 0
      %v6530 = vsel %vm2251, %v6506, 0
      %v6533 = vsel %vm2251, %v6507, 0
      %6535 = vmatprep.subr.bf16.mxu0 0
      %6536 = vmatpush1.bf16.msra.mxu0 %v6509
      %6537 = vmatprep.subr.bf16.mxu0 0
      %6538 = vmatpush1.bf16.msra.mxu0 0
      %6539 = vmatprep.subr.bf16.mxu0 0
      %6540 = vmatpush1.bf16.msra.mxu0 0
      %6541 = vmatprep.subr.bf16.mxu0 0
      %6542 = vmatpush1.bf16.msra.mxu0 0
      %6543 = vmatprep.subr.bf16.mxu0 0
      %6544 = vmatpush1.bf16.msra.mxu0 0
      %6545 = vmatprep.subr.bf16.mxu0 0
      %6546 = vmatpush1.bf16.msra.mxu0 0
      %6547 = vmatprep.subr.bf16.mxu0 0
      %6548 = vmatpush1.bf16.msra.mxu0 0
      %6549 = vmatprep.subr.bf16.mxu0 0
      %6550 = vmatpush1.bf16.msra.mxu0 0
      %6551 = vmatprep.subr.bf16.mxu0 0
      %6552 = vmatpush1.bf16.msra.mxu0 0
      %6553 = vmatprep.subr.bf16.mxu0 0
      %6554 = vmatpush1.bf16.msra.mxu0 0
      %6555 = vmatprep.subr.bf16.mxu0 0
      %6556 = vmatpush1.bf16.msra.mxu0 0
      %6557 = vmatprep.subr.bf16.mxu0 0
      %6558 = vmatpush1.bf16.msra.mxu0 0
      %6559 = vmatprep.subr.bf16.mxu0 0
      %6560 = vmatpush1.bf16.msra.mxu0 0
      %6561 = vmatprep.subr.bf16.mxu0 0
      %6562 = vmatpush1.bf16.msra.mxu0 0
      %6563 = vmatprep.subr.bf16.mxu0 0
      %6564 = vmatpush1.bf16.msra.mxu0 0
      %6565 = vmatprep.subr.bf16.mxu0 0
      %6566 = vmatpush1.bf16.msra.mxu0 0
      %6567 = vmatprep.mubr.bf16.mxu0 0
      %6568 = vmatmul.mubr.bf16.gmra.mrb[0].mxu0 %v6512
      %v6569 = vpop.f32.mrb[0].mxu0
      %v6570 = vadd.f32 0.0, %v6569
      %v6571 = vpop.f32.mrb[0].mxu0
      %v6572 = vpop.f32.mrb[0].mxu0
      %v6573 = vadd.f32 0.0, %v6572
      %v6574 = vpop.f32.mrb[0].mxu0
      %6575 = vmatprep.mubr.bf16.mxu0 0
      %6576 = vmatmul.mubr.bf16.gmra.mrb[0].mxu0 %v6515
      %v6577 = vpop.f32.mrb[0].mxu0
      %v6578 = vadd.f32 0.0, %v6577
      %v6579 = vpop.f32.mrb[0].mxu0
      %v6580 = vpop.f32.mrb[0].mxu0
      %v6581 = vadd.f32 0.0, %v6580
      %v6582 = vpop.f32.mrb[0].mxu0
      %6583 = vmatprep.mubr.bf16.mxu0 0
      %6584 = vmatmul.mubr.bf16.gmra.mrb[0].mxu0 %v6518
      %v6585 = vpop.f32.mrb[0].mxu0
      %v6586 = vadd.f32 0.0, %v6585
      %v6587 = vpop.f32.mrb[0].mxu0
      %v6588 = vpop.f32.mrb[0].mxu0
      %v6589 = vadd.f32 0.0, %v6588
      %v6590 = vpop.f32.mrb[0].mxu0
      %6591 = vmatprep.mubr.bf16.mxu0 0
      %6592 = vmatmul.mubr.bf16.gmra.mrb[0].mxu0 %v6521
      %v6593 = vpop.f32.mrb[0].mxu0
      %v6594 = vadd.f32 0.0, %v6593
      %v6595 = vpop.f32.mrb[0].mxu0
      %v6596 = vpop.f32.mrb[0].mxu0
      %v6597 = vadd.f32 0.0, %v6596
      %v6598 = vpop.f32.mrb[0].mxu0
      %6599 = vmatprep.mubr.bf16.mxu0 0
      %6600 = vmatmul.mubr.bf16.gmra.mrb[0].mxu0 %v6524
      %v6601 = vpop.f32.mrb[0].mxu0
      %v6602 = vadd.f32 0.0, %v6601
      %v6603 = vpop.f32.mrb[0].mxu0
      %v6604 = vpop.f32.mrb[0].mxu0
      %v6605 = vadd.f32 0.0, %v6604
      %v6606 = vpop.f32.mrb[0].mxu0
      %6607 = vmatprep.mubr.bf16.mxu0 0
      %6608 = vmatmul.mubr.bf16.gmra.mrb[0].mxu0 %v6527
      %v6609 = vpop.f32.mrb[0].mxu0
      %v6610 = vadd.f32 0.0, %v6609
      %v6611 = vpop.f32.mrb[0].mxu0
      %v6612 = vpop.f32.mrb[0].mxu0
      %v6613 = vadd.f32 0.0, %v6612
      %v6614 = vpop.f32.mrb[0].mxu0
      %6615 = vmatprep.mubr.bf16.mxu0 0
      %6616 = vmatmul.mubr.bf16.gmra.mrb[0].mxu0 %v6530
      %v6617 = vpop.f32.mrb[0].mxu0
      %v6618 = vadd.f32 0.0, %v6617
      %v6619 = vpop.f32.mrb[0].mxu0
      %v6620 = vpop.f32.mrb[0].mxu0
      %v6621 = vadd.f32 0.0, %v6620
      %v6622 = vpop.f32.mrb[0].mxu0
      %6623 = vmatprep.mubr.bf16.mxu0 0
      %6624 = vmatmul.mubr.bf16.gmra.mrb[0].mxu0 %v6533
      %v6625 = vpop.f32.mrb[0].mxu0
      %v6626 = vadd.f32 0.0, %v6625
      %v6627 = vpop.f32.mrb[0].mxu0
      %v6628 = vpop.f32.mrb[0].mxu0
      %v6629 = vadd.f32 0.0, %v6628
      %v6630 = vpop.f32.mrb[0].mxu0
      %6631 = vdwg.mxu0
      %v6632 = vadd.f32 %v6435, %v6570
      %v6633 = vadd.f32 %v6436, %v6573
      %v6634 = vadd.f32 %v6437, %v6578
      %v6635 = vadd.f32 %v6438, %v6581
      %v6636 = vadd.f32 %v6439, %v6586
      %v6637 = vadd.f32 %v6440, %v6589
      %v6638 = vadd.f32 %v6441, %v6594
      %v6639 = vadd.f32 %v6442, %v6597
      %v6640 = vadd.f32 %v6443, %v6602
      %v6641 = vadd.f32 %v6444, %v6605
      %v6642 = vadd.f32 %v6445, %v6610
      %v6643 = vadd.f32 %v6446, %v6613
      %v6644 = vadd.f32 %v6447, %v6618
      %v6645 = vadd.f32 %v6448, %v6621
      %v6646 = vadd.f32 %v6449, %v6626
      %v6647 = vadd.f32 %v6450, %v6629
      %v6648 = vpack.c.bf16 %v5104, %v5101
      %s6649 = scalar_lea.vmem %s5, 512
      %v6650 = vld [vmem:[%s6649] sm:$0xf]
      %v6651 = vld [vmem:[%s6649 + $0x4] sm:$0xf]
      %v6652 = vld [vmem:[%s6649 + $0x8] sm:$0xf]
      %v6653 = vld [vmem:[%s6649 + $0xc] sm:$0xf]
      %v6654 = vld [vmem:[%s6649 + $0x10] sm:$0xf]
      %v6655 = vld [vmem:[%s6649 + $0x14] sm:$0xf]
      %v6656 = vld [vmem:[%s6649 + $0x18] sm:$0xf]
      %v6657 = vld [vmem:[%s6649 + $0x1c] sm:$0xf]
      %v6658 = vld [vmem:[%s6649 + $0x20] sm:$0xf]
      %v6659 = vld [vmem:[%s6649 + $0x24] sm:$0xf]
      %v6660 = vld [vmem:[%s6649 + $0x28] sm:$0xf]
      %v6661 = vld [vmem:[%s6649 + $0x2c] sm:$0xf]
      %v6662 = vld [vmem:[%s6649 + $0x30] sm:$0xf]
      %v6663 = vld [vmem:[%s6649 + $0x34] sm:$0xf]
      %v6664 = vld [vmem:[%s6649 + $0x38] sm:$0xf]
      %v6665 = vld [vmem:[%s6649 + $0x3c] sm:$0xf]
      %v6682 = vunpack.c.l.b16 %v6650
      %v6683 = vunpack.c.l.b16 %v6651
      %v6684 = vunpack.c.l.b16 %v6652
      %v6685 = vunpack.c.l.b16 %v6653
      %v6686 = vunpack.c.l.b16 %v6654
      %v6687 = vunpack.c.l.b16 %v6655
      %v6688 = vunpack.c.l.b16 %v6656
      %v6689 = vunpack.c.l.b16 %v6657
      %v6690 = vunpack.c.l.b16 %v6658
      %v6691 = vunpack.c.l.b16 %v6659
      %v6692 = vunpack.c.l.b16 %v6660
      %v6693 = vunpack.c.l.b16 %v6661
      %v6694 = vunpack.c.l.b16 %v6662
      %v6695 = vunpack.c.l.b16 %v6663
      %v6696 = vunpack.c.l.b16 %v6664
      %v6697 = vunpack.c.l.b16 %v6665
      %v6698 = vpack.c.b16 %v6683, %v6682
      %v6699 = vpack.c.b16 %v6685, %v6684
      %v6700 = vpack.c.b16 %v6687, %v6686
      %v6701 = vpack.c.b16 %v6689, %v6688
      %v6702 = vpack.c.b16 %v6691, %v6690
      %v6703 = vpack.c.b16 %v6693, %v6692
      %v6704 = vpack.c.b16 %v6695, %v6694
      %v6705 = vpack.c.b16 %v6697, %v6696
      %6707 = vrot.lane.b32.xlu0 %v6648, 32
      %v6708 = vpop.permute.xlu0 %6707
      %v6711 = vsel %vm2251, %v6698, 0
      %v6714 = vsel %vm2251, %v6699, 0
      %v6717 = vsel %vm2251, %v6700, 0
      %v6720 = vsel %vm2251, %v6701, 0
      %v6723 = vsel %vm2251, %v6702, 0
      %v6726 = vsel %vm2251, %v6703, 0
      %v6729 = vsel %vm2251, %v6704, 0
      %v6732 = vsel %vm2251, %v6705, 0
      %6734 = vmatprep.subr.bf16.mxu0 0
      %6735 = vmatpush1.bf16.msra.mxu0 %v6708
      %6736 = vmatprep.subr.bf16.mxu0 0
      %6737 = vmatpush1.bf16.msra.mxu0 0
      %6738 = vmatprep.subr.bf16.mxu0 0
      %6739 = vmatpush1.bf16.msra.mxu0 0
      %6740 = vmatprep.subr.bf16.mxu0 0
      %6741 = vmatpush1.bf16.msra.mxu0 0
      %6742 = vmatprep.subr.bf16.mxu0 0
      %6743 = vmatpush1.bf16.msra.mxu0 0
      %6744 = vmatprep.subr.bf16.mxu0 0
      %6745 = vmatpush1.bf16.msra.mxu0 0
      %6746 = vmatprep.subr.bf16.mxu0 0
      %6747 = vmatpush1.bf16.msra.mxu0 0
      %6748 = vmatprep.subr.bf16.mxu0 0
      %6749 = vmatpush1.bf16.msra.mxu0 0
      %6750 = vmatprep.subr.bf16.mxu0 0
      %6751 = vmatpush1.bf16.msra.mxu0 0
      %6752 = vmatprep.subr.bf16.mxu0 0
      %6753 = vmatpush1.bf16.msra.mxu0 0
      %6754 = vmatprep.subr.bf16.mxu0 0
      %6755 = vmatpush1.bf16.msra.mxu0 0
      %6756 = vmatprep.subr.bf16.mxu0 0
      %6757 = vmatpush1.bf16.msra.mxu0 0
      %6758 = vmatprep.subr.bf16.mxu0 0
      %6759 = vmatpush1.bf16.msra.mxu0 0
      %6760 = vmatprep.subr.bf16.mxu0 0
      %6761 = vmatpush1.bf16.msra.mxu0 0
      %6762 = vmatprep.subr.bf16.mxu0 0
      %6763 = vmatpush1.bf16.msra.mxu0 0
      %6764 = vmatprep.subr.bf16.mxu0 0
      %6765 = vmatpush1.bf16.msra.mxu0 0
      %6766 = vmatprep.mubr.bf16.mxu0 0
      %6767 = vmatmul.mubr.bf16.gmra.mrb[0].mxu0 %v6711
      %v6768 = vpop.f32.mrb[0].mxu0
      %v6769 = vadd.f32 0.0, %v6768
      %v6770 = vpop.f32.mrb[0].mxu0
      %v6771 = vpop.f32.mrb[0].mxu0
      %v6772 = vadd.f32 0.0, %v6771
      %v6773 = vpop.f32.mrb[0].mxu0
      %6774 = vmatprep.mubr.bf16.mxu0 0
      %6775 = vmatmul.mubr.bf16.gmra.mrb[0].mxu0 %v6714
      %v6776 = vpop.f32.mrb[0].mxu0
      %v6777 = vadd.f32 0.0, %v6776
      %v6778 = vpop.f32.mrb[0].mxu0
      %v6779 = vpop.f32.mrb[0].mxu0
      %v6780 = vadd.f32 0.0, %v6779
      %v6781 = vpop.f32.mrb[0].mxu0
      %6782 = vmatprep.mubr.bf16.mxu0 0
      %6783 = vmatmul.mubr.bf16.gmra.mrb[0].mxu0 %v6717
      %v6784 = vpop.f32.mrb[0].mxu0
      %v6785 = vadd.f32 0.0, %v6784
      %v6786 = vpop.f32.mrb[0].mxu0
      %v6787 = vpop.f32.mrb[0].mxu0
      %v6788 = vadd.f32 0.0, %v6787
      %v6789 = vpop.f32.mrb[0].mxu0
      %6790 = vmatprep.mubr.bf16.mxu0 0
      %6791 = vmatmul.mubr.bf16.gmra.mrb[0].mxu0 %v6720
      %v6792 = vpop.f32.mrb[0].mxu0
      %v6793 = vadd.f32 0.0, %v6792
      %v6794 = vpop.f32.mrb[0].mxu0
      %v6795 = vpop.f32.mrb[0].mxu0
      %v6796 = vadd.f32 0.0, %v6795
      %v6797 = vpop.f32.mrb[0].mxu0
      %6798 = vmatprep.mubr.bf16.mxu0 0
      %6799 = vmatmul.mubr.bf16.gmra.mrb[0].mxu0 %v6723
      %v6800 = vpop.f32.mrb[0].mxu0
      %v6801 = vadd.f32 0.0, %v6800
      %v6802 = vpop.f32.mrb[0].mxu0
      %v6803 = vpop.f32.mrb[0].mxu0
      %v6804 = vadd.f32 0.0, %v6803
      %v6805 = vpop.f32.mrb[0].mxu0
      %6806 = vmatprep.mubr.bf16.mxu0 0
      %6807 = vmatmul.mubr.bf16.gmra.mrb[0].mxu0 %v6726
      %v6808 = vpop.f32.mrb[0].mxu0
      %v6809 = vadd.f32 0.0, %v6808
      %v6810 = vpop.f32.mrb[0].mxu0
      %v6811 = vpop.f32.mrb[0].mxu0
      %v6812 = vadd.f32 0.0, %v6811
      %v6813 = vpop.f32.mrb[0].mxu0
      %6814 = vmatprep.mubr.bf16.mxu0 0
      %6815 = vmatmul.mubr.bf16.gmra.mrb[0].mxu0 %v6729
      %v6816 = vpop.f32.mrb[0].mxu0
      %v6817 = vadd.f32 0.0, %v6816
      %v6818 = vpop.f32.mrb[0].mxu0
      %v6819 = vpop.f32.mrb[0].mxu0
      %v6820 = vadd.f32 0.0, %v6819
      %v6821 = vpop.f32.mrb[0].mxu0
      %6822 = vmatprep.mubr.bf16.mxu0 0
      %6823 = vmatmul.mubr.bf16.gmra.mrb[0].mxu0 %v6732
      %v6824 = vpop.f32.mrb[0].mxu0
      %v6825 = vadd.f32 0.0, %v6824
      %v6826 = vpop.f32.mrb[0].mxu0
      %v6827 = vpop.f32.mrb[0].mxu0
      %v6828 = vadd.f32 0.0, %v6827
      %v6829 = vpop.f32.mrb[0].mxu0
      %6830 = vdwg.mxu0
      %v6831 = vadd.f32 %v6632, %v6769
      %v6832 = vadd.f32 %v6633, %v6772
      %v6833 = vadd.f32 %v6634, %v6777
      %v6834 = vadd.f32 %v6635, %v6780
      %v6835 = vadd.f32 %v6636, %v6785
      %v6836 = vadd.f32 %v6637, %v6788
      %v6837 = vadd.f32 %v6638, %v6793
      %v6838 = vadd.f32 %v6639, %v6796
      %v6839 = vadd.f32 %v6640, %v6801
      %v6840 = vadd.f32 %v6641, %v6804
      %v6841 = vadd.f32 %v6642, %v6809
      %v6842 = vadd.f32 %v6643, %v6812
      %v6843 = vadd.f32 %v6644, %v6817
      %v6844 = vadd.f32 %v6645, %v6820
      %v6845 = vadd.f32 %v6646, %v6825
      %v6846 = vadd.f32 %v6647, %v6828
      %s6847 = scalar_lea.vmem %s5, 576
      %v6848 = vld [vmem:[%s6847] sm:$0xf]
      %v6849 = vld [vmem:[%s6847 + $0x4] sm:$0xf]
      %v6850 = vld [vmem:[%s6847 + $0x8] sm:$0xf]
      %v6851 = vld [vmem:[%s6847 + $0xc] sm:$0xf]
      %v6852 = vld [vmem:[%s6847 + $0x10] sm:$0xf]
      %v6853 = vld [vmem:[%s6847 + $0x14] sm:$0xf]
      %v6854 = vld [vmem:[%s6847 + $0x18] sm:$0xf]
      %v6855 = vld [vmem:[%s6847 + $0x1c] sm:$0xf]
      %v6856 = vld [vmem:[%s6847 + $0x20] sm:$0xf]
      %v6857 = vld [vmem:[%s6847 + $0x24] sm:$0xf]
      %v6858 = vld [vmem:[%s6847 + $0x28] sm:$0xf]
      %v6859 = vld [vmem:[%s6847 + $0x2c] sm:$0xf]
      %v6860 = vld [vmem:[%s6847 + $0x30] sm:$0xf]
      %v6861 = vld [vmem:[%s6847 + $0x34] sm:$0xf]
      %v6862 = vld [vmem:[%s6847 + $0x38] sm:$0xf]
      %v6863 = vld [vmem:[%s6847 + $0x3c] sm:$0xf]
      %v6880 = vunpack.c.l.b16 %v6848
      %v6881 = vunpack.c.l.b16 %v6849
      %v6882 = vunpack.c.l.b16 %v6850
      %v6883 = vunpack.c.l.b16 %v6851
      %v6884 = vunpack.c.l.b16 %v6852
      %v6885 = vunpack.c.l.b16 %v6853
      %v6886 = vunpack.c.l.b16 %v6854
      %v6887 = vunpack.c.l.b16 %v6855
      %v6888 = vunpack.c.l.b16 %v6856
      %v6889 = vunpack.c.l.b16 %v6857
      %v6890 = vunpack.c.l.b16 %v6858
      %v6891 = vunpack.c.l.b16 %v6859
      %v6892 = vunpack.c.l.b16 %v6860
      %v6893 = vunpack.c.l.b16 %v6861
      %v6894 = vunpack.c.l.b16 %v6862
      %v6895 = vunpack.c.l.b16 %v6863
      %v6896 = vpack.c.b16 %v6881, %v6880
      %v6897 = vpack.c.b16 %v6883, %v6882
      %v6898 = vpack.c.b16 %v6885, %v6884
      %v6899 = vpack.c.b16 %v6887, %v6886
      %v6900 = vpack.c.b16 %v6889, %v6888
      %v6901 = vpack.c.b16 %v6891, %v6890
      %v6902 = vpack.c.b16 %v6893, %v6892
      %v6903 = vpack.c.b16 %v6895, %v6894
      %6904 = vrot.lane.b32.xlu0 %v6648, 28
      %v6905 = vpop.permute.xlu0 %6904
      %v6908 = vsel %vm2251, %v6896, 0
      %v6911 = vsel %vm2251, %v6897, 0
      %v6914 = vsel %vm2251, %v6898, 0
      %v6917 = vsel %vm2251, %v6899, 0
      %v6920 = vsel %vm2251, %v6900, 0
      %v6923 = vsel %vm2251, %v6901, 0
      %v6926 = vsel %vm2251, %v6902, 0
      %v6929 = vsel %vm2251, %v6903, 0
      %6931 = vmatprep.subr.bf16.mxu0 0
      %6932 = vmatpush1.bf16.msra.mxu0 %v6905
      %6933 = vmatprep.subr.bf16.mxu0 0
      %6934 = vmatpush1.bf16.msra.mxu0 0
      %6935 = vmatprep.subr.bf16.mxu0 0
      %6936 = vmatpush1.bf16.msra.mxu0 0
      %6937 = vmatprep.subr.bf16.mxu0 0
      %6938 = vmatpush1.bf16.msra.mxu0 0
      %6939 = vmatprep.subr.bf16.mxu0 0
      %6940 = vmatpush1.bf16.msra.mxu0 0
      %6941 = vmatprep.subr.bf16.mxu0 0
      %6942 = vmatpush1.bf16.msra.mxu0 0
      %6943 = vmatprep.subr.bf16.mxu0 0
      %6944 = vmatpush1.bf16.msra.mxu0 0
      %6945 = vmatprep.subr.bf16.mxu0 0
      %6946 = vmatpush1.bf16.msra.mxu0 0
      %6947 = vmatprep.subr.bf16.mxu0 0
      %6948 = vmatpush1.bf16.msra.mxu0 0
      %6949 = vmatprep.subr.bf16.mxu0 0
      %6950 = vmatpush1.bf16.msra.mxu0 0
      %6951 = vmatprep.subr.bf16.mxu0 0
      %6952 = vmatpush1.bf16.msra.mxu0 0
      %6953 = vmatprep.subr.bf16.mxu0 0
      %6954 = vmatpush1.bf16.msra.mxu0 0
      %6955 = vmatprep.subr.bf16.mxu0 0
      %6956 = vmatpush1.bf16.msra.mxu0 0
      %6957 = vmatprep.subr.bf16.mxu0 0
      %6958 = vmatpush1.bf16.msra.mxu0 0
      %6959 = vmatprep.subr.bf16.mxu0 0
      %6960 = vmatpush1.bf16.msra.mxu0 0
      %6961 = vmatprep.subr.bf16.mxu0 0
      %6962 = vmatpush1.bf16.msra.mxu0 0
      %6963 = vmatprep.mubr.bf16.mxu0 0
      %6964 = vmatmul.mubr.bf16.gmra.mrb[0].mxu0 %v6908
      %v6965 = vpop.f32.mrb[0].mxu0
      %v6966 = vadd.f32 0.0, %v6965
      %v6967 = vpop.f32.mrb[0].mxu0
      %v6968 = vpop.f32.mrb[0].mxu0
      %v6969 = vadd.f32 0.0, %v6968
      %v6970 = vpop.f32.mrb[0].mxu0
      %6971 = vmatprep.mubr.bf16.mxu0 0
      %6972 = vmatmul.mubr.bf16.gmra.mrb[0].mxu0 %v6911
      %v6973 = vpop.f32.mrb[0].mxu0
      %v6974 = vadd.f32 0.0, %v6973
      %v6975 = vpop.f32.mrb[0].mxu0
      %v6976 = vpop.f32.mrb[0].mxu0
      %v6977 = vadd.f32 0.0, %v6976
      %v6978 = vpop.f32.mrb[0].mxu0
      %6979 = vmatprep.mubr.bf16.mxu0 0
      %6980 = vmatmul.mubr.bf16.gmra.mrb[0].mxu0 %v6914
      %v6981 = vpop.f32.mrb[0].mxu0
      %v6982 = vadd.f32 0.0, %v6981
      %v6983 = vpop.f32.mrb[0].mxu0
      %v6984 = vpop.f32.mrb[0].mxu0
      %v6985 = vadd.f32 0.0, %v6984
      %v6986 = vpop.f32.mrb[0].mxu0
      %6987 = vmatprep.mubr.bf16.mxu0 0
      %6988 = vmatmul.mubr.bf16.gmra.mrb[0].mxu0 %v6917
      %v6989 = vpop.f32.mrb[0].mxu0
      %v6990 = vadd.f32 0.0, %v6989
      %v6991 = vpop.f32.mrb[0].mxu0
      %v6992 = vpop.f32.mrb[0].mxu0
      %v6993 = vadd.f32 0.0, %v6992
      %v6994 = vpop.f32.mrb[0].mxu0
      %6995 = vmatprep.mubr.bf16.mxu0 0
      %6996 = vmatmul.mubr.bf16.gmra.mrb[0].mxu0 %v6920
      %v6997 = vpop.f32.mrb[0].mxu0
      %v6998 = vadd.f32 0.0, %v6997
      %v6999 = vpop.f32.mrb[0].mxu0
      %v7000 = vpop.f32.mrb[0].mxu0
      %v7001 = vadd.f32 0.0, %v7000
      %v7002 = vpop.f32.mrb[0].mxu0
      %7003 = vmatprep.mubr.bf16.mxu0 0
      %7004 = vmatmul.mubr.bf16.gmra.mrb[0].mxu0 %v6923
      %v7005 = vpop.f32.mrb[0].mxu0
      %v7006 = vadd.f32 0.0, %v7005
      %v7007 = vpop.f32.mrb[0].mxu0
      %v7008 = vpop.f32.mrb[0].mxu0
      %v7009 = vadd.f32 0.0, %v7008
      %v7010 = vpop.f32.mrb[0].mxu0
      %7011 = vmatprep.mubr.bf16.mxu0 0
      %7012 = vmatmul.mubr.bf16.gmra.mrb[0].mxu0 %v6926
      %v7013 = vpop.f32.mrb[0].mxu0
      %v7014 = vadd.f32 0.0, %v7013
      %v7015 = vpop.f32.mrb[0].mxu0
      %v7016 = vpop.f32.mrb[0].mxu0
      %v7017 = vadd.f32 0.0, %v7016
      %v7018 = vpop.f32.mrb[0].mxu0
      %7019 = vmatprep.mubr.bf16.mxu0 0
      %7020 = vmatmul.mubr.bf16.gmra.mrb[0].mxu0 %v6929
      %v7021 = vpop.f32.mrb[0].mxu0
      %v7022 = vadd.f32 0.0, %v7021
      %v7023 = vpop.f32.mrb[0].mxu0
      %v7024 = vpop.f32.mrb[0].mxu0
      %v7025 = vadd.f32 0.0, %v7024
      %v7026 = vpop.f32.mrb[0].mxu0
      %7027 = vdwg.mxu0
      %v7028 = vadd.f32 %v6831, %v6966
      %v7029 = vadd.f32 %v6832, %v6969
      %v7030 = vadd.f32 %v6833, %v6974
      %v7031 = vadd.f32 %v6834, %v6977
      %v7032 = vadd.f32 %v6835, %v6982
      %v7033 = vadd.f32 %v6836, %v6985
      %v7034 = vadd.f32 %v6837, %v6990
      %v7035 = vadd.f32 %v6838, %v6993
      %v7036 = vadd.f32 %v6839, %v6998
      %v7037 = vadd.f32 %v6840, %v7001
      %v7038 = vadd.f32 %v6841, %v7006
      %v7039 = vadd.f32 %v6842, %v7009
      %v7040 = vadd.f32 %v6843, %v7014
      %v7041 = vadd.f32 %v6844, %v7017
      %v7042 = vadd.f32 %v6845, %v7022
      %v7043 = vadd.f32 %v6846, %v7025
      %s7044 = scalar_lea.vmem %s5, 640
      %v7045 = vld [vmem:[%s7044] sm:$0xf]
      %v7046 = vld [vmem:[%s7044 + $0x4] sm:$0xf]
      %v7047 = vld [vmem:[%s7044 + $0x8] sm:$0xf]
      %v7048 = vld [vmem:[%s7044 + $0xc] sm:$0xf]
      %v7049 = vld [vmem:[%s7044 + $0x10] sm:$0xf]
      %v7050 = vld [vmem:[%s7044 + $0x14] sm:$0xf]
      %v7051 = vld [vmem:[%s7044 + $0x18] sm:$0xf]
      %v7052 = vld [vmem:[%s7044 + $0x1c] sm:$0xf]
      %v7053 = vld [vmem:[%s7044 + $0x20] sm:$0xf]
      %v7054 = vld [vmem:[%s7044 + $0x24] sm:$0xf]
      %v7055 = vld [vmem:[%s7044 + $0x28] sm:$0xf]
      %v7056 = vld [vmem:[%s7044 + $0x2c] sm:$0xf]
      %v7057 = vld [vmem:[%s7044 + $0x30] sm:$0xf]
      %v7058 = vld [vmem:[%s7044 + $0x34] sm:$0xf]
      %v7059 = vld [vmem:[%s7044 + $0x38] sm:$0xf]
      %v7060 = vld [vmem:[%s7044 + $0x3c] sm:$0xf]
      %v7077 = vunpack.c.l.b16 %v7045
      %v7078 = vunpack.c.l.b16 %v7046
      %v7079 = vunpack.c.l.b16 %v7047
      %v7080 = vunpack.c.l.b16 %v7048
      %v7081 = vunpack.c.l.b16 %v7049
      %v7082 = vunpack.c.l.b16 %v7050
      %v7083 = vunpack.c.l.b16 %v7051
      %v7084 = vunpack.c.l.b16 %v7052
      %v7085 = vunpack.c.l.b16 %v7053
      %v7086 = vunpack.c.l.b16 %v7054
      %v7087 = vunpack.c.l.b16 %v7055
      %v7088 = vunpack.c.l.b16 %v7056
      %v7089 = vunpack.c.l.b16 %v7057
      %v7090 = vunpack.c.l.b16 %v7058
      %v7091 = vunpack.c.l.b16 %v7059
      %v7092 = vunpack.c.l.b16 %v7060
      %v7093 = vpack.c.b16 %v7078, %v7077
      %v7094 = vpack.c.b16 %v7080, %v7079
      %v7095 = vpack.c.b16 %v7082, %v7081
      %v7096 = vpack.c.b16 %v7084, %v7083
      %v7097 = vpack.c.b16 %v7086, %v7085
      %v7098 = vpack.c.b16 %v7088, %v7087
      %v7099 = vpack.c.b16 %v7090, %v7089
      %v7100 = vpack.c.b16 %v7092, %v7091
      %7101 = vrot.lane.b32.xlu0 %v6648, 24
      %v7102 = vpop.permute.xlu0 %7101
      %v7105 = vsel %vm2251, %v7093, 0
      %v7108 = vsel %vm2251, %v7094, 0
      %v7111 = vsel %vm2251, %v7095, 0
      %v7114 = vsel %vm2251, %v7096, 0
      %v7117 = vsel %vm2251, %v7097, 0
      %v7120 = vsel %vm2251, %v7098, 0
      %v7123 = vsel %vm2251, %v7099, 0
      %v7126 = vsel %vm2251, %v7100, 0
      %7128 = vmatprep.subr.bf16.mxu0 0
      %7129 = vmatpush1.bf16.msra.mxu0 %v7102
      %7130 = vmatprep.subr.bf16.mxu0 0
      %7131 = vmatpush1.bf16.msra.mxu0 0
      %7132 = vmatprep.subr.bf16.mxu0 0
      %7133 = vmatpush1.bf16.msra.mxu0 0
      %7134 = vmatprep.subr.bf16.mxu0 0
      %7135 = vmatpush1.bf16.msra.mxu0 0
      %7136 = vmatprep.subr.bf16.mxu0 0
      %7137 = vmatpush1.bf16.msra.mxu0 0
      %7138 = vmatprep.subr.bf16.mxu0 0
      %7139 = vmatpush1.bf16.msra.mxu0 0
      %7140 = vmatprep.subr.bf16.mxu0 0
      %7141 = vmatpush1.bf16.msra.mxu0 0
      %7142 = vmatprep.subr.bf16.mxu0 0
      %7143 = vmatpush1.bf16.msra.mxu0 0
      %7144 = vmatprep.subr.bf16.mxu0 0
      %7145 = vmatpush1.bf16.msra.mxu0 0
      %7146 = vmatprep.subr.bf16.mxu0 0
      %7147 = vmatpush1.bf16.msra.mxu0 0
      %7148 = vmatprep.subr.bf16.mxu0 0
      %7149 = vmatpush1.bf16.msra.mxu0 0
      %7150 = vmatprep.subr.bf16.mxu0 0
      %7151 = vmatpush1.bf16.msra.mxu0 0
      %7152 = vmatprep.subr.bf16.mxu0 0
      %7153 = vmatpush1.bf16.msra.mxu0 0
      %7154 = vmatprep.subr.bf16.mxu0 0
      %7155 = vmatpush1.bf16.msra.mxu0 0
      %7156 = vmatprep.subr.bf16.mxu0 0
      %7157 = vmatpush1.bf16.msra.mxu0 0
      %7158 = vmatprep.subr.bf16.mxu0 0
      %7159 = vmatpush1.bf16.msra.mxu0 0
      %7160 = vmatprep.mubr.bf16.mxu0 0
      %7161 = vmatmul.mubr.bf16.gmra.mrb[0].mxu0 %v7105
      %v7162 = vpop.f32.mrb[0].mxu0
      %v7163 = vadd.f32 0.0, %v7162
      %v7164 = vpop.f32.mrb[0].mxu0
      %v7165 = vpop.f32.mrb[0].mxu0
      %v7166 = vadd.f32 0.0, %v7165
      %v7167 = vpop.f32.mrb[0].mxu0
      %7168 = vmatprep.mubr.bf16.mxu0 0
      %7169 = vmatmul.mubr.bf16.gmra.mrb[0].mxu0 %v7108
      %v7170 = vpop.f32.mrb[0].mxu0
      %v7171 = vadd.f32 0.0, %v7170
      %v7172 = vpop.f32.mrb[0].mxu0
      %v7173 = vpop.f32.mrb[0].mxu0
      %v7174 = vadd.f32 0.0, %v7173
      %v7175 = vpop.f32.mrb[0].mxu0
      %7176 = vmatprep.mubr.bf16.mxu0 0
      %7177 = vmatmul.mubr.bf16.gmra.mrb[0].mxu0 %v7111
      %v7178 = vpop.f32.mrb[0].mxu0
      %v7179 = vadd.f32 0.0, %v7178
      %v7180 = vpop.f32.mrb[0].mxu0
      %v7181 = vpop.f32.mrb[0].mxu0
      %v7182 = vadd.f32 0.0, %v7181
      %v7183 = vpop.f32.mrb[0].mxu0
      %7184 = vmatprep.mubr.bf16.mxu0 0
      %7185 = vmatmul.mubr.bf16.gmra.mrb[0].mxu0 %v7114
      %v7186 = vpop.f32.mrb[0].mxu0
      %v7187 = vadd.f32 0.0, %v7186
      %v7188 = vpop.f32.mrb[0].mxu0
      %v7189 = vpop.f32.mrb[0].mxu0
      %v7190 = vadd.f32 0.0, %v7189
      %v7191 = vpop.f32.mrb[0].mxu0
      %7192 = vmatprep.mubr.bf16.mxu0 0
      %7193 = vmatmul.mubr.bf16.gmra.mrb[0].mxu0 %v7117
      %v7194 = vpop.f32.mrb[0].mxu0
      %v7195 = vadd.f32 0.0, %v7194
      %v7196 = vpop.f32.mrb[0].mxu0
      %v7197 = vpop.f32.mrb[0].mxu0
      %v7198 = vadd.f32 0.0, %v7197
      %v7199 = vpop.f32.mrb[0].mxu0
      %7200 = vmatprep.mubr.bf16.mxu0 0
      %7201 = vmatmul.mubr.bf16.gmra.mrb[0].mxu0 %v7120
      %v7202 = vpop.f32.mrb[0].mxu0
      %v7203 = vadd.f32 0.0, %v7202
      %v7204 = vpop.f32.mrb[0].mxu0
      %v7205 = vpop.f32.mrb[0].mxu0
      %v7206 = vadd.f32 0.0, %v7205
      %v7207 = vpop.f32.mrb[0].mxu0
      %7208 = vmatprep.mubr.bf16.mxu0 0
      %7209 = vmatmul.mubr.bf16.gmra.mrb[0].mxu0 %v7123
      %v7210 = vpop.f32.mrb[0].mxu0
      %v7211 = vadd.f32 0.0, %v7210
      %v7212 = vpop.f32.mrb[0].mxu0
      %v7213 = vpop.f32.mrb[0].mxu0
      %v7214 = vadd.f32 0.0, %v7213
      %v7215 = vpop.f32.mrb[0].mxu0
      %7216 = vmatprep.mubr.bf16.mxu0 0
      %7217 = vmatmul.mubr.bf16.gmra.mrb[0].mxu0 %v7126
      %v7218 = vpop.f32.mrb[0].mxu0
      %v7219 = vadd.f32 0.0, %v7218
      %v7220 = vpop.f32.mrb[0].mxu0
      %v7221 = vpop.f32.mrb[0].mxu0
      %v7222 = vadd.f32 0.0, %v7221
      %v7223 = vpop.f32.mrb[0].mxu0
      %7224 = vdwg.mxu0
      %v7225 = vadd.f32 %v7028, %v7163
      %v7226 = vadd.f32 %v7029, %v7166
      %v7227 = vadd.f32 %v7030, %v7171
      %v7228 = vadd.f32 %v7031, %v7174
      %v7229 = vadd.f32 %v7032, %v7179
      %v7230 = vadd.f32 %v7033, %v7182
      %v7231 = vadd.f32 %v7034, %v7187
      %v7232 = vadd.f32 %v7035, %v7190
      %v7233 = vadd.f32 %v7036, %v7195
      %v7234 = vadd.f32 %v7037, %v7198
      %v7235 = vadd.f32 %v7038, %v7203
      %v7236 = vadd.f32 %v7039, %v7206
      %v7237 = vadd.f32 %v7040, %v7211
      %v7238 = vadd.f32 %v7041, %v7214
      %v7239 = vadd.f32 %v7042, %v7219
      %v7240 = vadd.f32 %v7043, %v7222
      %s7241 = scalar_lea.vmem %s5, 704
      %v7242 = vld [vmem:[%s7241] sm:$0xf]
      %v7243 = vld [vmem:[%s7241 + $0x4] sm:$0xf]
      %v7244 = vld [vmem:[%s7241 + $0x8] sm:$0xf]
      %v7245 = vld [vmem:[%s7241 + $0xc] sm:$0xf]
      %v7246 = vld [vmem:[%s7241 + $0x10] sm:$0xf]
      %v7247 = vld [vmem:[%s7241 + $0x14] sm:$0xf]
      %v7248 = vld [vmem:[%s7241 + $0x18] sm:$0xf]
      %v7249 = vld [vmem:[%s7241 + $0x1c] sm:$0xf]
      %v7250 = vld [vmem:[%s7241 + $0x20] sm:$0xf]
      %v7251 = vld [vmem:[%s7241 + $0x24] sm:$0xf]
      %v7252 = vld [vmem:[%s7241 + $0x28] sm:$0xf]
      %v7253 = vld [vmem:[%s7241 + $0x2c] sm:$0xf]
      %v7254 = vld [vmem:[%s7241 + $0x30] sm:$0xf]
      %v7255 = vld [vmem:[%s7241 + $0x34] sm:$0xf]
      %v7256 = vld [vmem:[%s7241 + $0x38] sm:$0xf]
      %v7257 = vld [vmem:[%s7241 + $0x3c] sm:$0xf]
      %v7274 = vunpack.c.l.b16 %v7242
      %v7275 = vunpack.c.l.b16 %v7243
      %v7276 = vunpack.c.l.b16 %v7244
      %v7277 = vunpack.c.l.b16 %v7245
      %v7278 = vunpack.c.l.b16 %v7246
      %v7279 = vunpack.c.l.b16 %v7247
      %v7280 = vunpack.c.l.b16 %v7248
      %v7281 = vunpack.c.l.b16 %v7249
      %v7282 = vunpack.c.l.b16 %v7250
      %v7283 = vunpack.c.l.b16 %v7251
      %v7284 = vunpack.c.l.b16 %v7252
      %v7285 = vunpack.c.l.b16 %v7253
      %v7286 = vunpack.c.l.b16 %v7254
      %v7287 = vunpack.c.l.b16 %v7255
      %v7288 = vunpack.c.l.b16 %v7256
      %v7289 = vunpack.c.l.b16 %v7257
      %v7290 = vpack.c.b16 %v7275, %v7274
      %v7291 = vpack.c.b16 %v7277, %v7276
      %v7292 = vpack.c.b16 %v7279, %v7278
      %v7293 = vpack.c.b16 %v7281, %v7280
      %v7294 = vpack.c.b16 %v7283, %v7282
      %v7295 = vpack.c.b16 %v7285, %v7284
      %v7296 = vpack.c.b16 %v7287, %v7286
      %v7297 = vpack.c.b16 %v7289, %v7288
      %7298 = vrot.lane.b32.xlu0 %v6648, 20
      %v7299 = vpop.permute.xlu0 %7298
      %v7302 = vsel %vm2251, %v7290, 0
      %v7305 = vsel %vm2251, %v7291, 0
      %v7308 = vsel %vm2251, %v7292, 0
      %v7311 = vsel %vm2251, %v7293, 0
      %v7314 = vsel %vm2251, %v7294, 0
      %v7317 = vsel %vm2251, %v7295, 0
      %v7320 = vsel %vm2251, %v7296, 0
      %v7323 = vsel %vm2251, %v7297, 0
      %7325 = vmatprep.subr.bf16.mxu0 0
      %7326 = vmatpush1.bf16.msra.mxu0 %v7299
      %7327 = vmatprep.subr.bf16.mxu0 0
      %7328 = vmatpush1.bf16.msra.mxu0 0
      %7329 = vmatprep.subr.bf16.mxu0 0
      %7330 = vmatpush1.bf16.msra.mxu0 0
      %7331 = vmatprep.subr.bf16.mxu0 0
      %7332 = vmatpush1.bf16.msra.mxu0 0
      %7333 = vmatprep.subr.bf16.mxu0 0
      %7334 = vmatpush1.bf16.msra.mxu0 0
      %7335 = vmatprep.subr.bf16.mxu0 0
      %7336 = vmatpush1.bf16.msra.mxu0 0
      %7337 = vmatprep.subr.bf16.mxu0 0
      %7338 = vmatpush1.bf16.msra.mxu0 0
      %7339 = vmatprep.subr.bf16.mxu0 0
      %7340 = vmatpush1.bf16.msra.mxu0 0
      %7341 = vmatprep.subr.bf16.mxu0 0
      %7342 = vmatpush1.bf16.msra.mxu0 0
      %7343 = vmatprep.subr.bf16.mxu0 0
      %7344 = vmatpush1.bf16.msra.mxu0 0
      %7345 = vmatprep.subr.bf16.mxu0 0
      %7346 = vmatpush1.bf16.msra.mxu0 0
      %7347 = vmatprep.subr.bf16.mxu0 0
      %7348 = vmatpush1.bf16.msra.mxu0 0
      %7349 = vmatprep.subr.bf16.mxu0 0
      %7350 = vmatpush1.bf16.msra.mxu0 0
      %7351 = vmatprep.subr.bf16.mxu0 0
      %7352 = vmatpush1.bf16.msra.mxu0 0
      %7353 = vmatprep.subr.bf16.mxu0 0
      %7354 = vmatpush1.bf16.msra.mxu0 0
      %7355 = vmatprep.subr.bf16.mxu0 0
      %7356 = vmatpush1.bf16.msra.mxu0 0
      %7357 = vmatprep.mubr.bf16.mxu0 0
      %7358 = vmatmul.mubr.bf16.gmra.mrb[0].mxu0 %v7302
      %v7359 = vpop.f32.mrb[0].mxu0
      %v7360 = vadd.f32 0.0, %v7359
      %v7361 = vpop.f32.mrb[0].mxu0
      %v7362 = vpop.f32.mrb[0].mxu0
      %v7363 = vadd.f32 0.0, %v7362
      %v7364 = vpop.f32.mrb[0].mxu0
      %7365 = vmatprep.mubr.bf16.mxu0 0
      %7366 = vmatmul.mubr.bf16.gmra.mrb[0].mxu0 %v7305
      %v7367 = vpop.f32.mrb[0].mxu0
      %v7368 = vadd.f32 0.0, %v7367
      %v7369 = vpop.f32.mrb[0].mxu0
      %v7370 = vpop.f32.mrb[0].mxu0
      %v7371 = vadd.f32 0.0, %v7370
      %v7372 = vpop.f32.mrb[0].mxu0
      %7373 = vmatprep.mubr.bf16.mxu0 0
      %7374 = vmatmul.mubr.bf16.gmra.mrb[0].mxu0 %v7308
      %v7375 = vpop.f32.mrb[0].mxu0
      %v7376 = vadd.f32 0.0, %v7375
      %v7377 = vpop.f32.mrb[0].mxu0
      %v7378 = vpop.f32.mrb[0].mxu0
      %v7379 = vadd.f32 0.0, %v7378
      %v7380 = vpop.f32.mrb[0].mxu0
      %7381 = vmatprep.mubr.bf16.mxu0 0
      %7382 = vmatmul.mubr.bf16.gmra.mrb[0].mxu0 %v7311
      %v7383 = vpop.f32.mrb[0].mxu0
      %v7384 = vadd.f32 0.0, %v7383
      %v7385 = vpop.f32.mrb[0].mxu0
      %v7386 = vpop.f32.mrb[0].mxu0
      %v7387 = vadd.f32 0.0, %v7386
      %v7388 = vpop.f32.mrb[0].mxu0
      %7389 = vmatprep.mubr.bf16.mxu0 0
      %7390 = vmatmul.mubr.bf16.gmra.mrb[0].mxu0 %v7314
      %v7391 = vpop.f32.mrb[0].mxu0
      %v7392 = vadd.f32 0.0, %v7391
      %v7393 = vpop.f32.mrb[0].mxu0
      %v7394 = vpop.f32.mrb[0].mxu0
      %v7395 = vadd.f32 0.0, %v7394
      %v7396 = vpop.f32.mrb[0].mxu0
      %7397 = vmatprep.mubr.bf16.mxu0 0
      %7398 = vmatmul.mubr.bf16.gmra.mrb[0].mxu0 %v7317
      %v7399 = vpop.f32.mrb[0].mxu0
      %v7400 = vadd.f32 0.0, %v7399
      %v7401 = vpop.f32.mrb[0].mxu0
      %v7402 = vpop.f32.mrb[0].mxu0
      %v7403 = vadd.f32 0.0, %v7402
      %v7404 = vpop.f32.mrb[0].mxu0
      %7405 = vmatprep.mubr.bf16.mxu0 0
      %7406 = vmatmul.mubr.bf16.gmra.mrb[0].mxu0 %v7320
      %v7407 = vpop.f32.mrb[0].mxu0
      %v7408 = vadd.f32 0.0, %v7407
      %v7409 = vpop.f32.mrb[0].mxu0
      %v7410 = vpop.f32.mrb[0].mxu0
      %v7411 = vadd.f32 0.0, %v7410
      %v7412 = vpop.f32.mrb[0].mxu0
      %7413 = vmatprep.mubr.bf16.mxu0 0
      %7414 = vmatmul.mubr.bf16.gmra.mrb[0].mxu0 %v7323
      %v7415 = vpop.f32.mrb[0].mxu0
      %v7416 = vadd.f32 0.0, %v7415
      %v7417 = vpop.f32.mrb[0].mxu0
      %v7418 = vpop.f32.mrb[0].mxu0
      %v7419 = vadd.f32 0.0, %v7418
      %v7420 = vpop.f32.mrb[0].mxu0
      %7421 = vdwg.mxu0
      %v7422 = vadd.f32 %v7225, %v7360
      %v7423 = vadd.f32 %v7226, %v7363
      %v7424 = vadd.f32 %v7227, %v7368
      %v7425 = vadd.f32 %v7228, %v7371
      %v7426 = vadd.f32 %v7229, %v7376
      %v7427 = vadd.f32 %v7230, %v7379
      %v7428 = vadd.f32 %v7231, %v7384
      %v7429 = vadd.f32 %v7232, %v7387
      %v7430 = vadd.f32 %v7233, %v7392
      %v7431 = vadd.f32 %v7234, %v7395
      %v7432 = vadd.f32 %v7235, %v7400
      %v7433 = vadd.f32 %v7236, %v7403
      %v7434 = vadd.f32 %v7237, %v7408
      %v7435 = vadd.f32 %v7238, %v7411
      %v7436 = vadd.f32 %v7239, %v7416
      %v7437 = vadd.f32 %v7240, %v7419
      %v7438 = vpack.c.bf16 %v5105, %v5102
      %s7439 = scalar_lea.vmem %s5, 768
      %v7440 = vld [vmem:[%s7439] sm:$0xf]
      %v7441 = vld [vmem:[%s7439 + $0x4] sm:$0xf]
      %v7442 = vld [vmem:[%s7439 + $0x8] sm:$0xf]
      %v7443 = vld [vmem:[%s7439 + $0xc] sm:$0xf]
      %v7444 = vld [vmem:[%s7439 + $0x10] sm:$0xf]
      %v7445 = vld [vmem:[%s7439 + $0x14] sm:$0xf]
      %v7446 = vld [vmem:[%s7439 + $0x18] sm:$0xf]
      %v7447 = vld [vmem:[%s7439 + $0x1c] sm:$0xf]
      %v7448 = vld [vmem:[%s7439 + $0x20] sm:$0xf]
      %v7449 = vld [vmem:[%s7439 + $0x24] sm:$0xf]
      %v7450 = vld [vmem:[%s7439 + $0x28] sm:$0xf]
      %v7451 = vld [vmem:[%s7439 + $0x2c] sm:$0xf]
      %v7452 = vld [vmem:[%s7439 + $0x30] sm:$0xf]
      %v7453 = vld [vmem:[%s7439 + $0x34] sm:$0xf]
      %v7454 = vld [vmem:[%s7439 + $0x38] sm:$0xf]
      %v7455 = vld [vmem:[%s7439 + $0x3c] sm:$0xf]
      %v7472 = vunpack.c.l.b16 %v7440
      %v7473 = vunpack.c.l.b16 %v7441
      %v7474 = vunpack.c.l.b16 %v7442
      %v7475 = vunpack.c.l.b16 %v7443
      %v7476 = vunpack.c.l.b16 %v7444
      %v7477 = vunpack.c.l.b16 %v7445
      %v7478 = vunpack.c.l.b16 %v7446
      %v7479 = vunpack.c.l.b16 %v7447
      %v7480 = vunpack.c.l.b16 %v7448
      %v7481 = vunpack.c.l.b16 %v7449
      %v7482 = vunpack.c.l.b16 %v7450
      %v7483 = vunpack.c.l.b16 %v7451
      %v7484 = vunpack.c.l.b16 %v7452
      %v7485 = vunpack.c.l.b16 %v7453
      %v7486 = vunpack.c.l.b16 %v7454
      %v7487 = vunpack.c.l.b16 %v7455
      %v7488 = vpack.c.b16 %v7473, %v7472
      %v7489 = vpack.c.b16 %v7475, %v7474
      %v7490 = vpack.c.b16 %v7477, %v7476
      %v7491 = vpack.c.b16 %v7479, %v7478
      %v7492 = vpack.c.b16 %v7481, %v7480
      %v7493 = vpack.c.b16 %v7483, %v7482
      %v7494 = vpack.c.b16 %v7485, %v7484
      %v7495 = vpack.c.b16 %v7487, %v7486
      %7497 = vrot.lane.b32.xlu0 %v7438, 48
      %v7498 = vpop.permute.xlu0 %7497
      %v7501 = vsel %vm2251, %v7488, 0
      %v7504 = vsel %vm2251, %v7489, 0
      %v7507 = vsel %vm2251, %v7490, 0
      %v7510 = vsel %vm2251, %v7491, 0
      %v7513 = vsel %vm2251, %v7492, 0
      %v7516 = vsel %vm2251, %v7493, 0
      %v7519 = vsel %vm2251, %v7494, 0
      %v7522 = vsel %vm2251, %v7495, 0
      %7524 = vmatprep.subr.bf16.mxu0 0
      %7525 = vmatpush1.bf16.msra.mxu0 %v7498
      %7526 = vmatprep.subr.bf16.mxu0 0
      %7527 = vmatpush1.bf16.msra.mxu0 0
      %7528 = vmatprep.subr.bf16.mxu0 0
      %7529 = vmatpush1.bf16.msra.mxu0 0
      %7530 = vmatprep.subr.bf16.mxu0 0
      %7531 = vmatpush1.bf16.msra.mxu0 0
      %7532 = vmatprep.subr.bf16.mxu0 0
      %7533 = vmatpush1.bf16.msra.mxu0 0
      %7534 = vmatprep.subr.bf16.mxu0 0
      %7535 = vmatpush1.bf16.msra.mxu0 0
      %7536 = vmatprep.subr.bf16.mxu0 0
      %7537 = vmatpush1.bf16.msra.mxu0 0
      %7538 = vmatprep.subr.bf16.mxu0 0
      %7539 = vmatpush1.bf16.msra.mxu0 0
      %7540 = vmatprep.subr.bf16.mxu0 0
      %7541 = vmatpush1.bf16.msra.mxu0 0
      %7542 = vmatprep.subr.bf16.mxu0 0
      %7543 = vmatpush1.bf16.msra.mxu0 0
      %7544 = vmatprep.subr.bf16.mxu0 0
      %7545 = vmatpush1.bf16.msra.mxu0 0
      %7546 = vmatprep.subr.bf16.mxu0 0
      %7547 = vmatpush1.bf16.msra.mxu0 0
      %7548 = vmatprep.subr.bf16.mxu0 0
      %7549 = vmatpush1.bf16.msra.mxu0 0
      %7550 = vmatprep.subr.bf16.mxu0 0
      %7551 = vmatpush1.bf16.msra.mxu0 0
      %7552 = vmatprep.subr.bf16.mxu0 0
      %7553 = vmatpush1.bf16.msra.mxu0 0
      %7554 = vmatprep.subr.bf16.mxu0 0
      %7555 = vmatpush1.bf16.msra.mxu0 0
      %7556 = vmatprep.mubr.bf16.mxu0 0
      %7557 = vmatmul.mubr.bf16.gmra.mrb[0].mxu0 %v7501
      %v7558 = vpop.f32.mrb[0].mxu0
      %v7559 = vadd.f32 0.0, %v7558
      %v7560 = vpop.f32.mrb[0].mxu0
      %v7561 = vpop.f32.mrb[0].mxu0
      %v7562 = vadd.f32 0.0, %v7561
      %v7563 = vpop.f32.mrb[0].mxu0
      %7564 = vmatprep.mubr.bf16.mxu0 0
      %7565 = vmatmul.mubr.bf16.gmra.mrb[0].mxu0 %v7504
      %v7566 = vpop.f32.mrb[0].mxu0
      %v7567 = vadd.f32 0.0, %v7566
      %v7568 = vpop.f32.mrb[0].mxu0
      %v7569 = vpop.f32.mrb[0].mxu0
      %v7570 = vadd.f32 0.0, %v7569
      %v7571 = vpop.f32.mrb[0].mxu0
      %7572 = vmatprep.mubr.bf16.mxu0 0
      %7573 = vmatmul.mubr.bf16.gmra.mrb[0].mxu0 %v7507
      %v7574 = vpop.f32.mrb[0].mxu0
      %v7575 = vadd.f32 0.0, %v7574
      %v7576 = vpop.f32.mrb[0].mxu0
      %v7577 = vpop.f32.mrb[0].mxu0
      %v7578 = vadd.f32 0.0, %v7577
      %v7579 = vpop.f32.mrb[0].mxu0
      %7580 = vmatprep.mubr.bf16.mxu0 0
      %7581 = vmatmul.mubr.bf16.gmra.mrb[0].mxu0 %v7510
      %v7582 = vpop.f32.mrb[0].mxu0
      %v7583 = vadd.f32 0.0, %v7582
      %v7584 = vpop.f32.mrb[0].mxu0
      %v7585 = vpop.f32.mrb[0].mxu0
      %v7586 = vadd.f32 0.0, %v7585
      %v7587 = vpop.f32.mrb[0].mxu0
      %7588 = vmatprep.mubr.bf16.mxu0 0
      %7589 = vmatmul.mubr.bf16.gmra.mrb[0].mxu0 %v7513
      %v7590 = vpop.f32.mrb[0].mxu0
      %v7591 = vadd.f32 0.0, %v7590
      %v7592 = vpop.f32.mrb[0].mxu0
      %v7593 = vpop.f32.mrb[0].mxu0
      %v7594 = vadd.f32 0.0, %v7593
      %v7595 = vpop.f32.mrb[0].mxu0
      %7596 = vmatprep.mubr.bf16.mxu0 0
      %7597 = vmatmul.mubr.bf16.gmra.mrb[0].mxu0 %v7516
      %v7598 = vpop.f32.mrb[0].mxu0
      %v7599 = vadd.f32 0.0, %v7598
      %v7600 = vpop.f32.mrb[0].mxu0
      %v7601 = vpop.f32.mrb[0].mxu0
      %v7602 = vadd.f32 0.0, %v7601
      %v7603 = vpop.f32.mrb[0].mxu0
      %7604 = vmatprep.mubr.bf16.mxu0 0
      %7605 = vmatmul.mubr.bf16.gmra.mrb[0].mxu0 %v7519
      %v7606 = vpop.f32.mrb[0].mxu0
      %v7607 = vadd.f32 0.0, %v7606
      %v7608 = vpop.f32.mrb[0].mxu0
      %v7609 = vpop.f32.mrb[0].mxu0
      %v7610 = vadd.f32 0.0, %v7609
      %v7611 = vpop.f32.mrb[0].mxu0
      %7612 = vmatprep.mubr.bf16.mxu0 0
      %7613 = vmatmul.mubr.bf16.gmra.mrb[0].mxu0 %v7522
      %v7614 = vpop.f32.mrb[0].mxu0
      %v7615 = vadd.f32 0.0, %v7614
      %v7616 = vpop.f32.mrb[0].mxu0
      %v7617 = vpop.f32.mrb[0].mxu0
      %v7618 = vadd.f32 0.0, %v7617
      %v7619 = vpop.f32.mrb[0].mxu0
      %7620 = vdwg.mxu0
      %v7621 = vadd.f32 %v7422, %v7559
      %v7622 = vadd.f32 %v7423, %v7562
      %v7623 = vadd.f32 %v7424, %v7567
      %v7624 = vadd.f32 %v7425, %v7570
      %v7625 = vadd.f32 %v7426, %v7575
      %v7626 = vadd.f32 %v7427, %v7578
      %v7627 = vadd.f32 %v7428, %v7583
      %v7628 = vadd.f32 %v7429, %v7586
      %v7629 = vadd.f32 %v7430, %v7591
      %v7630 = vadd.f32 %v7431, %v7594
      %v7631 = vadd.f32 %v7432, %v7599
      %v7632 = vadd.f32 %v7433, %v7602
      %v7633 = vadd.f32 %v7434, %v7607
      %v7634 = vadd.f32 %v7435, %v7610
      %v7635 = vadd.f32 %v7436, %v7615
      %v7636 = vadd.f32 %v7437, %v7618
      %s7637 = scalar_lea.vmem %s5, 832
      %v7638 = vld [vmem:[%s7637] sm:$0xf]
      %v7639 = vld [vmem:[%s7637 + $0x4] sm:$0xf]
      %v7640 = vld [vmem:[%s7637 + $0x8] sm:$0xf]
      %v7641 = vld [vmem:[%s7637 + $0xc] sm:$0xf]
      %v7642 = vld [vmem:[%s7637 + $0x10] sm:$0xf]
      %v7643 = vld [vmem:[%s7637 + $0x14] sm:$0xf]
      %v7644 = vld [vmem:[%s7637 + $0x18] sm:$0xf]
      %v7645 = vld [vmem:[%s7637 + $0x1c] sm:$0xf]
      %v7646 = vld [vmem:[%s7637 + $0x20] sm:$0xf]
      %v7647 = vld [vmem:[%s7637 + $0x24] sm:$0xf]
      %v7648 = vld [vmem:[%s7637 + $0x28] sm:$0xf]
      %v7649 = vld [vmem:[%s7637 + $0x2c] sm:$0xf]
      %v7650 = vld [vmem:[%s7637 + $0x30] sm:$0xf]
      %v7651 = vld [vmem:[%s7637 + $0x34] sm:$0xf]
      %v7652 = vld [vmem:[%s7637 + $0x38] sm:$0xf]
      %v7653 = vld [vmem:[%s7637 + $0x3c] sm:$0xf]
      %v7670 = vunpack.c.l.b16 %v7638
      %v7671 = vunpack.c.l.b16 %v7639
      %v7672 = vunpack.c.l.b16 %v7640
      %v7673 = vunpack.c.l.b16 %v7641
      %v7674 = vunpack.c.l.b16 %v7642
      %v7675 = vunpack.c.l.b16 %v7643
      %v7676 = vunpack.c.l.b16 %v7644
      %v7677 = vunpack.c.l.b16 %v7645
      %v7678 = vunpack.c.l.b16 %v7646
      %v7679 = vunpack.c.l.b16 %v7647
      %v7680 = vunpack.c.l.b16 %v7648
      %v7681 = vunpack.c.l.b16 %v7649
      %v7682 = vunpack.c.l.b16 %v7650
      %v7683 = vunpack.c.l.b16 %v7651
      %v7684 = vunpack.c.l.b16 %v7652
      %v7685 = vunpack.c.l.b16 %v7653
      %v7686 = vpack.c.b16 %v7671, %v7670
      %v7687 = vpack.c.b16 %v7673, %v7672
      %v7688 = vpack.c.b16 %v7675, %v7674
      %v7689 = vpack.c.b16 %v7677, %v7676
      %v7690 = vpack.c.b16 %v7679, %v7678
      %v7691 = vpack.c.b16 %v7681, %v7680
      %v7692 = vpack.c.b16 %v7683, %v7682
      %v7693 = vpack.c.b16 %v7685, %v7684
      %7694 = vrot.lane.b32.xlu0 %v7438, 44
      %v7695 = vpop.permute.xlu0 %7694
      %v7698 = vsel %vm2251, %v7686, 0
      %v7701 = vsel %vm2251, %v7687, 0
      %v7704 = vsel %vm2251, %v7688, 0
      %v7707 = vsel %vm2251, %v7689, 0
      %v7710 = vsel %vm2251, %v7690, 0
      %v7713 = vsel %vm2251, %v7691, 0
      %v7716 = vsel %vm2251, %v7692, 0
      %v7719 = vsel %vm2251, %v7693, 0
      %7721 = vmatprep.subr.bf16.mxu0 0
      %7722 = vmatpush1.bf16.msra.mxu0 %v7695
      %7723 = vmatprep.subr.bf16.mxu0 0
      %7724 = vmatpush1.bf16.msra.mxu0 0
      %7725 = vmatprep.subr.bf16.mxu0 0
      %7726 = vmatpush1.bf16.msra.mxu0 0
      %7727 = vmatprep.subr.bf16.mxu0 0
      %7728 = vmatpush1.bf16.msra.mxu0 0
      %7729 = vmatprep.subr.bf16.mxu0 0
      %7730 = vmatpush1.bf16.msra.mxu0 0
      %7731 = vmatprep.subr.bf16.mxu0 0
      %7732 = vmatpush1.bf16.msra.mxu0 0
      %7733 = vmatprep.subr.bf16.mxu0 0
      %7734 = vmatpush1.bf16.msra.mxu0 0
      %7735 = vmatprep.subr.bf16.mxu0 0
      %7736 = vmatpush1.bf16.msra.mxu0 0
      %7737 = vmatprep.subr.bf16.mxu0 0
      %7738 = vmatpush1.bf16.msra.mxu0 0
      %7739 = vmatprep.subr.bf16.mxu0 0
      %7740 = vmatpush1.bf16.msra.mxu0 0
      %7741 = vmatprep.subr.bf16.mxu0 0
      %7742 = vmatpush1.bf16.msra.mxu0 0
      %7743 = vmatprep.subr.bf16.mxu0 0
      %7744 = vmatpush1.bf16.msra.mxu0 0
      %7745 = vmatprep.subr.bf16.mxu0 0
      %7746 = vmatpush1.bf16.msra.mxu0 0
      %7747 = vmatprep.subr.bf16.mxu0 0
      %7748 = vmatpush1.bf16.msra.mxu0 0
      %7749 = vmatprep.subr.bf16.mxu0 0
      %7750 = vmatpush1.bf16.msra.mxu0 0
      %7751 = vmatprep.subr.bf16.mxu0 0
      %7752 = vmatpush1.bf16.msra.mxu0 0
      %7753 = vmatprep.mubr.bf16.mxu0 0
      %7754 = vmatmul.mubr.bf16.gmra.mrb[0].mxu0 %v7698
      %v7755 = vpop.f32.mrb[0].mxu0
      %v7756 = vadd.f32 0.0, %v7755
      %v7757 = vpop.f32.mrb[0].mxu0
      %v7758 = vpop.f32.mrb[0].mxu0
      %v7759 = vadd.f32 0.0, %v7758
      %v7760 = vpop.f32.mrb[0].mxu0
      %7761 = vmatprep.mubr.bf16.mxu0 0
      %7762 = vmatmul.mubr.bf16.gmra.mrb[0].mxu0 %v7701
      %v7763 = vpop.f32.mrb[0].mxu0
      %v7764 = vadd.f32 0.0, %v7763
      %v7765 = vpop.f32.mrb[0].mxu0
      %v7766 = vpop.f32.mrb[0].mxu0
      %v7767 = vadd.f32 0.0, %v7766
      %v7768 = vpop.f32.mrb[0].mxu0
      %7769 = vmatprep.mubr.bf16.mxu0 0
      %7770 = vmatmul.mubr.bf16.gmra.mrb[0].mxu0 %v7704
      %v7771 = vpop.f32.mrb[0].mxu0
      %v7772 = vadd.f32 0.0, %v7771
      %v7773 = vpop.f32.mrb[0].mxu0
      %v7774 = vpop.f32.mrb[0].mxu0
      %v7775 = vadd.f32 0.0, %v7774
      %v7776 = vpop.f32.mrb[0].mxu0
      %7777 = vmatprep.mubr.bf16.mxu0 0
      %7778 = vmatmul.mubr.bf16.gmra.mrb[0].mxu0 %v7707
      %v7779 = vpop.f32.mrb[0].mxu0
      %v7780 = vadd.f32 0.0, %v7779
      %v7781 = vpop.f32.mrb[0].mxu0
      %v7782 = vpop.f32.mrb[0].mxu0
      %v7783 = vadd.f32 0.0, %v7782
      %v7784 = vpop.f32.mrb[0].mxu0
      %7785 = vmatprep.mubr.bf16.mxu0 0
      %7786 = vmatmul.mubr.bf16.gmra.mrb[0].mxu0 %v7710
      %v7787 = vpop.f32.mrb[0].mxu0
      %v7788 = vadd.f32 0.0, %v7787
      %v7789 = vpop.f32.mrb[0].mxu0
      %v7790 = vpop.f32.mrb[0].mxu0
      %v7791 = vadd.f32 0.0, %v7790
      %v7792 = vpop.f32.mrb[0].mxu0
      %7793 = vmatprep.mubr.bf16.mxu0 0
      %7794 = vmatmul.mubr.bf16.gmra.mrb[0].mxu0 %v7713
      %v7795 = vpop.f32.mrb[0].mxu0
      %v7796 = vadd.f32 0.0, %v7795
      %v7797 = vpop.f32.mrb[0].mxu0
      %v7798 = vpop.f32.mrb[0].mxu0
      %v7799 = vadd.f32 0.0, %v7798
      %v7800 = vpop.f32.mrb[0].mxu0
      %7801 = vmatprep.mubr.bf16.mxu0 0
      %7802 = vmatmul.mubr.bf16.gmra.mrb[0].mxu0 %v7716
      %v7803 = vpop.f32.mrb[0].mxu0
      %v7804 = vadd.f32 0.0, %v7803
      %v7805 = vpop.f32.mrb[0].mxu0
      %v7806 = vpop.f32.mrb[0].mxu0
      %v7807 = vadd.f32 0.0, %v7806
      %v7808 = vpop.f32.mrb[0].mxu0
      %7809 = vmatprep.mubr.bf16.mxu0 0
      %7810 = vmatmul.mubr.bf16.gmra.mrb[0].mxu0 %v7719
      %v7811 = vpop.f32.mrb[0].mxu0
      %v7812 = vadd.f32 0.0, %v7811
      %v7813 = vpop.f32.mrb[0].mxu0
      %v7814 = vpop.f32.mrb[0].mxu0
      %v7815 = vadd.f32 0.0, %v7814
      %v7816 = vpop.f32.mrb[0].mxu0
      %7817 = vdwg.mxu0
      %v7818 = vadd.f32 %v7621, %v7756
      %v7819 = vadd.f32 %v7622, %v7759
      %v7820 = vadd.f32 %v7623, %v7764
      %v7821 = vadd.f32 %v7624, %v7767
      %v7822 = vadd.f32 %v7625, %v7772
      %v7823 = vadd.f32 %v7626, %v7775
      %v7824 = vadd.f32 %v7627, %v7780
      %v7825 = vadd.f32 %v7628, %v7783
      %v7826 = vadd.f32 %v7629, %v7788
      %v7827 = vadd.f32 %v7630, %v7791
      %v7828 = vadd.f32 %v7631, %v7796
      %v7829 = vadd.f32 %v7632, %v7799
      %v7830 = vadd.f32 %v7633, %v7804
      %v7831 = vadd.f32 %v7634, %v7807
      %v7832 = vadd.f32 %v7635, %v7812
      %v7833 = vadd.f32 %v7636, %v7815
      %s7834 = scalar_lea.vmem %s5, 896
      %v7835 = vld [vmem:[%s7834] sm:$0xf]
      %v7836 = vld [vmem:[%s7834 + $0x4] sm:$0xf]
      %v7837 = vld [vmem:[%s7834 + $0x8] sm:$0xf]
      %v7838 = vld [vmem:[%s7834 + $0xc] sm:$0xf]
      %v7839 = vld [vmem:[%s7834 + $0x10] sm:$0xf]
      %v7840 = vld [vmem:[%s7834 + $0x14] sm:$0xf]
      %v7841 = vld [vmem:[%s7834 + $0x18] sm:$0xf]
      %v7842 = vld [vmem:[%s7834 + $0x1c] sm:$0xf]
      %v7843 = vld [vmem:[%s7834 + $0x20] sm:$0xf]
      %v7844 = vld [vmem:[%s7834 + $0x24] sm:$0xf]
      %v7845 = vld [vmem:[%s7834 + $0x28] sm:$0xf]
      %v7846 = vld [vmem:[%s7834 + $0x2c] sm:$0xf]
      %v7847 = vld [vmem:[%s7834 + $0x30] sm:$0xf]
      %v7848 = vld [vmem:[%s7834 + $0x34] sm:$0xf]
      %v7849 = vld [vmem:[%s7834 + $0x38] sm:$0xf]
      %v7850 = vld [vmem:[%s7834 + $0x3c] sm:$0xf]
      %v7867 = vunpack.c.l.b16 %v7835
      %v7868 = vunpack.c.l.b16 %v7836
      %v7869 = vunpack.c.l.b16 %v7837
      %v7870 = vunpack.c.l.b16 %v7838
      %v7871 = vunpack.c.l.b16 %v7839
      %v7872 = vunpack.c.l.b16 %v7840
      %v7873 = vunpack.c.l.b16 %v7841
      %v7874 = vunpack.c.l.b16 %v7842
      %v7875 = vunpack.c.l.b16 %v7843
      %v7876 = vunpack.c.l.b16 %v7844
      %v7877 = vunpack.c.l.b16 %v7845
      %v7878 = vunpack.c.l.b16 %v7846
      %v7879 = vunpack.c.l.b16 %v7847
      %v7880 = vunpack.c.l.b16 %v7848
      %v7881 = vunpack.c.l.b16 %v7849
      %v7882 = vunpack.c.l.b16 %v7850
      %v7883 = vpack.c.b16 %v7868, %v7867
      %v7884 = vpack.c.b16 %v7870, %v7869
      %v7885 = vpack.c.b16 %v7872, %v7871
      %v7886 = vpack.c.b16 %v7874, %v7873
      %v7887 = vpack.c.b16 %v7876, %v7875
      %v7888 = vpack.c.b16 %v7878, %v7877
      %v7889 = vpack.c.b16 %v7880, %v7879
      %v7890 = vpack.c.b16 %v7882, %v7881
      %7891 = vrot.lane.b32.xlu0 %v7438, 40
      %v7892 = vpop.permute.xlu0 %7891
      %v7895 = vsel %vm2251, %v7883, 0
      %v7898 = vsel %vm2251, %v7884, 0
      %v7901 = vsel %vm2251, %v7885, 0
      %v7904 = vsel %vm2251, %v7886, 0
      %v7907 = vsel %vm2251, %v7887, 0
      %v7910 = vsel %vm2251, %v7888, 0
      %v7913 = vsel %vm2251, %v7889, 0
      %v7916 = vsel %vm2251, %v7890, 0
      %7918 = vmatprep.subr.bf16.mxu0 0
      %7919 = vmatpush1.bf16.msra.mxu0 %v7892
      %7920 = vmatprep.subr.bf16.mxu0 0
      %7921 = vmatpush1.bf16.msra.mxu0 0
      %7922 = vmatprep.subr.bf16.mxu0 0
      %7923 = vmatpush1.bf16.msra.mxu0 0
      %7924 = vmatprep.subr.bf16.mxu0 0
      %7925 = vmatpush1.bf16.msra.mxu0 0
      %7926 = vmatprep.subr.bf16.mxu0 0
      %7927 = vmatpush1.bf16.msra.mxu0 0
      %7928 = vmatprep.subr.bf16.mxu0 0
      %7929 = vmatpush1.bf16.msra.mxu0 0
      %7930 = vmatprep.subr.bf16.mxu0 0
      %7931 = vmatpush1.bf16.msra.mxu0 0
      %7932 = vmatprep.subr.bf16.mxu0 0
      %7933 = vmatpush1.bf16.msra.mxu0 0
      %7934 = vmatprep.subr.bf16.mxu0 0
      %7935 = vmatpush1.bf16.msra.mxu0 0
      %7936 = vmatprep.subr.bf16.mxu0 0
      %7937 = vmatpush1.bf16.msra.mxu0 0
      %7938 = vmatprep.subr.bf16.mxu0 0
      %7939 = vmatpush1.bf16.msra.mxu0 0
      %7940 = vmatprep.subr.bf16.mxu0 0
      %7941 = vmatpush1.bf16.msra.mxu0 0
      %7942 = vmatprep.subr.bf16.mxu0 0
      %7943 = vmatpush1.bf16.msra.mxu0 0
      %7944 = vmatprep.subr.bf16.mxu0 0
      %7945 = vmatpush1.bf16.msra.mxu0 0
      %7946 = vmatprep.subr.bf16.mxu0 0
      %7947 = vmatpush1.bf16.msra.mxu0 0
      %7948 = vmatprep.subr.bf16.mxu0 0
      %7949 = vmatpush1.bf16.msra.mxu0 0
      %7950 = vmatprep.mubr.bf16.mxu0 0
      %7951 = vmatmul.mubr.bf16.gmra.mrb[0].mxu0 %v7895
      %v7952 = vpop.f32.mrb[0].mxu0
      %v7953 = vadd.f32 0.0, %v7952
      %v7954 = vpop.f32.mrb[0].mxu0
      %v7955 = vpop.f32.mrb[0].mxu0
      %v7956 = vadd.f32 0.0, %v7955
      %v7957 = vpop.f32.mrb[0].mxu0
      %7958 = vmatprep.mubr.bf16.mxu0 0
      %7959 = vmatmul.mubr.bf16.gmra.mrb[0].mxu0 %v7898
      %v7960 = vpop.f32.mrb[0].mxu0
      %v7961 = vadd.f32 0.0, %v7960
      %v7962 = vpop.f32.mrb[0].mxu0
      %v7963 = vpop.f32.mrb[0].mxu0
      %v7964 = vadd.f32 0.0, %v7963
      %v7965 = vpop.f32.mrb[0].mxu0
      %7966 = vmatprep.mubr.bf16.mxu0 0
      %7967 = vmatmul.mubr.bf16.gmra.mrb[0].mxu0 %v7901
      %v7968 = vpop.f32.mrb[0].mxu0
      %v7969 = vadd.f32 0.0, %v7968
      %v7970 = vpop.f32.mrb[0].mxu0
      %v7971 = vpop.f32.mrb[0].mxu0
      %v7972 = vadd.f32 0.0, %v7971
      %v7973 = vpop.f32.mrb[0].mxu0
      %7974 = vmatprep.mubr.bf16.mxu0 0
      %7975 = vmatmul.mubr.bf16.gmra.mrb[0].mxu0 %v7904
      %v7976 = vpop.f32.mrb[0].mxu0
      %v7977 = vadd.f32 0.0, %v7976
      %v7978 = vpop.f32.mrb[0].mxu0
      %v7979 = vpop.f32.mrb[0].mxu0
      %v7980 = vadd.f32 0.0, %v7979
      %v7981 = vpop.f32.mrb[0].mxu0
      %7982 = vmatprep.mubr.bf16.mxu0 0
      %7983 = vmatmul.mubr.bf16.gmra.mrb[0].mxu0 %v7907
      %v7984 = vpop.f32.mrb[0].mxu0
      %v7985 = vadd.f32 0.0, %v7984
      %v7986 = vpop.f32.mrb[0].mxu0
      %v7987 = vpop.f32.mrb[0].mxu0
      %v7988 = vadd.f32 0.0, %v7987
      %v7989 = vpop.f32.mrb[0].mxu0
      %7990 = vmatprep.mubr.bf16.mxu0 0
      %7991 = vmatmul.mubr.bf16.gmra.mrb[0].mxu0 %v7910
      %v7992 = vpop.f32.mrb[0].mxu0
      %v7993 = vadd.f32 0.0, %v7992
      %v7994 = vpop.f32.mrb[0].mxu0
      %v7995 = vpop.f32.mrb[0].mxu0
      %v7996 = vadd.f32 0.0, %v7995
      %v7997 = vpop.f32.mrb[0].mxu0
      %7998 = vmatprep.mubr.bf16.mxu0 0
      %7999 = vmatmul.mubr.bf16.gmra.mrb[0].mxu0 %v7913
      %v8000 = vpop.f32.mrb[0].mxu0
      %v8001 = vadd.f32 0.0, %v8000
      %v8002 = vpop.f32.mrb[0].mxu0
      %v8003 = vpop.f32.mrb[0].mxu0
      %v8004 = vadd.f32 0.0, %v8003
      %v8005 = vpop.f32.mrb[0].mxu0
      %8006 = vmatprep.mubr.bf16.mxu0 0
      %8007 = vmatmul.mubr.bf16.gmra.mrb[0].mxu0 %v7916
      %v8008 = vpop.f32.mrb[0].mxu0
      %v8009 = vadd.f32 0.0, %v8008
      %v8010 = vpop.f32.mrb[0].mxu0
      %v8011 = vpop.f32.mrb[0].mxu0
      %v8012 = vadd.f32 0.0, %v8011
      %v8013 = vpop.f32.mrb[0].mxu0
      %8014 = vdwg.mxu0
      %v8015 = vadd.f32 %v7818, %v7953
      %v8016 = vadd.f32 %v7819, %v7956
      %v8017 = vadd.f32 %v7820, %v7961
      %v8018 = vadd.f32 %v7821, %v7964
      %v8019 = vadd.f32 %v7822, %v7969
      %v8020 = vadd.f32 %v7823, %v7972
      %v8021 = vadd.f32 %v7824, %v7977
      %v8022 = vadd.f32 %v7825, %v7980
      %v8023 = vadd.f32 %v7826, %v7985
      %v8024 = vadd.f32 %v7827, %v7988
      %v8025 = vadd.f32 %v7828, %v7993
      %v8026 = vadd.f32 %v7829, %v7996
      %v8027 = vadd.f32 %v7830, %v8001
      %v8028 = vadd.f32 %v7831, %v8004
      %v8029 = vadd.f32 %v7832, %v8009
      %v8030 = vadd.f32 %v7833, %v8012
      %s8031 = scalar_lea.vmem %s5, 960
      %v8032 = vld [vmem:[%s8031] sm:$0xf]
      %v8033 = vld [vmem:[%s8031 + $0x4] sm:$0xf]
      %v8034 = vld [vmem:[%s8031 + $0x8] sm:$0xf]
      %v8035 = vld [vmem:[%s8031 + $0xc] sm:$0xf]
      %v8036 = vld [vmem:[%s8031 + $0x10] sm:$0xf]
      %v8037 = vld [vmem:[%s8031 + $0x14] sm:$0xf]
      %v8038 = vld [vmem:[%s8031 + $0x18] sm:$0xf]
      %v8039 = vld [vmem:[%s8031 + $0x1c] sm:$0xf]
      %v8040 = vld [vmem:[%s8031 + $0x20] sm:$0xf]
      %v8041 = vld [vmem:[%s8031 + $0x24] sm:$0xf]
      %v8042 = vld [vmem:[%s8031 + $0x28] sm:$0xf]
      %v8043 = vld [vmem:[%s8031 + $0x2c] sm:$0xf]
      %v8044 = vld [vmem:[%s8031 + $0x30] sm:$0xf]
      %v8045 = vld [vmem:[%s8031 + $0x34] sm:$0xf]
      %v8046 = vld [vmem:[%s8031 + $0x38] sm:$0xf]
      %v8047 = vld [vmem:[%s8031 + $0x3c] sm:$0xf]
      %v8064 = vunpack.c.l.b16 %v8032
      %v8065 = vunpack.c.l.b16 %v8033
      %v8066 = vunpack.c.l.b16 %v8034
      %v8067 = vunpack.c.l.b16 %v8035
      %v8068 = vunpack.c.l.b16 %v8036
      %v8069 = vunpack.c.l.b16 %v8037
      %v8070 = vunpack.c.l.b16 %v8038
      %v8071 = vunpack.c.l.b16 %v8039
      %v8072 = vunpack.c.l.b16 %v8040
      %v8073 = vunpack.c.l.b16 %v8041
      %v8074 = vunpack.c.l.b16 %v8042
      %v8075 = vunpack.c.l.b16 %v8043
      %v8076 = vunpack.c.l.b16 %v8044
      %v8077 = vunpack.c.l.b16 %v8045
      %v8078 = vunpack.c.l.b16 %v8046
      %v8079 = vunpack.c.l.b16 %v8047
      %v8080 = vpack.c.b16 %v8065, %v8064
      %v8081 = vpack.c.b16 %v8067, %v8066
      %v8082 = vpack.c.b16 %v8069, %v8068
      %v8083 = vpack.c.b16 %v8071, %v8070
      %v8084 = vpack.c.b16 %v8073, %v8072
      %v8085 = vpack.c.b16 %v8075, %v8074
      %v8086 = vpack.c.b16 %v8077, %v8076
      %v8087 = vpack.c.b16 %v8079, %v8078
      %8088 = vrot.lane.b32.xlu0 %v7438, 36
      %v8089 = vpop.permute.xlu0 %8088
      %v8092 = vsel %vm2251, %v8080, 0
      %v8095 = vsel %vm2251, %v8081, 0
      %v8098 = vsel %vm2251, %v8082, 0
      %v8101 = vsel %vm2251, %v8083, 0
      %v8104 = vsel %vm2251, %v8084, 0
      %v8107 = vsel %vm2251, %v8085, 0
      %v8110 = vsel %vm2251, %v8086, 0
      %v8113 = vsel %vm2251, %v8087, 0
      %8115 = vmatprep.subr.bf16.mxu0 0
      %8116 = vmatpush1.bf16.msra.mxu0 %v8089
      %8117 = vmatprep.subr.bf16.mxu0 0
      %8118 = vmatpush1.bf16.msra.mxu0 0
      %8119 = vmatprep.subr.bf16.mxu0 0
      %8120 = vmatpush1.bf16.msra.mxu0 0
      %8121 = vmatprep.subr.bf16.mxu0 0
      %8122 = vmatpush1.bf16.msra.mxu0 0
      %8123 = vmatprep.subr.bf16.mxu0 0
      %8124 = vmatpush1.bf16.msra.mxu0 0
      %8125 = vmatprep.subr.bf16.mxu0 0
      %8126 = vmatpush1.bf16.msra.mxu0 0
      %8127 = vmatprep.subr.bf16.mxu0 0
      %8128 = vmatpush1.bf16.msra.mxu0 0
      %8129 = vmatprep.subr.bf16.mxu0 0
      %8130 = vmatpush1.bf16.msra.mxu0 0
      %8131 = vmatprep.subr.bf16.mxu0 0
      %8132 = vmatpush1.bf16.msra.mxu0 0
      %8133 = vmatprep.subr.bf16.mxu0 0
      %8134 = vmatpush1.bf16.msra.mxu0 0
      %8135 = vmatprep.subr.bf16.mxu0 0
      %8136 = vmatpush1.bf16.msra.mxu0 0
      %8137 = vmatprep.subr.bf16.mxu0 0
      %8138 = vmatpush1.bf16.msra.mxu0 0
      %8139 = vmatprep.subr.bf16.mxu0 0
      %8140 = vmatpush1.bf16.msra.mxu0 0
      %8141 = vmatprep.subr.bf16.mxu0 0
      %8142 = vmatpush1.bf16.msra.mxu0 0
      %8143 = vmatprep.subr.bf16.mxu0 0
      %8144 = vmatpush1.bf16.msra.mxu0 0
      %8145 = vmatprep.subr.bf16.mxu0 0
      %8146 = vmatpush1.bf16.msra.mxu0 0
      %8147 = vmatprep.mubr.bf16.mxu0 0
      %8148 = vmatmul.mubr.bf16.gmra.mrb[0].mxu0 %v8092
      %v8149 = vpop.f32.mrb[0].mxu0
      %v8150 = vadd.f32 0.0, %v8149
      %v8151 = vpop.f32.mrb[0].mxu0
      %v8152 = vpop.f32.mrb[0].mxu0
      %v8153 = vadd.f32 0.0, %v8152
      %v8154 = vpop.f32.mrb[0].mxu0
      %8155 = vmatprep.mubr.bf16.mxu0 0
      %8156 = vmatmul.mubr.bf16.gmra.mrb[0].mxu0 %v8095
      %v8157 = vpop.f32.mrb[0].mxu0
      %v8158 = vadd.f32 0.0, %v8157
      %v8159 = vpop.f32.mrb[0].mxu0
      %v8160 = vpop.f32.mrb[0].mxu0
      %v8161 = vadd.f32 0.0, %v8160
      %v8162 = vpop.f32.mrb[0].mxu0
      %8163 = vmatprep.mubr.bf16.mxu0 0
      %8164 = vmatmul.mubr.bf16.gmra.mrb[0].mxu0 %v8098
      %v8165 = vpop.f32.mrb[0].mxu0
      %v8166 = vadd.f32 0.0, %v8165
      %v8167 = vpop.f32.mrb[0].mxu0
      %v8168 = vpop.f32.mrb[0].mxu0
      %v8169 = vadd.f32 0.0, %v8168
      %v8170 = vpop.f32.mrb[0].mxu0
      %8171 = vmatprep.mubr.bf16.mxu0 0
      %8172 = vmatmul.mubr.bf16.gmra.mrb[0].mxu0 %v8101
      %v8173 = vpop.f32.mrb[0].mxu0
      %v8174 = vadd.f32 0.0, %v8173
      %v8175 = vpop.f32.mrb[0].mxu0
      %v8176 = vpop.f32.mrb[0].mxu0
      %v8177 = vadd.f32 0.0, %v8176
      %v8178 = vpop.f32.mrb[0].mxu0
      %8179 = vmatprep.mubr.bf16.mxu0 0
      %8180 = vmatmul.mubr.bf16.gmra.mrb[0].mxu0 %v8104
      %v8181 = vpop.f32.mrb[0].mxu0
      %v8182 = vadd.f32 0.0, %v8181
      %v8183 = vpop.f32.mrb[0].mxu0
      %v8184 = vpop.f32.mrb[0].mxu0
      %v8185 = vadd.f32 0.0, %v8184
      %v8186 = vpop.f32.mrb[0].mxu0
      %8187 = vmatprep.mubr.bf16.mxu0 0
      %8188 = vmatmul.mubr.bf16.gmra.mrb[0].mxu0 %v8107
      %v8189 = vpop.f32.mrb[0].mxu0
      %v8190 = vadd.f32 0.0, %v8189
      %v8191 = vpop.f32.mrb[0].mxu0
      %v8192 = vpop.f32.mrb[0].mxu0
      %v8193 = vadd.f32 0.0, %v8192
      %v8194 = vpop.f32.mrb[0].mxu0
      %8195 = vmatprep.mubr.bf16.mxu0 0
      %8196 = vmatmul.mubr.bf16.gmra.mrb[0].mxu0 %v8110
      %v8197 = vpop.f32.mrb[0].mxu0
      %v8198 = vadd.f32 0.0, %v8197
      %v8199 = vpop.f32.mrb[0].mxu0
      %v8200 = vpop.f32.mrb[0].mxu0
      %v8201 = vadd.f32 0.0, %v8200
      %v8202 = vpop.f32.mrb[0].mxu0
      %8203 = vmatprep.mubr.bf16.mxu0 0
      %8204 = vmatmul.mubr.bf16.gmra.mrb[0].mxu0 %v8113
      %v8205 = vpop.f32.mrb[0].mxu0
      %v8206 = vadd.f32 0.0, %v8205
      %v8207 = vpop.f32.mrb[0].mxu0
      %v8208 = vpop.f32.mrb[0].mxu0
      %v8209 = vadd.f32 0.0, %v8208
      %v8210 = vpop.f32.mrb[0].mxu0
      %8211 = vdwg.mxu0
      %v8212 = vadd.f32 %v8015, %v8150
      %v8213 = vadd.f32 %v8016, %v8153
      %v8214 = vadd.f32 %v8017, %v8158
      %v8215 = vadd.f32 %v8018, %v8161
      %v8216 = vadd.f32 %v8019, %v8166
      %v8217 = vadd.f32 %v8020, %v8169
      %v8218 = vadd.f32 %v8021, %v8174
      %v8219 = vadd.f32 %v8022, %v8177
      %v8220 = vadd.f32 %v8023, %v8182
      %v8221 = vadd.f32 %v8024, %v8185
      %v8222 = vadd.f32 %v8025, %v8190
      %v8223 = vadd.f32 %v8026, %v8193
      %v8224 = vadd.f32 %v8027, %v8198
      %v8225 = vadd.f32 %v8028, %v8201
      %v8226 = vadd.f32 %v8029, %v8206
      %v8227 = vadd.f32 %v8030, %v8209
      %v8228 = vld [vmem:[%s6] sm:$0xff]
      %v8229 = vld [vmem:[%s6 + $0x8] sm:$0xff]
      %v8230 = vld [vmem:[%s6 + $0x10] sm:$0xff]
      %v8231 = vld [vmem:[%s6 + $0x18] sm:$0xff]
      %v8232 = vld [vmem:[%s6 + $0x20] sm:$0xff]
      %v8233 = vld [vmem:[%s6 + $0x28] sm:$0xff]
      %v8234 = vld [vmem:[%s6 + $0x30] sm:$0xff]
      %v8235 = vld [vmem:[%s6 + $0x38] sm:$0xff]
      %v8236 = vld [vmem:[%s6 + $0x40] sm:$0xff]
      %v8237 = vld [vmem:[%s6 + $0x48] sm:$0xff]
      %v8238 = vld [vmem:[%s6 + $0x50] sm:$0xff]
      %v8239 = vld [vmem:[%s6 + $0x58] sm:$0xff]
      %v8240 = vld [vmem:[%s6 + $0x60] sm:$0xff]
      %v8241 = vld [vmem:[%s6 + $0x68] sm:$0xff]
      %v8242 = vld [vmem:[%s6 + $0x70] sm:$0xff]
      %v8243 = vld [vmem:[%s6 + $0x78] sm:$0xff]
      %v8244 = vadd.f32 %v8212, %v8228
      %v8245 = vadd.f32 %v8213, %v8229
      %v8246 = vadd.f32 %v8214, %v8230
      %v8247 = vadd.f32 %v8215, %v8231
      %v8248 = vadd.f32 %v8216, %v8232
      %v8249 = vadd.f32 %v8217, %v8233
      %v8250 = vadd.f32 %v8218, %v8234
      %v8251 = vadd.f32 %v8219, %v8235
      %v8252 = vadd.f32 %v8220, %v8236
      %v8253 = vadd.f32 %v8221, %v8237
      %v8254 = vadd.f32 %v8222, %v8238
      %v8255 = vadd.f32 %v8223, %v8239
      %v8256 = vadd.f32 %v8224, %v8240
      %v8257 = vadd.f32 %v8225, %v8241
      %v8258 = vadd.f32 %v8226, %v8242
      %v8259 = vadd.f32 %v8227, %v8243
      %v8260 = vmax.f32 %v8244, 0.0
      %v8261 = vmax.f32 %v8245, 0.0
      %v8262 = vmax.f32 %v8246, 0.0
      %v8263 = vmax.f32 %v8247, 0.0
      %v8264 = vmax.f32 %v8248, 0.0
      %v8265 = vmax.f32 %v8249, 0.0
      %v8266 = vmax.f32 %v8250, 0.0
      %v8267 = vmax.f32 %v8251, 0.0
      %v8268 = vmax.f32 %v8252, 0.0
      %v8269 = vmax.f32 %v8253, 0.0
      %v8270 = vmax.f32 %v8254, 0.0
      %v8271 = vmax.f32 %v8255, 0.0
      %v8272 = vmax.f32 %v8256, 0.0
      %v8273 = vmax.f32 %v8257, 0.0
      %v8274 = vmax.f32 %v8258, 0.0
      %v8275 = vmax.f32 %v8259, 0.0
      %v8276 = vpack.c.bf16 %v8261, %v8260
      %v8277 = vpack.c.bf16 %v8263, %v8262
      %v8278 = vpack.c.bf16 %v8265, %v8264
      %v8279 = vpack.c.bf16 %v8267, %v8266
      %v8280 = vpack.c.bf16 %v8269, %v8268
      %v8281 = vpack.c.bf16 %v8271, %v8270
      %v8282 = vpack.c.bf16 %v8273, %v8272
      %v8283 = vpack.c.bf16 %v8275, %v8274
      %v8284 = vld [vmem:[%s7] sm:$0xf]
      %v8285 = vld [vmem:[%s7 + $0x4] sm:$0xf]
      %v8286 = vld [vmem:[%s7 + $0x8] sm:$0xf]
      %v8287 = vld [vmem:[%s7 + $0xc] sm:$0xf]
      %v8288 = vld [vmem:[%s7 + $0x10] sm:$0xf]
      %v8289 = vld [vmem:[%s7 + $0x14] sm:$0xf]
      %v8290 = vld [vmem:[%s7 + $0x18] sm:$0xf]
      %v8291 = vld [vmem:[%s7 + $0x1c] sm:$0xf]
      %v8292 = vld [vmem:[%s8] sm:$0xff]
      %v8293 = vld [vmem:[%s8 + $0x8] sm:$0xff]
      %v8294 = vld [vmem:[%s8 + $0x10] sm:$0xff]
      %v8295 = vld [vmem:[%s8 + $0x18] sm:$0xff]
      %v8296 = vld [vmem:[%s8 + $0x20] sm:$0xff]
      %v8297 = vld [vmem:[%s8 + $0x28] sm:$0xff]
      %v8298 = vld [vmem:[%s8 + $0x30] sm:$0xff]
      %v8299 = vld [vmem:[%s8 + $0x38] sm:$0xff]
      %v8308 = vunpack.c.l.b16 %v8284
      %v8309 = vunpack.c.l.b16 %v8285
      %v8310 = vunpack.c.l.b16 %v8286
      %v8311 = vunpack.c.l.b16 %v8287
      %v8312 = vunpack.c.l.b16 %v8288
      %v8313 = vunpack.c.l.b16 %v8289
      %v8314 = vunpack.c.l.b16 %v8290
      %v8315 = vunpack.c.l.b16 %v8291
      %v8316 = vpack.c.b16 %v8309, %v8308
      %v8317 = vpack.c.b16 %v8311, %v8310
      %v8318 = vpack.c.b16 %v8313, %v8312
      %v8319 = vpack.c.b16 %v8315, %v8314
      %8324 = vmatprep.subr.bf16.mxu0 0
      %8325 = vmatpush1.bf16.msra.mxu0 %v8276
      %8326 = vmatprep.subr.bf16.mxu0 0
      %8327 = vmatpush1.bf16.msra.mxu0 %v8277
      %8328 = vmatprep.subr.bf16.mxu0 0
      %8329 = vmatpush1.bf16.msra.mxu0 %v8278
      %8330 = vmatprep.subr.bf16.mxu0 0
      %8331 = vmatpush1.bf16.msra.mxu0 %v8279
      %8332 = vmatprep.subr.bf16.mxu0 0
      %8333 = vmatpush1.bf16.msra.mxu0 %v8280
      %8334 = vmatprep.subr.bf16.mxu0 0
      %8335 = vmatpush1.bf16.msra.mxu0 %v8281
      %8336 = vmatprep.subr.bf16.mxu0 0
      %8337 = vmatpush1.bf16.msra.mxu0 %v8282
      %8338 = vmatprep.subr.bf16.mxu0 0
      %8339 = vmatpush1.bf16.msra.mxu0 %v8283
      %8340 = vmatprep.subr.bf16.mxu0 0
      %8341 = vmatpush1.bf16.msra.mxu0 0
      %8342 = vmatprep.subr.bf16.mxu0 0
      %8343 = vmatpush1.bf16.msra.mxu0 0
      %8344 = vmatprep.subr.bf16.mxu0 0
      %8345 = vmatpush1.bf16.msra.mxu0 0
      %8346 = vmatprep.subr.bf16.mxu0 0
      %8347 = vmatpush1.bf16.msra.mxu0 0
      %8348 = vmatprep.subr.bf16.mxu0 0
      %8349 = vmatpush1.bf16.msra.mxu0 0
      %8350 = vmatprep.subr.bf16.mxu0 0
      %8351 = vmatpush1.bf16.msra.mxu0 0
      %8352 = vmatprep.subr.bf16.mxu0 0
      %8353 = vmatpush1.bf16.msra.mxu0 0
      %8354 = vmatprep.subr.bf16.mxu0 0
      %8355 = vmatpush1.bf16.msra.mxu0 0
      %8356 = vmatprep.mubr.bf16.mxu0 0
      %8357 = vmatmul.mubr.bf16.gmra.mrb[0].mxu0 %v8316
      %v8358 = vpop.f32.mrb[0].mxu0
      %v8359 = vadd.f32 %v8292, %v8358
      %v8360 = vpop.f32.mrb[0].mxu0
      %v8361 = vpop.f32.mrb[0].mxu0
      %v8362 = vadd.f32 %v8293, %v8361
      %v8363 = vpop.f32.mrb[0].mxu0
      %8364 = vmatprep.mubr.bf16.mxu0 0
      %8365 = vmatmul.mubr.bf16.gmra.mrb[0].mxu0 %v8317
      %v8366 = vpop.f32.mrb[0].mxu0
      %v8367 = vadd.f32 %v8294, %v8366
      %v8368 = vpop.f32.mrb[0].mxu0
      %v8369 = vpop.f32.mrb[0].mxu0
      %v8370 = vadd.f32 %v8295, %v8369
      %v8371 = vpop.f32.mrb[0].mxu0
      %8372 = vmatprep.mubr.bf16.mxu0 0
      %8373 = vmatmul.mubr.bf16.gmra.mrb[0].mxu0 %v8318
      %v8374 = vpop.f32.mrb[0].mxu0
      %v8375 = vadd.f32 %v8296, %v8374
      %v8376 = vpop.f32.mrb[0].mxu0
      %v8377 = vpop.f32.mrb[0].mxu0
      %v8378 = vadd.f32 %v8297, %v8377
      %v8379 = vpop.f32.mrb[0].mxu0
      %8380 = vmatprep.mubr.bf16.mxu0 0
      %8381 = vmatmul.mubr.bf16.gmra.mrb[0].mxu0 %v8319
      %v8382 = vpop.f32.mrb[0].mxu0
      %v8383 = vadd.f32 %v8298, %v8382
      %v8384 = vpop.f32.mrb[0].mxu0
      %v8385 = vpop.f32.mrb[0].mxu0
      %v8386 = vadd.f32 %v8299, %v8385
      %v8387 = vpop.f32.mrb[0].mxu0
      %8388 = vdwg.mxu0
      %v8389 = vmax.f32 %v8359, 0.0
      %v8390 = vmax.f32 %v8362, 0.0
      %v8391 = vmax.f32 %v8367, 0.0
      %v8392 = vmax.f32 %v8370, 0.0
      %v8393 = vmax.f32 %v8375, 0.0
      %v8394 = vmax.f32 %v8378, 0.0
      %v8395 = vmax.f32 %v8383, 0.0
      %v8396 = vmax.f32 %v8386, 0.0
      %v8397 = vpack.c.bf16 %v8390, %v8389
      %v8398 = vpack.c.bf16 %v8392, %v8391
      %v8399 = vpack.c.bf16 %v8394, %v8393
      %v8400 = vpack.c.bf16 %v8396, %v8395
      %v8401 = vld [vmem:[%s9] sm:$0xf]
      %v8402 = vld [vmem:[%s9 + $0x4] sm:$0x1]
      %v8403 = vld [vmem:[%s10] sm:$0xff]
      %v8404 = vld [vmem:[%s10 + $0x8] sm:$0x3]
      %v8407 = vunpack.c.l.b16 %v8401
      %v8408 = vunpack.c.l.b16 %v8402
      %v8409 = vpack.c.b16 %v8408, %v8407
      %v8411 = vsel %vm3372, %v8409, 0
      %8413 = vmatprep.subr.bf16.mxu0 0
      %8414 = vmatpush1.bf16.msra.mxu0 %v8397
      %8415 = vmatprep.subr.bf16.mxu0 0
      %8416 = vmatpush1.bf16.msra.mxu0 %v8398
      %8417 = vmatprep.subr.bf16.mxu0 0
      %8418 = vmatpush1.bf16.msra.mxu0 %v8399
      %8419 = vmatprep.subr.bf16.mxu0 0
      %8420 = vmatpush1.bf16.msra.mxu0 %v8400
      %8421 = vmatprep.subr.bf16.mxu0 0
      %8422 = vmatpush1.bf16.msra.mxu0 0
      %8423 = vmatprep.subr.bf16.mxu0 0
      %8424 = vmatpush1.bf16.msra.mxu0 0
      %8425 = vmatprep.subr.bf16.mxu0 0
      %8426 = vmatpush1.bf16.msra.mxu0 0
      %8427 = vmatprep.subr.bf16.mxu0 0
      %8428 = vmatpush1.bf16.msra.mxu0 0
      %8429 = vmatprep.subr.bf16.mxu0 0
      %8430 = vmatpush1.bf16.msra.mxu0 0
      %8431 = vmatprep.subr.bf16.mxu0 0
      %8432 = vmatpush1.bf16.msra.mxu0 0
      %8433 = vmatprep.subr.bf16.mxu0 0
      %8434 = vmatpush1.bf16.msra.mxu0 0
      %8435 = vmatprep.subr.bf16.mxu0 0
      %8436 = vmatpush1.bf16.msra.mxu0 0
      %8437 = vmatprep.subr.bf16.mxu0 0
      %8438 = vmatpush1.bf16.msra.mxu0 0
      %8439 = vmatprep.subr.bf16.mxu0 0
      %8440 = vmatpush1.bf16.msra.mxu0 0
      %8441 = vmatprep.subr.bf16.mxu0 0
      %8442 = vmatpush1.bf16.msra.mxu0 0
      %8443 = vmatprep.subr.bf16.mxu0 0
      %8444 = vmatpush1.bf16.msra.mxu0 0
      %8445 = vmatprep.mubr.bf16.mxu0 0
      %8446 = vmatmul.mubr.bf16.gmra.mrb[0].mxu0 %v8411
      %v8447 = vpop.f32.mrb[0].mxu0
      %v8448 = vadd.f32 %v8403, %v8447
      %v8449 = vpop.f32.mrb[0].mxu0
      %v8450 = vpop.f32.mrb[0].mxu0
      %v8451 = vadd.f32 %v8404, %v8450
      %v8452 = vpop.f32.mrb[0].mxu0
      %8453 = vdwg.mxu0
      %vm8454 = vcmask 7168
      %8455 = vst.msk [vmem:[%s386] sm:$0xff] %vm8454, %v8448
      %vm8456 = vcmask 1024
      %8457 = vst.msk [vmem:[%s386 + $0x8] sm:$0x3] %vm8456, %v8451
      %p8458 = scmp.lt.s32.totalorder %s22, 1
      %s8459 = scalar_select %p8458, %s22, 1
      %s8460 = smul.addr %s8459, 2
      %s8461 = smul.addr %s8460, 8
      %s8462 = scalar_lea.vmem %s11, %s8461
      // Predicated region
      $region65: #{classifier_forward.1} parent=63 // pred_check
        %p8463 = pneg %p276
      $region66: #{classifier_forward.1} parent=63 // pred_check_branch
        %8465 = sbr.rel (%p8463) target = $region68
      $region67: #{classifier_forward.1} parent=63 // pred_region
        _
      $region68: #{classifier_forward.1} parent=63 // pred_fallthru
        _
    $region64: #{classifier_forward.1} parent=5 // pred_fallthru
      _
    %p8466 = scmp.le.s32.totalorder 2, %s17
    // Predicated region
    $region69: #{classifier_forward.1} parent=5 // pred_check
      %p8467 = pneg %p8466
    $region70: #{classifier_forward.1} parent=5 // pred_check_branch
      %8469 = sbr.rel (%p8467) target = $region72
    $region71: #{classifier_forward.1} parent=5 // pred_region
      %s8470 = ssub.s32 %s17, 2
      // Predicated region
      $region73: #{classifier_forward.1} parent=71 // pred_check
        %p8471 = pneg %p282
      $region74: #{classifier_forward.1} parent=71 // pred_check_branch
        %8473 = sbr.rel (%p8471) target = $region76
      $region75: #{classifier_forward.1} parent=71 // pred_region
        %p8474 = scmp.lt.s32.totalorder %s23, 1
        %s8475 = scalar_select %p8474, %s23, 1
        %s8476 = smul.addr %s8475, 2
        %s8477 = smul.addr %s8476, 8
        %s8478 = scalar_lea.vmem %s11, %s8477
      $region76: #{classifier_forward.1} parent=71 // pred_fallthru
        _
    $region72: #{classifier_forward.1} parent=5 // pred_fallthru
      _
  $region6: #{classifier_forward.1} parent=0 // loop_footer
    %s21 = sadd.s32 1, %s17
  $region7: #{classifier_forward.1} parent=0 // loop_footer_branch
    %16 = sbr.rel target = $region3
  $region8: #{classifier_forward.1} parent=0 // loop_exit
    _

</llo_original>
